<compile_context>
chip_gen: v7x
topology: tpu7x:2x2x1
jax: 0.10.0
libtpu: 0.0.40
codegen_flags: <defaults>
</compile_context>

<pallas_src>
import functools
import numpy as np
import jax
import jax.numpy as jnp
from jax.experimental import pallas as pl
from jax.experimental.pallas import tpu as pltpu


# ----------------------------- config --------------------------------------
class Cfg:
    seq_len = 16
    pred_len = 8
    enc_in = 4
    c_out = 4
    d_model = 16
    d_ff = 16
    num_kernels = 2
    e_layers = 1
    mark_dim = 4          # embed='timeF', freq='h' -> 4 time features
    totalscal = 100       # CWT scales (FeedForwardNetwork freq_len=100)


CFG = Cfg()


# --------------------------- Pallas kernel A: CWT ---------------------------
def _cwt_kernel(wc_ref, xe_ref, o_ref):
    # wc_ref block: [1, S*T, T], xe_ref block: [1, T, D]  ->  [S*T, D]
    o_ref[0, 0] = jnp.dot(wc_ref[0], xe_ref[0],
                          preferred_element_type=jnp.float32)


def cwt_project(wc, x_embed):
    """Apply the precomputed CWT operator.  wc:[2,S*T,T]  x:[B,T,D] -> [2,B,S*T,D]."""
    B, T, D = x_embed.shape
    ST = wc.shape[1]
    return pl.pallas_call(
        _cwt_kernel,
        out_shape=jax.ShapeDtypeStruct((2, B, ST, D), jnp.float32),
        grid_spec=pltpu.PrefetchScalarGridSpec(
            num_scalar_prefetch=0,
            grid=(2, B),
            in_specs=[pl.BlockSpec((1, ST, T), lambda i, j: (i, 0, 0)),
                      pl.BlockSpec((1, T, D), lambda i, j: (j, 0, 0))],
            out_specs=pl.BlockSpec((1, 1, ST, D), lambda i, j: (i, j, 0, 0))),
        compiler_params=pltpu.CompilerParams(
            dimension_semantics=("parallel", "parallel")),
    )(wc.astype(jnp.float32), x_embed.astype(jnp.float32))


# ------------------ Pallas kernel B: conv + GELU + conv + tanh + FFN ---------
def _conv_ffn_kernel(z_ref, w1_ref, b1_ref, w2_ref, b2_ref,
                     wf1_ref, bf1_ref, wf2_ref, o_ref, *, n_chunks, chunk):
    S, W = z_ref.shape[1], z_ref.shape[2]            # S=100 scales, W=T*D=384
    z = z_ref[0]                                     # [S, W]

    # +/-1 shift matrices along the scale axis (zero boundary), built from iota.
    r = jax.lax.broadcasted_iota(jnp.int32, (S, S), 0)
    c = jax.lax.broadcasted_iota(jnp.int32, (S, S), 1)
    sh_dn = (r == c + 1).astype(jnp.float32)         # x_dn[s] = x[s-1]
    sh_up = (r + 1 == c).astype(jnp.float32)         # x_up[s] = x[s+1]

    def conv3(x, w_ref, b_ref):
        # banded form of the (k=1 + k=3)/2 inception conv: 3 row-shifted matmuls
        x_dn = jnp.dot(sh_dn, x, preferred_element_type=jnp.float32)
        x_up = jnp.dot(sh_up, x, preferred_element_type=jnp.float32)
        acc = jnp.dot(x_dn, w_ref[0], preferred_element_type=jnp.float32)
        acc = acc + jnp.dot(x, w_ref[1], preferred_element_type=jnp.float32)
        acc = acc + jnp.dot(x_up, w_ref[2], preferred_element_type=jnp.float32)
        return acc + b_ref[...]

    h = conv3(z, w1_ref, b1_ref)
    h = 0.5 * h * (1.0 + jax.lax.erf(h * 0.7071067811865476))     # exact GELU
    y = jnp.tanh(conv3(h, w2_ref, b2_ref))                        # [S, W]

    yt = y.T                                                      # [W, S] rows=(t,d)

    def chunk_body(ci, acc):
        lo = pl.multiple_of(ci * chunk, chunk)
        w1c = wf1_ref[:, pl.ds(lo, chunk)]                        # [S, chunk]
        hc = jnp.dot(yt, w1c, preferred_element_type=jnp.float32) # [W, chunk]
        hc = jnp.maximum(hc + bf1_ref[:, pl.ds(lo, chunk)], 0.0)
        return acc + jnp.sum(hc * wf2_ref[:, pl.ds(lo, chunk)],
                             axis=-1, keepdims=True)

    acc_o = jax.lax.fori_loop(0, n_chunks, chunk_body,
                              jnp.zeros((W, 1), jnp.float32))
    o_ref[0] = acc_o                                              # [W, 1]


def conv_ffn(z_wide, blk, *, chunk=512):
    """z_wide:[2B, S, T*D] -> [2B, T*D, 1] (FFN layer-2 bias added by caller)."""
    nB, S, W = z_wide.shape
    H = blk["fnn_w1"].shape[1]
    kern = functools.partial(_conv_ffn_kernel, n_chunks=H // chunk, chunk=chunk)
    return pl.pallas_call(
        kern,
        out_shape=jax.ShapeDtypeStruct((nB, W, 1), jnp.float32),
        grid_spec=pltpu.PrefetchScalarGridSpec(
            num_scalar_prefetch=0,
            grid=(nB,),
            in_specs=[
                pl.BlockSpec((1, S, W), lambda i: (i, 0, 0)),
                pl.BlockSpec((3, W, W), lambda i: (0, 0, 0)),
                pl.BlockSpec((1, W), lambda i: (0, 0)),
                pl.BlockSpec((3, W, W), lambda i: (0, 0, 0)),
                pl.BlockSpec((1, W), lambda i: (0, 0)),
                pl.BlockSpec((S, H), lambda i: (0, 0)),
                pl.BlockSpec((1, H), lambda i: (0, 0)),
                pl.BlockSpec((1, H), lambda i: (0, 0)),
            ],
            out_specs=pl.BlockSpec((1, W, 1), lambda i: (i, 0, 0))),
        compiler_params=pltpu.CompilerParams(
            dimension_semantics=("parallel",),
            vmem_limit_bytes=32 * 1024 * 1024),
    )(z_wide.astype(jnp.float32),
      blk["conv1_w"], blk["conv1_b"], blk["conv2_w"], blk["conv2_b"],
      blk["fnn_w1"], blk["fnn_b1"], blk["fnn_w2"])


# --------------------- host-side CWT operator (pywt cgau8) ------------------
def build_cwt_matrix(T, totalscal=100, precision=10):
    # cgau8: psi = C * d^8/dx^8 [exp(-x^2) exp(-i x)], unit L2 norm.
    Q = np.array([1.0 + 0.0j])
    for _ in range(8):
        dQ = Q[1:] * np.arange(1, len(Q)) if len(Q) > 1 else np.zeros(0, complex)
        newQ = np.zeros(len(Q) + 1, complex)
        newQ[1:] += -2.0 * Q
        newQ[:len(Q)] += -1j * Q
        newQ[:len(dQ)] += dQ
        Q = newQ
    P = np.convolve(Q, np.conj(Q))                  # |Q(x)|^2 coefficients
    norm_sq = 0.0
    for k in range(0, len(P), 2):
        m = k // 2
        dfact = 1.0
        for t in range(1, 2 * m, 2):
            dfact *= t
        norm_sq += P[k].real * dfact / (4.0 ** m) * np.sqrt(np.pi / 2.0)
    C = 1.0 / np.sqrt(norm_sq)

    def psi_fun(x):
        return C * np.polyval(Q[::-1], x) * np.exp(-x ** 2) * np.exp(-1j * x)

    lb, ub = -8.0, 8.0
    x8 = np.linspace(lb, ub, 2 ** 8)
    psi8 = psi_fun(x8)
    domain = x8[-1] - x8[0]
    index = int(np.argmax(np.abs(np.fft.fft(psi8)[1:]))) + 2
    if index > len(psi8) / 2:
        index = len(psi8) - index + 2
    wfc = (index - 1) / domain
    scales = 2 * wfc * totalscal / np.arange(totalscal, 0, -1)

    x = np.linspace(lb, ub, 2 ** precision)
    psi = psi_fun(x)
    step = x[1] - x[0]
    int_psi = np.conj(np.cumsum(psi) * step)

    S = totalscal
    M = np.zeros((S, T, T), complex)
    t_in = np.arange(T)
    for si, scale in enumerate(scales):
        j = np.arange(scale * (x[-1] - x[0]) + 1) / (scale * step)
        j = j.astype(int)
        if j[-1] >= int_psi.size:
            j = j[j < int_psi.size]
        f = int_psi[j][::-1]
        L = len(f)
        lo = int(np.floor((L - 2) / 2.0))
        for t_out in range(T):
            k0 = lo + t_out
            i1 = k0 + 1 - t_in
            i0 = k0 - t_in
            v1 = np.where((i1 >= 0) & (i1 < L), f[np.clip(i1, 0, L - 1)], 0)
            v0 = np.where((i0 >= 0) & (i0 < L), f[np.clip(i0, 0, L - 1)], 0)
            M[si, t_out, :] = -np.sqrt(scale) * (v1 - v0)
    # Wc[ri, s*T + t_out, t_in] = Re/Im(M[s, t_out, t_in])
    Wc = np.stack([M.real, M.imag], axis=0).reshape(2, S * T, T).astype(np.float32)
    return jnp.asarray(Wc)


# ----------------- combined (k=1 + k=3)/2 inception as banded matmuls --------
def build_banded_inception(w1, b1, w3, b3, T):
    """Return (Wband [3, T*Cin, T*Cout], bias_row [1, T*Cout]) for the wide layout
    x[s, t*Cin+ci]; y[s] = sum_dh shift_dh(x)[s] @ Wband[dh] + bias_row."""
    w1 = np.asarray(w1)
    w3 = np.asarray(w3)
    bcomb = 0.5 * (np.asarray(b1) + np.asarray(b3))
    Cout, Cin = w3.shape[0], w3.shape[1]
    Wb = np.zeros((3, T * Cin, T * Cout), np.float32)
    for dh in range(3):
        for dw in range(3):
            blk = 0.5 * w3[:, :, dh, dw].T            # [Cin, Cout]
            for t in range(T):
                tin = t + dw - 1
                if 0 <= tin < T:
                    Wb[dh, tin * Cin:(tin + 1) * Cin,
                       t * Cout:(t + 1) * Cout] += blk
    blk1 = 0.5 * w1[:, :, 0, 0].T
    for t in range(T):
        Wb[1, t * Cin:(t + 1) * Cin, t * Cout:(t + 1) * Cout] += blk1
    brow = np.tile(bcomb, T).reshape(1, T * Cout).astype(np.float32)
    return jnp.asarray(Wb), jnp.asarray(brow)


# ------------------------------- XLA glue ------------------------------------
def positional_embedding(T, d_model):
    pos = np.arange(T, dtype=np.float64)[:, None]
    div = np.exp(np.arange(0, d_model, 2, dtype=np.float64)
                 * -(np.log(10000.0) / d_model))
    pe = np.zeros((T, d_model), np.float32)
    pe[:, 0::2] = np.sin(pos * div)
    pe[:, 1::2] = np.cos(pos * div)
    return jnp.asarray(pe)


def moving_avg(x, k):
    pad = (k - 1) // 2
    front = jnp.repeat(x[:, :1, :], pad, axis=1)
    end = jnp.repeat(x[:, -1:, :], pad, axis=1)
    xp = jnp.concatenate([front, x, end], axis=1)
    c = jnp.cumsum(xp, axis=1)
    c = jnp.concatenate([jnp.zeros_like(c[:, :1]), c], axis=1)
    return (c[:, k:, :] - c[:, :-k, :]) / k


def series_decomp_multi(x):
    mas = [moving_avg(x, k) for k in (13, 17)]
    mean = sum(mas) / len(mas)
    sea = sum(x - m for m in mas) / len(mas)
    return sea, mean


def layernorm(x, g, b):
    mu = jnp.mean(x, axis=-1, keepdims=True)
    var = jnp.mean((x - mu) ** 2, axis=-1, keepdims=True)
    return (x - mu) * jax.lax.rsqrt(var + 1e-5) * g + b


def data_embedding(params, x, x_mark):
    B, T, _ = x.shape
    # TokenEmbedding: Conv1d(k=3, circular padding, bias=False)
    xm1 = jnp.roll(x, 1, axis=1)
    xp1 = jnp.roll(x, -1, axis=1)
    feat = jnp.concatenate([xm1, x, xp1], axis=-1)
    ve = jnp.einsum("btf,fd->btd", feat, params["tok_wf"])
    te = jnp.einsum("btf,fd->btd", x_mark, params["temp_w"])
    return ve + te + params["pos_pe"][None, :T]          # dropout: identity


def times_block(params, blk, x_embed):
    B, T, D = x_embed.shape
    S = CFG.totalscal
    # (A) CWT projection -> [2, B, S*T, D]; free contiguous reshape to wide layout
    z = cwt_project(params["W_cwt"], x_embed)
    z_wide = z.reshape(2 * B, S, T * D)
    # (B) fused inception-conv x2 + GELU + tanh + FFN (r/i branches batched)
    o = conv_ffn(z_wide, blk)                            # [2B, T*D, 1]
    o = o.reshape(2, B, T, D) + blk["fnn_b2"]
    res_r, res_i = o[0], o[1]                            # [B, T, D] each
    # merge Conv2d(d_model, d_model, kernel=(2,1)) as two tiny matmuls (XLA)
    out = (jnp.einsum("btd,dc->btc", res_r, blk["merge_wr"])
           + jnp.einsum("btd,dc->btc", res_i, blk["merge_wi"])
           + blk["merge_b"])
    out = out[:, :CFG.seq_len + CFG.pred_len, :]
    return out + x_embed


def seasonal_prediction(params, x):
    for blk in params["blocks"]:
        sea, _trend = series_decomp_multi(x)
        x = layernorm(times_block(params, blk, sea),
                      params["ln_g"], params["ln_b"])
    return jnp.einsum("btd,dc->btc", x, params["proj_w"]) + params["proj_b"]


def model_forward(params, x_enc, x_mark_enc, x_dec, x_mark_dec):
    del x_mark_enc, x_dec                                # unused by 'regre' forecast
    B = x_enc.shape[0]
    means = jnp.mean(x_enc, axis=1, keepdims=True)
    x = x_enc - means
    stdev = jnp.sqrt(jnp.var(x, axis=1, keepdims=True) + 1e-5)   # unbiased=False
    x = x / stdev
    sea, trend = series_decomp_multi(x)
    tr = jnp.einsum("bct,tp->bcp", jnp.transpose(trend, (0, 2, 1)),
                    params["reg_w"]) + params["reg_b"]
    trend_out = jnp.transpose(tr, (0, 2, 1))             # [B, pred_len, C]
    zeros = jnp.zeros((B, CFG.pred_len, CFG.enc_in), jnp.float32)
    seasonal = jnp.concatenate([sea[:, -CFG.seq_len:, :], zeros], axis=1)
    emb = data_embedding(params, seasonal, x_mark_dec)
    seasonal_out = seasonal_prediction(params, emb)
    y_pred = seasonal_out[:, -CFG.pred_len:, :] + trend_out[:, -CFG.pred_len:, :]
    y_pred = y_pred * stdev[:, 0:1, :] + means[:, 0:1, :]
    return y_pred


# ----------------------------- parameters -----------------------------------
def init_params(key):
    assert CFG.num_kernels == 2, "banded builder assumes kernels k=1 and k=3"
    T = CFG.seq_len + CFG.pred_len
    d_model, d_ff, enc_in, c_out = CFG.d_model, CFG.d_ff, CFG.enc_in, CFG.c_out
    keys = iter(jax.random.split(key, 64))

    def normal(shape, std):
        return std * jax.random.normal(next(keys), shape, jnp.float32)

    def xavier(shape):
        limit = float(np.sqrt(6.0 / (shape[0] + shape[1])))
        return jax.random.uniform(next(keys), shape, jnp.float32, -limit, limit)

    def conv_w(cout, cin, k):
        return normal((cout, cin, k, k), float(np.sqrt(2.0 / (cin * k * k))))

    tok_w = normal((d_model, enc_in, 3), float(np.sqrt(2.0 / (enc_in * 3))))
    p = {
        "tok_wf": jnp.transpose(tok_w, (2, 1, 0)).reshape(3 * enc_in, d_model),
        "temp_w": xavier((CFG.mark_dim, d_model)),
        "pos_pe": positional_embedding(T, d_model),
        "reg_w": jnp.ones((CFG.seq_len, CFG.pred_len), jnp.float32) / CFG.pred_len,
        "reg_b": jnp.zeros((CFG.pred_len,), jnp.float32),
        "ln_g": jnp.ones((d_model,), jnp.float32),
        "ln_b": jnp.zeros((d_model,), jnp.float32),
        "proj_w": xavier((d_model, c_out)),
        "proj_b": jnp.zeros((c_out,), jnp.float32),
        "W_cwt": build_cwt_matrix(T, CFG.totalscal),
    }
    blocks = []
    for _ in range(CFG.e_layers):
        inc1_w = [conv_w(d_ff, d_model, 2 * i + 1) for i in range(CFG.num_kernels)]
        inc1_b = [jnp.zeros((d_ff,), jnp.float32) for _ in range(CFG.num_kernels)]
        inc2_w = [conv_w(d_model, d_ff, 2 * i + 1) for i in range(CFG.num_kernels)]
        inc2_b = [jnp.zeros((d_model,), jnp.float32) for _ in range(CFG.num_kernels)]
        c1w, c1b = build_banded_inception(inc1_w[0], inc1_b[0], inc1_w[1], inc1_b[1], T)
        c2w, c2b = build_banded_inception(inc2_w[0], inc2_b[0], inc2_w[1], inc2_b[1], T)
        merge_w = normal((d_model, d_model, 2, 1),
                         float(np.sqrt(1.0 / (d_model * 2))))
        blk = {
            "conv1_w": c1w, "conv1_b": c1b,
            "conv2_w": c2w, "conv2_b": c2b,
            "fnn_w1": xavier((CFG.totalscal, 2048)),
            "fnn_b1": jnp.zeros((1, 2048), jnp.float32),
            "fnn_w2": xavier((2048, 1)).reshape(1, 2048),
            "fnn_b2": jnp.zeros((), jnp.float32),
            "merge_wr": jnp.transpose(merge_w[:, :, 0, 0]),   # [c_in, c_out]
            "merge_wi": jnp.transpose(merge_w[:, :, 1, 0]),
            "merge_b": jnp.zeros((d_model,), jnp.float32),
        }
        blocks.append(blk)
    p["blocks"] = blocks
    return p


# --------------------------------- main --------------------------------------
if __name__ == "__main__":
    B = 2
    key = jax.random.PRNGKey(0)
    k1, k2, k3, k4, kp = jax.random.split(key, 5)
    x_enc = jax.random.normal(k1, (B, CFG.seq_len, CFG.enc_in), jnp.float32)
    x_mark_enc = jax.random.normal(k2, (B, CFG.seq_len, CFG.mark_dim), jnp.float32)
    x_dec = jax.random.normal(k3, (B, CFG.seq_len + CFG.pred_len, CFG.enc_in),
                              jnp.float32)
    x_mark_dec = jax.random.normal(k4, (B, CFG.seq_len + CFG.pred_len, CFG.mark_dim),
                                   jnp.float32)

    params = init_params(kp)
    fwd = jax.jit(model_forward)
    y_pred = jax.block_until_ready(fwd(params, x_enc, x_mark_enc, x_dec, x_mark_dec))
    assert y_pred.shape == (B, CFG.pred_len, CFG.c_out)
    assert bool(jnp.all(jnp.isfinite(y_pred)))
    print("KERNEL_OK")
</pallas_src>

<mosaic_0001>
module attributes {stable_mosaic.version = 11 : i64} {
  func.func @_cwt_kernel(%arg0: i32, %arg1: i32, %arg2: memref<1x2400x24xf32, #tpu.memory_space<vmem>>, %arg3: memref<1x24x16xf32, #tpu.memory_space<vmem>>, %arg4: memref<1x1x2400x16xf32, #tpu.memory_space<vmem>>) attributes {dimension_semantics = [#tpu.dimension_semantics<parallel>, #tpu.dimension_semantics<parallel>], iteration_bounds = array<i64: 2, 2>, scalar_prefetch = 0 : i64, scratch_operands = 0 : i64, tpu.core_type = #tpu.core_type<tc>, window_params = [{transform_indices = @transform_0, window_bounds = array<i64: 1, 2400, 24>}, {transform_indices = @transform_1, window_bounds = array<i64: 1, 24, 16>}, {transform_indices = @transform_2, window_bounds = array<i64: 1, 1, 2400, 16>}]} {
    %c0 = arith.constant 0 : index
    %c0_0 = arith.constant 0 : index
    %c0_1 = arith.constant 0 : index
    %0 = vector.load %arg2[%c0, %c0_0, %c0_1] : memref<1x2400x24xf32, #tpu.memory_space<vmem>>, vector<1x2400x24xf32>
    %1 = vector.shape_cast %0 : vector<1x2400x24xf32> to vector<2400x24xf32>
    %c0_2 = arith.constant 0 : index
    %c0_3 = arith.constant 0 : index
    %c0_4 = arith.constant 0 : index
    %2 = vector.load %arg3[%c0_2, %c0_3, %c0_4] : memref<1x24x16xf32, #tpu.memory_space<vmem>>, vector<1x24x16xf32>
    %3 = vector.shape_cast %2 : vector<1x24x16xf32> to vector<24x16xf32>
    %cst = arith.constant dense<0.000000e+00> : vector<2400x16xf32>
    %4 = tpu.matmul %1, %3, %cst {dimension_numbers = #tpu.dot_dimension_numbers<[1], [0], [0], [1], [0, 0, 1, 1], [], []>} : vector<2400x24xf32>, vector<24x16xf32>, vector<2400x16xf32> -> vector<2400x16xf32>
    %c0_5 = arith.constant 0 : index
    %c0_6 = arith.constant 0 : index
    %c0_7 = arith.constant 0 : index
    %c0_8 = arith.constant 0 : index
    %5 = vector.load %arg4[%c0_5, %c0_6, %c0_7, %c0_8] : memref<1x1x2400x16xf32, #tpu.memory_space<vmem>>, vector<1x1x2400x16xf32>
    %6 = vector.shape_cast %5 : vector<1x1x2400x16xf32> to vector<2400x16xf32>
    %7 = vector.shape_cast %4 : vector<2400x16xf32> to vector<1x1x2400x16xf32>
    tpu.vector_store %arg4[%c0_5, %c0_6, %c0_7, %c0_8], %7 {strides = array<i32>} : memref<1x1x2400x16xf32, #tpu.memory_space<vmem>>, vector<1x1x2400x16xf32>,
    return
  }
  func.func @transform_0(%arg0: i32, %arg1: i32) -> (i32, i32, i32) {
    %c0_i32 = arith.constant 0 : i32
    %c0_i32_0 = arith.constant 0 : i32
    %c0_i32_1 = arith.constant 0 : i32
    return %arg0, %c0_i32, %c0_i32_0 : i32, i32, i32
  }
  func.func @transform_1(%arg0: i32, %arg1: i32) -> (i32, i32, i32) {
    %c0_i32 = arith.constant 0 : i32
    %c0_i32_0 = arith.constant 0 : i32
    %c0_i32_1 = arith.constant 0 : i32
    return %arg1, %c0_i32, %c0_i32_0 : i32, i32, i32
  }
  func.func @transform_2(%arg0: i32, %arg1: i32) -> (i32, i32, i32, i32) {
    %c0_i32 = arith.constant 0 : i32
    %c0_i32_0 = arith.constant 0 : i32
    %c0_i32_1 = arith.constant 0 : i32
    return %arg0, %arg1, %c0_i32, %c0_i32_0 : i32, i32, i32, i32
  }
}

module attributes {stable_mosaic.version = 11 : i64} {
  func.func @_conv_ffn_kernel(%arg0: i32, %arg1: memref<1x100x384xf32, #tpu.memory_space<vmem>>, %arg2: memref<3x384x384xf32, #tpu.memory_space<vmem>>, %arg3: memref<1x384xf32, #tpu.memory_space<vmem>>, %arg4: memref<3x384x384xf32, #tpu.memory_space<vmem>>, %arg5: memref<1x384xf32, #tpu.memory_space<vmem>>, %arg6: memref<100x2048xf32, #tpu.memory_space<vmem>>, %arg7: memref<1x2048xf32, #tpu.memory_space<vmem>>, %arg8: memref<1x2048xf32, #tpu.memory_space<vmem>>, %arg9: memref<1x384x1xf32, #tpu.memory_space<vmem>>) attributes {dimension_semantics = [#tpu.dimension_semantics<parallel>], iteration_bounds = array<i64: 4>, scalar_prefetch = 0 : i64, scratch_operands = 0 : i64, tpu.core_type = #tpu.core_type<tc>, window_params = [{transform_indices = @transform_0, window_bounds = array<i64: 1, 100, 384>}, {pipeline_mode = #tpu.pipeline_mode<synchronous>, transform_indices = @transform_1, window_bounds = array<i64: 3, 384, 384>}, {pipeline_mode = #tpu.pipeline_mode<synchronous>, transform_indices = @transform_2, window_bounds = array<i64: 1, 384>}, {pipeline_mode = #tpu.pipeline_mode<synchronous>, transform_indices = @transform_3, window_bounds = array<i64: 3, 384, 384>}, {pipeline_mode = #tpu.pipeline_mode<synchronous>, transform_indices = @transform_4, window_bounds = array<i64: 1, 384>}, {pipeline_mode = #tpu.pipeline_mode<synchronous>, transform_indices = @transform_5, window_bounds = array<i64: 100, 2048>}, {pipeline_mode = #tpu.pipeline_mode<synchronous>, transform_indices = @transform_6, window_bounds = array<i64: 1, 2048>}, {pipeline_mode = #tpu.pipeline_mode<synchronous>, transform_indices = @transform_7, window_bounds = array<i64: 1, 2048>}, {transform_indices = @transform_8, window_bounds = array<i64: 1, 384, 1>}]} {
    %c0 = arith.constant 0 : index
    %c0_0 = arith.constant 0 : index
    %c0_1 = arith.constant 0 : index
    %0 = vector.load %arg1[%c0, %c0_0, %c0_1] : memref<1x100x384xf32, #tpu.memory_space<vmem>>, vector<1x100x384xf32>
    %1 = vector.shape_cast %0 : vector<1x100x384xf32> to vector<100x384xf32>
    %2 = tpu.iota {dimensions = array<i32: 0>} : vector<100x100xi32>
    %3 = tpu.iota {dimensions = array<i32: 1>} : vector<100x100xi32>
    %c1_i32 = arith.constant 1 : i32
    %4 = vector.broadcast %c1_i32 : i32 to vector<100x100xi32>
    %5 = arith.addi %3, %4 : vector<100x100xi32>
    %6 = arith.cmpi eq, %2, %5 : vector<100x100xi32>
    %7 = arith.extui %6 : vector<100x100xi1> to vector<100x100xi32>
    %8 = arith.sitofp %7 : vector<100x100xi32> to vector<100x100xf32>
    %c1_i32_2 = arith.constant 1 : i32
    %9 = vector.broadcast %c1_i32_2 : i32 to vector<100x100xi32>
    %10 = arith.addi %2, %9 : vector<100x100xi32>
    %11 = arith.cmpi eq, %10, %3 : vector<100x100xi32>
    %12 = arith.extui %11 : vector<100x100xi1> to vector<100x100xi32>
    %13 = arith.sitofp %12 : vector<100x100xi32> to vector<100x100xf32>
    %cst = arith.constant dense<0.000000e+00> : vector<100x384xf32>
    %14 = tpu.matmul %8, %1, %cst {dimension_numbers = #tpu.dot_dimension_numbers<[1], [0], [0], [1], [0, 0, 1, 1], [], []>} : vector<100x100xf32>, vector<100x384xf32>, vector<100x384xf32> -> vector<100x384xf32>
    %cst_3 = arith.constant dense<0.000000e+00> : vector<100x384xf32>
    %15 = tpu.matmul %13, %1, %cst_3 {dimension_numbers = #tpu.dot_dimension_numbers<[1], [0], [0], [1], [0, 0, 1, 1], [], []>} : vector<100x100xf32>, vector<100x384xf32>, vector<100x384xf32> -> vector<100x384xf32>
    %c0_4 = arith.constant 0 : index
    %c0_5 = arith.constant 0 : index
    %c0_6 = arith.constant 0 : index
    %16 = vector.load %arg2[%c0_4, %c0_5, %c0_6] : memref<3x384x384xf32, #tpu.memory_space<vmem>>, vector<1x384x384xf32>
    %17 = vector.shape_cast %16 : vector<1x384x384xf32> to vector<384x384xf32>
    %cst_7 = arith.constant dense<0.000000e+00> : vector<100x384xf32>
    %18 = tpu.matmul %14, %17, %cst_7 {dimension_numbers = #tpu.dot_dimension_numbers<[1], [0], [0], [1], [0, 0, 1, 1], [], []>} : vector<100x384xf32>, vector<384x384xf32>, vector<100x384xf32> -> vector<100x384xf32>
    %c1 = arith.constant 1 : index
    %c0_8 = arith.constant 0 : index
    %c0_9 = arith.constant 0 : index
    %19 = vector.load %arg2[%c1, %c0_8, %c0_9] : memref<3x384x384xf32, #tpu.memory_space<vmem>>, vector<1x384x384xf32>
    %20 = vector.shape_cast %19 : vector<1x384x384xf32> to vector<384x384xf32>
    %cst_10 = arith.constant dense<0.000000e+00> : vector<100x384xf32>
    %21 = tpu.matmul %1, %20, %cst_10 {dimension_numbers = #tpu.dot_dimension_numbers<[1], [0], [0], [1], [0, 0, 1, 1], [], []>} : vector<100x384xf32>, vector<384x384xf32>, vector<100x384xf32> -> vector<100x384xf32>
    %22 = arith.addf %18, %21 : vector<100x384xf32>
    %c2 = arith.constant 2 : index
    %c0_11 = arith.constant 0 : index
    %c0_12 = arith.constant 0 : index
    %23 = vector.load %arg2[%c2, %c0_11, %c0_12] : memref<3x384x384xf32, #tpu.memory_space<vmem>>, vector<1x384x384xf32>
    %24 = vector.shape_cast %23 : vector<1x384x384xf32> to vector<384x384xf32>
    %cst_13 = arith.constant dense<0.000000e+00> : vector<100x384xf32>
    %25 = tpu.matmul %15, %24, %cst_13 {dimension_numbers = #tpu.dot_dimension_numbers<[1], [0], [0], [1], [0, 0, 1, 1], [], []>} : vector<100x384xf32>, vector<384x384xf32>, vector<100x384xf32> -> vector<100x384xf32>
    %26 = arith.addf %22, %25 : vector<100x384xf32>
    %c0_14 = arith.constant 0 : index
    %c0_15 = arith.constant 0 : index
    %27 = vector.load %arg3[%c0_14, %c0_15] : memref<1x384xf32, #tpu.memory_space<vmem>>, vector<1x384xf32>
    %28 = vector.broadcast %27 : vector<1x384xf32> to vector<100x384xf32>
    %29 = arith.addf %26, %28 : vector<100x384xf32>
    %cst_16 = arith.constant 5.000000e-01 : f32
    %30 = vector.broadcast %cst_16 : f32 to vector<100x384xf32>
    %31 = arith.mulf %30, %29 : vector<100x384xf32>
    %cst_17 = arith.constant 0.707106769 : f32
    %32 = vector.broadcast %cst_17 : f32 to vector<100x384xf32>
    %33 = arith.mulf %29, %32 : vector<100x384xf32>
    %34 = math.erf %33 : vector<100x384xf32>
    %cst_18 = arith.constant 1.000000e+00 : f32
    %35 = vector.broadcast %cst_18 : f32 to vector<100x384xf32>
    %36 = arith.addf %35, %34 : vector<100x384xf32>
    %37 = arith.mulf %31, %36 : vector<100x384xf32>
    %cst_19 = arith.constant dense<0.000000e+00> : vector<100x384xf32>
    %38 = tpu.matmul %8, %37, %cst_19 {dimension_numbers = #tpu.dot_dimension_numbers<[1], [0], [0], [1], [0, 0, 1, 1], [], []>} : vector<100x100xf32>, vector<100x384xf32>, vector<100x384xf32> -> vector<100x384xf32>
    %cst_20 = arith.constant dense<0.000000e+00> : vector<100x384xf32>
    %39 = tpu.matmul %13, %37, %cst_20 {dimension_numbers = #tpu.dot_dimension_numbers<[1], [0], [0], [1], [0, 0, 1, 1], [], []>} : vector<100x100xf32>, vector<100x384xf32>, vector<100x384xf32> -> vector<100x384xf32>
    %c0_21 = arith.constant 0 : index
    %c0_22 = arith.constant 0 : index
    %c0_23 = arith.constant 0 : index
    %40 = vector.load %arg4[%c0_21, %c0_22, %c0_23] : memref<3x384x384xf32, #tpu.memory_space<vmem>>, vector<1x384x384xf32>
    %41 = vector.shape_cast %40 : vector<1x384x384xf32> to vector<384x384xf32>
    %cst_24 = arith.constant dense<0.000000e+00> : vector<100x384xf32>
    %42 = tpu.matmul %38, %41, %cst_24 {dimension_numbers = #tpu.dot_dimension_numbers<[1], [0], [0], [1], [0, 0, 1, 1], [], []>} : vector<100x384xf32>, vector<384x384xf32>, vector<100x384xf32> -> vector<100x384xf32>
    %c1_25 = arith.constant 1 : index
    %c0_26 = arith.constant 0 : index
    %c0_27 = arith.constant 0 : index
    %43 = vector.load %arg4[%c1_25, %c0_26, %c0_27] : memref<3x384x384xf32, #tpu.memory_space<vmem>>, vector<1x384x384xf32>
    %44 = vector.shape_cast %43 : vector<1x384x384xf32> to vector<384x384xf32>
    %cst_28 = arith.constant dense<0.000000e+00> : vector<100x384xf32>
    %45 = tpu.matmul %37, %44, %cst_28 {dimension_numbers = #tpu.dot_dimension_numbers<[1], [0], [0], [1], [0, 0, 1, 1], [], []>} : vector<100x384xf32>, vector<384x384xf32>, vector<100x384xf32> -> vector<100x384xf32>
    %46 = arith.addf %42, %45 : vector<100x384xf32>
    %c2_29 = arith.constant 2 : index
    %c0_30 = arith.constant 0 : index
    %c0_31 = arith.constant 0 : index
    %47 = vector.load %arg4[%c2_29, %c0_30, %c0_31] : memref<3x384x384xf32, #tpu.memory_space<vmem>>, vector<1x384x384xf32>
    %48 = vector.shape_cast %47 : vector<1x384x384xf32> to vector<384x384xf32>
    %cst_32 = arith.constant dense<0.000000e+00> : vector<100x384xf32>
    %49 = tpu.matmul %39, %48, %cst_32 {dimension_numbers = #tpu.dot_dimension_numbers<[1], [0], [0], [1], [0, 0, 1, 1], [], []>} : vector<100x384xf32>, vector<384x384xf32>, vector<100x384xf32> -> vector<100x384xf32>
    %50 = arith.addf %46, %49 : vector<100x384xf32>
    %c0_33 = arith.constant 0 : index
    %c0_34 = arith.constant 0 : index
    %51 = vector.load %arg5[%c0_33, %c0_34] : memref<1x384xf32, #tpu.memory_space<vmem>>, vector<1x384xf32>
    %52 = vector.broadcast %51 : vector<1x384xf32> to vector<100x384xf32>
    %53 = arith.addf %50, %52 : vector<100x384xf32>
    %54 = math.tanh %53 : vector<100x384xf32>
    %55 = tpu.transpose %54, [1, 0] : vector<100x384xf32> -> vector<384x100xf32>
    %cst_35 = arith.constant 0.000000e+00 : f32
    %56 = vector.broadcast %cst_35 : f32 to vector<384x1xf32>
    %c0_i32 = arith.constant 0 : i32
    %c4_i32 = arith.constant 4 : i32
    %57 = arith.addi %c0_i32, %c4_i32 : i32
    %c1_i32_36 = arith.constant 1 : i32
    %58 = scf.for %arg10 = %c0_i32 to %57 step %c1_i32_36 iter_args(%arg11 = %56) -> (vector<384x1xf32>)  : i32 {
      %c512_i32 = arith.constant 512 : i32
      %62 = arith.muli %arg10, %c512_i32 : i32
      %63 = tpu.assume_multiple %62, 512 : i32
      %c0_41 = arith.constant 0 : index
      %64 = arith.index_cast %63 : i32 to index
      %65 = vector.load %arg6[%c0_41, %64] : memref<100x2048xf32, #tpu.memory_space<vmem>>, vector<100x512xf32>
      %cst_42 = arith.constant dense<0.000000e+00> : vector<384x512xf32>
      %66 = tpu.matmul %55, %65, %cst_42 {dimension_numbers = #tpu.dot_dimension_numbers<[1], [0], [0], [1], [0, 0, 1, 1], [], []>} : vector<384x100xf32>, vector<100x512xf32>, vector<384x512xf32> -> vector<384x512xf32>
      %c0_43 = arith.constant 0 : index
      %67 = arith.index_cast %63 : i32 to index
      %68 = vector.load %arg7[%c0_43, %67] : memref<1x2048xf32, #tpu.memory_space<vmem>>, vector<1x512xf32>
      %69 = vector.broadcast %68 : vector<1x512xf32> to vector<384x512xf32>
      %70 = arith.addf %66, %69 : vector<384x512xf32>
      %cst_44 = arith.constant 0.000000e+00 : f32
      %71 = vector.broadcast %cst_44 : f32 to vector<384x512xf32>
      %72 = arith.maximumf %70, %71 : vector<384x512xf32>
      %c0_45 = arith.constant 0 : index
      %73 = arith.index_cast %63 : i32 to index
      %74 = vector.load %arg8[%c0_45, %73] : memref<1x2048xf32, #tpu.memory_space<vmem>>, vector<1x512xf32>
      %75 = vector.broadcast %74 : vector<1x512xf32> to vector<384x512xf32>
      %76 = arith.mulf %72, %75 : vector<384x512xf32>
      %cst_46 = arith.constant dense<0.000000e+00> : vector<384xf32>
      %77 = vector.multi_reduction <add>, %76, %cst_46 [1] : vector<384x512xf32> to vector<384xf32>
      %78 = vector.shape_cast %77 : vector<384xf32> to vector<384x1xf32>
      %79 = arith.addf %arg11, %78 : vector<384x1xf32>
      scf.yield %79 : vector<384x1xf32>
    }
    %c4_i32_37 = arith.constant 4 : i32
    %c0_38 = arith.constant 0 : index
    %c0_39 = arith.constant 0 : index
    %c0_40 = arith.constant 0 : index
    %59 = vector.load %arg9[%c0_38, %c0_39, %c0_40] : memref<1x384x1xf32, #tpu.memory_space<vmem>>, vector<1x384x1xf32>
    %60 = vector.shape_cast %59 : vector<1x384x1xf32> to vector<384x1xf32>
    %61 = vector.shape_cast %58 : vector<384x1xf32> to vector<1x384x1xf32>
    tpu.vector_store %arg9[%c0_38, %c0_39, %c0_40], %61 {strides = array<i32>} : memref<1x384x1xf32, #tpu.memory_space<vmem>>, vector<1x384x1xf32>,
    return
  }
  func.func @transform_0(%arg0: i32) -> (i32, i32, i32) {
    %c0_i32 = arith.constant 0 : i32
    %c0_i32_0 = arith.constant 0 : i32
    %c0_i32_1 = arith.constant 0 : i32
    return %arg0, %c0_i32, %c0_i32_0 : i32, i32, i32
  }
  func.func @transform_1(%arg0: i32) -> (i32, i32, i32) {
    %c0_i32 = arith.constant 0 : i32
    %c0_i32_0 = arith.constant 0 : i32
    %c0_i32_1 = arith.constant 0 : i32
    %c0_i32_2 = arith.constant 0 : i32
    return %c0_i32, %c0_i32_0, %c0_i32_1 : i32, i32, i32
  }
  func.func @transform_2(%arg0: i32) -> (i32, i32) {
    %c0_i32 = arith.constant 0 : i32
    %c0_i32_0 = arith.constant 0 : i32
    %c0_i32_1 = arith.constant 0 : i32
    return %c0_i32, %c0_i32_0 : i32, i32
  }
  func.func @transform_3(%arg0: i32) -> (i32, i32, i32) {
    %c0_i32 = arith.constant 0 : i32
    %c0_i32_0 = arith.constant 0 : i32
    %c0_i32_1 = arith.constant 0 : i32
    %c0_i32_2 = arith.constant 0 : i32
    return %c0_i32, %c0_i32_0, %c0_i32_1 : i32, i32, i32
  }
  func.func @transform_4(%arg0: i32) -> (i32, i32) {
    %c0_i32 = arith.constant 0 : i32
    %c0_i32_0 = arith.constant 0 : i32
    %c0_i32_1 = arith.constant 0 : i32
    return %c0_i32, %c0_i32_0 : i32, i32
  }
  func.func @transform_5(%arg0: i32) -> (i32, i32) {
    %c0_i32 = arith.constant 0 : i32
    %c0_i32_0 = arith.constant 0 : i32
    %c0_i32_1 = arith.constant 0 : i32
    return %c0_i32, %c0_i32_0 : i32, i32
  }
  func.func @transform_6(%arg0: i32) -> (i32, i32) {
    %c0_i32 = arith.constant 0 : i32
    %c0_i32_0 = arith.constant 0 : i32
    %c0_i32_1 = arith.constant 0 : i32
    return %c0_i32, %c0_i32_0 : i32, i32
  }
  func.func @transform_7(%arg0: i32) -> (i32, i32) {
    %c0_i32 = arith.constant 0 : i32
    %c0_i32_0 = arith.constant 0 : i32
    %c0_i32_1 = arith.constant 0 : i32
    return %c0_i32, %c0_i32_0 : i32, i32
  }
  func.func @transform_8(%arg0: i32) -> (i32, i32, i32) {
    %c0_i32 = arith.constant 0 : i32
    %c0_i32_0 = arith.constant 0 : i32
    %c0_i32_1 = arith.constant 0 : i32
    return %arg0, %c0_i32, %c0_i32_0 : i32, i32, i32
  }
}

</mosaic_0001>

<llo_original>
// kernel: model_forward.2
$region0: #{model_forward.2}
  #allocation0 [shape = 'u32[]', space=smem, size = 0x4, offset = 0x4, fixed_abs, tag = 'smem constant byte address 0x4 - core index']
  #allocation1 [shape = 'u32[144,128]{1,0:T(1,128)}', space=vmem, size = 0x12000, scoped, tag = 'internal scratch']
  %s0 = inlined_call_operand.vmem [shape: f32[2,2400,24], index: 0, kind: input, shape index: {}]
  %s1 = inlined_call_operand.vmem [shape: f32[2,24,16], index: 1, kind: input, shape index: {}]
  %s2 = inlined_call_operand.vmem [shape: f32[2,2,2400,16], index: 2, kind: output, shape index: {}]
  %s3 = sld [smem:[#allocation0]]
  $region41: #{model_forward.2} parent=0
    _
  %s5 = ssub.s32 1, %s3
  %s6 = scalar_select 0, %s5, %s3
  loop: start=0, step=1, limit=6
  $region2: #{model_forward.2} parent=0 // loop_pre_header
    _
  $region3: #{model_forward.2} parent=0 // loop_header
    %s8 = sphi 0, %s12
    %p9 = scmp.ge.s32.totalorder %s8, 6
    %s15 = sphi 0, %s27
    %s16 = sphi 0, %s23
    %s17 = sphi 0, %s15
    %s18 = sphi 0, %s16
    %s19 = sphi 0, %s17
    %s20 = sphi 0, %s18
    %s30 = sphi 0, %s32
    %s33 = sphi 0, %s30
    %s34 = sphi 0, %s33
    %s50 = sphi 0, %s34
    %s56 = sphi 0, %s58
    %s59 = sphi 0, %s56
    %s60 = sphi 0, %s59
    %s76 = sphi 0, %s60
    %s84 = sphi 0, %s86
    %s87 = sphi 0, %s84
    %s88 = sphi 0, %s87
    %s104 = sphi 0, %s88
  $region4: #{model_forward.2} parent=0 // loop_header_branch
    %11 = sbr.rel (%p9) target = $region8
  $region5: #{model_forward.2} parent=0 // loop_body
    %s13 = ssub.s32 %s8, 1
    %s14 = ssub.s32 %s8, 2
    %s21 = sadd.s32 1, %s16
    %p22 = scmp.ge.s32.totalorder %s21, 2
    %s23 = scalar_select %p22, 0, %s21
    %s24 = sadd.s32 1, %s15
    %s25 = scalar_select %p22, %s24, %s15
    %p26 = scmp.ge.s32.totalorder %s25, 2
    %s27 = scalar_select %p26, 0, %s25
    %s28 = ssub.s32 %s15, %s27
    %p29 = scmp.eq.s32.totalorder %s28, 0
    %s31 = sadd.s32 %s30, 1
    %s32 = scalar_select %p29, %s30, %s31
    %p35 = pneg %p29
    %p36 = scmp.eq.s32.totalorder %s8, 3
    %p37 = por %p35, %p36
    %p38 = scmp.ne.s32.totalorder %s30, %s33
    %p39 = scmp.eq.s32.totalorder %s8, 0
    %p40 = por %p38, %p39
    %p41 = scmp.ne.s32.totalorder %s30, %s33
    %p42 = scmp.eq.s32.totalorder %s13, 3
    %p43 = por %p41, %p42
    %p44 = scmp.ne.s32.totalorder %s33, %s34
    %p45 = scmp.eq.s32.totalorder %s13, 0
    %p46 = por %p44, %p45
    %p47 = scmp.ne.s32.totalorder %s33, %s34
    %p48 = scmp.eq.s32.totalorder %s14, 3
    %p49 = por %p47, %p48
    %p51 = scmp.ne.s32.totalorder %s34, %s50
    %p52 = scmp.eq.s32.totalorder %s14, 0
    %p53 = por %p51, %p52
    %s54 = ssub.s32 %s16, %s23
    %p55 = scmp.eq.s32.totalorder %s54, 0
    %s57 = sadd.s32 %s56, 1
    %s58 = scalar_select %p55, %s56, %s57
    %p61 = pneg %p55
    %p62 = scmp.eq.s32.totalorder %s8, 3
    %p63 = por %p61, %p62
    %p64 = scmp.ne.s32.totalorder %s56, %s59
    %p65 = scmp.eq.s32.totalorder %s8, 0
    %p66 = por %p64, %p65
    %p67 = scmp.ne.s32.totalorder %s56, %s59
    %p68 = scmp.eq.s32.totalorder %s13, 3
    %p69 = por %p67, %p68
    %p70 = scmp.ne.s32.totalorder %s59, %s60
    %p71 = scmp.eq.s32.totalorder %s13, 0
    %p72 = por %p70, %p71
    %p73 = scmp.ne.s32.totalorder %s59, %s60
    %p74 = scmp.eq.s32.totalorder %s14, 3
    %p75 = por %p73, %p74
    %p77 = scmp.ne.s32.totalorder %s60, %s76
    %p78 = scmp.eq.s32.totalorder %s14, 0
    %p79 = por %p77, %p78
    %s80 = ssub.s32 %s15, %s27
    %s81 = ssub.s32 %s16, %s23
    %s82 = sor.u32 %s80, %s81
    %p83 = scmp.eq.s32.totalorder %s82, 0
    %s85 = sadd.s32 %s84, 1
    %s86 = scalar_select %p83, %s84, %s85
    %p89 = pneg %p83
    %p90 = scmp.eq.s32.totalorder %s8, 3
    %p91 = por %p89, %p90
    %p92 = scmp.ne.s32.totalorder %s84, %s87
    %p93 = scmp.eq.s32.totalorder %s8, 0
    %p94 = por %p92, %p93
    %p95 = scmp.ne.s32.totalorder %s84, %s87
    %p96 = scmp.eq.s32.totalorder %s13, 3
    %p97 = por %p95, %p96
    %p98 = scmp.ne.s32.totalorder %s87, %s88
    %p99 = scmp.eq.s32.totalorder %s13, 0
    %p100 = por %p98, %p99
    %p101 = scmp.ne.s32.totalorder %s87, %s88
    %p102 = scmp.eq.s32.totalorder %s14, 3
    %p103 = por %p101, %p102
    %p105 = scmp.ne.s32.totalorder %s88, %s104
    %p106 = scmp.eq.s32.totalorder %s14, 0
    %p107 = por %p105, %p106
    %p108 = scmp.le.s32.totalorder 1, %s8
    %p109 = scmp.lt.s32.totalorder %s8, 5
    %p110 = pnand %p108, %p109
    %p111 = pneg %p110
    // Predicated region
    $region9: #{model_forward.2} parent=5 // pred_check
      _
    $region10: #{model_forward.2} parent=5 // pred_check_branch
      %113 = sbr.rel (%p110) target = $region12
    $region11: #{model_forward.2} parent=5 // pred_region
      %s114 = ssub.s32 %s8, 1
    $region12: #{model_forward.2} parent=5 // pred_fallthru
      _
    %p115 = scmp.lt.s32.totalorder %s8, 4
    // Predicated region
    $region13: #{model_forward.2} parent=5 // pred_check
      %p116 = pneg %p115
    $region14: #{model_forward.2} parent=5 // pred_check_branch
      %118 = sbr.rel (%p116) target = $region16
    $region15: #{model_forward.2} parent=5 // pred_region
      // Predicated region
      $region17: #{model_forward.2} parent=15 // pred_check
        %p119 = pneg %p40
      $region18: #{model_forward.2} parent=15 // pred_check_branch
        %121 = sbr.rel (%p119) target = $region20
      $region19: #{model_forward.2} parent=15 // pred_region
        %p122 = scmp.lt.s32.totalorder %s15, 1
        %s123 = scalar_select %p122, %s15, 1
        %s124 = smul.addr %s123, 300
        %s125 = smul.addr %s124, 8
        %s126 = scalar_lea.vmem %s0, %s125
      $region20: #{model_forward.2} parent=15 // pred_fallthru
        _
      // Predicated region
      $region21: #{model_forward.2} parent=15 // pred_check
        %p127 = pneg %p66
      $region22: #{model_forward.2} parent=15 // pred_check_branch
        %129 = sbr.rel (%p127) target = $region24
      $region23: #{model_forward.2} parent=15 // pred_region
        %p130 = scmp.lt.s32.totalorder %s16, 1
        %s131 = scalar_select %p130, %s16, 1
        %s132 = smul.addr %s131, 3
        %s133 = smul.addr %s132, 8
        %s134 = scalar_lea.vmem %s1, %s133
      $region24: #{model_forward.2} parent=15 // pred_fallthru
        _
    $region16: #{model_forward.2} parent=5 // pred_fallthru
      _
    %p135 = scmp.le.s32.totalorder 1, %s8
    %p136 = scmp.lt.s32.totalorder %s8, 5
    %p137 = pnand %p135, %p136
    %p138 = pneg %p137
    // Predicated region
    $region25: #{model_forward.2} parent=5 // pred_check
      _
    $region26: #{model_forward.2} parent=5 // pred_check_branch
      %140 = sbr.rel (%p137) target = $region28
    $region27: #{model_forward.2} parent=5 // pred_region
      %s141 = ssub.s32 %s8, 1
      %p142 = scmp.lt.s32.totalorder %s17, 1
      %s143 = scalar_select %p142, %s17, 1
      %s144 = smul.addr %s143, 300
      %s145 = smul.addr %s144, 8
      %s146 = scalar_lea.vmem %s0, %s145
      %p147 = pneg %p46
      %p148 = pneg %p43
      %p149 = scmp.lt.s32.totalorder %s18, 1
      %s150 = scalar_select %p149, %s18, 1
      %s151 = smul.addr %s150, 3
      %s152 = smul.addr %s151, 8
      %s153 = scalar_lea.vmem %s1, %s152
      %p154 = pneg %p72
      %p155 = pneg %p69
      %p156 = pneg %p100
      %p157 = pneg %p97
      %p158 = scmp.lt.s32.totalorder %s17, 1
      %s159 = scalar_select %p158, %s17, 1
      %p160 = scmp.lt.s32.totalorder %s18, 1
      %s161 = scalar_select %p160, %s18, 1
      %s162 = smul.addr %s161, 300
      %s163 = smul.addr %s159, 600
      %s164 = sadd.s32 %s162, %s163
      %s165 = smul.addr %s164, 8
      %s166 = scalar_lea.vmem %s2, %s165
      %p167 = scmp.lt.s32.totalorder %s17, 1
      %s168 = scalar_select %p167, %s17, 1
      %s169 = smul.addr %s168, 300
      %s170 = smul.addr %s169, 8
      %s171 = scalar_lea.vmem %s0, %s170
      %p172 = scmp.lt.s32.totalorder %s18, 1
      %s173 = scalar_select %p172, %s18, 1
      %s174 = smul.addr %s173, 3
      %s175 = smul.addr %s174, 8
      %s176 = scalar_lea.vmem %s1, %s175
      %p177 = scmp.lt.s32.totalorder %s17, 1
      %s178 = scalar_select %p177, %s17, 1
      %p179 = scmp.lt.s32.totalorder %s18, 1
      %s180 = scalar_select %p179, %s18, 1
      %s181 = smul.addr %s180, 300
      %s182 = smul.addr %s178, 600
      %s183 = sadd.s32 %s181, %s182
      %s184 = smul.addr %s183, 8
      %s185 = scalar_lea.vmem %s2, %s184
      %v186 = vld [vmem:[%s171] sm:$0xff]
      %v187 = vld [vmem:[%s171 + $0x8] sm:$0xff]
      %v188 = vld [vmem:[%s171 + $0x10] sm:$0xff]
      %v189 = vld [vmem:[%s171 + $0x18] sm:$0xff]
      %v190 = vld [vmem:[%s171 + $0x20] sm:$0xff]
      %v191 = vld [vmem:[%s171 + $0x28] sm:$0xff]
      %v192 = vld [vmem:[%s171 + $0x30] sm:$0xff]
      %v193 = vld [vmem:[%s171 + $0x38] sm:$0xff]
      %v194 = vld [vmem:[%s171 + $0x40] sm:$0xff]
      %v195 = vld [vmem:[%s171 + $0x48] sm:$0xff]
      %v196 = vld [vmem:[%s171 + $0x50] sm:$0xff]
      %v197 = vld [vmem:[%s171 + $0x58] sm:$0xff]
      %v198 = vld [vmem:[%s171 + $0x60] sm:$0xff]
      %v199 = vld [vmem:[%s171 + $0x68] sm:$0xff]
      %v200 = vld [vmem:[%s171 + $0x70] sm:$0xff]
      %v201 = vld [vmem:[%s171 + $0x78] sm:$0xff]
      %v202 = vld [vmem:[%s171 + $0x80] sm:$0xff]
      %v203 = vld [vmem:[%s171 + $0x88] sm:$0xff]
      %v204 = vld [vmem:[%s171 + $0x90] sm:$0xff]
      %v205 = vld [vmem:[%s171 + $0x98] sm:$0xff]
      %v206 = vld [vmem:[%s171 + $0xa0] sm:$0xff]
      %v207 = vld [vmem:[%s171 + $0xa8] sm:$0xff]
      %v208 = vld [vmem:[%s171 + $0xb0] sm:$0xff]
      %v209 = vld [vmem:[%s171 + $0xb8] sm:$0xff]
      %v210 = vld [vmem:[%s171 + $0xc0] sm:$0xff]
      %v211 = vld [vmem:[%s171 + $0xc8] sm:$0xff]
      %v212 = vld [vmem:[%s171 + $0xd0] sm:$0xff]
      %v213 = vld [vmem:[%s171 + $0xd8] sm:$0xff]
      %v214 = vld [vmem:[%s171 + $0xe0] sm:$0xff]
      %v215 = vld [vmem:[%s171 + $0xe8] sm:$0xff]
      %v216 = vld [vmem:[%s171 + $0xf0] sm:$0xff]
      %v217 = vld [vmem:[%s171 + $0xf8] sm:$0xff]
      %v218 = vld [vmem:[%s171 + $0x100] sm:$0xff]
      %v219 = vld [vmem:[%s171 + $0x108] sm:$0xff]
      %v220 = vld [vmem:[%s171 + $0x110] sm:$0xff]
      %v221 = vld [vmem:[%s171 + $0x118] sm:$0xff]
      %v222 = vld [vmem:[%s171 + $0x120] sm:$0xff]
      %v223 = vld [vmem:[%s171 + $0x128] sm:$0xff]
      %v224 = vld [vmem:[%s171 + $0x130] sm:$0xff]
      %v225 = vld [vmem:[%s171 + $0x138] sm:$0xff]
      %v226 = vld [vmem:[%s171 + $0x140] sm:$0xff]
      %v227 = vld [vmem:[%s171 + $0x148] sm:$0xff]
      %v228 = vld [vmem:[%s171 + $0x150] sm:$0xff]
      %v229 = vld [vmem:[%s171 + $0x158] sm:$0xff]
      %v230 = vld [vmem:[%s171 + $0x160] sm:$0xff]
      %v231 = vld [vmem:[%s171 + $0x168] sm:$0xff]
      %v232 = vld [vmem:[%s171 + $0x170] sm:$0xff]
      %v233 = vld [vmem:[%s171 + $0x178] sm:$0xff]
      %v234 = vld [vmem:[%s171 + $0x180] sm:$0xff]
      %v235 = vld [vmem:[%s171 + $0x188] sm:$0xff]
      %v236 = vld [vmem:[%s171 + $0x190] sm:$0xff]
      %v237 = vld [vmem:[%s171 + $0x198] sm:$0xff]
      %v238 = vld [vmem:[%s171 + $0x1a0] sm:$0xff]
      %v239 = vld [vmem:[%s171 + $0x1a8] sm:$0xff]
      %v240 = vld [vmem:[%s171 + $0x1b0] sm:$0xff]
      %v241 = vld [vmem:[%s171 + $0x1b8] sm:$0xff]
      %v242 = vld [vmem:[%s171 + $0x1c0] sm:$0xff]
      %v243 = vld [vmem:[%s171 + $0x1c8] sm:$0xff]
      %v244 = vld [vmem:[%s171 + $0x1d0] sm:$0xff]
      %v245 = vld [vmem:[%s171 + $0x1d8] sm:$0xff]
      %v246 = vld [vmem:[%s171 + $0x1e0] sm:$0xff]
      %v247 = vld [vmem:[%s171 + $0x1e8] sm:$0xff]
      %v248 = vld [vmem:[%s171 + $0x1f0] sm:$0xff]
      %v249 = vld [vmem:[%s171 + $0x1f8] sm:$0xff]
      %v250 = vld [vmem:[%s171 + $0x200] sm:$0xff]
      %v251 = vld [vmem:[%s171 + $0x208] sm:$0xff]
      %v252 = vld [vmem:[%s171 + $0x210] sm:$0xff]
      %v253 = vld [vmem:[%s171 + $0x218] sm:$0xff]
      %v254 = vld [vmem:[%s171 + $0x220] sm:$0xff]
      %v255 = vld [vmem:[%s171 + $0x228] sm:$0xff]
      %v256 = vld [vmem:[%s171 + $0x230] sm:$0xff]
      %v257 = vld [vmem:[%s171 + $0x238] sm:$0xff]
      %v258 = vld [vmem:[%s171 + $0x240] sm:$0xff]
      %v259 = vld [vmem:[%s171 + $0x248] sm:$0xff]
      %v260 = vld [vmem:[%s171 + $0x250] sm:$0xff]
      %v261 = vld [vmem:[%s171 + $0x258] sm:$0xff]
      %v262 = vld [vmem:[%s171 + $0x260] sm:$0xff]
      %v263 = vld [vmem:[%s171 + $0x268] sm:$0xff]
      %v264 = vld [vmem:[%s171 + $0x270] sm:$0xff]
      %v265 = vld [vmem:[%s171 + $0x278] sm:$0xff]
      %v266 = vld [vmem:[%s171 + $0x280] sm:$0xff]
      %v267 = vld [vmem:[%s171 + $0x288] sm:$0xff]
      %v268 = vld [vmem:[%s171 + $0x290] sm:$0xff]
      %v269 = vld [vmem:[%s171 + $0x298] sm:$0xff]
      %v270 = vld [vmem:[%s171 + $0x2a0] sm:$0xff]
      %v271 = vld [vmem:[%s171 + $0x2a8] sm:$0xff]
      %v272 = vld [vmem:[%s171 + $0x2b0] sm:$0xff]
      %v273 = vld [vmem:[%s171 + $0x2b8] sm:$0xff]
      %v274 = vld [vmem:[%s171 + $0x2c0] sm:$0xff]
      %v275 = vld [vmem:[%s171 + $0x2c8] sm:$0xff]
      %v276 = vld [vmem:[%s171 + $0x2d0] sm:$0xff]
      %v277 = vld [vmem:[%s171 + $0x2d8] sm:$0xff]
      %v278 = vld [vmem:[%s171 + $0x2e0] sm:$0xff]
      %v279 = vld [vmem:[%s171 + $0x2e8] sm:$0xff]
      %v280 = vld [vmem:[%s171 + $0x2f0] sm:$0xff]
      %v281 = vld [vmem:[%s171 + $0x2f8] sm:$0xff]
      %v282 = vld [vmem:[%s171 + $0x300] sm:$0xff]
      %v283 = vld [vmem:[%s171 + $0x308] sm:$0xff]
      %v284 = vld [vmem:[%s171 + $0x310] sm:$0xff]
      %v285 = vld [vmem:[%s171 + $0x318] sm:$0xff]
      %v286 = vld [vmem:[%s171 + $0x320] sm:$0xff]
      %v287 = vld [vmem:[%s171 + $0x328] sm:$0xff]
      %v288 = vld [vmem:[%s171 + $0x330] sm:$0xff]
      %v289 = vld [vmem:[%s171 + $0x338] sm:$0xff]
      %v290 = vld [vmem:[%s171 + $0x340] sm:$0xff]
      %v291 = vld [vmem:[%s171 + $0x348] sm:$0xff]
      %v292 = vld [vmem:[%s171 + $0x350] sm:$0xff]
      %v293 = vld [vmem:[%s171 + $0x358] sm:$0xff]
      %v294 = vld [vmem:[%s171 + $0x360] sm:$0xff]
      %v295 = vld [vmem:[%s171 + $0x368] sm:$0xff]
      %v296 = vld [vmem:[%s171 + $0x370] sm:$0xff]
      %v297 = vld [vmem:[%s171 + $0x378] sm:$0xff]
      %v298 = vld [vmem:[%s171 + $0x380] sm:$0xff]
      %v299 = vld [vmem:[%s171 + $0x388] sm:$0xff]
      %v300 = vld [vmem:[%s171 + $0x390] sm:$0xff]
      %v301 = vld [vmem:[%s171 + $0x398] sm:$0xff]
      %v302 = vld [vmem:[%s171 + $0x3a0] sm:$0xff]
      %v303 = vld [vmem:[%s171 + $0x3a8] sm:$0xff]
      %v304 = vld [vmem:[%s171 + $0x3b0] sm:$0xff]
      %v305 = vld [vmem:[%s171 + $0x3b8] sm:$0xff]
      %v306 = vld [vmem:[%s171 + $0x3c0] sm:$0xff]
      %v307 = vld [vmem:[%s171 + $0x3c8] sm:$0xff]
      %v308 = vld [vmem:[%s171 + $0x3d0] sm:$0xff]
      %v309 = vld [vmem:[%s171 + $0x3d8] sm:$0xff]
      %v310 = vld [vmem:[%s171 + $0x3e0] sm:$0xff]
      %v311 = vld [vmem:[%s171 + $0x3e8] sm:$0xff]
      %v312 = vld [vmem:[%s171 + $0x3f0] sm:$0xff]
      %v313 = vld [vmem:[%s171 + $0x3f8] sm:$0xff]
      %v314 = vld [vmem:[%s171 + $0x400] sm:$0xff]
      %v315 = vld [vmem:[%s171 + $0x408] sm:$0xff]
      %v316 = vld [vmem:[%s171 + $0x410] sm:$0xff]
      %v317 = vld [vmem:[%s171 + $0x418] sm:$0xff]
      %v318 = vld [vmem:[%s171 + $0x420] sm:$0xff]
      %v319 = vld [vmem:[%s171 + $0x428] sm:$0xff]
      %v320 = vld [vmem:[%s171 + $0x430] sm:$0xff]
      %v321 = vld [vmem:[%s171 + $0x438] sm:$0xff]
      %v322 = vld [vmem:[%s171 + $0x440] sm:$0xff]
      %v323 = vld [vmem:[%s171 + $0x448] sm:$0xff]
      %v324 = vld [vmem:[%s171 + $0x450] sm:$0xff]
      %v325 = vld [vmem:[%s171 + $0x458] sm:$0xff]
      %v326 = vld [vmem:[%s171 + $0x460] sm:$0xff]
      %v327 = vld [vmem:[%s171 + $0x468] sm:$0xff]
      %v328 = vld [vmem:[%s171 + $0x470] sm:$0xff]
      %v329 = vld [vmem:[%s171 + $0x478] sm:$0xff]
      %v330 = vld [vmem:[%s171 + $0x480] sm:$0xff]
      %v331 = vld [vmem:[%s171 + $0x488] sm:$0xff]
      %v332 = vld [vmem:[%s171 + $0x490] sm:$0xff]
      %v333 = vld [vmem:[%s171 + $0x498] sm:$0xff]
      %v334 = vld [vmem:[%s171 + $0x4a0] sm:$0xff]
      %v335 = vld [vmem:[%s171 + $0x4a8] sm:$0xff]
      %v336 = vld [vmem:[%s171 + $0x4b0] sm:$0xff]
      %v337 = vld [vmem:[%s171 + $0x4b8] sm:$0xff]
      %v338 = vld [vmem:[%s171 + $0x4c0] sm:$0xff]
      %v339 = vld [vmem:[%s171 + $0x4c8] sm:$0xff]
      %v340 = vld [vmem:[%s171 + $0x4d0] sm:$0xff]
      %v341 = vld [vmem:[%s171 + $0x4d8] sm:$0xff]
      %v342 = vld [vmem:[%s171 + $0x4e0] sm:$0xff]
      %v343 = vld [vmem:[%s171 + $0x4e8] sm:$0xff]
      %v344 = vld [vmem:[%s171 + $0x4f0] sm:$0xff]
      %v345 = vld [vmem:[%s171 + $0x4f8] sm:$0xff]
      %v346 = vld [vmem:[%s171 + $0x500] sm:$0xff]
      %v347 = vld [vmem:[%s171 + $0x508] sm:$0xff]
      %v348 = vld [vmem:[%s171 + $0x510] sm:$0xff]
      %v349 = vld [vmem:[%s171 + $0x518] sm:$0xff]
      %v350 = vld [vmem:[%s171 + $0x520] sm:$0xff]
      %v351 = vld [vmem:[%s171 + $0x528] sm:$0xff]
      %v352 = vld [vmem:[%s171 + $0x530] sm:$0xff]
      %v353 = vld [vmem:[%s171 + $0x538] sm:$0xff]
      %v354 = vld [vmem:[%s171 + $0x540] sm:$0xff]
      %v355 = vld [vmem:[%s171 + $0x548] sm:$0xff]
      %v356 = vld [vmem:[%s171 + $0x550] sm:$0xff]
      %v357 = vld [vmem:[%s171 + $0x558] sm:$0xff]
      %v358 = vld [vmem:[%s171 + $0x560] sm:$0xff]
      %v359 = vld [vmem:[%s171 + $0x568] sm:$0xff]
      %v360 = vld [vmem:[%s171 + $0x570] sm:$0xff]
      %v361 = vld [vmem:[%s171 + $0x578] sm:$0xff]
      %v362 = vld [vmem:[%s171 + $0x580] sm:$0xff]
      %v363 = vld [vmem:[%s171 + $0x588] sm:$0xff]
      %v364 = vld [vmem:[%s171 + $0x590] sm:$0xff]
      %v365 = vld [vmem:[%s171 + $0x598] sm:$0xff]
      %v366 = vld [vmem:[%s171 + $0x5a0] sm:$0xff]
      %v367 = vld [vmem:[%s171 + $0x5a8] sm:$0xff]
      %v368 = vld [vmem:[%s171 + $0x5b0] sm:$0xff]
      %v369 = vld [vmem:[%s171 + $0x5b8] sm:$0xff]
      %v370 = vld [vmem:[%s171 + $0x5c0] sm:$0xff]
      %v371 = vld [vmem:[%s171 + $0x5c8] sm:$0xff]
      %v372 = vld [vmem:[%s171 + $0x5d0] sm:$0xff]
      %v373 = vld [vmem:[%s171 + $0x5d8] sm:$0xff]
      %v374 = vld [vmem:[%s171 + $0x5e0] sm:$0xff]
      %v375 = vld [vmem:[%s171 + $0x5e8] sm:$0xff]
      %v376 = vld [vmem:[%s171 + $0x5f0] sm:$0xff]
      %v377 = vld [vmem:[%s171 + $0x5f8] sm:$0xff]
      %v378 = vld [vmem:[%s171 + $0x600] sm:$0xff]
      %v379 = vld [vmem:[%s171 + $0x608] sm:$0xff]
      %v380 = vld [vmem:[%s171 + $0x610] sm:$0xff]
      %v381 = vld [vmem:[%s171 + $0x618] sm:$0xff]
      %v382 = vld [vmem:[%s171 + $0x620] sm:$0xff]
      %v383 = vld [vmem:[%s171 + $0x628] sm:$0xff]
      %v384 = vld [vmem:[%s171 + $0x630] sm:$0xff]
      %v385 = vld [vmem:[%s171 + $0x638] sm:$0xff]
      %v386 = vld [vmem:[%s171 + $0x640] sm:$0xff]
      %v387 = vld [vmem:[%s171 + $0x648] sm:$0xff]
      %v388 = vld [vmem:[%s171 + $0x650] sm:$0xff]
      %v389 = vld [vmem:[%s171 + $0x658] sm:$0xff]
      %v390 = vld [vmem:[%s171 + $0x660] sm:$0xff]
      %v391 = vld [vmem:[%s171 + $0x668] sm:$0xff]
      %v392 = vld [vmem:[%s171 + $0x670] sm:$0xff]
      %v393 = vld [vmem:[%s171 + $0x678] sm:$0xff]
      %v394 = vld [vmem:[%s171 + $0x680] sm:$0xff]
      %v395 = vld [vmem:[%s171 + $0x688] sm:$0xff]
      %v396 = vld [vmem:[%s171 + $0x690] sm:$0xff]
      %v397 = vld [vmem:[%s171 + $0x698] sm:$0xff]
      %v398 = vld [vmem:[%s171 + $0x6a0] sm:$0xff]
      %v399 = vld [vmem:[%s171 + $0x6a8] sm:$0xff]
      %v400 = vld [vmem:[%s171 + $0x6b0] sm:$0xff]
      %v401 = vld [vmem:[%s171 + $0x6b8] sm:$0xff]
      %v402 = vld [vmem:[%s171 + $0x6c0] sm:$0xff]
      %v403 = vld [vmem:[%s171 + $0x6c8] sm:$0xff]
      %v404 = vld [vmem:[%s171 + $0x6d0] sm:$0xff]
      %v405 = vld [vmem:[%s171 + $0x6d8] sm:$0xff]
      %v406 = vld [vmem:[%s171 + $0x6e0] sm:$0xff]
      %v407 = vld [vmem:[%s171 + $0x6e8] sm:$0xff]
      %v408 = vld [vmem:[%s171 + $0x6f0] sm:$0xff]
      %v409 = vld [vmem:[%s171 + $0x6f8] sm:$0xff]
      %v410 = vld [vmem:[%s171 + $0x700] sm:$0xff]
      %v411 = vld [vmem:[%s171 + $0x708] sm:$0xff]
      %v412 = vld [vmem:[%s171 + $0x710] sm:$0xff]
      %v413 = vld [vmem:[%s171 + $0x718] sm:$0xff]
      %v414 = vld [vmem:[%s171 + $0x720] sm:$0xff]
      %v415 = vld [vmem:[%s171 + $0x728] sm:$0xff]
      %v416 = vld [vmem:[%s171 + $0x730] sm:$0xff]
      %v417 = vld [vmem:[%s171 + $0x738] sm:$0xff]
      %v418 = vld [vmem:[%s171 + $0x740] sm:$0xff]
      %v419 = vld [vmem:[%s171 + $0x748] sm:$0xff]
      %v420 = vld [vmem:[%s171 + $0x750] sm:$0xff]
      %v421 = vld [vmem:[%s171 + $0x758] sm:$0xff]
      %v422 = vld [vmem:[%s171 + $0x760] sm:$0xff]
      %v423 = vld [vmem:[%s171 + $0x768] sm:$0xff]
      %v424 = vld [vmem:[%s171 + $0x770] sm:$0xff]
      %v425 = vld [vmem:[%s171 + $0x778] sm:$0xff]
      %v426 = vld [vmem:[%s171 + $0x780] sm:$0xff]
      %v427 = vld [vmem:[%s171 + $0x788] sm:$0xff]
      %v428 = vld [vmem:[%s171 + $0x790] sm:$0xff]
      %v429 = vld [vmem:[%s171 + $0x798] sm:$0xff]
      %v430 = vld [vmem:[%s171 + $0x7a0] sm:$0xff]
      %v431 = vld [vmem:[%s171 + $0x7a8] sm:$0xff]
      %v432 = vld [vmem:[%s171 + $0x7b0] sm:$0xff]
      %v433 = vld [vmem:[%s171 + $0x7b8] sm:$0xff]
      %v434 = vld [vmem:[%s171 + $0x7c0] sm:$0xff]
      %v435 = vld [vmem:[%s171 + $0x7c8] sm:$0xff]
      %v436 = vld [vmem:[%s171 + $0x7d0] sm:$0xff]
      %v437 = vld [vmem:[%s171 + $0x7d8] sm:$0xff]
      %v438 = vld [vmem:[%s171 + $0x7e0] sm:$0xff]
      %v439 = vld [vmem:[%s171 + $0x7e8] sm:$0xff]
      %v440 = vld [vmem:[%s171 + $0x7f0] sm:$0xff]
      %v441 = vld [vmem:[%s171 + $0x7f8] sm:$0xff]
      %v442 = vld [vmem:[%s171 + $0x800] sm:$0xff]
      %v443 = vld [vmem:[%s171 + $0x808] sm:$0xff]
      %v444 = vld [vmem:[%s171 + $0x810] sm:$0xff]
      %v445 = vld [vmem:[%s171 + $0x818] sm:$0xff]
      %v446 = vld [vmem:[%s171 + $0x820] sm:$0xff]
      %v447 = vld [vmem:[%s171 + $0x828] sm:$0xff]
      %v448 = vld [vmem:[%s171 + $0x830] sm:$0xff]
      %v449 = vld [vmem:[%s171 + $0x838] sm:$0xff]
      %v450 = vld [vmem:[%s171 + $0x840] sm:$0xff]
      %v451 = vld [vmem:[%s171 + $0x848] sm:$0xff]
      %v452 = vld [vmem:[%s171 + $0x850] sm:$0xff]
      %v453 = vld [vmem:[%s171 + $0x858] sm:$0xff]
      %v454 = vld [vmem:[%s171 + $0x860] sm:$0xff]
      %v455 = vld [vmem:[%s171 + $0x868] sm:$0xff]
      %v456 = vld [vmem:[%s171 + $0x870] sm:$0xff]
      %v457 = vld [vmem:[%s171 + $0x878] sm:$0xff]
      %v458 = vld [vmem:[%s171 + $0x880] sm:$0xff]
      %v459 = vld [vmem:[%s171 + $0x888] sm:$0xff]
      %v460 = vld [vmem:[%s171 + $0x890] sm:$0xff]
      %v461 = vld [vmem:[%s171 + $0x898] sm:$0xff]
      %v462 = vld [vmem:[%s171 + $0x8a0] sm:$0xff]
      %v463 = vld [vmem:[%s171 + $0x8a8] sm:$0xff]
      %v464 = vld [vmem:[%s171 + $0x8b0] sm:$0xff]
      %v465 = vld [vmem:[%s171 + $0x8b8] sm:$0xff]
      %v466 = vld [vmem:[%s171 + $0x8c0] sm:$0xff]
      %v467 = vld [vmem:[%s171 + $0x8c8] sm:$0xff]
      %v468 = vld [vmem:[%s171 + $0x8d0] sm:$0xff]
      %v469 = vld [vmem:[%s171 + $0x8d8] sm:$0xff]
      %v470 = vld [vmem:[%s171 + $0x8e0] sm:$0xff]
      %v471 = vld [vmem:[%s171 + $0x8e8] sm:$0xff]
      %v472 = vld [vmem:[%s171 + $0x8f0] sm:$0xff]
      %v473 = vld [vmem:[%s171 + $0x8f8] sm:$0xff]
      %v474 = vld [vmem:[%s171 + $0x900] sm:$0xff]
      %v475 = vld [vmem:[%s171 + $0x908] sm:$0xff]
      %v476 = vld [vmem:[%s171 + $0x910] sm:$0xff]
      %v477 = vld [vmem:[%s171 + $0x918] sm:$0xff]
      %v478 = vld [vmem:[%s171 + $0x920] sm:$0xff]
      %v479 = vld [vmem:[%s171 + $0x928] sm:$0xff]
      %v480 = vld [vmem:[%s171 + $0x930] sm:$0xff]
      %v481 = vld [vmem:[%s171 + $0x938] sm:$0xff]
      %v482 = vld [vmem:[%s171 + $0x940] sm:$0xff]
      %v483 = vld [vmem:[%s171 + $0x948] sm:$0xff]
      %v484 = vld [vmem:[%s171 + $0x950] sm:$0xff]
      %v485 = vld [vmem:[%s171 + $0x958] sm:$0xff]
      %v486 = vld [vmem:[%s176] sm:$0xff]
      %v487 = vld [vmem:[%s176 + $0x8] sm:$0xff]
      %v488 = vld [vmem:[%s176 + $0x10] sm:$0xff]
      %vm489 = vcmask 195584
      %v491 = vsel %vm489, %v186, 0
      %v494 = vsel %vm489, %v187, 0
      %v497 = vsel %vm489, %v188, 0
      %v500 = vsel %vm489, %v189, 0
      %v503 = vsel %vm489, %v190, 0
      %v506 = vsel %vm489, %v191, 0
      %v509 = vsel %vm489, %v192, 0
      %v512 = vsel %vm489, %v193, 0
      %v515 = vsel %vm489, %v194, 0
      %v518 = vsel %vm489, %v195, 0
      %v521 = vsel %vm489, %v196, 0
      %v524 = vsel %vm489, %v197, 0
      %v527 = vsel %vm489, %v198, 0
      %v530 = vsel %vm489, %v199, 0
      %v533 = vsel %vm489, %v200, 0
      %v536 = vsel %vm489, %v201, 0
      %v539 = vsel %vm489, %v202, 0
      %v542 = vsel %vm489, %v203, 0
      %v545 = vsel %vm489, %v204, 0
      %v548 = vsel %vm489, %v205, 0
      %v551 = vsel %vm489, %v206, 0
      %v554 = vsel %vm489, %v207, 0
      %v557 = vsel %vm489, %v208, 0
      %v560 = vsel %vm489, %v209, 0
      %v563 = vsel %vm489, %v210, 0
      %v566 = vsel %vm489, %v211, 0
      %v569 = vsel %vm489, %v212, 0
      %v572 = vsel %vm489, %v213, 0
      %v575 = vsel %vm489, %v214, 0
      %v578 = vsel %vm489, %v215, 0
      %v581 = vsel %vm489, %v216, 0
      %v584 = vsel %vm489, %v217, 0
      %v587 = vsel %vm489, %v218, 0
      %v590 = vsel %vm489, %v219, 0
      %v593 = vsel %vm489, %v220, 0
      %v596 = vsel %vm489, %v221, 0
      %v599 = vsel %vm489, %v222, 0
      %v602 = vsel %vm489, %v223, 0
      %v605 = vsel %vm489, %v224, 0
      %v608 = vsel %vm489, %v225, 0
      %v611 = vsel %vm489, %v226, 0
      %v614 = vsel %vm489, %v227, 0
      %v617 = vsel %vm489, %v228, 0
      %v620 = vsel %vm489, %v229, 0
      %v623 = vsel %vm489, %v230, 0
      %v626 = vsel %vm489, %v231, 0
      %v629 = vsel %vm489, %v232, 0
      %v632 = vsel %vm489, %v233, 0
      %v635 = vsel %vm489, %v234, 0
      %v638 = vsel %vm489, %v235, 0
      %v641 = vsel %vm489, %v236, 0
      %v644 = vsel %vm489, %v237, 0
      %v647 = vsel %vm489, %v238, 0
      %v650 = vsel %vm489, %v239, 0
      %v653 = vsel %vm489, %v240, 0
      %v656 = vsel %vm489, %v241, 0
      %v659 = vsel %vm489, %v242, 0
      %v662 = vsel %vm489, %v243, 0
      %v665 = vsel %vm489, %v244, 0
      %v668 = vsel %vm489, %v245, 0
      %v671 = vsel %vm489, %v246, 0
      %v674 = vsel %vm489, %v247, 0
      %v677 = vsel %vm489, %v248, 0
      %v680 = vsel %vm489, %v249, 0
      %v683 = vsel %vm489, %v250, 0
      %v686 = vsel %vm489, %v251, 0
      %v689 = vsel %vm489, %v252, 0
      %v692 = vsel %vm489, %v253, 0
      %v695 = vsel %vm489, %v254, 0
      %v698 = vsel %vm489, %v255, 0
      %v701 = vsel %vm489, %v256, 0
      %v704 = vsel %vm489, %v257, 0
      %v707 = vsel %vm489, %v258, 0
      %v710 = vsel %vm489, %v259, 0
      %v713 = vsel %vm489, %v260, 0
      %v716 = vsel %vm489, %v261, 0
      %v719 = vsel %vm489, %v262, 0
      %v722 = vsel %vm489, %v263, 0
      %v725 = vsel %vm489, %v264, 0
      %v728 = vsel %vm489, %v265, 0
      %v731 = vsel %vm489, %v266, 0
      %v734 = vsel %vm489, %v267, 0
      %v737 = vsel %vm489, %v268, 0
      %v740 = vsel %vm489, %v269, 0
      %v743 = vsel %vm489, %v270, 0
      %v746 = vsel %vm489, %v271, 0
      %v749 = vsel %vm489, %v272, 0
      %v752 = vsel %vm489, %v273, 0
      %v755 = vsel %vm489, %v274, 0
      %v758 = vsel %vm489, %v275, 0
      %v761 = vsel %vm489, %v276, 0
      %v764 = vsel %vm489, %v277, 0
      %v767 = vsel %vm489, %v278, 0
      %v770 = vsel %vm489, %v279, 0
      %v773 = vsel %vm489, %v280, 0
      %v776 = vsel %vm489, %v281, 0
      %v779 = vsel %vm489, %v282, 0
      %v782 = vsel %vm489, %v283, 0
      %v785 = vsel %vm489, %v284, 0
      %v788 = vsel %vm489, %v285, 0
      %v791 = vsel %vm489, %v286, 0
      %v794 = vsel %vm489, %v287, 0
      %v797 = vsel %vm489, %v288, 0
      %v800 = vsel %vm489, %v289, 0
      %v803 = vsel %vm489, %v290, 0
      %v806 = vsel %vm489, %v291, 0
      %v809 = vsel %vm489, %v292, 0
      %v812 = vsel %vm489, %v293, 0
      %v815 = vsel %vm489, %v294, 0
      %v818 = vsel %vm489, %v295, 0
      %v821 = vsel %vm489, %v296, 0
      %v824 = vsel %vm489, %v297, 0
      %v827 = vsel %vm489, %v298, 0
      %v830 = vsel %vm489, %v299, 0
      %v833 = vsel %vm489, %v300, 0
      %v836 = vsel %vm489, %v301, 0
      %v839 = vsel %vm489, %v302, 0
      %v842 = vsel %vm489, %v303, 0
      %v845 = vsel %vm489, %v304, 0
      %v848 = vsel %vm489, %v305, 0
      %v851 = vsel %vm489, %v306, 0
      %v854 = vsel %vm489, %v307, 0
      %v857 = vsel %vm489, %v308, 0
      %v860 = vsel %vm489, %v309, 0
      %v863 = vsel %vm489, %v310, 0
      %v866 = vsel %vm489, %v311, 0
      %v869 = vsel %vm489, %v312, 0
      %v872 = vsel %vm489, %v313, 0
      %v875 = vsel %vm489, %v314, 0
      %v878 = vsel %vm489, %v315, 0
      %v881 = vsel %vm489, %v316, 0
      %v884 = vsel %vm489, %v317, 0
      %v887 = vsel %vm489, %v318, 0
      %v890 = vsel %vm489, %v319, 0
      %v893 = vsel %vm489, %v320, 0
      %v896 = vsel %vm489, %v321, 0
      %v899 = vsel %vm489, %v322, 0
      %v902 = vsel %vm489, %v323, 0
      %v905 = vsel %vm489, %v324, 0
      %v908 = vsel %vm489, %v325, 0
      %v911 = vsel %vm489, %v326, 0
      %v914 = vsel %vm489, %v327, 0
      %v917 = vsel %vm489, %v328, 0
      %v920 = vsel %vm489, %v329, 0
      %v923 = vsel %vm489, %v330, 0
      %v926 = vsel %vm489, %v331, 0
      %v929 = vsel %vm489, %v332, 0
      %v932 = vsel %vm489, %v333, 0
      %v935 = vsel %vm489, %v334, 0
      %v938 = vsel %vm489, %v335, 0
      %v941 = vsel %vm489, %v336, 0
      %v944 = vsel %vm489, %v337, 0
      %v947 = vsel %vm489, %v338, 0
      %v950 = vsel %vm489, %v339, 0
      %v953 = vsel %vm489, %v340, 0
      %v956 = vsel %vm489, %v341, 0
      %v959 = vsel %vm489, %v342, 0
      %v962 = vsel %vm489, %v343, 0
      %v965 = vsel %vm489, %v344, 0
      %v968 = vsel %vm489, %v345, 0
      %v971 = vsel %vm489, %v346, 0
      %v974 = vsel %vm489, %v347, 0
      %v977 = vsel %vm489, %v348, 0
      %v980 = vsel %vm489, %v349, 0
      %v983 = vsel %vm489, %v350, 0
      %v986 = vsel %vm489, %v351, 0
      %v989 = vsel %vm489, %v352, 0
      %v992 = vsel %vm489, %v353, 0
      %v995 = vsel %vm489, %v354, 0
      %v998 = vsel %vm489, %v355, 0
      %v1001 = vsel %vm489, %v356, 0
      %v1004 = vsel %vm489, %v357, 0
      %v1007 = vsel %vm489, %v358, 0
      %v1010 = vsel %vm489, %v359, 0
      %v1013 = vsel %vm489, %v360, 0
      %v1016 = vsel %vm489, %v361, 0
      %v1019 = vsel %vm489, %v362, 0
      %v1022 = vsel %vm489, %v363, 0
      %v1025 = vsel %vm489, %v364, 0
      %v1028 = vsel %vm489, %v365, 0
      %v1031 = vsel %vm489, %v366, 0
      %v1034 = vsel %vm489, %v367, 0
      %v1037 = vsel %vm489, %v368, 0
      %v1040 = vsel %vm489, %v369, 0
      %v1043 = vsel %vm489, %v370, 0
      %v1046 = vsel %vm489, %v371, 0
      %v1049 = vsel %vm489, %v372, 0
      %v1052 = vsel %vm489, %v373, 0
      %v1055 = vsel %vm489, %v374, 0
      %v1058 = vsel %vm489, %v375, 0
      %v1061 = vsel %vm489, %v376, 0
      %v1064 = vsel %vm489, %v377, 0
      %v1067 = vsel %vm489, %v378, 0
      %v1070 = vsel %vm489, %v379, 0
      %v1073 = vsel %vm489, %v380, 0
      %v1076 = vsel %vm489, %v381, 0
      %v1079 = vsel %vm489, %v382, 0
      %v1082 = vsel %vm489, %v383, 0
      %v1085 = vsel %vm489, %v384, 0
      %v1088 = vsel %vm489, %v385, 0
      %v1091 = vsel %vm489, %v386, 0
      %v1094 = vsel %vm489, %v387, 0
      %v1097 = vsel %vm489, %v388, 0
      %v1100 = vsel %vm489, %v389, 0
      %v1103 = vsel %vm489, %v390, 0
      %v1106 = vsel %vm489, %v391, 0
      %v1109 = vsel %vm489, %v392, 0
      %v1112 = vsel %vm489, %v393, 0
      %v1115 = vsel %vm489, %v394, 0
      %v1118 = vsel %vm489, %v395, 0
      %v1121 = vsel %vm489, %v396, 0
      %v1124 = vsel %vm489, %v397, 0
      %v1127 = vsel %vm489, %v398, 0
      %v1130 = vsel %vm489, %v399, 0
      %v1133 = vsel %vm489, %v400, 0
      %v1136 = vsel %vm489, %v401, 0
      %v1139 = vsel %vm489, %v402, 0
      %v1142 = vsel %vm489, %v403, 0
      %v1145 = vsel %vm489, %v404, 0
      %v1148 = vsel %vm489, %v405, 0
      %v1151 = vsel %vm489, %v406, 0
      %v1154 = vsel %vm489, %v407, 0
      %v1157 = vsel %vm489, %v408, 0
      %v1160 = vsel %vm489, %v409, 0
      %v1163 = vsel %vm489, %v410, 0
      %v1166 = vsel %vm489, %v411, 0
      %v1169 = vsel %vm489, %v412, 0
      %v1172 = vsel %vm489, %v413, 0
      %v1175 = vsel %vm489, %v414, 0
      %v1178 = vsel %vm489, %v415, 0
      %v1181 = vsel %vm489, %v416, 0
      %v1184 = vsel %vm489, %v417, 0
      %v1187 = vsel %vm489, %v418, 0
      %v1190 = vsel %vm489, %v419, 0
      %v1193 = vsel %vm489, %v420, 0
      %v1196 = vsel %vm489, %v421, 0
      %v1199 = vsel %vm489, %v422, 0
      %v1202 = vsel %vm489, %v423, 0
      %v1205 = vsel %vm489, %v424, 0
      %v1208 = vsel %vm489, %v425, 0
      %v1211 = vsel %vm489, %v426, 0
      %v1214 = vsel %vm489, %v427, 0
      %v1217 = vsel %vm489, %v428, 0
      %v1220 = vsel %vm489, %v429, 0
      %v1223 = vsel %vm489, %v430, 0
      %v1226 = vsel %vm489, %v431, 0
      %v1229 = vsel %vm489, %v432, 0
      %v1232 = vsel %vm489, %v433, 0
      %v1235 = vsel %vm489, %v434, 0
      %v1238 = vsel %vm489, %v435, 0
      %v1241 = vsel %vm489, %v436, 0
      %v1244 = vsel %vm489, %v437, 0
      %v1247 = vsel %vm489, %v438, 0
      %v1250 = vsel %vm489, %v439, 0
      %v1253 = vsel %vm489, %v440, 0
      %v1256 = vsel %vm489, %v441, 0
      %v1259 = vsel %vm489, %v442, 0
      %v1262 = vsel %vm489, %v443, 0
      %v1265 = vsel %vm489, %v444, 0
      %v1268 = vsel %vm489, %v445, 0
      %v1271 = vsel %vm489, %v446, 0
      %v1274 = vsel %vm489, %v447, 0
      %v1277 = vsel %vm489, %v448, 0
      %v1280 = vsel %vm489, %v449, 0
      %v1283 = vsel %vm489, %v450, 0
      %v1286 = vsel %vm489, %v451, 0
      %v1289 = vsel %vm489, %v452, 0
      %v1292 = vsel %vm489, %v453, 0
      %v1295 = vsel %vm489, %v454, 0
      %v1298 = vsel %vm489, %v455, 0
      %v1301 = vsel %vm489, %v456, 0
      %v1304 = vsel %vm489, %v457, 0
      %v1307 = vsel %vm489, %v458, 0
      %v1310 = vsel %vm489, %v459, 0
      %v1313 = vsel %vm489, %v460, 0
      %v1316 = vsel %vm489, %v461, 0
      %v1319 = vsel %vm489, %v462, 0
      %v1322 = vsel %vm489, %v463, 0
      %v1325 = vsel %vm489, %v464, 0
      %v1328 = vsel %vm489, %v465, 0
      %v1331 = vsel %vm489, %v466, 0
      %v1334 = vsel %vm489, %v467, 0
      %v1337 = vsel %vm489, %v468, 0
      %v1340 = vsel %vm489, %v469, 0
      %v1343 = vsel %vm489, %v470, 0
      %v1346 = vsel %vm489, %v471, 0
      %v1349 = vsel %vm489, %v472, 0
      %v1352 = vsel %vm489, %v473, 0
      %v1355 = vsel %vm489, %v474, 0
      %v1358 = vsel %vm489, %v475, 0
      %v1361 = vsel %vm489, %v476, 0
      %v1364 = vsel %vm489, %v477, 0
      %v1367 = vsel %vm489, %v478, 0
      %v1370 = vsel %vm489, %v479, 0
      %v1373 = vsel %vm489, %v480, 0
      %v1376 = vsel %vm489, %v481, 0
      %v1379 = vsel %vm489, %v482, 0
      %v1382 = vsel %vm489, %v483, 0
      %v1385 = vsel %vm489, %v484, 0
      %v1388 = vsel %vm489, %v485, 0
      %1390 = vmatprep.subr.mxu0 0.0
      %1391 = vmatpush1.msra.mxu0 %v486
      %1392 = vmatprep.subr.mxu0 0.0
      %1393 = vmatpush1.msra.mxu0 %v487
      %1394 = vmatprep.subr.mxu0 0.0
      %1395 = vmatpush1.msra.mxu0 %v488
      %1396 = vmatprep.subr.mxu0 0.0
      %1397 = vmatpush1.msra.mxu0 0.0
      %1398 = vmatprep.subr.mxu0 0.0
      %1399 = vmatpush1.msra.mxu0 0.0
      %1400 = vmatprep.subr.mxu0 0.0
      %1401 = vmatpush1.msra.mxu0 0.0
      %1402 = vmatprep.subr.mxu0 0.0
      %1403 = vmatpush1.msra.mxu0 0.0
      %1404 = vmatprep.subr.mxu0 0.0
      %1405 = vmatpush1.msra.mxu0 0.0
      %1406 = vmatprep.subr.mxu0 0.0
      %1407 = vmatpush1.msra.mxu0 0.0
      %1408 = vmatprep.subr.mxu0 0.0
      %1409 = vmatpush1.msra.mxu0 0.0
      %1410 = vmatprep.subr.mxu0 0.0
      %1411 = vmatpush1.msra.mxu0 0.0
      %1412 = vmatprep.subr.mxu0 0.0
      %1413 = vmatpush1.msra.mxu0 0.0
      %1414 = vmatprep.subr.mxu0 0.0
      %1415 = vmatpush1.msra.mxu0 0.0
      %1416 = vmatprep.subr.mxu0 0.0
      %1417 = vmatpush1.msra.mxu0 0.0
      %1418 = vmatprep.subr.mxu0 0.0
      %1419 = vmatpush1.msra.mxu0 0.0
      %1420 = vmatprep.subr.mxu0 0.0
      %1421 = vmatpush1.msra.mxu0 0.0
      %1422 = vmatprep.subr.mxu0 0.0
      %1423 = vmatpush1.msra.mxu0 0.0
      %1424 = vmatprep.subr.mxu0 0.0
      %1425 = vmatpush1.msra.mxu0 0.0
      %1426 = vmatprep.subr.mxu0 0.0
      %1427 = vmatpush1.msra.mxu0 0.0
      %1428 = vmatprep.subr.mxu0 0.0
      %1429 = vmatpush1.msra.mxu0 0.0
      %1430 = vmatprep.subr.mxu0 0.0
      %1431 = vmatpush1.msra.mxu0 0.0
      %1432 = vmatprep.subr.mxu0 0.0
      %1433 = vmatpush1.msra.mxu0 0.0
      %1434 = vmatprep.subr.mxu0 0.0
      %1435 = vmatpush1.msra.mxu0 0.0
      %1436 = vmatprep.subr.mxu0 0.0
      %1437 = vmatpush1.msra.mxu0 0.0
      %1438 = vmatprep.subr.mxu0 0.0
      %1439 = vmatpush1.msra.mxu0 0.0
      %1440 = vmatprep.subr.mxu0 0.0
      %1441 = vmatpush1.msra.mxu0 0.0
      %1442 = vmatprep.subr.mxu0 0.0
      %1443 = vmatpush1.msra.mxu0 0.0
      %1444 = vmatprep.subr.mxu0 0.0
      %1445 = vmatpush1.msra.mxu0 0.0
      %1446 = vmatprep.subr.mxu0 0.0
      %1447 = vmatpush1.msra.mxu0 0.0
      %1448 = vmatprep.subr.mxu0 0.0
      %1449 = vmatpush1.msra.mxu0 0.0
      %1450 = vmatprep.subr.mxu0 0.0
      %1451 = vmatpush1.msra.mxu0 0.0
      %1452 = vmatprep.subr.mxu0 0.0
      %1453 = vmatpush1.msra.mxu0 0.0
      %1454 = vmatprep.mubr.f32.mxu0 0.0
      %1455 = vmatmul.mubr.f32.gmra.mrb[0].mxu0 %v491
      %v1456 = vpop.f32.mrb[0].mxu0
      %v1457 = vadd.f32 0.0, %v1456
      %v1458 = vpop.f32.mrb[0].mxu0
      %1459 = vmatprep.mubr.f32.mxu0 0.0
      %1460 = vmatmul.mubr.f32.gmra.mrb[0].mxu0 %v494
      %v1461 = vpop.f32.mrb[0].mxu0
      %v1462 = vadd.f32 0.0, %v1461
      %v1463 = vpop.f32.mrb[0].mxu0
      %1464 = vmatprep.mubr.f32.mxu0 0.0
      %1465 = vmatmul.mubr.f32.gmra.mrb[0].mxu0 %v497
      %v1466 = vpop.f32.mrb[0].mxu0
      %v1467 = vadd.f32 0.0, %v1466
      %v1468 = vpop.f32.mrb[0].mxu0
      %1469 = vmatprep.mubr.f32.mxu0 0.0
      %1470 = vmatmul.mubr.f32.gmra.mrb[0].mxu0 %v500
      %v1471 = vpop.f32.mrb[0].mxu0
      %v1472 = vadd.f32 0.0, %v1471
      %v1473 = vpop.f32.mrb[0].mxu0
      %1474 = vmatprep.mubr.f32.mxu0 0.0
      %1475 = vmatmul.mubr.f32.gmra.mrb[0].mxu0 %v503
      %v1476 = vpop.f32.mrb[0].mxu0
      %v1477 = vadd.f32 0.0, %v1476
      %v1478 = vpop.f32.mrb[0].mxu0
      %1479 = vmatprep.mubr.f32.mxu0 0.0
      %1480 = vmatmul.mubr.f32.gmra.mrb[0].mxu0 %v506
      %v1481 = vpop.f32.mrb[0].mxu0
      %v1482 = vadd.f32 0.0, %v1481
      %v1483 = vpop.f32.mrb[0].mxu0
      %1484 = vmatprep.mubr.f32.mxu0 0.0
      %1485 = vmatmul.mubr.f32.gmra.mrb[0].mxu0 %v509
      %v1486 = vpop.f32.mrb[0].mxu0
      %v1487 = vadd.f32 0.0, %v1486
      %v1488 = vpop.f32.mrb[0].mxu0
      %1489 = vmatprep.mubr.f32.mxu0 0.0
      %1490 = vmatmul.mubr.f32.gmra.mrb[0].mxu0 %v512
      %v1491 = vpop.f32.mrb[0].mxu0
      %v1492 = vadd.f32 0.0, %v1491
      %v1493 = vpop.f32.mrb[0].mxu0
      %1494 = vmatprep.mubr.f32.mxu0 0.0
      %1495 = vmatmul.mubr.f32.gmra.mrb[0].mxu0 %v515
      %v1496 = vpop.f32.mrb[0].mxu0
      %v1497 = vadd.f32 0.0, %v1496
      %v1498 = vpop.f32.mrb[0].mxu0
      %1499 = vmatprep.mubr.f32.mxu0 0.0
      %1500 = vmatmul.mubr.f32.gmra.mrb[0].mxu0 %v518
      %v1501 = vpop.f32.mrb[0].mxu0
      %v1502 = vadd.f32 0.0, %v1501
      %v1503 = vpop.f32.mrb[0].mxu0
      %1504 = vmatprep.mubr.f32.mxu0 0.0
      %1505 = vmatmul.mubr.f32.gmra.mrb[0].mxu0 %v521
      %v1506 = vpop.f32.mrb[0].mxu0
      %v1507 = vadd.f32 0.0, %v1506
      %v1508 = vpop.f32.mrb[0].mxu0
      %1509 = vmatprep.mubr.f32.mxu0 0.0
      %1510 = vmatmul.mubr.f32.gmra.mrb[0].mxu0 %v524
      %v1511 = vpop.f32.mrb[0].mxu0
      %v1512 = vadd.f32 0.0, %v1511
      %v1513 = vpop.f32.mrb[0].mxu0
      %1514 = vmatprep.mubr.f32.mxu0 0.0
      %1515 = vmatmul.mubr.f32.gmra.mrb[0].mxu0 %v527
      %v1516 = vpop.f32.mrb[0].mxu0
      %v1517 = vadd.f32 0.0, %v1516
      %v1518 = vpop.f32.mrb[0].mxu0
      %1519 = vmatprep.mubr.f32.mxu0 0.0
      %1520 = vmatmul.mubr.f32.gmra.mrb[0].mxu0 %v530
      %v1521 = vpop.f32.mrb[0].mxu0
      %v1522 = vadd.f32 0.0, %v1521
      %v1523 = vpop.f32.mrb[0].mxu0
      %1524 = vmatprep.mubr.f32.mxu0 0.0
      %1525 = vmatmul.mubr.f32.gmra.mrb[0].mxu0 %v533
      %v1526 = vpop.f32.mrb[0].mxu0
      %v1527 = vadd.f32 0.0, %v1526
      %v1528 = vpop.f32.mrb[0].mxu0
      %1529 = vmatprep.mubr.f32.mxu0 0.0
      %1530 = vmatmul.mubr.f32.gmra.mrb[0].mxu0 %v536
      %v1531 = vpop.f32.mrb[0].mxu0
      %v1532 = vadd.f32 0.0, %v1531
      %v1533 = vpop.f32.mrb[0].mxu0
      %1534 = vmatprep.mubr.f32.mxu0 0.0
      %1535 = vmatmul.mubr.f32.gmra.mrb[0].mxu0 %v539
      %v1536 = vpop.f32.mrb[0].mxu0
      %v1537 = vadd.f32 0.0, %v1536
      %v1538 = vpop.f32.mrb[0].mxu0
      %1539 = vmatprep.mubr.f32.mxu0 0.0
      %1540 = vmatmul.mubr.f32.gmra.mrb[0].mxu0 %v542
      %v1541 = vpop.f32.mrb[0].mxu0
      %v1542 = vadd.f32 0.0, %v1541
      %v1543 = vpop.f32.mrb[0].mxu0
      %1544 = vmatprep.mubr.f32.mxu0 0.0
      %1545 = vmatmul.mubr.f32.gmra.mrb[0].mxu0 %v545
      %v1546 = vpop.f32.mrb[0].mxu0
      %v1547 = vadd.f32 0.0, %v1546
      %v1548 = vpop.f32.mrb[0].mxu0
      %1549 = vmatprep.mubr.f32.mxu0 0.0
      %1550 = vmatmul.mubr.f32.gmra.mrb[0].mxu0 %v548
      %v1551 = vpop.f32.mrb[0].mxu0
      %v1552 = vadd.f32 0.0, %v1551
      %v1553 = vpop.f32.mrb[0].mxu0
      %1554 = vmatprep.mubr.f32.mxu0 0.0
      %1555 = vmatmul.mubr.f32.gmra.mrb[0].mxu0 %v551
      %v1556 = vpop.f32.mrb[0].mxu0
      %v1557 = vadd.f32 0.0, %v1556
      %v1558 = vpop.f32.mrb[0].mxu0
      %1559 = vmatprep.mubr.f32.mxu0 0.0
      %1560 = vmatmul.mubr.f32.gmra.mrb[0].mxu0 %v554
      %v1561 = vpop.f32.mrb[0].mxu0
      %v1562 = vadd.f32 0.0, %v1561
      %v1563 = vpop.f32.mrb[0].mxu0
      %1564 = vmatprep.mubr.f32.mxu0 0.0
      %1565 = vmatmul.mubr.f32.gmra.mrb[0].mxu0 %v557
      %v1566 = vpop.f32.mrb[0].mxu0
      %v1567 = vadd.f32 0.0, %v1566
      %v1568 = vpop.f32.mrb[0].mxu0
      %1569 = vmatprep.mubr.f32.mxu0 0.0
      %1570 = vmatmul.mubr.f32.gmra.mrb[0].mxu0 %v560
      %v1571 = vpop.f32.mrb[0].mxu0
      %v1572 = vadd.f32 0.0, %v1571
      %v1573 = vpop.f32.mrb[0].mxu0
      %1574 = vmatprep.mubr.f32.mxu0 0.0
      %1575 = vmatmul.mubr.f32.gmra.mrb[0].mxu0 %v563
      %v1576 = vpop.f32.mrb[0].mxu0
      %v1577 = vadd.f32 0.0, %v1576
      %v1578 = vpop.f32.mrb[0].mxu0
      %1579 = vmatprep.mubr.f32.mxu0 0.0
      %1580 = vmatmul.mubr.f32.gmra.mrb[0].mxu0 %v566
      %v1581 = vpop.f32.mrb[0].mxu0
      %v1582 = vadd.f32 0.0, %v1581
      %v1583 = vpop.f32.mrb[0].mxu0
      %1584 = vmatprep.mubr.f32.mxu0 0.0
      %1585 = vmatmul.mubr.f32.gmra.mrb[0].mxu0 %v569
      %v1586 = vpop.f32.mrb[0].mxu0
      %v1587 = vadd.f32 0.0, %v1586
      %v1588 = vpop.f32.mrb[0].mxu0
      %1589 = vmatprep.mubr.f32.mxu0 0.0
      %1590 = vmatmul.mubr.f32.gmra.mrb[0].mxu0 %v572
      %v1591 = vpop.f32.mrb[0].mxu0
      %v1592 = vadd.f32 0.0, %v1591
      %v1593 = vpop.f32.mrb[0].mxu0
      %1594 = vmatprep.mubr.f32.mxu0 0.0
      %1595 = vmatmul.mubr.f32.gmra.mrb[0].mxu0 %v575
      %v1596 = vpop.f32.mrb[0].mxu0
      %v1597 = vadd.f32 0.0, %v1596
      %v1598 = vpop.f32.mrb[0].mxu0
      %1599 = vmatprep.mubr.f32.mxu0 0.0
      %1600 = vmatmul.mubr.f32.gmra.mrb[0].mxu0 %v578
      %v1601 = vpop.f32.mrb[0].mxu0
      %v1602 = vadd.f32 0.0, %v1601
      %v1603 = vpop.f32.mrb[0].mxu0
      %1604 = vmatprep.mubr.f32.mxu0 0.0
      %1605 = vmatmul.mubr.f32.gmra.mrb[0].mxu0 %v581
      %v1606 = vpop.f32.mrb[0].mxu0
      %v1607 = vadd.f32 0.0, %v1606
      %v1608 = vpop.f32.mrb[0].mxu0
      %1609 = vmatprep.mubr.f32.mxu0 0.0
      %1610 = vmatmul.mubr.f32.gmra.mrb[0].mxu0 %v584
      %v1611 = vpop.f32.mrb[0].mxu0
      %v1612 = vadd.f32 0.0, %v1611
      %v1613 = vpop.f32.mrb[0].mxu0
      %1614 = vmatprep.mubr.f32.mxu0 0.0
      %1615 = vmatmul.mubr.f32.gmra.mrb[0].mxu0 %v587
      %v1616 = vpop.f32.mrb[0].mxu0
      %v1617 = vadd.f32 0.0, %v1616
      %v1618 = vpop.f32.mrb[0].mxu0
      %1619 = vmatprep.mubr.f32.mxu0 0.0
      %1620 = vmatmul.mubr.f32.gmra.mrb[0].mxu0 %v590
      %v1621 = vpop.f32.mrb[0].mxu0
      %v1622 = vadd.f32 0.0, %v1621
      %v1623 = vpop.f32.mrb[0].mxu0
      %1624 = vmatprep.mubr.f32.mxu0 0.0
      %1625 = vmatmul.mubr.f32.gmra.mrb[0].mxu0 %v593
      %v1626 = vpop.f32.mrb[0].mxu0
      %v1627 = vadd.f32 0.0, %v1626
      %v1628 = vpop.f32.mrb[0].mxu0
      %1629 = vmatprep.mubr.f32.mxu0 0.0
      %1630 = vmatmul.mubr.f32.gmra.mrb[0].mxu0 %v596
      %v1631 = vpop.f32.mrb[0].mxu0
      %v1632 = vadd.f32 0.0, %v1631
      %v1633 = vpop.f32.mrb[0].mxu0
      %1634 = vmatprep.mubr.f32.mxu0 0.0
      %1635 = vmatmul.mubr.f32.gmra.mrb[0].mxu0 %v599
      %v1636 = vpop.f32.mrb[0].mxu0
      %v1637 = vadd.f32 0.0, %v1636
      %v1638 = vpop.f32.mrb[0].mxu0
      %1639 = vmatprep.mubr.f32.mxu0 0.0
      %1640 = vmatmul.mubr.f32.gmra.mrb[0].mxu0 %v602
      %v1641 = vpop.f32.mrb[0].mxu0
      %v1642 = vadd.f32 0.0, %v1641
      %v1643 = vpop.f32.mrb[0].mxu0
      %1644 = vmatprep.mubr.f32.mxu0 0.0
      %1645 = vmatmul.mubr.f32.gmra.mrb[0].mxu0 %v605
      %v1646 = vpop.f32.mrb[0].mxu0
      %v1647 = vadd.f32 0.0, %v1646
      %v1648 = vpop.f32.mrb[0].mxu0
      %1649 = vmatprep.mubr.f32.mxu0 0.0
      %1650 = vmatmul.mubr.f32.gmra.mrb[0].mxu0 %v608
      %v1651 = vpop.f32.mrb[0].mxu0
      %v1652 = vadd.f32 0.0, %v1651
      %v1653 = vpop.f32.mrb[0].mxu0
      %1654 = vmatprep.mubr.f32.mxu0 0.0
      %1655 = vmatmul.mubr.f32.gmra.mrb[0].mxu0 %v611
      %v1656 = vpop.f32.mrb[0].mxu0
      %v1657 = vadd.f32 0.0, %v1656
      %v1658 = vpop.f32.mrb[0].mxu0
      %1659 = vmatprep.mubr.f32.mxu0 0.0
      %1660 = vmatmul.mubr.f32.gmra.mrb[0].mxu0 %v614
      %v1661 = vpop.f32.mrb[0].mxu0
      %v1662 = vadd.f32 0.0, %v1661
      %v1663 = vpop.f32.mrb[0].mxu0
      %1664 = vmatprep.mubr.f32.mxu0 0.0
      %1665 = vmatmul.mubr.f32.gmra.mrb[0].mxu0 %v617
      %v1666 = vpop.f32.mrb[0].mxu0
      %v1667 = vadd.f32 0.0, %v1666
      %v1668 = vpop.f32.mrb[0].mxu0
      %1669 = vmatprep.mubr.f32.mxu0 0.0
      %1670 = vmatmul.mubr.f32.gmra.mrb[0].mxu0 %v620
      %v1671 = vpop.f32.mrb[0].mxu0
      %v1672 = vadd.f32 0.0, %v1671
      %v1673 = vpop.f32.mrb[0].mxu0
      %1674 = vmatprep.mubr.f32.mxu0 0.0
      %1675 = vmatmul.mubr.f32.gmra.mrb[0].mxu0 %v623
      %v1676 = vpop.f32.mrb[0].mxu0
      %v1677 = vadd.f32 0.0, %v1676
      %v1678 = vpop.f32.mrb[0].mxu0
      %1679 = vmatprep.mubr.f32.mxu0 0.0
      %1680 = vmatmul.mubr.f32.gmra.mrb[0].mxu0 %v626
      %v1681 = vpop.f32.mrb[0].mxu0
      %v1682 = vadd.f32 0.0, %v1681
      %v1683 = vpop.f32.mrb[0].mxu0
      %1684 = vmatprep.mubr.f32.mxu0 0.0
      %1685 = vmatmul.mubr.f32.gmra.mrb[0].mxu0 %v629
      %v1686 = vpop.f32.mrb[0].mxu0
      %v1687 = vadd.f32 0.0, %v1686
      %v1688 = vpop.f32.mrb[0].mxu0
      %1689 = vmatprep.mubr.f32.mxu0 0.0
      %1690 = vmatmul.mubr.f32.gmra.mrb[0].mxu0 %v632
      %v1691 = vpop.f32.mrb[0].mxu0
      %v1692 = vadd.f32 0.0, %v1691
      %v1693 = vpop.f32.mrb[0].mxu0
      %1694 = vmatprep.mubr.f32.mxu0 0.0
      %1695 = vmatmul.mubr.f32.gmra.mrb[0].mxu0 %v635
      %v1696 = vpop.f32.mrb[0].mxu0
      %v1697 = vadd.f32 0.0, %v1696
      %v1698 = vpop.f32.mrb[0].mxu0
      %1699 = vmatprep.mubr.f32.mxu0 0.0
      %1700 = vmatmul.mubr.f32.gmra.mrb[0].mxu0 %v638
      %v1701 = vpop.f32.mrb[0].mxu0
      %v1702 = vadd.f32 0.0, %v1701
      %v1703 = vpop.f32.mrb[0].mxu0
      %1704 = vmatprep.mubr.f32.mxu0 0.0
      %1705 = vmatmul.mubr.f32.gmra.mrb[0].mxu0 %v641
      %v1706 = vpop.f32.mrb[0].mxu0
      %v1707 = vadd.f32 0.0, %v1706
      %v1708 = vpop.f32.mrb[0].mxu0
      %1709 = vmatprep.mubr.f32.mxu0 0.0
      %1710 = vmatmul.mubr.f32.gmra.mrb[0].mxu0 %v644
      %v1711 = vpop.f32.mrb[0].mxu0
      %v1712 = vadd.f32 0.0, %v1711
      %v1713 = vpop.f32.mrb[0].mxu0
      %1714 = vmatprep.mubr.f32.mxu0 0.0
      %1715 = vmatmul.mubr.f32.gmra.mrb[0].mxu0 %v647
      %v1716 = vpop.f32.mrb[0].mxu0
      %v1717 = vadd.f32 0.0, %v1716
      %v1718 = vpop.f32.mrb[0].mxu0
      %1719 = vmatprep.mubr.f32.mxu0 0.0
      %1720 = vmatmul.mubr.f32.gmra.mrb[0].mxu0 %v650
      %v1721 = vpop.f32.mrb[0].mxu0
      %v1722 = vadd.f32 0.0, %v1721
      %v1723 = vpop.f32.mrb[0].mxu0
      %1724 = vmatprep.mubr.f32.mxu0 0.0
      %1725 = vmatmul.mubr.f32.gmra.mrb[0].mxu0 %v653
      %v1726 = vpop.f32.mrb[0].mxu0
      %v1727 = vadd.f32 0.0, %v1726
      %v1728 = vpop.f32.mrb[0].mxu0
      %1729 = vmatprep.mubr.f32.mxu0 0.0
      %1730 = vmatmul.mubr.f32.gmra.mrb[0].mxu0 %v656
      %v1731 = vpop.f32.mrb[0].mxu0
      %v1732 = vadd.f32 0.0, %v1731
      %v1733 = vpop.f32.mrb[0].mxu0
      %1734 = vmatprep.mubr.f32.mxu0 0.0
      %1735 = vmatmul.mubr.f32.gmra.mrb[0].mxu0 %v659
      %v1736 = vpop.f32.mrb[0].mxu0
      %v1737 = vadd.f32 0.0, %v1736
      %v1738 = vpop.f32.mrb[0].mxu0
      %1739 = vmatprep.mubr.f32.mxu0 0.0
      %1740 = vmatmul.mubr.f32.gmra.mrb[0].mxu0 %v662
      %v1741 = vpop.f32.mrb[0].mxu0
      %v1742 = vadd.f32 0.0, %v1741
      %v1743 = vpop.f32.mrb[0].mxu0
      %1744 = vmatprep.mubr.f32.mxu0 0.0
      %1745 = vmatmul.mubr.f32.gmra.mrb[0].mxu0 %v665
      %v1746 = vpop.f32.mrb[0].mxu0
      %v1747 = vadd.f32 0.0, %v1746
      %v1748 = vpop.f32.mrb[0].mxu0
      %1749 = vmatprep.mubr.f32.mxu0 0.0
      %1750 = vmatmul.mubr.f32.gmra.mrb[0].mxu0 %v668
      %v1751 = vpop.f32.mrb[0].mxu0
      %v1752 = vadd.f32 0.0, %v1751
      %v1753 = vpop.f32.mrb[0].mxu0
      %1754 = vmatprep.mubr.f32.mxu0 0.0
      %1755 = vmatmul.mubr.f32.gmra.mrb[0].mxu0 %v671
      %v1756 = vpop.f32.mrb[0].mxu0
      %v1757 = vadd.f32 0.0, %v1756
      %v1758 = vpop.f32.mrb[0].mxu0
      %1759 = vmatprep.mubr.f32.mxu0 0.0
      %1760 = vmatmul.mubr.f32.gmra.mrb[0].mxu0 %v674
      %v1761 = vpop.f32.mrb[0].mxu0
      %v1762 = vadd.f32 0.0, %v1761
      %v1763 = vpop.f32.mrb[0].mxu0
      %1764 = vmatprep.mubr.f32.mxu0 0.0
      %1765 = vmatmul.mubr.f32.gmra.mrb[0].mxu0 %v677
      %v1766 = vpop.f32.mrb[0].mxu0
      %v1767 = vadd.f32 0.0, %v1766
      %v1768 = vpop.f32.mrb[0].mxu0
      %1769 = vmatprep.mubr.f32.mxu0 0.0
      %1770 = vmatmul.mubr.f32.gmra.mrb[0].mxu0 %v680
      %v1771 = vpop.f32.mrb[0].mxu0
      %v1772 = vadd.f32 0.0, %v1771
      %v1773 = vpop.f32.mrb[0].mxu0
      %1774 = vmatprep.mubr.f32.mxu0 0.0
      %1775 = vmatmul.mubr.f32.gmra.mrb[0].mxu0 %v683
      %v1776 = vpop.f32.mrb[0].mxu0
      %v1777 = vadd.f32 0.0, %v1776
      %v1778 = vpop.f32.mrb[0].mxu0
      %1779 = vmatprep.mubr.f32.mxu0 0.0
      %1780 = vmatmul.mubr.f32.gmra.mrb[0].mxu0 %v686
      %v1781 = vpop.f32.mrb[0].mxu0
      %v1782 = vadd.f32 0.0, %v1781
      %v1783 = vpop.f32.mrb[0].mxu0
      %1784 = vmatprep.mubr.f32.mxu0 0.0
      %1785 = vmatmul.mubr.f32.gmra.mrb[0].mxu0 %v689
      %v1786 = vpop.f32.mrb[0].mxu0
      %v1787 = vadd.f32 0.0, %v1786
      %v1788 = vpop.f32.mrb[0].mxu0
      %1789 = vmatprep.mubr.f32.mxu0 0.0
      %1790 = vmatmul.mubr.f32.gmra.mrb[0].mxu0 %v692
      %v1791 = vpop.f32.mrb[0].mxu0
      %v1792 = vadd.f32 0.0, %v1791
      %v1793 = vpop.f32.mrb[0].mxu0
      %1794 = vmatprep.mubr.f32.mxu0 0.0
      %1795 = vmatmul.mubr.f32.gmra.mrb[0].mxu0 %v695
      %v1796 = vpop.f32.mrb[0].mxu0
      %v1797 = vadd.f32 0.0, %v1796
      %v1798 = vpop.f32.mrb[0].mxu0
      %1799 = vmatprep.mubr.f32.mxu0 0.0
      %1800 = vmatmul.mubr.f32.gmra.mrb[0].mxu0 %v698
      %v1801 = vpop.f32.mrb[0].mxu0
      %v1802 = vadd.f32 0.0, %v1801
      %v1803 = vpop.f32.mrb[0].mxu0
      %1804 = vmatprep.mubr.f32.mxu0 0.0
      %1805 = vmatmul.mubr.f32.gmra.mrb[0].mxu0 %v701
      %v1806 = vpop.f32.mrb[0].mxu0
      %v1807 = vadd.f32 0.0, %v1806
      %v1808 = vpop.f32.mrb[0].mxu0
      %1809 = vmatprep.mubr.f32.mxu0 0.0
      %1810 = vmatmul.mubr.f32.gmra.mrb[0].mxu0 %v704
      %v1811 = vpop.f32.mrb[0].mxu0
      %v1812 = vadd.f32 0.0, %v1811
      %v1813 = vpop.f32.mrb[0].mxu0
      %1814 = vmatprep.mubr.f32.mxu0 0.0
      %1815 = vmatmul.mubr.f32.gmra.mrb[0].mxu0 %v707
      %v1816 = vpop.f32.mrb[0].mxu0
      %v1817 = vadd.f32 0.0, %v1816
      %v1818 = vpop.f32.mrb[0].mxu0
      %1819 = vmatprep.mubr.f32.mxu0 0.0
      %1820 = vmatmul.mubr.f32.gmra.mrb[0].mxu0 %v710
      %v1821 = vpop.f32.mrb[0].mxu0
      %v1822 = vadd.f32 0.0, %v1821
      %v1823 = vpop.f32.mrb[0].mxu0
      %1824 = vmatprep.mubr.f32.mxu0 0.0
      %1825 = vmatmul.mubr.f32.gmra.mrb[0].mxu0 %v713
      %v1826 = vpop.f32.mrb[0].mxu0
      %v1827 = vadd.f32 0.0, %v1826
      %v1828 = vpop.f32.mrb[0].mxu0
      %1829 = vmatprep.mubr.f32.mxu0 0.0
      %1830 = vmatmul.mubr.f32.gmra.mrb[0].mxu0 %v716
      %v1831 = vpop.f32.mrb[0].mxu0
      %v1832 = vadd.f32 0.0, %v1831
      %v1833 = vpop.f32.mrb[0].mxu0
      %1834 = vmatprep.mubr.f32.mxu0 0.0
      %1835 = vmatmul.mubr.f32.gmra.mrb[0].mxu0 %v719
      %v1836 = vpop.f32.mrb[0].mxu0
      %v1837 = vadd.f32 0.0, %v1836
      %v1838 = vpop.f32.mrb[0].mxu0
      %1839 = vmatprep.mubr.f32.mxu0 0.0
      %1840 = vmatmul.mubr.f32.gmra.mrb[0].mxu0 %v722
      %v1841 = vpop.f32.mrb[0].mxu0
      %v1842 = vadd.f32 0.0, %v1841
      %v1843 = vpop.f32.mrb[0].mxu0
      %1844 = vmatprep.mubr.f32.mxu0 0.0
      %1845 = vmatmul.mubr.f32.gmra.mrb[0].mxu0 %v725
      %v1846 = vpop.f32.mrb[0].mxu0
      %v1847 = vadd.f32 0.0, %v1846
      %v1848 = vpop.f32.mrb[0].mxu0
      %1849 = vmatprep.mubr.f32.mxu0 0.0
      %1850 = vmatmul.mubr.f32.gmra.mrb[0].mxu0 %v728
      %v1851 = vpop.f32.mrb[0].mxu0
      %v1852 = vadd.f32 0.0, %v1851
      %v1853 = vpop.f32.mrb[0].mxu0
      %1854 = vmatprep.mubr.f32.mxu0 0.0
      %1855 = vmatmul.mubr.f32.gmra.mrb[0].mxu0 %v731
      %v1856 = vpop.f32.mrb[0].mxu0
      %v1857 = vadd.f32 0.0, %v1856
      %v1858 = vpop.f32.mrb[0].mxu0
      %1859 = vmatprep.mubr.f32.mxu0 0.0
      %1860 = vmatmul.mubr.f32.gmra.mrb[0].mxu0 %v734
      %v1861 = vpop.f32.mrb[0].mxu0
      %v1862 = vadd.f32 0.0, %v1861
      %v1863 = vpop.f32.mrb[0].mxu0
      %1864 = vmatprep.mubr.f32.mxu0 0.0
      %1865 = vmatmul.mubr.f32.gmra.mrb[0].mxu0 %v737
      %v1866 = vpop.f32.mrb[0].mxu0
      %v1867 = vadd.f32 0.0, %v1866
      %v1868 = vpop.f32.mrb[0].mxu0
      %1869 = vmatprep.mubr.f32.mxu0 0.0
      %1870 = vmatmul.mubr.f32.gmra.mrb[0].mxu0 %v740
      %v1871 = vpop.f32.mrb[0].mxu0
      %v1872 = vadd.f32 0.0, %v1871
      %v1873 = vpop.f32.mrb[0].mxu0
      %1874 = vmatprep.mubr.f32.mxu0 0.0
      %1875 = vmatmul.mubr.f32.gmra.mrb[0].mxu0 %v743
      %v1876 = vpop.f32.mrb[0].mxu0
      %v1877 = vadd.f32 0.0, %v1876
      %v1878 = vpop.f32.mrb[0].mxu0
      %1879 = vmatprep.mubr.f32.mxu0 0.0
      %1880 = vmatmul.mubr.f32.gmra.mrb[0].mxu0 %v746
      %v1881 = vpop.f32.mrb[0].mxu0
      %v1882 = vadd.f32 0.0, %v1881
      %v1883 = vpop.f32.mrb[0].mxu0
      %1884 = vmatprep.mubr.f32.mxu0 0.0
      %1885 = vmatmul.mubr.f32.gmra.mrb[0].mxu0 %v749
      %v1886 = vpop.f32.mrb[0].mxu0
      %v1887 = vadd.f32 0.0, %v1886
      %v1888 = vpop.f32.mrb[0].mxu0
      %1889 = vmatprep.mubr.f32.mxu0 0.0
      %1890 = vmatmul.mubr.f32.gmra.mrb[0].mxu0 %v752
      %v1891 = vpop.f32.mrb[0].mxu0
      %v1892 = vadd.f32 0.0, %v1891
      %v1893 = vpop.f32.mrb[0].mxu0
      %1894 = vmatprep.mubr.f32.mxu0 0.0
      %1895 = vmatmul.mubr.f32.gmra.mrb[0].mxu0 %v755
      %v1896 = vpop.f32.mrb[0].mxu0
      %v1897 = vadd.f32 0.0, %v1896
      %v1898 = vpop.f32.mrb[0].mxu0
      %1899 = vmatprep.mubr.f32.mxu0 0.0
      %1900 = vmatmul.mubr.f32.gmra.mrb[0].mxu0 %v758
      %v1901 = vpop.f32.mrb[0].mxu0
      %v1902 = vadd.f32 0.0, %v1901
      %v1903 = vpop.f32.mrb[0].mxu0
      %1904 = vmatprep.mubr.f32.mxu0 0.0
      %1905 = vmatmul.mubr.f32.gmra.mrb[0].mxu0 %v761
      %v1906 = vpop.f32.mrb[0].mxu0
      %v1907 = vadd.f32 0.0, %v1906
      %v1908 = vpop.f32.mrb[0].mxu0
      %1909 = vmatprep.mubr.f32.mxu0 0.0
      %1910 = vmatmul.mubr.f32.gmra.mrb[0].mxu0 %v764
      %v1911 = vpop.f32.mrb[0].mxu0
      %v1912 = vadd.f32 0.0, %v1911
      %v1913 = vpop.f32.mrb[0].mxu0
      %1914 = vmatprep.mubr.f32.mxu0 0.0
      %1915 = vmatmul.mubr.f32.gmra.mrb[0].mxu0 %v767
      %v1916 = vpop.f32.mrb[0].mxu0
      %v1917 = vadd.f32 0.0, %v1916
      %v1918 = vpop.f32.mrb[0].mxu0
      %1919 = vmatprep.mubr.f32.mxu0 0.0
      %1920 = vmatmul.mubr.f32.gmra.mrb[0].mxu0 %v770
      %v1921 = vpop.f32.mrb[0].mxu0
      %v1922 = vadd.f32 0.0, %v1921
      %v1923 = vpop.f32.mrb[0].mxu0
      %1924 = vmatprep.mubr.f32.mxu0 0.0
      %1925 = vmatmul.mubr.f32.gmra.mrb[0].mxu0 %v773
      %v1926 = vpop.f32.mrb[0].mxu0
      %v1927 = vadd.f32 0.0, %v1926
      %v1928 = vpop.f32.mrb[0].mxu0
      %1929 = vmatprep.mubr.f32.mxu0 0.0
      %1930 = vmatmul.mubr.f32.gmra.mrb[0].mxu0 %v776
      %v1931 = vpop.f32.mrb[0].mxu0
      %v1932 = vadd.f32 0.0, %v1931
      %v1933 = vpop.f32.mrb[0].mxu0
      %1934 = vmatprep.mubr.f32.mxu0 0.0
      %1935 = vmatmul.mubr.f32.gmra.mrb[0].mxu0 %v779
      %v1936 = vpop.f32.mrb[0].mxu0
      %v1937 = vadd.f32 0.0, %v1936
      %v1938 = vpop.f32.mrb[0].mxu0
      %1939 = vmatprep.mubr.f32.mxu0 0.0
      %1940 = vmatmul.mubr.f32.gmra.mrb[0].mxu0 %v782
      %v1941 = vpop.f32.mrb[0].mxu0
      %v1942 = vadd.f32 0.0, %v1941
      %v1943 = vpop.f32.mrb[0].mxu0
      %1944 = vmatprep.mubr.f32.mxu0 0.0
      %1945 = vmatmul.mubr.f32.gmra.mrb[0].mxu0 %v785
      %v1946 = vpop.f32.mrb[0].mxu0
      %v1947 = vadd.f32 0.0, %v1946
      %v1948 = vpop.f32.mrb[0].mxu0
      %1949 = vmatprep.mubr.f32.mxu0 0.0
      %1950 = vmatmul.mubr.f32.gmra.mrb[0].mxu0 %v788
      %v1951 = vpop.f32.mrb[0].mxu0
      %v1952 = vadd.f32 0.0, %v1951
      %v1953 = vpop.f32.mrb[0].mxu0
      %1954 = vmatprep.mubr.f32.mxu0 0.0
      %1955 = vmatmul.mubr.f32.gmra.mrb[0].mxu0 %v791
      %v1956 = vpop.f32.mrb[0].mxu0
      %v1957 = vadd.f32 0.0, %v1956
      %v1958 = vpop.f32.mrb[0].mxu0
      %1959 = vmatprep.mubr.f32.mxu0 0.0
      %1960 = vmatmul.mubr.f32.gmra.mrb[0].mxu0 %v794
      %v1961 = vpop.f32.mrb[0].mxu0
      %v1962 = vadd.f32 0.0, %v1961
      %v1963 = vpop.f32.mrb[0].mxu0
      %1964 = vmatprep.mubr.f32.mxu0 0.0
      %1965 = vmatmul.mubr.f32.gmra.mrb[0].mxu0 %v797
      %v1966 = vpop.f32.mrb[0].mxu0
      %v1967 = vadd.f32 0.0, %v1966
      %v1968 = vpop.f32.mrb[0].mxu0
      %1969 = vmatprep.mubr.f32.mxu0 0.0
      %1970 = vmatmul.mubr.f32.gmra.mrb[0].mxu0 %v800
      %v1971 = vpop.f32.mrb[0].mxu0
      %v1972 = vadd.f32 0.0, %v1971
      %v1973 = vpop.f32.mrb[0].mxu0
      %1974 = vmatprep.mubr.f32.mxu0 0.0
      %1975 = vmatmul.mubr.f32.gmra.mrb[0].mxu0 %v803
      %v1976 = vpop.f32.mrb[0].mxu0
      %v1977 = vadd.f32 0.0, %v1976
      %v1978 = vpop.f32.mrb[0].mxu0
      %1979 = vmatprep.mubr.f32.mxu0 0.0
      %1980 = vmatmul.mubr.f32.gmra.mrb[0].mxu0 %v806
      %v1981 = vpop.f32.mrb[0].mxu0
      %v1982 = vadd.f32 0.0, %v1981
      %v1983 = vpop.f32.mrb[0].mxu0
      %1984 = vmatprep.mubr.f32.mxu0 0.0
      %1985 = vmatmul.mubr.f32.gmra.mrb[0].mxu0 %v809
      %v1986 = vpop.f32.mrb[0].mxu0
      %v1987 = vadd.f32 0.0, %v1986
      %v1988 = vpop.f32.mrb[0].mxu0
      %1989 = vmatprep.mubr.f32.mxu0 0.0
      %1990 = vmatmul.mubr.f32.gmra.mrb[0].mxu0 %v812
      %v1991 = vpop.f32.mrb[0].mxu0
      %v1992 = vadd.f32 0.0, %v1991
      %v1993 = vpop.f32.mrb[0].mxu0
      %1994 = vmatprep.mubr.f32.mxu0 0.0
      %1995 = vmatmul.mubr.f32.gmra.mrb[0].mxu0 %v815
      %v1996 = vpop.f32.mrb[0].mxu0
      %v1997 = vadd.f32 0.0, %v1996
      %v1998 = vpop.f32.mrb[0].mxu0
      %1999 = vmatprep.mubr.f32.mxu0 0.0
      %2000 = vmatmul.mubr.f32.gmra.mrb[0].mxu0 %v818
      %v2001 = vpop.f32.mrb[0].mxu0
      %v2002 = vadd.f32 0.0, %v2001
      %v2003 = vpop.f32.mrb[0].mxu0
      %2004 = vmatprep.mubr.f32.mxu0 0.0
      %2005 = vmatmul.mubr.f32.gmra.mrb[0].mxu0 %v821
      %v2006 = vpop.f32.mrb[0].mxu0
      %v2007 = vadd.f32 0.0, %v2006
      %v2008 = vpop.f32.mrb[0].mxu0
      %2009 = vmatprep.mubr.f32.mxu0 0.0
      %2010 = vmatmul.mubr.f32.gmra.mrb[0].mxu0 %v824
      %v2011 = vpop.f32.mrb[0].mxu0
      %v2012 = vadd.f32 0.0, %v2011
      %v2013 = vpop.f32.mrb[0].mxu0
      %2014 = vmatprep.mubr.f32.mxu0 0.0
      %2015 = vmatmul.mubr.f32.gmra.mrb[0].mxu0 %v827
      %v2016 = vpop.f32.mrb[0].mxu0
      %v2017 = vadd.f32 0.0, %v2016
      %v2018 = vpop.f32.mrb[0].mxu0
      %2019 = vmatprep.mubr.f32.mxu0 0.0
      %2020 = vmatmul.mubr.f32.gmra.mrb[0].mxu0 %v830
      %v2021 = vpop.f32.mrb[0].mxu0
      %v2022 = vadd.f32 0.0, %v2021
      %v2023 = vpop.f32.mrb[0].mxu0
      %2024 = vmatprep.mubr.f32.mxu0 0.0
      %2025 = vmatmul.mubr.f32.gmra.mrb[0].mxu0 %v833
      %v2026 = vpop.f32.mrb[0].mxu0
      %v2027 = vadd.f32 0.0, %v2026
      %v2028 = vpop.f32.mrb[0].mxu0
      %2029 = vmatprep.mubr.f32.mxu0 0.0
      %2030 = vmatmul.mubr.f32.gmra.mrb[0].mxu0 %v836
      %v2031 = vpop.f32.mrb[0].mxu0
      %v2032 = vadd.f32 0.0, %v2031
      %v2033 = vpop.f32.mrb[0].mxu0
      %2034 = vmatprep.mubr.f32.mxu0 0.0
      %2035 = vmatmul.mubr.f32.gmra.mrb[0].mxu0 %v839
      %v2036 = vpop.f32.mrb[0].mxu0
      %v2037 = vadd.f32 0.0, %v2036
      %v2038 = vpop.f32.mrb[0].mxu0
      %2039 = vmatprep.mubr.f32.mxu0 0.0
      %2040 = vmatmul.mubr.f32.gmra.mrb[0].mxu0 %v842
      %v2041 = vpop.f32.mrb[0].mxu0
      %v2042 = vadd.f32 0.0, %v2041
      %v2043 = vpop.f32.mrb[0].mxu0
      %2044 = vmatprep.mubr.f32.mxu0 0.0
      %2045 = vmatmul.mubr.f32.gmra.mrb[0].mxu0 %v845
      %v2046 = vpop.f32.mrb[0].mxu0
      %v2047 = vadd.f32 0.0, %v2046
      %v2048 = vpop.f32.mrb[0].mxu0
      %2049 = vmatprep.mubr.f32.mxu0 0.0
      %2050 = vmatmul.mubr.f32.gmra.mrb[0].mxu0 %v848
      %v2051 = vpop.f32.mrb[0].mxu0
      %v2052 = vadd.f32 0.0, %v2051
      %v2053 = vpop.f32.mrb[0].mxu0
      %2054 = vmatprep.mubr.f32.mxu0 0.0
      %2055 = vmatmul.mubr.f32.gmra.mrb[0].mxu0 %v851
      %v2056 = vpop.f32.mrb[0].mxu0
      %v2057 = vadd.f32 0.0, %v2056
      %v2058 = vpop.f32.mrb[0].mxu0
      %2059 = vmatprep.mubr.f32.mxu0 0.0
      %2060 = vmatmul.mubr.f32.gmra.mrb[0].mxu0 %v854
      %v2061 = vpop.f32.mrb[0].mxu0
      %v2062 = vadd.f32 0.0, %v2061
      %v2063 = vpop.f32.mrb[0].mxu0
      %2064 = vmatprep.mubr.f32.mxu0 0.0
      %2065 = vmatmul.mubr.f32.gmra.mrb[0].mxu0 %v857
      %v2066 = vpop.f32.mrb[0].mxu0
      %v2067 = vadd.f32 0.0, %v2066
      %v2068 = vpop.f32.mrb[0].mxu0
      %2069 = vmatprep.mubr.f32.mxu0 0.0
      %2070 = vmatmul.mubr.f32.gmra.mrb[0].mxu0 %v860
      %v2071 = vpop.f32.mrb[0].mxu0
      %v2072 = vadd.f32 0.0, %v2071
      %v2073 = vpop.f32.mrb[0].mxu0
      %2074 = vmatprep.mubr.f32.mxu0 0.0
      %2075 = vmatmul.mubr.f32.gmra.mrb[0].mxu0 %v863
      %v2076 = vpop.f32.mrb[0].mxu0
      %v2077 = vadd.f32 0.0, %v2076
      %v2078 = vpop.f32.mrb[0].mxu0
      %2079 = vmatprep.mubr.f32.mxu0 0.0
      %2080 = vmatmul.mubr.f32.gmra.mrb[0].mxu0 %v866
      %v2081 = vpop.f32.mrb[0].mxu0
      %v2082 = vadd.f32 0.0, %v2081
      %v2083 = vpop.f32.mrb[0].mxu0
      %2084 = vmatprep.mubr.f32.mxu0 0.0
      %2085 = vmatmul.mubr.f32.gmra.mrb[0].mxu0 %v869
      %v2086 = vpop.f32.mrb[0].mxu0
      %v2087 = vadd.f32 0.0, %v2086
      %v2088 = vpop.f32.mrb[0].mxu0
      %2089 = vmatprep.mubr.f32.mxu0 0.0
      %2090 = vmatmul.mubr.f32.gmra.mrb[0].mxu0 %v872
      %v2091 = vpop.f32.mrb[0].mxu0
      %v2092 = vadd.f32 0.0, %v2091
      %v2093 = vpop.f32.mrb[0].mxu0
      %2094 = vmatprep.mubr.f32.mxu0 0.0
      %2095 = vmatmul.mubr.f32.gmra.mrb[0].mxu0 %v875
      %v2096 = vpop.f32.mrb[0].mxu0
      %v2097 = vadd.f32 0.0, %v2096
      %v2098 = vpop.f32.mrb[0].mxu0
      %2099 = vmatprep.mubr.f32.mxu0 0.0
      %2100 = vmatmul.mubr.f32.gmra.mrb[0].mxu0 %v878
      %v2101 = vpop.f32.mrb[0].mxu0
      %v2102 = vadd.f32 0.0, %v2101
      %v2103 = vpop.f32.mrb[0].mxu0
      %2104 = vmatprep.mubr.f32.mxu0 0.0
      %2105 = vmatmul.mubr.f32.gmra.mrb[0].mxu0 %v881
      %v2106 = vpop.f32.mrb[0].mxu0
      %v2107 = vadd.f32 0.0, %v2106
      %v2108 = vpop.f32.mrb[0].mxu0
      %2109 = vmatprep.mubr.f32.mxu0 0.0
      %2110 = vmatmul.mubr.f32.gmra.mrb[0].mxu0 %v884
      %v2111 = vpop.f32.mrb[0].mxu0
      %v2112 = vadd.f32 0.0, %v2111
      %v2113 = vpop.f32.mrb[0].mxu0
      %2114 = vmatprep.mubr.f32.mxu0 0.0
      %2115 = vmatmul.mubr.f32.gmra.mrb[0].mxu0 %v887
      %v2116 = vpop.f32.mrb[0].mxu0
      %v2117 = vadd.f32 0.0, %v2116
      %v2118 = vpop.f32.mrb[0].mxu0
      %2119 = vmatprep.mubr.f32.mxu0 0.0
      %2120 = vmatmul.mubr.f32.gmra.mrb[0].mxu0 %v890
      %v2121 = vpop.f32.mrb[0].mxu0
      %v2122 = vadd.f32 0.0, %v2121
      %v2123 = vpop.f32.mrb[0].mxu0
      %2124 = vmatprep.mubr.f32.mxu0 0.0
      %2125 = vmatmul.mubr.f32.gmra.mrb[0].mxu0 %v893
      %v2126 = vpop.f32.mrb[0].mxu0
      %v2127 = vadd.f32 0.0, %v2126
      %v2128 = vpop.f32.mrb[0].mxu0
      %2129 = vmatprep.mubr.f32.mxu0 0.0
      %2130 = vmatmul.mubr.f32.gmra.mrb[0].mxu0 %v896
      %v2131 = vpop.f32.mrb[0].mxu0
      %v2132 = vadd.f32 0.0, %v2131
      %v2133 = vpop.f32.mrb[0].mxu0
      %2134 = vmatprep.mubr.f32.mxu0 0.0
      %2135 = vmatmul.mubr.f32.gmra.mrb[0].mxu0 %v899
      %v2136 = vpop.f32.mrb[0].mxu0
      %v2137 = vadd.f32 0.0, %v2136
      %v2138 = vpop.f32.mrb[0].mxu0
      %2139 = vmatprep.mubr.f32.mxu0 0.0
      %2140 = vmatmul.mubr.f32.gmra.mrb[0].mxu0 %v902
      %v2141 = vpop.f32.mrb[0].mxu0
      %v2142 = vadd.f32 0.0, %v2141
      %v2143 = vpop.f32.mrb[0].mxu0
      %2144 = vmatprep.mubr.f32.mxu0 0.0
      %2145 = vmatmul.mubr.f32.gmra.mrb[0].mxu0 %v905
      %v2146 = vpop.f32.mrb[0].mxu0
      %v2147 = vadd.f32 0.0, %v2146
      %v2148 = vpop.f32.mrb[0].mxu0
      %2149 = vmatprep.mubr.f32.mxu0 0.0
      %2150 = vmatmul.mubr.f32.gmra.mrb[0].mxu0 %v908
      %v2151 = vpop.f32.mrb[0].mxu0
      %v2152 = vadd.f32 0.0, %v2151
      %v2153 = vpop.f32.mrb[0].mxu0
      %2154 = vmatprep.mubr.f32.mxu0 0.0
      %2155 = vmatmul.mubr.f32.gmra.mrb[0].mxu0 %v911
      %v2156 = vpop.f32.mrb[0].mxu0
      %v2157 = vadd.f32 0.0, %v2156
      %v2158 = vpop.f32.mrb[0].mxu0
      %2159 = vmatprep.mubr.f32.mxu0 0.0
      %2160 = vmatmul.mubr.f32.gmra.mrb[0].mxu0 %v914
      %v2161 = vpop.f32.mrb[0].mxu0
      %v2162 = vadd.f32 0.0, %v2161
      %v2163 = vpop.f32.mrb[0].mxu0
      %2164 = vmatprep.mubr.f32.mxu0 0.0
      %2165 = vmatmul.mubr.f32.gmra.mrb[0].mxu0 %v917
      %v2166 = vpop.f32.mrb[0].mxu0
      %v2167 = vadd.f32 0.0, %v2166
      %v2168 = vpop.f32.mrb[0].mxu0
      %2169 = vmatprep.mubr.f32.mxu0 0.0
      %2170 = vmatmul.mubr.f32.gmra.mrb[0].mxu0 %v920
      %v2171 = vpop.f32.mrb[0].mxu0
      %v2172 = vadd.f32 0.0, %v2171
      %v2173 = vpop.f32.mrb[0].mxu0
      %2174 = vmatprep.mubr.f32.mxu0 0.0
      %2175 = vmatmul.mubr.f32.gmra.mrb[0].mxu0 %v923
      %v2176 = vpop.f32.mrb[0].mxu0
      %v2177 = vadd.f32 0.0, %v2176
      %v2178 = vpop.f32.mrb[0].mxu0
      %2179 = vmatprep.mubr.f32.mxu0 0.0
      %2180 = vmatmul.mubr.f32.gmra.mrb[0].mxu0 %v926
      %v2181 = vpop.f32.mrb[0].mxu0
      %v2182 = vadd.f32 0.0, %v2181
      %v2183 = vpop.f32.mrb[0].mxu0
      %2184 = vmatprep.mubr.f32.mxu0 0.0
      %2185 = vmatmul.mubr.f32.gmra.mrb[0].mxu0 %v929
      %v2186 = vpop.f32.mrb[0].mxu0
      %v2187 = vadd.f32 0.0, %v2186
      %v2188 = vpop.f32.mrb[0].mxu0
      %2189 = vmatprep.mubr.f32.mxu0 0.0
      %2190 = vmatmul.mubr.f32.gmra.mrb[0].mxu0 %v932
      %v2191 = vpop.f32.mrb[0].mxu0
      %v2192 = vadd.f32 0.0, %v2191
      %v2193 = vpop.f32.mrb[0].mxu0
      %2194 = vmatprep.mubr.f32.mxu0 0.0
      %2195 = vmatmul.mubr.f32.gmra.mrb[0].mxu0 %v935
      %v2196 = vpop.f32.mrb[0].mxu0
      %v2197 = vadd.f32 0.0, %v2196
      %v2198 = vpop.f32.mrb[0].mxu0
      %2199 = vmatprep.mubr.f32.mxu0 0.0
      %2200 = vmatmul.mubr.f32.gmra.mrb[0].mxu0 %v938
      %v2201 = vpop.f32.mrb[0].mxu0
      %v2202 = vadd.f32 0.0, %v2201
      %v2203 = vpop.f32.mrb[0].mxu0
      %2204 = vmatprep.mubr.f32.mxu0 0.0
      %2205 = vmatmul.mubr.f32.gmra.mrb[0].mxu0 %v941
      %v2206 = vpop.f32.mrb[0].mxu0
      %v2207 = vadd.f32 0.0, %v2206
      %v2208 = vpop.f32.mrb[0].mxu0
      %2209 = vmatprep.mubr.f32.mxu0 0.0
      %2210 = vmatmul.mubr.f32.gmra.mrb[0].mxu0 %v944
      %v2211 = vpop.f32.mrb[0].mxu0
      %v2212 = vadd.f32 0.0, %v2211
      %v2213 = vpop.f32.mrb[0].mxu0
      %2214 = vmatprep.mubr.f32.mxu0 0.0
      %2215 = vmatmul.mubr.f32.gmra.mrb[0].mxu0 %v947
      %v2216 = vpop.f32.mrb[0].mxu0
      %v2217 = vadd.f32 0.0, %v2216
      %v2218 = vpop.f32.mrb[0].mxu0
      %2219 = vmatprep.mubr.f32.mxu0 0.0
      %2220 = vmatmul.mubr.f32.gmra.mrb[0].mxu0 %v950
      %v2221 = vpop.f32.mrb[0].mxu0
      %v2222 = vadd.f32 0.0, %v2221
      %v2223 = vpop.f32.mrb[0].mxu0
      %2224 = vmatprep.mubr.f32.mxu0 0.0
      %2225 = vmatmul.mubr.f32.gmra.mrb[0].mxu0 %v953
      %v2226 = vpop.f32.mrb[0].mxu0
      %v2227 = vadd.f32 0.0, %v2226
      %v2228 = vpop.f32.mrb[0].mxu0
      %2229 = vmatprep.mubr.f32.mxu0 0.0
      %2230 = vmatmul.mubr.f32.gmra.mrb[0].mxu0 %v956
      %v2231 = vpop.f32.mrb[0].mxu0
      %v2232 = vadd.f32 0.0, %v2231
      %v2233 = vpop.f32.mrb[0].mxu0
      %2234 = vmatprep.mubr.f32.mxu0 0.0
      %2235 = vmatmul.mubr.f32.gmra.mrb[0].mxu0 %v959
      %v2236 = vpop.f32.mrb[0].mxu0
      %v2237 = vadd.f32 0.0, %v2236
      %v2238 = vpop.f32.mrb[0].mxu0
      %2239 = vmatprep.mubr.f32.mxu0 0.0
      %2240 = vmatmul.mubr.f32.gmra.mrb[0].mxu0 %v962
      %v2241 = vpop.f32.mrb[0].mxu0
      %v2242 = vadd.f32 0.0, %v2241
      %v2243 = vpop.f32.mrb[0].mxu0
      %2244 = vmatprep.mubr.f32.mxu0 0.0
      %2245 = vmatmul.mubr.f32.gmra.mrb[0].mxu0 %v965
      %v2246 = vpop.f32.mrb[0].mxu0
      %v2247 = vadd.f32 0.0, %v2246
      %v2248 = vpop.f32.mrb[0].mxu0
      %2249 = vmatprep.mubr.f32.mxu0 0.0
      %2250 = vmatmul.mubr.f32.gmra.mrb[0].mxu0 %v968
      %v2251 = vpop.f32.mrb[0].mxu0
      %v2252 = vadd.f32 0.0, %v2251
      %v2253 = vpop.f32.mrb[0].mxu0
      %2254 = vmatprep.mubr.f32.mxu0 0.0
      %2255 = vmatmul.mubr.f32.gmra.mrb[0].mxu0 %v971
      %v2256 = vpop.f32.mrb[0].mxu0
      %v2257 = vadd.f32 0.0, %v2256
      %v2258 = vpop.f32.mrb[0].mxu0
      %2259 = vmatprep.mubr.f32.mxu0 0.0
      %2260 = vmatmul.mubr.f32.gmra.mrb[0].mxu0 %v974
      %v2261 = vpop.f32.mrb[0].mxu0
      %v2262 = vadd.f32 0.0, %v2261
      %v2263 = vpop.f32.mrb[0].mxu0
      %2264 = vmatprep.mubr.f32.mxu0 0.0
      %2265 = vmatmul.mubr.f32.gmra.mrb[0].mxu0 %v977
      %v2266 = vpop.f32.mrb[0].mxu0
      %v2267 = vadd.f32 0.0, %v2266
      %v2268 = vpop.f32.mrb[0].mxu0
      %2269 = vmatprep.mubr.f32.mxu0 0.0
      %2270 = vmatmul.mubr.f32.gmra.mrb[0].mxu0 %v980
      %v2271 = vpop.f32.mrb[0].mxu0
      %v2272 = vadd.f32 0.0, %v2271
      %v2273 = vpop.f32.mrb[0].mxu0
      %2274 = vmatprep.mubr.f32.mxu0 0.0
      %2275 = vmatmul.mubr.f32.gmra.mrb[0].mxu0 %v983
      %v2276 = vpop.f32.mrb[0].mxu0
      %v2277 = vadd.f32 0.0, %v2276
      %v2278 = vpop.f32.mrb[0].mxu0
      %2279 = vmatprep.mubr.f32.mxu0 0.0
      %2280 = vmatmul.mubr.f32.gmra.mrb[0].mxu0 %v986
      %v2281 = vpop.f32.mrb[0].mxu0
      %v2282 = vadd.f32 0.0, %v2281
      %v2283 = vpop.f32.mrb[0].mxu0
      %2284 = vmatprep.mubr.f32.mxu0 0.0
      %2285 = vmatmul.mubr.f32.gmra.mrb[0].mxu0 %v989
      %v2286 = vpop.f32.mrb[0].mxu0
      %v2287 = vadd.f32 0.0, %v2286
      %v2288 = vpop.f32.mrb[0].mxu0
      %2289 = vmatprep.mubr.f32.mxu0 0.0
      %2290 = vmatmul.mubr.f32.gmra.mrb[0].mxu0 %v992
      %v2291 = vpop.f32.mrb[0].mxu0
      %v2292 = vadd.f32 0.0, %v2291
      %v2293 = vpop.f32.mrb[0].mxu0
      %2294 = vmatprep.mubr.f32.mxu0 0.0
      %2295 = vmatmul.mubr.f32.gmra.mrb[0].mxu0 %v995
      %v2296 = vpop.f32.mrb[0].mxu0
      %v2297 = vadd.f32 0.0, %v2296
      %v2298 = vpop.f32.mrb[0].mxu0
      %2299 = vmatprep.mubr.f32.mxu0 0.0
      %2300 = vmatmul.mubr.f32.gmra.mrb[0].mxu0 %v998
      %v2301 = vpop.f32.mrb[0].mxu0
      %v2302 = vadd.f32 0.0, %v2301
      %v2303 = vpop.f32.mrb[0].mxu0
      %2304 = vmatprep.mubr.f32.mxu0 0.0
      %2305 = vmatmul.mubr.f32.gmra.mrb[0].mxu0 %v1001
      %v2306 = vpop.f32.mrb[0].mxu0
      %v2307 = vadd.f32 0.0, %v2306
      %v2308 = vpop.f32.mrb[0].mxu0
      %2309 = vmatprep.mubr.f32.mxu0 0.0
      %2310 = vmatmul.mubr.f32.gmra.mrb[0].mxu0 %v1004
      %v2311 = vpop.f32.mrb[0].mxu0
      %v2312 = vadd.f32 0.0, %v2311
      %v2313 = vpop.f32.mrb[0].mxu0
      %2314 = vmatprep.mubr.f32.mxu0 0.0
      %2315 = vmatmul.mubr.f32.gmra.mrb[0].mxu0 %v1007
      %v2316 = vpop.f32.mrb[0].mxu0
      %v2317 = vadd.f32 0.0, %v2316
      %v2318 = vpop.f32.mrb[0].mxu0
      %2319 = vmatprep.mubr.f32.mxu0 0.0
      %2320 = vmatmul.mubr.f32.gmra.mrb[0].mxu0 %v1010
      %v2321 = vpop.f32.mrb[0].mxu0
      %v2322 = vadd.f32 0.0, %v2321
      %v2323 = vpop.f32.mrb[0].mxu0
      %2324 = vmatprep.mubr.f32.mxu0 0.0
      %2325 = vmatmul.mubr.f32.gmra.mrb[0].mxu0 %v1013
      %v2326 = vpop.f32.mrb[0].mxu0
      %v2327 = vadd.f32 0.0, %v2326
      %v2328 = vpop.f32.mrb[0].mxu0
      %2329 = vmatprep.mubr.f32.mxu0 0.0
      %2330 = vmatmul.mubr.f32.gmra.mrb[0].mxu0 %v1016
      %v2331 = vpop.f32.mrb[0].mxu0
      %v2332 = vadd.f32 0.0, %v2331
      %v2333 = vpop.f32.mrb[0].mxu0
      %2334 = vmatprep.mubr.f32.mxu0 0.0
      %2335 = vmatmul.mubr.f32.gmra.mrb[0].mxu0 %v1019
      %v2336 = vpop.f32.mrb[0].mxu0
      %v2337 = vadd.f32 0.0, %v2336
      %v2338 = vpop.f32.mrb[0].mxu0
      %2339 = vmatprep.mubr.f32.mxu0 0.0
      %2340 = vmatmul.mubr.f32.gmra.mrb[0].mxu0 %v1022
      %v2341 = vpop.f32.mrb[0].mxu0
      %v2342 = vadd.f32 0.0, %v2341
      %v2343 = vpop.f32.mrb[0].mxu0
      %2344 = vmatprep.mubr.f32.mxu0 0.0
      %2345 = vmatmul.mubr.f32.gmra.mrb[0].mxu0 %v1025
      %v2346 = vpop.f32.mrb[0].mxu0
      %v2347 = vadd.f32 0.0, %v2346
      %v2348 = vpop.f32.mrb[0].mxu0
      %2349 = vmatprep.mubr.f32.mxu0 0.0
      %2350 = vmatmul.mubr.f32.gmra.mrb[0].mxu0 %v1028
      %v2351 = vpop.f32.mrb[0].mxu0
      %v2352 = vadd.f32 0.0, %v2351
      %v2353 = vpop.f32.mrb[0].mxu0
      %2354 = vmatprep.mubr.f32.mxu0 0.0
      %2355 = vmatmul.mubr.f32.gmra.mrb[0].mxu0 %v1031
      %v2356 = vpop.f32.mrb[0].mxu0
      %v2357 = vadd.f32 0.0, %v2356
      %v2358 = vpop.f32.mrb[0].mxu0
      %2359 = vmatprep.mubr.f32.mxu0 0.0
      %2360 = vmatmul.mubr.f32.gmra.mrb[0].mxu0 %v1034
      %v2361 = vpop.f32.mrb[0].mxu0
      %v2362 = vadd.f32 0.0, %v2361
      %v2363 = vpop.f32.mrb[0].mxu0
      %2364 = vmatprep.mubr.f32.mxu0 0.0
      %2365 = vmatmul.mubr.f32.gmra.mrb[0].mxu0 %v1037
      %v2366 = vpop.f32.mrb[0].mxu0
      %v2367 = vadd.f32 0.0, %v2366
      %v2368 = vpop.f32.mrb[0].mxu0
      %2369 = vmatprep.mubr.f32.mxu0 0.0
      %2370 = vmatmul.mubr.f32.gmra.mrb[0].mxu0 %v1040
      %v2371 = vpop.f32.mrb[0].mxu0
      %v2372 = vadd.f32 0.0, %v2371
      %v2373 = vpop.f32.mrb[0].mxu0
      %2374 = vmatprep.mubr.f32.mxu0 0.0
      %2375 = vmatmul.mubr.f32.gmra.mrb[0].mxu0 %v1043
      %v2376 = vpop.f32.mrb[0].mxu0
      %v2377 = vadd.f32 0.0, %v2376
      %v2378 = vpop.f32.mrb[0].mxu0
      %2379 = vmatprep.mubr.f32.mxu0 0.0
      %2380 = vmatmul.mubr.f32.gmra.mrb[0].mxu0 %v1046
      %v2381 = vpop.f32.mrb[0].mxu0
      %v2382 = vadd.f32 0.0, %v2381
      %v2383 = vpop.f32.mrb[0].mxu0
      %2384 = vmatprep.mubr.f32.mxu0 0.0
      %2385 = vmatmul.mubr.f32.gmra.mrb[0].mxu0 %v1049
      %v2386 = vpop.f32.mrb[0].mxu0
      %v2387 = vadd.f32 0.0, %v2386
      %v2388 = vpop.f32.mrb[0].mxu0
      %2389 = vmatprep.mubr.f32.mxu0 0.0
      %2390 = vmatmul.mubr.f32.gmra.mrb[0].mxu0 %v1052
      %v2391 = vpop.f32.mrb[0].mxu0
      %v2392 = vadd.f32 0.0, %v2391
      %v2393 = vpop.f32.mrb[0].mxu0
      %2394 = vmatprep.mubr.f32.mxu0 0.0
      %2395 = vmatmul.mubr.f32.gmra.mrb[0].mxu0 %v1055
      %v2396 = vpop.f32.mrb[0].mxu0
      %v2397 = vadd.f32 0.0, %v2396
      %v2398 = vpop.f32.mrb[0].mxu0
      %2399 = vmatprep.mubr.f32.mxu0 0.0
      %2400 = vmatmul.mubr.f32.gmra.mrb[0].mxu0 %v1058
      %v2401 = vpop.f32.mrb[0].mxu0
      %v2402 = vadd.f32 0.0, %v2401
      %v2403 = vpop.f32.mrb[0].mxu0
      %2404 = vmatprep.mubr.f32.mxu0 0.0
      %2405 = vmatmul.mubr.f32.gmra.mrb[0].mxu0 %v1061
      %v2406 = vpop.f32.mrb[0].mxu0
      %v2407 = vadd.f32 0.0, %v2406
      %v2408 = vpop.f32.mrb[0].mxu0
      %2409 = vmatprep.mubr.f32.mxu0 0.0
      %2410 = vmatmul.mubr.f32.gmra.mrb[0].mxu0 %v1064
      %v2411 = vpop.f32.mrb[0].mxu0
      %v2412 = vadd.f32 0.0, %v2411
      %v2413 = vpop.f32.mrb[0].mxu0
      %2414 = vmatprep.mubr.f32.mxu0 0.0
      %2415 = vmatmul.mubr.f32.gmra.mrb[0].mxu0 %v1067
      %v2416 = vpop.f32.mrb[0].mxu0
      %v2417 = vadd.f32 0.0, %v2416
      %v2418 = vpop.f32.mrb[0].mxu0
      %2419 = vmatprep.mubr.f32.mxu0 0.0
      %2420 = vmatmul.mubr.f32.gmra.mrb[0].mxu0 %v1070
      %v2421 = vpop.f32.mrb[0].mxu0
      %v2422 = vadd.f32 0.0, %v2421
      %v2423 = vpop.f32.mrb[0].mxu0
      %2424 = vmatprep.mubr.f32.mxu0 0.0
      %2425 = vmatmul.mubr.f32.gmra.mrb[0].mxu0 %v1073
      %v2426 = vpop.f32.mrb[0].mxu0
      %v2427 = vadd.f32 0.0, %v2426
      %v2428 = vpop.f32.mrb[0].mxu0
      %2429 = vmatprep.mubr.f32.mxu0 0.0
      %2430 = vmatmul.mubr.f32.gmra.mrb[0].mxu0 %v1076
      %v2431 = vpop.f32.mrb[0].mxu0
      %v2432 = vadd.f32 0.0, %v2431
      %v2433 = vpop.f32.mrb[0].mxu0
      %2434 = vmatprep.mubr.f32.mxu0 0.0
      %2435 = vmatmul.mubr.f32.gmra.mrb[0].mxu0 %v1079
      %v2436 = vpop.f32.mrb[0].mxu0
      %v2437 = vadd.f32 0.0, %v2436
      %v2438 = vpop.f32.mrb[0].mxu0
      %2439 = vmatprep.mubr.f32.mxu0 0.0
      %2440 = vmatmul.mubr.f32.gmra.mrb[0].mxu0 %v1082
      %v2441 = vpop.f32.mrb[0].mxu0
      %v2442 = vadd.f32 0.0, %v2441
      %v2443 = vpop.f32.mrb[0].mxu0
      %2444 = vmatprep.mubr.f32.mxu0 0.0
      %2445 = vmatmul.mubr.f32.gmra.mrb[0].mxu0 %v1085
      %v2446 = vpop.f32.mrb[0].mxu0
      %v2447 = vadd.f32 0.0, %v2446
      %v2448 = vpop.f32.mrb[0].mxu0
      %2449 = vmatprep.mubr.f32.mxu0 0.0
      %2450 = vmatmul.mubr.f32.gmra.mrb[0].mxu0 %v1088
      %v2451 = vpop.f32.mrb[0].mxu0
      %v2452 = vadd.f32 0.0, %v2451
      %v2453 = vpop.f32.mrb[0].mxu0
      %2454 = vmatprep.mubr.f32.mxu0 0.0
      %2455 = vmatmul.mubr.f32.gmra.mrb[0].mxu0 %v1091
      %v2456 = vpop.f32.mrb[0].mxu0
      %v2457 = vadd.f32 0.0, %v2456
      %v2458 = vpop.f32.mrb[0].mxu0
      %2459 = vmatprep.mubr.f32.mxu0 0.0
      %2460 = vmatmul.mubr.f32.gmra.mrb[0].mxu0 %v1094
      %v2461 = vpop.f32.mrb[0].mxu0
      %v2462 = vadd.f32 0.0, %v2461
      %v2463 = vpop.f32.mrb[0].mxu0
      %2464 = vmatprep.mubr.f32.mxu0 0.0
      %2465 = vmatmul.mubr.f32.gmra.mrb[0].mxu0 %v1097
      %v2466 = vpop.f32.mrb[0].mxu0
      %v2467 = vadd.f32 0.0, %v2466
      %v2468 = vpop.f32.mrb[0].mxu0
      %2469 = vmatprep.mubr.f32.mxu0 0.0
      %2470 = vmatmul.mubr.f32.gmra.mrb[0].mxu0 %v1100
      %v2471 = vpop.f32.mrb[0].mxu0
      %v2472 = vadd.f32 0.0, %v2471
      %v2473 = vpop.f32.mrb[0].mxu0
      %2474 = vmatprep.mubr.f32.mxu0 0.0
      %2475 = vmatmul.mubr.f32.gmra.mrb[0].mxu0 %v1103
      %v2476 = vpop.f32.mrb[0].mxu0
      %v2477 = vadd.f32 0.0, %v2476
      %v2478 = vpop.f32.mrb[0].mxu0
      %2479 = vmatprep.mubr.f32.mxu0 0.0
      %2480 = vmatmul.mubr.f32.gmra.mrb[0].mxu0 %v1106
      %v2481 = vpop.f32.mrb[0].mxu0
      %v2482 = vadd.f32 0.0, %v2481
      %v2483 = vpop.f32.mrb[0].mxu0
      %2484 = vmatprep.mubr.f32.mxu0 0.0
      %2485 = vmatmul.mubr.f32.gmra.mrb[0].mxu0 %v1109
      %v2486 = vpop.f32.mrb[0].mxu0
      %v2487 = vadd.f32 0.0, %v2486
      %v2488 = vpop.f32.mrb[0].mxu0
      %2489 = vmatprep.mubr.f32.mxu0 0.0
      %2490 = vmatmul.mubr.f32.gmra.mrb[0].mxu0 %v1112
      %v2491 = vpop.f32.mrb[0].mxu0
      %v2492 = vadd.f32 0.0, %v2491
      %v2493 = vpop.f32.mrb[0].mxu0
      %2494 = vmatprep.mubr.f32.mxu0 0.0
      %2495 = vmatmul.mubr.f32.gmra.mrb[0].mxu0 %v1115
      %v2496 = vpop.f32.mrb[0].mxu0
      %v2497 = vadd.f32 0.0, %v2496
      %v2498 = vpop.f32.mrb[0].mxu0
      %2499 = vmatprep.mubr.f32.mxu0 0.0
      %2500 = vmatmul.mubr.f32.gmra.mrb[0].mxu0 %v1118
      %v2501 = vpop.f32.mrb[0].mxu0
      %v2502 = vadd.f32 0.0, %v2501
      %v2503 = vpop.f32.mrb[0].mxu0
      %2504 = vmatprep.mubr.f32.mxu0 0.0
      %2505 = vmatmul.mubr.f32.gmra.mrb[0].mxu0 %v1121
      %v2506 = vpop.f32.mrb[0].mxu0
      %v2507 = vadd.f32 0.0, %v2506
      %v2508 = vpop.f32.mrb[0].mxu0
      %2509 = vmatprep.mubr.f32.mxu0 0.0
      %2510 = vmatmul.mubr.f32.gmra.mrb[0].mxu0 %v1124
      %v2511 = vpop.f32.mrb[0].mxu0
      %v2512 = vadd.f32 0.0, %v2511
      %v2513 = vpop.f32.mrb[0].mxu0
      %2514 = vmatprep.mubr.f32.mxu0 0.0
      %2515 = vmatmul.mubr.f32.gmra.mrb[0].mxu0 %v1127
      %v2516 = vpop.f32.mrb[0].mxu0
      %v2517 = vadd.f32 0.0, %v2516
      %v2518 = vpop.f32.mrb[0].mxu0
      %2519 = vmatprep.mubr.f32.mxu0 0.0
      %2520 = vmatmul.mubr.f32.gmra.mrb[0].mxu0 %v1130
      %v2521 = vpop.f32.mrb[0].mxu0
      %v2522 = vadd.f32 0.0, %v2521
      %v2523 = vpop.f32.mrb[0].mxu0
      %2524 = vmatprep.mubr.f32.mxu0 0.0
      %2525 = vmatmul.mubr.f32.gmra.mrb[0].mxu0 %v1133
      %v2526 = vpop.f32.mrb[0].mxu0
      %v2527 = vadd.f32 0.0, %v2526
      %v2528 = vpop.f32.mrb[0].mxu0
      %2529 = vmatprep.mubr.f32.mxu0 0.0
      %2530 = vmatmul.mubr.f32.gmra.mrb[0].mxu0 %v1136
      %v2531 = vpop.f32.mrb[0].mxu0
      %v2532 = vadd.f32 0.0, %v2531
      %v2533 = vpop.f32.mrb[0].mxu0
      %2534 = vmatprep.mubr.f32.mxu0 0.0
      %2535 = vmatmul.mubr.f32.gmra.mrb[0].mxu0 %v1139
      %v2536 = vpop.f32.mrb[0].mxu0
      %v2537 = vadd.f32 0.0, %v2536
      %v2538 = vpop.f32.mrb[0].mxu0
      %2539 = vmatprep.mubr.f32.mxu0 0.0
      %2540 = vmatmul.mubr.f32.gmra.mrb[0].mxu0 %v1142
      %v2541 = vpop.f32.mrb[0].mxu0
      %v2542 = vadd.f32 0.0, %v2541
      %v2543 = vpop.f32.mrb[0].mxu0
      %2544 = vmatprep.mubr.f32.mxu0 0.0
      %2545 = vmatmul.mubr.f32.gmra.mrb[0].mxu0 %v1145
      %v2546 = vpop.f32.mrb[0].mxu0
      %v2547 = vadd.f32 0.0, %v2546
      %v2548 = vpop.f32.mrb[0].mxu0
      %2549 = vmatprep.mubr.f32.mxu0 0.0
      %2550 = vmatmul.mubr.f32.gmra.mrb[0].mxu0 %v1148
      %v2551 = vpop.f32.mrb[0].mxu0
      %v2552 = vadd.f32 0.0, %v2551
      %v2553 = vpop.f32.mrb[0].mxu0
      %2554 = vmatprep.mubr.f32.mxu0 0.0
      %2555 = vmatmul.mubr.f32.gmra.mrb[0].mxu0 %v1151
      %v2556 = vpop.f32.mrb[0].mxu0
      %v2557 = vadd.f32 0.0, %v2556
      %v2558 = vpop.f32.mrb[0].mxu0
      %2559 = vmatprep.mubr.f32.mxu0 0.0
      %2560 = vmatmul.mubr.f32.gmra.mrb[0].mxu0 %v1154
      %v2561 = vpop.f32.mrb[0].mxu0
      %v2562 = vadd.f32 0.0, %v2561
      %v2563 = vpop.f32.mrb[0].mxu0
      %2564 = vmatprep.mubr.f32.mxu0 0.0
      %2565 = vmatmul.mubr.f32.gmra.mrb[0].mxu0 %v1157
      %v2566 = vpop.f32.mrb[0].mxu0
      %v2567 = vadd.f32 0.0, %v2566
      %v2568 = vpop.f32.mrb[0].mxu0
      %2569 = vmatprep.mubr.f32.mxu0 0.0
      %2570 = vmatmul.mubr.f32.gmra.mrb[0].mxu0 %v1160
      %v2571 = vpop.f32.mrb[0].mxu0
      %v2572 = vadd.f32 0.0, %v2571
      %v2573 = vpop.f32.mrb[0].mxu0
      %2574 = vmatprep.mubr.f32.mxu0 0.0
      %2575 = vmatmul.mubr.f32.gmra.mrb[0].mxu0 %v1163
      %v2576 = vpop.f32.mrb[0].mxu0
      %v2577 = vadd.f32 0.0, %v2576
      %v2578 = vpop.f32.mrb[0].mxu0
      %2579 = vmatprep.mubr.f32.mxu0 0.0
      %2580 = vmatmul.mubr.f32.gmra.mrb[0].mxu0 %v1166
      %v2581 = vpop.f32.mrb[0].mxu0
      %v2582 = vadd.f32 0.0, %v2581
      %v2583 = vpop.f32.mrb[0].mxu0
      %2584 = vmatprep.mubr.f32.mxu0 0.0
      %2585 = vmatmul.mubr.f32.gmra.mrb[0].mxu0 %v1169
      %v2586 = vpop.f32.mrb[0].mxu0
      %v2587 = vadd.f32 0.0, %v2586
      %v2588 = vpop.f32.mrb[0].mxu0
      %2589 = vmatprep.mubr.f32.mxu0 0.0
      %2590 = vmatmul.mubr.f32.gmra.mrb[0].mxu0 %v1172
      %v2591 = vpop.f32.mrb[0].mxu0
      %v2592 = vadd.f32 0.0, %v2591
      %v2593 = vpop.f32.mrb[0].mxu0
      %2594 = vmatprep.mubr.f32.mxu0 0.0
      %2595 = vmatmul.mubr.f32.gmra.mrb[0].mxu0 %v1175
      %v2596 = vpop.f32.mrb[0].mxu0
      %v2597 = vadd.f32 0.0, %v2596
      %v2598 = vpop.f32.mrb[0].mxu0
      %2599 = vmatprep.mubr.f32.mxu0 0.0
      %2600 = vmatmul.mubr.f32.gmra.mrb[0].mxu0 %v1178
      %v2601 = vpop.f32.mrb[0].mxu0
      %v2602 = vadd.f32 0.0, %v2601
      %v2603 = vpop.f32.mrb[0].mxu0
      %2604 = vmatprep.mubr.f32.mxu0 0.0
      %2605 = vmatmul.mubr.f32.gmra.mrb[0].mxu0 %v1181
      %v2606 = vpop.f32.mrb[0].mxu0
      %v2607 = vadd.f32 0.0, %v2606
      %v2608 = vpop.f32.mrb[0].mxu0
      %2609 = vmatprep.mubr.f32.mxu0 0.0
      %2610 = vmatmul.mubr.f32.gmra.mrb[0].mxu0 %v1184
      %v2611 = vpop.f32.mrb[0].mxu0
      %v2612 = vadd.f32 0.0, %v2611
      %v2613 = vpop.f32.mrb[0].mxu0
      %2614 = vmatprep.mubr.f32.mxu0 0.0
      %2615 = vmatmul.mubr.f32.gmra.mrb[0].mxu0 %v1187
      %v2616 = vpop.f32.mrb[0].mxu0
      %v2617 = vadd.f32 0.0, %v2616
      %v2618 = vpop.f32.mrb[0].mxu0
      %2619 = vmatprep.mubr.f32.mxu0 0.0
      %2620 = vmatmul.mubr.f32.gmra.mrb[0].mxu0 %v1190
      %v2621 = vpop.f32.mrb[0].mxu0
      %v2622 = vadd.f32 0.0, %v2621
      %v2623 = vpop.f32.mrb[0].mxu0
      %2624 = vmatprep.mubr.f32.mxu0 0.0
      %2625 = vmatmul.mubr.f32.gmra.mrb[0].mxu0 %v1193
      %v2626 = vpop.f32.mrb[0].mxu0
      %v2627 = vadd.f32 0.0, %v2626
      %v2628 = vpop.f32.mrb[0].mxu0
      %2629 = vmatprep.mubr.f32.mxu0 0.0
      %2630 = vmatmul.mubr.f32.gmra.mrb[0].mxu0 %v1196
      %v2631 = vpop.f32.mrb[0].mxu0
      %v2632 = vadd.f32 0.0, %v2631
      %v2633 = vpop.f32.mrb[0].mxu0
      %2634 = vmatprep.mubr.f32.mxu0 0.0
      %2635 = vmatmul.mubr.f32.gmra.mrb[0].mxu0 %v1199
      %v2636 = vpop.f32.mrb[0].mxu0
      %v2637 = vadd.f32 0.0, %v2636
      %v2638 = vpop.f32.mrb[0].mxu0
      %2639 = vmatprep.mubr.f32.mxu0 0.0
      %2640 = vmatmul.mubr.f32.gmra.mrb[0].mxu0 %v1202
      %v2641 = vpop.f32.mrb[0].mxu0
      %v2642 = vadd.f32 0.0, %v2641
      %v2643 = vpop.f32.mrb[0].mxu0
      %2644 = vmatprep.mubr.f32.mxu0 0.0
      %2645 = vmatmul.mubr.f32.gmra.mrb[0].mxu0 %v1205
      %v2646 = vpop.f32.mrb[0].mxu0
      %v2647 = vadd.f32 0.0, %v2646
      %v2648 = vpop.f32.mrb[0].mxu0
      %2649 = vmatprep.mubr.f32.mxu0 0.0
      %2650 = vmatmul.mubr.f32.gmra.mrb[0].mxu0 %v1208
      %v2651 = vpop.f32.mrb[0].mxu0
      %v2652 = vadd.f32 0.0, %v2651
      %v2653 = vpop.f32.mrb[0].mxu0
      %2654 = vmatprep.mubr.f32.mxu0 0.0
      %2655 = vmatmul.mubr.f32.gmra.mrb[0].mxu0 %v1211
      %v2656 = vpop.f32.mrb[0].mxu0
      %v2657 = vadd.f32 0.0, %v2656
      %v2658 = vpop.f32.mrb[0].mxu0
      %2659 = vmatprep.mubr.f32.mxu0 0.0
      %2660 = vmatmul.mubr.f32.gmra.mrb[0].mxu0 %v1214
      %v2661 = vpop.f32.mrb[0].mxu0
      %v2662 = vadd.f32 0.0, %v2661
      %v2663 = vpop.f32.mrb[0].mxu0
      %2664 = vmatprep.mubr.f32.mxu0 0.0
      %2665 = vmatmul.mubr.f32.gmra.mrb[0].mxu0 %v1217
      %v2666 = vpop.f32.mrb[0].mxu0
      %v2667 = vadd.f32 0.0, %v2666
      %v2668 = vpop.f32.mrb[0].mxu0
      %2669 = vmatprep.mubr.f32.mxu0 0.0
      %2670 = vmatmul.mubr.f32.gmra.mrb[0].mxu0 %v1220
      %v2671 = vpop.f32.mrb[0].mxu0
      %v2672 = vadd.f32 0.0, %v2671
      %v2673 = vpop.f32.mrb[0].mxu0
      %2674 = vmatprep.mubr.f32.mxu0 0.0
      %2675 = vmatmul.mubr.f32.gmra.mrb[0].mxu0 %v1223
      %v2676 = vpop.f32.mrb[0].mxu0
      %v2677 = vadd.f32 0.0, %v2676
      %v2678 = vpop.f32.mrb[0].mxu0
      %2679 = vmatprep.mubr.f32.mxu0 0.0
      %2680 = vmatmul.mubr.f32.gmra.mrb[0].mxu0 %v1226
      %v2681 = vpop.f32.mrb[0].mxu0
      %v2682 = vadd.f32 0.0, %v2681
      %v2683 = vpop.f32.mrb[0].mxu0
      %2684 = vmatprep.mubr.f32.mxu0 0.0
      %2685 = vmatmul.mubr.f32.gmra.mrb[0].mxu0 %v1229
      %v2686 = vpop.f32.mrb[0].mxu0
      %v2687 = vadd.f32 0.0, %v2686
      %v2688 = vpop.f32.mrb[0].mxu0
      %2689 = vmatprep.mubr.f32.mxu0 0.0
      %2690 = vmatmul.mubr.f32.gmra.mrb[0].mxu0 %v1232
      %v2691 = vpop.f32.mrb[0].mxu0
      %v2692 = vadd.f32 0.0, %v2691
      %v2693 = vpop.f32.mrb[0].mxu0
      %2694 = vmatprep.mubr.f32.mxu0 0.0
      %2695 = vmatmul.mubr.f32.gmra.mrb[0].mxu0 %v1235
      %v2696 = vpop.f32.mrb[0].mxu0
      %v2697 = vadd.f32 0.0, %v2696
      %v2698 = vpop.f32.mrb[0].mxu0
      %2699 = vmatprep.mubr.f32.mxu0 0.0
      %2700 = vmatmul.mubr.f32.gmra.mrb[0].mxu0 %v1238
      %v2701 = vpop.f32.mrb[0].mxu0
      %v2702 = vadd.f32 0.0, %v2701
      %v2703 = vpop.f32.mrb[0].mxu0
      %2704 = vmatprep.mubr.f32.mxu0 0.0
      %2705 = vmatmul.mubr.f32.gmra.mrb[0].mxu0 %v1241
      %v2706 = vpop.f32.mrb[0].mxu0
      %v2707 = vadd.f32 0.0, %v2706
      %v2708 = vpop.f32.mrb[0].mxu0
      %2709 = vmatprep.mubr.f32.mxu0 0.0
      %2710 = vmatmul.mubr.f32.gmra.mrb[0].mxu0 %v1244
      %v2711 = vpop.f32.mrb[0].mxu0
      %v2712 = vadd.f32 0.0, %v2711
      %v2713 = vpop.f32.mrb[0].mxu0
      %2714 = vmatprep.mubr.f32.mxu0 0.0
      %2715 = vmatmul.mubr.f32.gmra.mrb[0].mxu0 %v1247
      %v2716 = vpop.f32.mrb[0].mxu0
      %v2717 = vadd.f32 0.0, %v2716
      %v2718 = vpop.f32.mrb[0].mxu0
      %2719 = vmatprep.mubr.f32.mxu0 0.0
      %2720 = vmatmul.mubr.f32.gmra.mrb[0].mxu0 %v1250
      %v2721 = vpop.f32.mrb[0].mxu0
      %v2722 = vadd.f32 0.0, %v2721
      %v2723 = vpop.f32.mrb[0].mxu0
      %2724 = vmatprep.mubr.f32.mxu0 0.0
      %2725 = vmatmul.mubr.f32.gmra.mrb[0].mxu0 %v1253
      %v2726 = vpop.f32.mrb[0].mxu0
      %v2727 = vadd.f32 0.0, %v2726
      %v2728 = vpop.f32.mrb[0].mxu0
      %2729 = vmatprep.mubr.f32.mxu0 0.0
      %2730 = vmatmul.mubr.f32.gmra.mrb[0].mxu0 %v1256
      %v2731 = vpop.f32.mrb[0].mxu0
      %v2732 = vadd.f32 0.0, %v2731
      %v2733 = vpop.f32.mrb[0].mxu0
      %2734 = vmatprep.mubr.f32.mxu0 0.0
      %2735 = vmatmul.mubr.f32.gmra.mrb[0].mxu0 %v1259
      %v2736 = vpop.f32.mrb[0].mxu0
      %v2737 = vadd.f32 0.0, %v2736
      %v2738 = vpop.f32.mrb[0].mxu0
      %2739 = vmatprep.mubr.f32.mxu0 0.0
      %2740 = vmatmul.mubr.f32.gmra.mrb[0].mxu0 %v1262
      %v2741 = vpop.f32.mrb[0].mxu0
      %v2742 = vadd.f32 0.0, %v2741
      %v2743 = vpop.f32.mrb[0].mxu0
      %2744 = vmatprep.mubr.f32.mxu0 0.0
      %2745 = vmatmul.mubr.f32.gmra.mrb[0].mxu0 %v1265
      %v2746 = vpop.f32.mrb[0].mxu0
      %v2747 = vadd.f32 0.0, %v2746
      %v2748 = vpop.f32.mrb[0].mxu0
      %2749 = vmatprep.mubr.f32.mxu0 0.0
      %2750 = vmatmul.mubr.f32.gmra.mrb[0].mxu0 %v1268
      %v2751 = vpop.f32.mrb[0].mxu0
      %v2752 = vadd.f32 0.0, %v2751
      %v2753 = vpop.f32.mrb[0].mxu0
      %2754 = vmatprep.mubr.f32.mxu0 0.0
      %2755 = vmatmul.mubr.f32.gmra.mrb[0].mxu0 %v1271
      %v2756 = vpop.f32.mrb[0].mxu0
      %v2757 = vadd.f32 0.0, %v2756
      %v2758 = vpop.f32.mrb[0].mxu0
      %2759 = vmatprep.mubr.f32.mxu0 0.0
      %2760 = vmatmul.mubr.f32.gmra.mrb[0].mxu0 %v1274
      %v2761 = vpop.f32.mrb[0].mxu0
      %v2762 = vadd.f32 0.0, %v2761
      %v2763 = vpop.f32.mrb[0].mxu0
      %2764 = vmatprep.mubr.f32.mxu0 0.0
      %2765 = vmatmul.mubr.f32.gmra.mrb[0].mxu0 %v1277
      %v2766 = vpop.f32.mrb[0].mxu0
      %v2767 = vadd.f32 0.0, %v2766
      %v2768 = vpop.f32.mrb[0].mxu0
      %2769 = vmatprep.mubr.f32.mxu0 0.0
      %2770 = vmatmul.mubr.f32.gmra.mrb[0].mxu0 %v1280
      %v2771 = vpop.f32.mrb[0].mxu0
      %v2772 = vadd.f32 0.0, %v2771
      %v2773 = vpop.f32.mrb[0].mxu0
      %2774 = vmatprep.mubr.f32.mxu0 0.0
      %2775 = vmatmul.mubr.f32.gmra.mrb[0].mxu0 %v1283
      %v2776 = vpop.f32.mrb[0].mxu0
      %v2777 = vadd.f32 0.0, %v2776
      %v2778 = vpop.f32.mrb[0].mxu0
      %2779 = vmatprep.mubr.f32.mxu0 0.0
      %2780 = vmatmul.mubr.f32.gmra.mrb[0].mxu0 %v1286
      %v2781 = vpop.f32.mrb[0].mxu0
      %v2782 = vadd.f32 0.0, %v2781
      %v2783 = vpop.f32.mrb[0].mxu0
      %2784 = vmatprep.mubr.f32.mxu0 0.0
      %2785 = vmatmul.mubr.f32.gmra.mrb[0].mxu0 %v1289
      %v2786 = vpop.f32.mrb[0].mxu0
      %v2787 = vadd.f32 0.0, %v2786
      %v2788 = vpop.f32.mrb[0].mxu0
      %2789 = vmatprep.mubr.f32.mxu0 0.0
      %2790 = vmatmul.mubr.f32.gmra.mrb[0].mxu0 %v1292
      %v2791 = vpop.f32.mrb[0].mxu0
      %v2792 = vadd.f32 0.0, %v2791
      %v2793 = vpop.f32.mrb[0].mxu0
      %2794 = vmatprep.mubr.f32.mxu0 0.0
      %2795 = vmatmul.mubr.f32.gmra.mrb[0].mxu0 %v1295
      %v2796 = vpop.f32.mrb[0].mxu0
      %v2797 = vadd.f32 0.0, %v2796
      %v2798 = vpop.f32.mrb[0].mxu0
      %2799 = vmatprep.mubr.f32.mxu0 0.0
      %2800 = vmatmul.mubr.f32.gmra.mrb[0].mxu0 %v1298
      %v2801 = vpop.f32.mrb[0].mxu0
      %v2802 = vadd.f32 0.0, %v2801
      %v2803 = vpop.f32.mrb[0].mxu0
      %2804 = vmatprep.mubr.f32.mxu0 0.0
      %2805 = vmatmul.mubr.f32.gmra.mrb[0].mxu0 %v1301
      %v2806 = vpop.f32.mrb[0].mxu0
      %v2807 = vadd.f32 0.0, %v2806
      %v2808 = vpop.f32.mrb[0].mxu0
      %2809 = vmatprep.mubr.f32.mxu0 0.0
      %2810 = vmatmul.mubr.f32.gmra.mrb[0].mxu0 %v1304
      %v2811 = vpop.f32.mrb[0].mxu0
      %v2812 = vadd.f32 0.0, %v2811
      %v2813 = vpop.f32.mrb[0].mxu0
      %2814 = vmatprep.mubr.f32.mxu0 0.0
      %2815 = vmatmul.mubr.f32.gmra.mrb[0].mxu0 %v1307
      %v2816 = vpop.f32.mrb[0].mxu0
      %v2817 = vadd.f32 0.0, %v2816
      %v2818 = vpop.f32.mrb[0].mxu0
      %2819 = vmatprep.mubr.f32.mxu0 0.0
      %2820 = vmatmul.mubr.f32.gmra.mrb[0].mxu0 %v1310
      %v2821 = vpop.f32.mrb[0].mxu0
      %v2822 = vadd.f32 0.0, %v2821
      %v2823 = vpop.f32.mrb[0].mxu0
      %2824 = vmatprep.mubr.f32.mxu0 0.0
      %2825 = vmatmul.mubr.f32.gmra.mrb[0].mxu0 %v1313
      %v2826 = vpop.f32.mrb[0].mxu0
      %v2827 = vadd.f32 0.0, %v2826
      %v2828 = vpop.f32.mrb[0].mxu0
      %2829 = vmatprep.mubr.f32.mxu0 0.0
      %2830 = vmatmul.mubr.f32.gmra.mrb[0].mxu0 %v1316
      %v2831 = vpop.f32.mrb[0].mxu0
      %v2832 = vadd.f32 0.0, %v2831
      %v2833 = vpop.f32.mrb[0].mxu0
      %2834 = vmatprep.mubr.f32.mxu0 0.0
      %2835 = vmatmul.mubr.f32.gmra.mrb[0].mxu0 %v1319
      %v2836 = vpop.f32.mrb[0].mxu0
      %v2837 = vadd.f32 0.0, %v2836
      %v2838 = vpop.f32.mrb[0].mxu0
      %2839 = vmatprep.mubr.f32.mxu0 0.0
      %2840 = vmatmul.mubr.f32.gmra.mrb[0].mxu0 %v1322
      %v2841 = vpop.f32.mrb[0].mxu0
      %v2842 = vadd.f32 0.0, %v2841
      %v2843 = vpop.f32.mrb[0].mxu0
      %2844 = vmatprep.mubr.f32.mxu0 0.0
      %2845 = vmatmul.mubr.f32.gmra.mrb[0].mxu0 %v1325
      %v2846 = vpop.f32.mrb[0].mxu0
      %v2847 = vadd.f32 0.0, %v2846
      %v2848 = vpop.f32.mrb[0].mxu0
      %2849 = vmatprep.mubr.f32.mxu0 0.0
      %2850 = vmatmul.mubr.f32.gmra.mrb[0].mxu0 %v1328
      %v2851 = vpop.f32.mrb[0].mxu0
      %v2852 = vadd.f32 0.0, %v2851
      %v2853 = vpop.f32.mrb[0].mxu0
      %2854 = vmatprep.mubr.f32.mxu0 0.0
      %2855 = vmatmul.mubr.f32.gmra.mrb[0].mxu0 %v1331
      %v2856 = vpop.f32.mrb[0].mxu0
      %v2857 = vadd.f32 0.0, %v2856
      %v2858 = vpop.f32.mrb[0].mxu0
      %2859 = vmatprep.mubr.f32.mxu0 0.0
      %2860 = vmatmul.mubr.f32.gmra.mrb[0].mxu0 %v1334
      %v2861 = vpop.f32.mrb[0].mxu0
      %v2862 = vadd.f32 0.0, %v2861
      %v2863 = vpop.f32.mrb[0].mxu0
      %2864 = vmatprep.mubr.f32.mxu0 0.0
      %2865 = vmatmul.mubr.f32.gmra.mrb[0].mxu0 %v1337
      %v2866 = vpop.f32.mrb[0].mxu0
      %v2867 = vadd.f32 0.0, %v2866
      %v2868 = vpop.f32.mrb[0].mxu0
      %2869 = vmatprep.mubr.f32.mxu0 0.0
      %2870 = vmatmul.mubr.f32.gmra.mrb[0].mxu0 %v1340
      %v2871 = vpop.f32.mrb[0].mxu0
      %v2872 = vadd.f32 0.0, %v2871
      %v2873 = vpop.f32.mrb[0].mxu0
      %2874 = vmatprep.mubr.f32.mxu0 0.0
      %2875 = vmatmul.mubr.f32.gmra.mrb[0].mxu0 %v1343
      %v2876 = vpop.f32.mrb[0].mxu0
      %v2877 = vadd.f32 0.0, %v2876
      %v2878 = vpop.f32.mrb[0].mxu0
      %2879 = vmatprep.mubr.f32.mxu0 0.0
      %2880 = vmatmul.mubr.f32.gmra.mrb[0].mxu0 %v1346
      %v2881 = vpop.f32.mrb[0].mxu0
      %v2882 = vadd.f32 0.0, %v2881
      %v2883 = vpop.f32.mrb[0].mxu0
      %2884 = vmatprep.mubr.f32.mxu0 0.0
      %2885 = vmatmul.mubr.f32.gmra.mrb[0].mxu0 %v1349
      %v2886 = vpop.f32.mrb[0].mxu0
      %v2887 = vadd.f32 0.0, %v2886
      %v2888 = vpop.f32.mrb[0].mxu0
      %2889 = vmatprep.mubr.f32.mxu0 0.0
      %2890 = vmatmul.mubr.f32.gmra.mrb[0].mxu0 %v1352
      %v2891 = vpop.f32.mrb[0].mxu0
      %v2892 = vadd.f32 0.0, %v2891
      %v2893 = vpop.f32.mrb[0].mxu0
      %2894 = vmatprep.mubr.f32.mxu0 0.0
      %2895 = vmatmul.mubr.f32.gmra.mrb[0].mxu0 %v1355
      %v2896 = vpop.f32.mrb[0].mxu0
      %v2897 = vadd.f32 0.0, %v2896
      %v2898 = vpop.f32.mrb[0].mxu0
      %2899 = vmatprep.mubr.f32.mxu0 0.0
      %2900 = vmatmul.mubr.f32.gmra.mrb[0].mxu0 %v1358
      %v2901 = vpop.f32.mrb[0].mxu0
      %v2902 = vadd.f32 0.0, %v2901
      %v2903 = vpop.f32.mrb[0].mxu0
      %2904 = vmatprep.mubr.f32.mxu0 0.0
      %2905 = vmatmul.mubr.f32.gmra.mrb[0].mxu0 %v1361
      %v2906 = vpop.f32.mrb[0].mxu0
      %v2907 = vadd.f32 0.0, %v2906
      %v2908 = vpop.f32.mrb[0].mxu0
      %2909 = vmatprep.mubr.f32.mxu0 0.0
      %2910 = vmatmul.mubr.f32.gmra.mrb[0].mxu0 %v1364
      %v2911 = vpop.f32.mrb[0].mxu0
      %v2912 = vadd.f32 0.0, %v2911
      %v2913 = vpop.f32.mrb[0].mxu0
      %2914 = vmatprep.mubr.f32.mxu0 0.0
      %2915 = vmatmul.mubr.f32.gmra.mrb[0].mxu0 %v1367
      %v2916 = vpop.f32.mrb[0].mxu0
      %v2917 = vadd.f32 0.0, %v2916
      %v2918 = vpop.f32.mrb[0].mxu0
      %2919 = vmatprep.mubr.f32.mxu0 0.0
      %2920 = vmatmul.mubr.f32.gmra.mrb[0].mxu0 %v1370
      %v2921 = vpop.f32.mrb[0].mxu0
      %v2922 = vadd.f32 0.0, %v2921
      %v2923 = vpop.f32.mrb[0].mxu0
      %2924 = vmatprep.mubr.f32.mxu0 0.0
      %2925 = vmatmul.mubr.f32.gmra.mrb[0].mxu0 %v1373
      %v2926 = vpop.f32.mrb[0].mxu0
      %v2927 = vadd.f32 0.0, %v2926
      %v2928 = vpop.f32.mrb[0].mxu0
      %2929 = vmatprep.mubr.f32.mxu0 0.0
      %2930 = vmatmul.mubr.f32.gmra.mrb[0].mxu0 %v1376
      %v2931 = vpop.f32.mrb[0].mxu0
      %v2932 = vadd.f32 0.0, %v2931
      %v2933 = vpop.f32.mrb[0].mxu0
      %2934 = vmatprep.mubr.f32.mxu0 0.0
      %2935 = vmatmul.mubr.f32.gmra.mrb[0].mxu0 %v1379
      %v2936 = vpop.f32.mrb[0].mxu0
      %v2937 = vadd.f32 0.0, %v2936
      %v2938 = vpop.f32.mrb[0].mxu0
      %2939 = vmatprep.mubr.f32.mxu0 0.0
      %2940 = vmatmul.mubr.f32.gmra.mrb[0].mxu0 %v1382
      %v2941 = vpop.f32.mrb[0].mxu0
      %v2942 = vadd.f32 0.0, %v2941
      %v2943 = vpop.f32.mrb[0].mxu0
      %2944 = vmatprep.mubr.f32.mxu0 0.0
      %2945 = vmatmul.mubr.f32.gmra.mrb[0].mxu0 %v1385
      %v2946 = vpop.f32.mrb[0].mxu0
      %v2947 = vadd.f32 0.0, %v2946
      %v2948 = vpop.f32.mrb[0].mxu0
      %2949 = vmatprep.mubr.f32.mxu0 0.0
      %2950 = vmatmul.mubr.f32.gmra.mrb[0].mxu0 %v1388
      %v2951 = vpop.f32.mrb[0].mxu0
      %v2952 = vadd.f32 0.0, %v2951
      %v2953 = vpop.f32.mrb[0].mxu0
      %2954 = vdwg.mxu0
      %vm2955 = vcmask 130048
      %2956 = vst.msk [vmem:[%s185] sm:$0xff] %vm2955, %v1457
      %2957 = vst.msk [vmem:[%s185 + $0x8] sm:$0xff] %vm2955, %v1462
      %2958 = vst.msk [vmem:[%s185 + $0x10] sm:$0xff] %vm2955, %v1467
      %2959 = vst.msk [vmem:[%s185 + $0x18] sm:$0xff] %vm2955, %v1472
      %2960 = vst.msk [vmem:[%s185 + $0x20] sm:$0xff] %vm2955, %v1477
      %2961 = vst.msk [vmem:[%s185 + $0x28] sm:$0xff] %vm2955, %v1482
      %2962 = vst.msk [vmem:[%s185 + $0x30] sm:$0xff] %vm2955, %v1487
      %2963 = vst.msk [vmem:[%s185 + $0x38] sm:$0xff] %vm2955, %v1492
      %2964 = vst.msk [vmem:[%s185 + $0x40] sm:$0xff] %vm2955, %v1497
      %2965 = vst.msk [vmem:[%s185 + $0x48] sm:$0xff] %vm2955, %v1502
      %2966 = vst.msk [vmem:[%s185 + $0x50] sm:$0xff] %vm2955, %v1507
      %2967 = vst.msk [vmem:[%s185 + $0x58] sm:$0xff] %vm2955, %v1512
      %2968 = vst.msk [vmem:[%s185 + $0x60] sm:$0xff] %vm2955, %v1517
      %2969 = vst.msk [vmem:[%s185 + $0x68] sm:$0xff] %vm2955, %v1522
      %2970 = vst.msk [vmem:[%s185 + $0x70] sm:$0xff] %vm2955, %v1527
      %2971 = vst.msk [vmem:[%s185 + $0x78] sm:$0xff] %vm2955, %v1532
      %2972 = vst.msk [vmem:[%s185 + $0x80] sm:$0xff] %vm2955, %v1537
      %2973 = vst.msk [vmem:[%s185 + $0x88] sm:$0xff] %vm2955, %v1542
      %2974 = vst.msk [vmem:[%s185 + $0x90] sm:$0xff] %vm2955, %v1547
      %2975 = vst.msk [vmem:[%s185 + $0x98] sm:$0xff] %vm2955, %v1552
      %2976 = vst.msk [vmem:[%s185 + $0xa0] sm:$0xff] %vm2955, %v1557
      %2977 = vst.msk [vmem:[%s185 + $0xa8] sm:$0xff] %vm2955, %v1562
      %2978 = vst.msk [vmem:[%s185 + $0xb0] sm:$0xff] %vm2955, %v1567
      %2979 = vst.msk [vmem:[%s185 + $0xb8] sm:$0xff] %vm2955, %v1572
      %2980 = vst.msk [vmem:[%s185 + $0xc0] sm:$0xff] %vm2955, %v1577
      %2981 = vst.msk [vmem:[%s185 + $0xc8] sm:$0xff] %vm2955, %v1582
      %2982 = vst.msk [vmem:[%s185 + $0xd0] sm:$0xff] %vm2955, %v1587
      %2983 = vst.msk [vmem:[%s185 + $0xd8] sm:$0xff] %vm2955, %v1592
      %2984 = vst.msk [vmem:[%s185 + $0xe0] sm:$0xff] %vm2955, %v1597
      %2985 = vst.msk [vmem:[%s185 + $0xe8] sm:$0xff] %vm2955, %v1602
      %2986 = vst.msk [vmem:[%s185 + $0xf0] sm:$0xff] %vm2955, %v1607
      %2987 = vst.msk [vmem:[%s185 + $0xf8] sm:$0xff] %vm2955, %v1612
      %2988 = vst.msk [vmem:[%s185 + $0x100] sm:$0xff] %vm2955, %v1617
      %2989 = vst.msk [vmem:[%s185 + $0x108] sm:$0xff] %vm2955, %v1622
      %2990 = vst.msk [vmem:[%s185 + $0x110] sm:$0xff] %vm2955, %v1627
      %2991 = vst.msk [vmem:[%s185 + $0x118] sm:$0xff] %vm2955, %v1632
      %2992 = vst.msk [vmem:[%s185 + $0x120] sm:$0xff] %vm2955, %v1637
      %2993 = vst.msk [vmem:[%s185 + $0x128] sm:$0xff] %vm2955, %v1642
      %2994 = vst.msk [vmem:[%s185 + $0x130] sm:$0xff] %vm2955, %v1647
      %2995 = vst.msk [vmem:[%s185 + $0x138] sm:$0xff] %vm2955, %v1652
      %2996 = vst.msk [vmem:[%s185 + $0x140] sm:$0xff] %vm2955, %v1657
      %2997 = vst.msk [vmem:[%s185 + $0x148] sm:$0xff] %vm2955, %v1662
      %2998 = vst.msk [vmem:[%s185 + $0x150] sm:$0xff] %vm2955, %v1667
      %2999 = vst.msk [vmem:[%s185 + $0x158] sm:$0xff] %vm2955, %v1672
      %3000 = vst.msk [vmem:[%s185 + $0x160] sm:$0xff] %vm2955, %v1677
      %3001 = vst.msk [vmem:[%s185 + $0x168] sm:$0xff] %vm2955, %v1682
      %3002 = vst.msk [vmem:[%s185 + $0x170] sm:$0xff] %vm2955, %v1687
      %3003 = vst.msk [vmem:[%s185 + $0x178] sm:$0xff] %vm2955, %v1692
      %3004 = vst.msk [vmem:[%s185 + $0x180] sm:$0xff] %vm2955, %v1697
      %3005 = vst.msk [vmem:[%s185 + $0x188] sm:$0xff] %vm2955, %v1702
      %3006 = vst.msk [vmem:[%s185 + $0x190] sm:$0xff] %vm2955, %v1707
      %3007 = vst.msk [vmem:[%s185 + $0x198] sm:$0xff] %vm2955, %v1712
      %3008 = vst.msk [vmem:[%s185 + $0x1a0] sm:$0xff] %vm2955, %v1717
      %3009 = vst.msk [vmem:[%s185 + $0x1a8] sm:$0xff] %vm2955, %v1722
      %3010 = vst.msk [vmem:[%s185 + $0x1b0] sm:$0xff] %vm2955, %v1727
      %3011 = vst.msk [vmem:[%s185 + $0x1b8] sm:$0xff] %vm2955, %v1732
      %3012 = vst.msk [vmem:[%s185 + $0x1c0] sm:$0xff] %vm2955, %v1737
      %3013 = vst.msk [vmem:[%s185 + $0x1c8] sm:$0xff] %vm2955, %v1742
      %3014 = vst.msk [vmem:[%s185 + $0x1d0] sm:$0xff] %vm2955, %v1747
      %3015 = vst.msk [vmem:[%s185 + $0x1d8] sm:$0xff] %vm2955, %v1752
      %3016 = vst.msk [vmem:[%s185 + $0x1e0] sm:$0xff] %vm2955, %v1757
      %3017 = vst.msk [vmem:[%s185 + $0x1e8] sm:$0xff] %vm2955, %v1762
      %3018 = vst.msk [vmem:[%s185 + $0x1f0] sm:$0xff] %vm2955, %v1767
      %3019 = vst.msk [vmem:[%s185 + $0x1f8] sm:$0xff] %vm2955, %v1772
      %3020 = vst.msk [vmem:[%s185 + $0x200] sm:$0xff] %vm2955, %v1777
      %3021 = vst.msk [vmem:[%s185 + $0x208] sm:$0xff] %vm2955, %v1782
      %3022 = vst.msk [vmem:[%s185 + $0x210] sm:$0xff] %vm2955, %v1787
      %3023 = vst.msk [vmem:[%s185 + $0x218] sm:$0xff] %vm2955, %v1792
      %3024 = vst.msk [vmem:[%s185 + $0x220] sm:$0xff] %vm2955, %v1797
      %3025 = vst.msk [vmem:[%s185 + $0x228] sm:$0xff] %vm2955, %v1802
      %3026 = vst.msk [vmem:[%s185 + $0x230] sm:$0xff] %vm2955, %v1807
      %3027 = vst.msk [vmem:[%s185 + $0x238] sm:$0xff] %vm2955, %v1812
      %3028 = vst.msk [vmem:[%s185 + $0x240] sm:$0xff] %vm2955, %v1817
      %3029 = vst.msk [vmem:[%s185 + $0x248] sm:$0xff] %vm2955, %v1822
      %3030 = vst.msk [vmem:[%s185 + $0x250] sm:$0xff] %vm2955, %v1827
      %3031 = vst.msk [vmem:[%s185 + $0x258] sm:$0xff] %vm2955, %v1832
      %3032 = vst.msk [vmem:[%s185 + $0x260] sm:$0xff] %vm2955, %v1837
      %3033 = vst.msk [vmem:[%s185 + $0x268] sm:$0xff] %vm2955, %v1842
      %3034 = vst.msk [vmem:[%s185 + $0x270] sm:$0xff] %vm2955, %v1847
      %3035 = vst.msk [vmem:[%s185 + $0x278] sm:$0xff] %vm2955, %v1852
      %3036 = vst.msk [vmem:[%s185 + $0x280] sm:$0xff] %vm2955, %v1857
      %3037 = vst.msk [vmem:[%s185 + $0x288] sm:$0xff] %vm2955, %v1862
      %3038 = vst.msk [vmem:[%s185 + $0x290] sm:$0xff] %vm2955, %v1867
      %3039 = vst.msk [vmem:[%s185 + $0x298] sm:$0xff] %vm2955, %v1872
      %3040 = vst.msk [vmem:[%s185 + $0x2a0] sm:$0xff] %vm2955, %v1877
      %3041 = vst.msk [vmem:[%s185 + $0x2a8] sm:$0xff] %vm2955, %v1882
      %3042 = vst.msk [vmem:[%s185 + $0x2b0] sm:$0xff] %vm2955, %v1887
      %3043 = vst.msk [vmem:[%s185 + $0x2b8] sm:$0xff] %vm2955, %v1892
      %3044 = vst.msk [vmem:[%s185 + $0x2c0] sm:$0xff] %vm2955, %v1897
      %3045 = vst.msk [vmem:[%s185 + $0x2c8] sm:$0xff] %vm2955, %v1902
      %3046 = vst.msk [vmem:[%s185 + $0x2d0] sm:$0xff] %vm2955, %v1907
      %3047 = vst.msk [vmem:[%s185 + $0x2d8] sm:$0xff] %vm2955, %v1912
      %3048 = vst.msk [vmem:[%s185 + $0x2e0] sm:$0xff] %vm2955, %v1917
      %3049 = vst.msk [vmem:[%s185 + $0x2e8] sm:$0xff] %vm2955, %v1922
      %3050 = vst.msk [vmem:[%s185 + $0x2f0] sm:$0xff] %vm2955, %v1927
      %3051 = vst.msk [vmem:[%s185 + $0x2f8] sm:$0xff] %vm2955, %v1932
      %3052 = vst.msk [vmem:[%s185 + $0x300] sm:$0xff] %vm2955, %v1937
      %3053 = vst.msk [vmem:[%s185 + $0x308] sm:$0xff] %vm2955, %v1942
      %3054 = vst.msk [vmem:[%s185 + $0x310] sm:$0xff] %vm2955, %v1947
      %3055 = vst.msk [vmem:[%s185 + $0x318] sm:$0xff] %vm2955, %v1952
      %3056 = vst.msk [vmem:[%s185 + $0x320] sm:$0xff] %vm2955, %v1957
      %3057 = vst.msk [vmem:[%s185 + $0x328] sm:$0xff] %vm2955, %v1962
      %3058 = vst.msk [vmem:[%s185 + $0x330] sm:$0xff] %vm2955, %v1967
      %3059 = vst.msk [vmem:[%s185 + $0x338] sm:$0xff] %vm2955, %v1972
      %3060 = vst.msk [vmem:[%s185 + $0x340] sm:$0xff] %vm2955, %v1977
      %3061 = vst.msk [vmem:[%s185 + $0x348] sm:$0xff] %vm2955, %v1982
      %3062 = vst.msk [vmem:[%s185 + $0x350] sm:$0xff] %vm2955, %v1987
      %3063 = vst.msk [vmem:[%s185 + $0x358] sm:$0xff] %vm2955, %v1992
      %3064 = vst.msk [vmem:[%s185 + $0x360] sm:$0xff] %vm2955, %v1997
      %3065 = vst.msk [vmem:[%s185 + $0x368] sm:$0xff] %vm2955, %v2002
      %3066 = vst.msk [vmem:[%s185 + $0x370] sm:$0xff] %vm2955, %v2007
      %3067 = vst.msk [vmem:[%s185 + $0x378] sm:$0xff] %vm2955, %v2012
      %3068 = vst.msk [vmem:[%s185 + $0x380] sm:$0xff] %vm2955, %v2017
      %3069 = vst.msk [vmem:[%s185 + $0x388] sm:$0xff] %vm2955, %v2022
      %3070 = vst.msk [vmem:[%s185 + $0x390] sm:$0xff] %vm2955, %v2027
      %3071 = vst.msk [vmem:[%s185 + $0x398] sm:$0xff] %vm2955, %v2032
      %3072 = vst.msk [vmem:[%s185 + $0x3a0] sm:$0xff] %vm2955, %v2037
      %3073 = vst.msk [vmem:[%s185 + $0x3a8] sm:$0xff] %vm2955, %v2042
      %3074 = vst.msk [vmem:[%s185 + $0x3b0] sm:$0xff] %vm2955, %v2047
      %3075 = vst.msk [vmem:[%s185 + $0x3b8] sm:$0xff] %vm2955, %v2052
      %3076 = vst.msk [vmem:[%s185 + $0x3c0] sm:$0xff] %vm2955, %v2057
      %3077 = vst.msk [vmem:[%s185 + $0x3c8] sm:$0xff] %vm2955, %v2062
      %3078 = vst.msk [vmem:[%s185 + $0x3d0] sm:$0xff] %vm2955, %v2067
      %3079 = vst.msk [vmem:[%s185 + $0x3d8] sm:$0xff] %vm2955, %v2072
      %3080 = vst.msk [vmem:[%s185 + $0x3e0] sm:$0xff] %vm2955, %v2077
      %3081 = vst.msk [vmem:[%s185 + $0x3e8] sm:$0xff] %vm2955, %v2082
      %3082 = vst.msk [vmem:[%s185 + $0x3f0] sm:$0xff] %vm2955, %v2087
      %3083 = vst.msk [vmem:[%s185 + $0x3f8] sm:$0xff] %vm2955, %v2092
      %3084 = vst.msk [vmem:[%s185 + $0x400] sm:$0xff] %vm2955, %v2097
      %3085 = vst.msk [vmem:[%s185 + $0x408] sm:$0xff] %vm2955, %v2102
      %3086 = vst.msk [vmem:[%s185 + $0x410] sm:$0xff] %vm2955, %v2107
      %3087 = vst.msk [vmem:[%s185 + $0x418] sm:$0xff] %vm2955, %v2112
      %3088 = vst.msk [vmem:[%s185 + $0x420] sm:$0xff] %vm2955, %v2117
      %3089 = vst.msk [vmem:[%s185 + $0x428] sm:$0xff] %vm2955, %v2122
      %3090 = vst.msk [vmem:[%s185 + $0x430] sm:$0xff] %vm2955, %v2127
      %3091 = vst.msk [vmem:[%s185 + $0x438] sm:$0xff] %vm2955, %v2132
      %3092 = vst.msk [vmem:[%s185 + $0x440] sm:$0xff] %vm2955, %v2137
      %3093 = vst.msk [vmem:[%s185 + $0x448] sm:$0xff] %vm2955, %v2142
      %3094 = vst.msk [vmem:[%s185 + $0x450] sm:$0xff] %vm2955, %v2147
      %3095 = vst.msk [vmem:[%s185 + $0x458] sm:$0xff] %vm2955, %v2152
      %3096 = vst.msk [vmem:[%s185 + $0x460] sm:$0xff] %vm2955, %v2157
      %3097 = vst.msk [vmem:[%s185 + $0x468] sm:$0xff] %vm2955, %v2162
      %3098 = vst.msk [vmem:[%s185 + $0x470] sm:$0xff] %vm2955, %v2167
      %3099 = vst.msk [vmem:[%s185 + $0x478] sm:$0xff] %vm2955, %v2172
      %3100 = vst.msk [vmem:[%s185 + $0x480] sm:$0xff] %vm2955, %v2177
      %3101 = vst.msk [vmem:[%s185 + $0x488] sm:$0xff] %vm2955, %v2182
      %3102 = vst.msk [vmem:[%s185 + $0x490] sm:$0xff] %vm2955, %v2187
      %3103 = vst.msk [vmem:[%s185 + $0x498] sm:$0xff] %vm2955, %v2192
      %3104 = vst.msk [vmem:[%s185 + $0x4a0] sm:$0xff] %vm2955, %v2197
      %3105 = vst.msk [vmem:[%s185 + $0x4a8] sm:$0xff] %vm2955, %v2202
      %3106 = vst.msk [vmem:[%s185 + $0x4b0] sm:$0xff] %vm2955, %v2207
      %3107 = vst.msk [vmem:[%s185 + $0x4b8] sm:$0xff] %vm2955, %v2212
      %3108 = vst.msk [vmem:[%s185 + $0x4c0] sm:$0xff] %vm2955, %v2217
      %3109 = vst.msk [vmem:[%s185 + $0x4c8] sm:$0xff] %vm2955, %v2222
      %3110 = vst.msk [vmem:[%s185 + $0x4d0] sm:$0xff] %vm2955, %v2227
      %3111 = vst.msk [vmem:[%s185 + $0x4d8] sm:$0xff] %vm2955, %v2232
      %3112 = vst.msk [vmem:[%s185 + $0x4e0] sm:$0xff] %vm2955, %v2237
      %3113 = vst.msk [vmem:[%s185 + $0x4e8] sm:$0xff] %vm2955, %v2242
      %3114 = vst.msk [vmem:[%s185 + $0x4f0] sm:$0xff] %vm2955, %v2247
      %3115 = vst.msk [vmem:[%s185 + $0x4f8] sm:$0xff] %vm2955, %v2252
      %3116 = vst.msk [vmem:[%s185 + $0x500] sm:$0xff] %vm2955, %v2257
      %3117 = vst.msk [vmem:[%s185 + $0x508] sm:$0xff] %vm2955, %v2262
      %3118 = vst.msk [vmem:[%s185 + $0x510] sm:$0xff] %vm2955, %v2267
      %3119 = vst.msk [vmem:[%s185 + $0x518] sm:$0xff] %vm2955, %v2272
      %3120 = vst.msk [vmem:[%s185 + $0x520] sm:$0xff] %vm2955, %v2277
      %3121 = vst.msk [vmem:[%s185 + $0x528] sm:$0xff] %vm2955, %v2282
      %3122 = vst.msk [vmem:[%s185 + $0x530] sm:$0xff] %vm2955, %v2287
      %3123 = vst.msk [vmem:[%s185 + $0x538] sm:$0xff] %vm2955, %v2292
      %3124 = vst.msk [vmem:[%s185 + $0x540] sm:$0xff] %vm2955, %v2297
      %3125 = vst.msk [vmem:[%s185 + $0x548] sm:$0xff] %vm2955, %v2302
      %3126 = vst.msk [vmem:[%s185 + $0x550] sm:$0xff] %vm2955, %v2307
      %3127 = vst.msk [vmem:[%s185 + $0x558] sm:$0xff] %vm2955, %v2312
      %3128 = vst.msk [vmem:[%s185 + $0x560] sm:$0xff] %vm2955, %v2317
      %3129 = vst.msk [vmem:[%s185 + $0x568] sm:$0xff] %vm2955, %v2322
      %3130 = vst.msk [vmem:[%s185 + $0x570] sm:$0xff] %vm2955, %v2327
      %3131 = vst.msk [vmem:[%s185 + $0x578] sm:$0xff] %vm2955, %v2332
      %3132 = vst.msk [vmem:[%s185 + $0x580] sm:$0xff] %vm2955, %v2337
      %3133 = vst.msk [vmem:[%s185 + $0x588] sm:$0xff] %vm2955, %v2342
      %3134 = vst.msk [vmem:[%s185 + $0x590] sm:$0xff] %vm2955, %v2347
      %3135 = vst.msk [vmem:[%s185 + $0x598] sm:$0xff] %vm2955, %v2352
      %3136 = vst.msk [vmem:[%s185 + $0x5a0] sm:$0xff] %vm2955, %v2357
      %3137 = vst.msk [vmem:[%s185 + $0x5a8] sm:$0xff] %vm2955, %v2362
      %3138 = vst.msk [vmem:[%s185 + $0x5b0] sm:$0xff] %vm2955, %v2367
      %3139 = vst.msk [vmem:[%s185 + $0x5b8] sm:$0xff] %vm2955, %v2372
      %3140 = vst.msk [vmem:[%s185 + $0x5c0] sm:$0xff] %vm2955, %v2377
      %3141 = vst.msk [vmem:[%s185 + $0x5c8] sm:$0xff] %vm2955, %v2382
      %3142 = vst.msk [vmem:[%s185 + $0x5d0] sm:$0xff] %vm2955, %v2387
      %3143 = vst.msk [vmem:[%s185 + $0x5d8] sm:$0xff] %vm2955, %v2392
      %3144 = vst.msk [vmem:[%s185 + $0x5e0] sm:$0xff] %vm2955, %v2397
      %3145 = vst.msk [vmem:[%s185 + $0x5e8] sm:$0xff] %vm2955, %v2402
      %3146 = vst.msk [vmem:[%s185 + $0x5f0] sm:$0xff] %vm2955, %v2407
      %3147 = vst.msk [vmem:[%s185 + $0x5f8] sm:$0xff] %vm2955, %v2412
      %3148 = vst.msk [vmem:[%s185 + $0x600] sm:$0xff] %vm2955, %v2417
      %3149 = vst.msk [vmem:[%s185 + $0x608] sm:$0xff] %vm2955, %v2422
      %3150 = vst.msk [vmem:[%s185 + $0x610] sm:$0xff] %vm2955, %v2427
      %3151 = vst.msk [vmem:[%s185 + $0x618] sm:$0xff] %vm2955, %v2432
      %3152 = vst.msk [vmem:[%s185 + $0x620] sm:$0xff] %vm2955, %v2437
      %3153 = vst.msk [vmem:[%s185 + $0x628] sm:$0xff] %vm2955, %v2442
      %3154 = vst.msk [vmem:[%s185 + $0x630] sm:$0xff] %vm2955, %v2447
      %3155 = vst.msk [vmem:[%s185 + $0x638] sm:$0xff] %vm2955, %v2452
      %3156 = vst.msk [vmem:[%s185 + $0x640] sm:$0xff] %vm2955, %v2457
      %3157 = vst.msk [vmem:[%s185 + $0x648] sm:$0xff] %vm2955, %v2462
      %3158 = vst.msk [vmem:[%s185 + $0x650] sm:$0xff] %vm2955, %v2467
      %3159 = vst.msk [vmem:[%s185 + $0x658] sm:$0xff] %vm2955, %v2472
      %3160 = vst.msk [vmem:[%s185 + $0x660] sm:$0xff] %vm2955, %v2477
      %3161 = vst.msk [vmem:[%s185 + $0x668] sm:$0xff] %vm2955, %v2482
      %3162 = vst.msk [vmem:[%s185 + $0x670] sm:$0xff] %vm2955, %v2487
      %3163 = vst.msk [vmem:[%s185 + $0x678] sm:$0xff] %vm2955, %v2492
      %3164 = vst.msk [vmem:[%s185 + $0x680] sm:$0xff] %vm2955, %v2497
      %3165 = vst.msk [vmem:[%s185 + $0x688] sm:$0xff] %vm2955, %v2502
      %3166 = vst.msk [vmem:[%s185 + $0x690] sm:$0xff] %vm2955, %v2507
      %3167 = vst.msk [vmem:[%s185 + $0x698] sm:$0xff] %vm2955, %v2512
      %3168 = vst.msk [vmem:[%s185 + $0x6a0] sm:$0xff] %vm2955, %v2517
      %3169 = vst.msk [vmem:[%s185 + $0x6a8] sm:$0xff] %vm2955, %v2522
      %3170 = vst.msk [vmem:[%s185 + $0x6b0] sm:$0xff] %vm2955, %v2527
      %3171 = vst.msk [vmem:[%s185 + $0x6b8] sm:$0xff] %vm2955, %v2532
      %3172 = vst.msk [vmem:[%s185 + $0x6c0] sm:$0xff] %vm2955, %v2537
      %3173 = vst.msk [vmem:[%s185 + $0x6c8] sm:$0xff] %vm2955, %v2542
      %3174 = vst.msk [vmem:[%s185 + $0x6d0] sm:$0xff] %vm2955, %v2547
      %3175 = vst.msk [vmem:[%s185 + $0x6d8] sm:$0xff] %vm2955, %v2552
      %3176 = vst.msk [vmem:[%s185 + $0x6e0] sm:$0xff] %vm2955, %v2557
      %3177 = vst.msk [vmem:[%s185 + $0x6e8] sm:$0xff] %vm2955, %v2562
      %3178 = vst.msk [vmem:[%s185 + $0x6f0] sm:$0xff] %vm2955, %v2567
      %3179 = vst.msk [vmem:[%s185 + $0x6f8] sm:$0xff] %vm2955, %v2572
      %3180 = vst.msk [vmem:[%s185 + $0x700] sm:$0xff] %vm2955, %v2577
      %3181 = vst.msk [vmem:[%s185 + $0x708] sm:$0xff] %vm2955, %v2582
      %3182 = vst.msk [vmem:[%s185 + $0x710] sm:$0xff] %vm2955, %v2587
      %3183 = vst.msk [vmem:[%s185 + $0x718] sm:$0xff] %vm2955, %v2592
      %3184 = vst.msk [vmem:[%s185 + $0x720] sm:$0xff] %vm2955, %v2597
      %3185 = vst.msk [vmem:[%s185 + $0x728] sm:$0xff] %vm2955, %v2602
      %3186 = vst.msk [vmem:[%s185 + $0x730] sm:$0xff] %vm2955, %v2607
      %3187 = vst.msk [vmem:[%s185 + $0x738] sm:$0xff] %vm2955, %v2612
      %3188 = vst.msk [vmem:[%s185 + $0x740] sm:$0xff] %vm2955, %v2617
      %3189 = vst.msk [vmem:[%s185 + $0x748] sm:$0xff] %vm2955, %v2622
      %3190 = vst.msk [vmem:[%s185 + $0x750] sm:$0xff] %vm2955, %v2627
      %3191 = vst.msk [vmem:[%s185 + $0x758] sm:$0xff] %vm2955, %v2632
      %3192 = vst.msk [vmem:[%s185 + $0x760] sm:$0xff] %vm2955, %v2637
      %3193 = vst.msk [vmem:[%s185 + $0x768] sm:$0xff] %vm2955, %v2642
      %3194 = vst.msk [vmem:[%s185 + $0x770] sm:$0xff] %vm2955, %v2647
      %3195 = vst.msk [vmem:[%s185 + $0x778] sm:$0xff] %vm2955, %v2652
      %3196 = vst.msk [vmem:[%s185 + $0x780] sm:$0xff] %vm2955, %v2657
      %3197 = vst.msk [vmem:[%s185 + $0x788] sm:$0xff] %vm2955, %v2662
      %3198 = vst.msk [vmem:[%s185 + $0x790] sm:$0xff] %vm2955, %v2667
      %3199 = vst.msk [vmem:[%s185 + $0x798] sm:$0xff] %vm2955, %v2672
      %3200 = vst.msk [vmem:[%s185 + $0x7a0] sm:$0xff] %vm2955, %v2677
      %3201 = vst.msk [vmem:[%s185 + $0x7a8] sm:$0xff] %vm2955, %v2682
      %3202 = vst.msk [vmem:[%s185 + $0x7b0] sm:$0xff] %vm2955, %v2687
      %3203 = vst.msk [vmem:[%s185 + $0x7b8] sm:$0xff] %vm2955, %v2692
      %3204 = vst.msk [vmem:[%s185 + $0x7c0] sm:$0xff] %vm2955, %v2697
      %3205 = vst.msk [vmem:[%s185 + $0x7c8] sm:$0xff] %vm2955, %v2702
      %3206 = vst.msk [vmem:[%s185 + $0x7d0] sm:$0xff] %vm2955, %v2707
      %3207 = vst.msk [vmem:[%s185 + $0x7d8] sm:$0xff] %vm2955, %v2712
      %3208 = vst.msk [vmem:[%s185 + $0x7e0] sm:$0xff] %vm2955, %v2717
      %3209 = vst.msk [vmem:[%s185 + $0x7e8] sm:$0xff] %vm2955, %v2722
      %3210 = vst.msk [vmem:[%s185 + $0x7f0] sm:$0xff] %vm2955, %v2727
      %3211 = vst.msk [vmem:[%s185 + $0x7f8] sm:$0xff] %vm2955, %v2732
      %3212 = vst.msk [vmem:[%s185 + $0x800] sm:$0xff] %vm2955, %v2737
      %3213 = vst.msk [vmem:[%s185 + $0x808] sm:$0xff] %vm2955, %v2742
      %3214 = vst.msk [vmem:[%s185 + $0x810] sm:$0xff] %vm2955, %v2747
      %3215 = vst.msk [vmem:[%s185 + $0x818] sm:$0xff] %vm2955, %v2752
      %3216 = vst.msk [vmem:[%s185 + $0x820] sm:$0xff] %vm2955, %v2757
      %3217 = vst.msk [vmem:[%s185 + $0x828] sm:$0xff] %vm2955, %v2762
      %3218 = vst.msk [vmem:[%s185 + $0x830] sm:$0xff] %vm2955, %v2767
      %3219 = vst.msk [vmem:[%s185 + $0x838] sm:$0xff] %vm2955, %v2772
      %3220 = vst.msk [vmem:[%s185 + $0x840] sm:$0xff] %vm2955, %v2777
      %3221 = vst.msk [vmem:[%s185 + $0x848] sm:$0xff] %vm2955, %v2782
      %3222 = vst.msk [vmem:[%s185 + $0x850] sm:$0xff] %vm2955, %v2787
      %3223 = vst.msk [vmem:[%s185 + $0x858] sm:$0xff] %vm2955, %v2792
      %3224 = vst.msk [vmem:[%s185 + $0x860] sm:$0xff] %vm2955, %v2797
      %3225 = vst.msk [vmem:[%s185 + $0x868] sm:$0xff] %vm2955, %v2802
      %3226 = vst.msk [vmem:[%s185 + $0x870] sm:$0xff] %vm2955, %v2807
      %3227 = vst.msk [vmem:[%s185 + $0x878] sm:$0xff] %vm2955, %v2812
      %3228 = vst.msk [vmem:[%s185 + $0x880] sm:$0xff] %vm2955, %v2817
      %3229 = vst.msk [vmem:[%s185 + $0x888] sm:$0xff] %vm2955, %v2822
      %3230 = vst.msk [vmem:[%s185 + $0x890] sm:$0xff] %vm2955, %v2827
      %3231 = vst.msk [vmem:[%s185 + $0x898] sm:$0xff] %vm2955, %v2832
      %3232 = vst.msk [vmem:[%s185 + $0x8a0] sm:$0xff] %vm2955, %v2837
      %3233 = vst.msk [vmem:[%s185 + $0x8a8] sm:$0xff] %vm2955, %v2842
      %3234 = vst.msk [vmem:[%s185 + $0x8b0] sm:$0xff] %vm2955, %v2847
      %3235 = vst.msk [vmem:[%s185 + $0x8b8] sm:$0xff] %vm2955, %v2852
      %3236 = vst.msk [vmem:[%s185 + $0x8c0] sm:$0xff] %vm2955, %v2857
      %3237 = vst.msk [vmem:[%s185 + $0x8c8] sm:$0xff] %vm2955, %v2862
      %3238 = vst.msk [vmem:[%s185 + $0x8d0] sm:$0xff] %vm2955, %v2867
      %3239 = vst.msk [vmem:[%s185 + $0x8d8] sm:$0xff] %vm2955, %v2872
      %3240 = vst.msk [vmem:[%s185 + $0x8e0] sm:$0xff] %vm2955, %v2877
      %3241 = vst.msk [vmem:[%s185 + $0x8e8] sm:$0xff] %vm2955, %v2882
      %3242 = vst.msk [vmem:[%s185 + $0x8f0] sm:$0xff] %vm2955, %v2887
      %3243 = vst.msk [vmem:[%s185 + $0x8f8] sm:$0xff] %vm2955, %v2892
      %3244 = vst.msk [vmem:[%s185 + $0x900] sm:$0xff] %vm2955, %v2897
      %3245 = vst.msk [vmem:[%s185 + $0x908] sm:$0xff] %vm2955, %v2902
      %3246 = vst.msk [vmem:[%s185 + $0x910] sm:$0xff] %vm2955, %v2907
      %3247 = vst.msk [vmem:[%s185 + $0x918] sm:$0xff] %vm2955, %v2912
      %3248 = vst.msk [vmem:[%s185 + $0x920] sm:$0xff] %vm2955, %v2917
      %3249 = vst.msk [vmem:[%s185 + $0x928] sm:$0xff] %vm2955, %v2922
      %3250 = vst.msk [vmem:[%s185 + $0x930] sm:$0xff] %vm2955, %v2927
      %3251 = vst.msk [vmem:[%s185 + $0x938] sm:$0xff] %vm2955, %v2932
      %3252 = vst.msk [vmem:[%s185 + $0x940] sm:$0xff] %vm2955, %v2937
      %3253 = vst.msk [vmem:[%s185 + $0x948] sm:$0xff] %vm2955, %v2942
      %3254 = vst.msk [vmem:[%s185 + $0x950] sm:$0xff] %vm2955, %v2947
      %3255 = vst.msk [vmem:[%s185 + $0x958] sm:$0xff] %vm2955, %v2952
      %p3256 = scmp.lt.s32.totalorder %s17, 1
      %s3257 = scalar_select %p3256, %s17, 1
      %p3258 = scmp.lt.s32.totalorder %s18, 1
      %s3259 = scalar_select %p3258, %s18, 1
      %s3260 = smul.addr %s3259, 300
      %s3261 = smul.addr %s3257, 600
      %s3262 = sadd.s32 %s3260, %s3261
      %s3263 = smul.addr %s3262, 8
      %s3264 = scalar_lea.vmem %s2, %s3263
      // Predicated region
      $region29: #{model_forward.2} parent=27 // pred_check
        %p3265 = pneg %p97
      $region30: #{model_forward.2} parent=27 // pred_check_branch
        %3267 = sbr.rel (%p3265) target = $region32
      $region31: #{model_forward.2} parent=27 // pred_region
        _
      $region32: #{model_forward.2} parent=27 // pred_fallthru
        _
    $region28: #{model_forward.2} parent=5 // pred_fallthru
      _
    %p3268 = scmp.le.s32.totalorder 2, %s8
    // Predicated region
    $region33: #{model_forward.2} parent=5 // pred_check
      %p3269 = pneg %p3268
    $region34: #{model_forward.2} parent=5 // pred_check_branch
      %3271 = sbr.rel (%p3269) target = $region36
    $region35: #{model_forward.2} parent=5 // pred_region
      %s3272 = ssub.s32 %s8, 2
      // Predicated region
      $region37: #{model_forward.2} parent=35 // pred_check
        %p3273 = pneg %p103
      $region38: #{model_forward.2} parent=35 // pred_check_branch
        %3275 = sbr.rel (%p3273) target = $region40
      $region39: #{model_forward.2} parent=35 // pred_region
        %p3276 = scmp.lt.s32.totalorder %s19, 1
        %s3277 = scalar_select %p3276, %s19, 1
        %p3278 = scmp.lt.s32.totalorder %s20, 1
        %s3279 = scalar_select %p3278, %s20, 1
        %s3280 = smul.addr %s3279, 300
        %s3281 = smul.addr %s3277, 600
        %s3282 = sadd.s32 %s3280, %s3281
        %s3283 = smul.addr %s3282, 8
        %s3284 = scalar_lea.vmem %s2, %s3283
      $region40: #{model_forward.2} parent=35 // pred_fallthru
        _
    $region36: #{model_forward.2} parent=5 // pred_fallthru
      _
  $region6: #{model_forward.2} parent=0 // loop_footer
    %s12 = sadd.s32 1, %s8
  $region7: #{model_forward.2} parent=0 // loop_footer_branch
    %7 = sbr.rel target = $region3
  $region8: #{model_forward.2} parent=0 // loop_exit
    _

// kernel: squeeze.2
$region0: #{squeeze.2}
  %s0 = inlined_call_operand.vmem [shape: bf16[2,384], index: 0, kind: input, shape index: {}]
  %s1 = inlined_call_operand.vmem [shape: bf16[2,24,16], index: 1, kind: output, shape index: {}]
  $region1: #{squeeze.2} parent=0
    #allocation0 [shape = 'u8[24576]{0}', space=vmem, size = 0x6000, scoped, tag = 'scoped mem for output reshape']
    #allocation1 [shape = 'u8[12288]{0}', space=vmem, size = 0x3000, scoped, tag = 'scoped mem for input reshape']
    %s3 = smul.u32 1, 2
    %s4 = sshllo.u32 0, %s3
    %s5 = smul.addr 1, 2
    %s6 = scalar_lea.vmem %s0, %s5
    %s7 = sshrl.u32 %s4, 1
    %s8 = sor.u32 %s4, %s7
    %s9 = sand.u32 %s8, 85
    %s10 = sshrl.u32 %s9, 1
    %s11 = sor.u32 %s9, %s10
    %s12 = sand.u32 51, %s11
    %s13 = sshrl.u32 %s12, 2
    %s14 = sor.u32 %s12, %s13
    %s15 = sand.u32 15, %s14
    %v16 = vld [vmem:[%s6] sm:%s15]
    %v17 = vunpack.c.l.bf16 %v16
    %v18 = vunpack.c.h.bf16 %v16
    %s19 = scalar_lea.vmem [#allocation1], 16
    %20 = vst [vmem:[%s19] sm:%s4] %v17
    %s21 = scalar_lea.vmem %s0, 1
    %s22 = sshrl.u32 %s4, 1
    %s23 = sor.u32 %s4, %s22
    %s24 = sand.u32 %s23, 85
    %s25 = sshrl.u32 %s24, 1
    %s26 = sor.u32 %s24, %s25
    %s27 = sand.u32 51, %s26
    %s28 = sshrl.u32 %s27, 2
    %s29 = sor.u32 %s27, %s28
    %s30 = sand.u32 15, %s29
    %v31 = vld [vmem:[%s21] sm:%s30]
    %v32 = vunpack.c.l.bf16 %v31
    %v33 = vunpack.c.h.bf16 %v31
    %s34 = scalar_lea.vmem [#allocation1], 8
    %35 = vst [vmem:[%s34] sm:%s4] %v32
    %s36 = sshrl.u32 %s4, 1
    %s37 = sor.u32 %s4, %s36
    %s38 = sand.u32 %s37, 85
    %s39 = sshrl.u32 %s38, 1
    %s40 = sor.u32 %s38, %s39
    %s41 = sand.u32 51, %s40
    %s42 = sshrl.u32 %s41, 2
    %s43 = sor.u32 %s41, %s42
    %s44 = sand.u32 15, %s43
    %v45 = vld [vmem:[%s0] sm:%s44]
    %v46 = vunpack.c.l.bf16 %v45
    %v47 = vunpack.c.h.bf16 %v45
    %48 = vst [vmem:[#allocation1] sm:%s4] %v46
    %v49 = vld [vmem:[#allocation1] sm:$0x3]
    %vm50 = vcmask 130048
    %51 = vst.msk [vmem:[#allocation0] ss:$24 sm:$0x3] %vm50, %v49
    %s52 = scalar_lea.vmem [#allocation1], 8
    %v53 = vld [vmem:[%s52] sm:$0x3]
    %vm54 = vcmask 130048
    %s55 = scalar_lea.vmem [#allocation0], 8
    %56 = vst.msk [vmem:[%s55] ss:$24 sm:$0x3] %vm54, %v53
    %s57 = scalar_lea.vmem [#allocation1], 16
    %v58 = vld [vmem:[%s57] sm:$0x3]
    %vm59 = vcmask 130048
    %s60 = scalar_lea.vmem [#allocation0], 16
    %61 = vst.msk [vmem:[%s60] ss:$24 sm:$0x3] %vm59, %v58
    %v62 = vld [vmem:[#allocation1] ss:$8 sm:$0x7]
    %s63 = scalar_lea.vmem [#allocation1], 4294967273
    %v64 = vld [vmem:[%s63] ss:$8 sm:$0x38]
    %vm65 = vcmask 1045507
    %v66 = vsel %vm65, %v64, %v62
    %67 = vrot.lane.b32.xlu0 %v66, 112
    %v68 = vpop.permute.xlu0 %67
    %vm69 = vcmask 130048
    %s70 = scalar_lea.vmem [#allocation0], 1
    %71 = vst.msk [vmem:[%s70] ss:$8 sm:$0xf] %vm69, %v68
    %s72 = scalar_lea.vmem [#allocation0], 1
    %73 = vst.msk [vmem:[%s72] ss:$8 sm:$0x30] %vm69, %v68
    %v74 = vld [vmem:[#allocation1] ss:$8 sm:$0x7]
    %s75 = scalar_lea.vmem [#allocation1], 4294967273
    %v76 = vld [vmem:[%s75] ss:$8 sm:$0x38]
    %vm77 = vcmask 1045507
    %v78 = vsel %vm77, %v76, %v74
    %79 = vrot.lane.b32.xlu0 %v78, 96
    %v80 = vpop.permute.xlu0 %79
    %vm81 = vcmask 130048
    %s82 = scalar_lea.vmem [#allocation0], 2
    %83 = vst.msk [vmem:[%s82] ss:$8 sm:$0xf] %vm81, %v80
    %s84 = scalar_lea.vmem [#allocation0], 2
    %85 = vst.msk [vmem:[%s84] ss:$8 sm:$0x30] %vm81, %v80
    %v86 = vld [vmem:[#allocation1] ss:$8 sm:$0x7]
    %s87 = scalar_lea.vmem [#allocation1], 4294967273
    %v88 = vld [vmem:[%s87] ss:$8 sm:$0x38]
    %vm89 = vcmask 1045507
    %v90 = vsel %vm89, %v88, %v86
    %91 = vrot.lane.b32.xlu0 %v90, 80
    %v92 = vpop.permute.xlu0 %91
    %vm93 = vcmask 130048
    %s94 = scalar_lea.vmem [#allocation0], 3
    %95 = vst.msk [vmem:[%s94] ss:$8 sm:$0xf] %vm93, %v92
    %s96 = scalar_lea.vmem [#allocation0], 3
    %97 = vst.msk [vmem:[%s96] ss:$8 sm:$0x30] %vm93, %v92
    %v98 = vld [vmem:[#allocation1] ss:$8 sm:$0x7]
    %s99 = scalar_lea.vmem [#allocation1], 4294967273
    %v100 = vld [vmem:[%s99] ss:$8 sm:$0x38]
    %vm101 = vcmask 1045507
    %v102 = vsel %vm101, %v100, %v98
    %103 = vrot.lane.b32.xlu0 %v102, 64
    %v104 = vpop.permute.xlu0 %103
    %vm105 = vcmask 130048
    %s106 = scalar_lea.vmem [#allocation0], 4
    %107 = vst.msk [vmem:[%s106] ss:$8 sm:$0xf] %vm105, %v104
    %s108 = scalar_lea.vmem [#allocation0], 4
    %109 = vst.msk [vmem:[%s108] ss:$8 sm:$0x30] %vm105, %v104
    %v110 = vld [vmem:[#allocation1] ss:$8 sm:$0x7]
    %s111 = scalar_lea.vmem [#allocation1], 4294967273
    %v112 = vld [vmem:[%s111] ss:$8 sm:$0x38]
    %vm113 = vcmask 1045507
    %v114 = vsel %vm113, %v112, %v110
    %115 = vrot.lane.b32.xlu0 %v114, 48
    %v116 = vpop.permute.xlu0 %115
    %vm117 = vcmask 130048
    %s118 = scalar_lea.vmem [#allocation0], 5
    %119 = vst.msk [vmem:[%s118] ss:$8 sm:$0xf] %vm117, %v116
    %s120 = scalar_lea.vmem [#allocation0], 5
    %121 = vst.msk [vmem:[%s120] ss:$8 sm:$0x30] %vm117, %v116
    %v122 = vld [vmem:[#allocation1] ss:$8 sm:$0x7]
    %s123 = scalar_lea.vmem [#allocation1], 4294967273
    %v124 = vld [vmem:[%s123] ss:$8 sm:$0x38]
    %vm125 = vcmask 1045507
    %v126 = vsel %vm125, %v124, %v122
    %127 = vrot.lane.b32.xlu0 %v126, 32
    %v128 = vpop.permute.xlu0 %127
    %vm129 = vcmask 130048
    %s130 = scalar_lea.vmem [#allocation0], 6
    %131 = vst.msk [vmem:[%s130] ss:$8 sm:$0xf] %vm129, %v128
    %s132 = scalar_lea.vmem [#allocation0], 6
    %133 = vst.msk [vmem:[%s132] ss:$8 sm:$0x30] %vm129, %v128
    %v134 = vld [vmem:[#allocation1] ss:$8 sm:$0x7]
    %s135 = scalar_lea.vmem [#allocation1], 4294967273
    %v136 = vld [vmem:[%s135] ss:$8 sm:$0x38]
    %vm137 = vcmask 1045507
    %v138 = vsel %vm137, %v136, %v134
    %139 = vrot.lane.b32.xlu0 %v138, 16
    %v140 = vpop.permute.xlu0 %139
    %vm141 = vcmask 130048
    %s142 = scalar_lea.vmem [#allocation0], 7
    %143 = vst.msk [vmem:[%s142] ss:$8 sm:$0xf] %vm141, %v140
    %s144 = scalar_lea.vmem [#allocation0], 7
    %145 = vst.msk [vmem:[%s144] ss:$8 sm:$0x30] %vm141, %v140
    %s147 = smul.u32 4, 2
    %s148 = sshllo.u32 0, %s147
    %s149 = sshrl.u32 %s147, 1
    %v150 = vld [vmem:[#allocation0] sm:%s148]
    %v151 = vpack.c.bf16 0.0, %v150
    %s152 = sshllo.u32 0, %s149
    %153 = vst [vmem:[%s1] sm:%s152] %v151
    %s154 = scalar_lea.vmem [#allocation0], 8
    %v155 = vld [vmem:[%s154] sm:%s148]
    %v156 = vpack.c.bf16 0.0, %v155
    %s157 = sshllo.u32 0, %s149
    %s158 = scalar_lea.vmem %s1, 4
    %159 = vst [vmem:[%s158] sm:%s157] %v156
    %s160 = scalar_lea.vmem [#allocation0], 16
    %v161 = vld [vmem:[%s160] sm:%s148]
    %v162 = vpack.c.bf16 0.0, %v161
    %s163 = sshllo.u32 0, %s149
    %s164 = smul.addr 4, 2
    %s165 = scalar_lea.vmem %s1, %s164
    %166 = vst [vmem:[%s165] sm:%s163] %v162
    %s167 = scalar_lea.vmem [#allocation0], 24
    %v168 = vld [vmem:[%s167] sm:%s148]
    %v169 = vpack.c.bf16 0.0, %v168
    %s170 = sshllo.u32 0, %s149
    %s171 = smul.addr 4, 3
    %s172 = scalar_lea.vmem %s1, %s171
    %173 = vst [vmem:[%s172] sm:%s170] %v169
    %s174 = scalar_lea.vmem [#allocation0], 32
    %v175 = vld [vmem:[%s174] sm:%s148]
    %v176 = vpack.c.bf16 0.0, %v175
    %s177 = sshllo.u32 0, %s149
    %s178 = smul.addr 4, 4
    %s179 = scalar_lea.vmem %s1, %s178
    %180 = vst [vmem:[%s179] sm:%s177] %v176
    %s181 = scalar_lea.vmem [#allocation0], 40
    %v182 = vld [vmem:[%s181] sm:%s148]
    %v183 = vpack.c.bf16 0.0, %v182
    %s184 = sshllo.u32 0, %s149
    %s185 = smul.addr 4, 5
    %s186 = scalar_lea.vmem %s1, %s185
    %187 = vst [vmem:[%s186] sm:%s184] %v183

// kernel: model_forward.3
$region0: #{model_forward.3}
  #allocation0 [shape = 'u32[]', space=smem, size = 0x4, offset = 0x4, fixed_abs, tag = 'smem constant byte address 0x4 - core index']
  #allocation1 [shape = 'u32[144,128]{1,0:T(1,128)}', space=vmem, size = 0x12000, scoped, tag = 'internal scratch']
  %s0 = inlined_call_operand.vmem [shape: f32[4,100,384], index: 0, kind: input, shape index: {}]
  %s1 = inlined_call_operand.vmem [shape: f32[3,384,384], index: 1, kind: input, shape index: {}]
  %s2 = inlined_call_operand.vmem [shape: f32[1,384], index: 2, kind: input, shape index: {}]
  %s3 = inlined_call_operand.vmem [shape: f32[3,384,384], index: 3, kind: input, shape index: {}]
  %s4 = inlined_call_operand.vmem [shape: f32[1,384], index: 4, kind: input, shape index: {}]
  %s5 = inlined_call_operand.vmem [shape: f32[100,2048], index: 5, kind: input, shape index: {}]
  %s6 = inlined_call_operand.vmem [shape: f32[1,2048], index: 6, kind: input, shape index: {}]
  %s7 = inlined_call_operand.vmem [shape: f32[1,2048], index: 7, kind: input, shape index: {}]
  %s8 = inlined_call_operand.vmem [shape: f32[4,384,1], index: 8, kind: output, shape index: {}]
  %s9 = sld [smem:[#allocation0]]
  $region72: #{model_forward.3} parent=0
    _
  %s11 = ssub.s32 1, %s9
  %s12 = scalar_select 0, %s11, %s9
  loop: start=0, step=1, limit=6
  $region2: #{model_forward.3} parent=0 // loop_pre_header
    _
  $region3: #{model_forward.3} parent=0 // loop_header
    %s14 = sphi 0, %s18
    %p15 = scmp.ge.s32.totalorder %s14, 6
    %s24 = sphi 0, %s26
    %s27 = sphi 0, %s24
    %s28 = sphi 0, %s27
    %s44 = sphi 0, %s28
    %s48 = sphi 0, %s48
    %s50 = sphi 0, %s48
    %s51 = sphi 0, %s50
    %s65 = sphi 0, %s51
    %s69 = sphi 0, %s69
    %s71 = sphi 0, %s69
    %s72 = sphi 0, %s71
    %s86 = sphi 0, %s72
    %s90 = sphi 0, %s90
    %s92 = sphi 0, %s90
    %s93 = sphi 0, %s92
    %s107 = sphi 0, %s93
    %s111 = sphi 0, %s111
    %s113 = sphi 0, %s111
    %s114 = sphi 0, %s113
    %s128 = sphi 0, %s114
    %s132 = sphi 0, %s132
    %s134 = sphi 0, %s132
    %s135 = sphi 0, %s134
    %s149 = sphi 0, %s135
    %s153 = sphi 0, %s153
    %s155 = sphi 0, %s153
    %s156 = sphi 0, %s155
    %s170 = sphi 0, %s156
    %s174 = sphi 0, %s174
    %s176 = sphi 0, %s174
    %s177 = sphi 0, %s176
    %s191 = sphi 0, %s177
    %s197 = sphi 0, %s199
    %s200 = sphi 0, %s197
    %s201 = sphi 0, %s200
    %s217 = sphi 0, %s201
  $region4: #{model_forward.3} parent=0 // loop_header_branch
    %17 = sbr.rel (%p15) target = $region8
  $region5: #{model_forward.3} parent=0 // loop_body
    %s19 = ssub.s32 %s14, 1
    %s20 = ssub.s32 %s14, 2
    %s21 = sadd.s32 %s14, 1
    %s22 = ssub.s32 %s14, %s21
    %p23 = scmp.eq.s32.totalorder %s22, 0
    %s25 = sadd.s32 %s24, 1
    %s26 = scalar_select %p23, %s24, %s25
    %p29 = pneg %p23
    %p30 = scmp.eq.s32.totalorder %s14, 3
    %p31 = por %p29, %p30
    %p32 = scmp.ne.s32.totalorder %s24, %s27
    %p33 = scmp.eq.s32.totalorder %s14, 0
    %p34 = por %p32, %p33
    %p35 = scmp.ne.s32.totalorder %s24, %s27
    %p36 = scmp.eq.s32.totalorder %s19, 3
    %p37 = por %p35, %p36
    %p38 = scmp.ne.s32.totalorder %s27, %s28
    %p39 = scmp.eq.s32.totalorder %s19, 0
    %p40 = por %p38, %p39
    %p41 = scmp.ne.s32.totalorder %s27, %s28
    %p42 = scmp.eq.s32.totalorder %s20, 3
    %p43 = por %p41, %p42
    %p45 = scmp.ne.s32.totalorder %s28, %s44
    %p46 = scmp.eq.s32.totalorder %s20, 0
    %p47 = por %p45, %p46
    %s49 = sadd.s32 %s48, 1
    %p52 = scmp.eq.s32.totalorder %s14, 3
    %p53 = scmp.ne.s32.totalorder %s48, %s50
    %p54 = scmp.eq.s32.totalorder %s14, 0
    %p55 = por %p53, %p54
    %p56 = scmp.ne.s32.totalorder %s48, %s50
    %p57 = scmp.eq.s32.totalorder %s19, 3
    %p58 = por %p56, %p57
    %p59 = scmp.ne.s32.totalorder %s50, %s51
    %p60 = scmp.eq.s32.totalorder %s19, 0
    %p61 = por %p59, %p60
    %p62 = scmp.ne.s32.totalorder %s50, %s51
    %p63 = scmp.eq.s32.totalorder %s20, 3
    %p64 = por %p62, %p63
    %p66 = scmp.ne.s32.totalorder %s51, %s65
    %p67 = scmp.eq.s32.totalorder %s20, 0
    %p68 = por %p66, %p67
    %s70 = sadd.s32 %s69, 1
    %p73 = scmp.eq.s32.totalorder %s14, 3
    %p74 = scmp.ne.s32.totalorder %s69, %s71
    %p75 = scmp.eq.s32.totalorder %s14, 0
    %p76 = por %p74, %p75
    %p77 = scmp.ne.s32.totalorder %s69, %s71
    %p78 = scmp.eq.s32.totalorder %s19, 3
    %p79 = por %p77, %p78
    %p80 = scmp.ne.s32.totalorder %s71, %s72
    %p81 = scmp.eq.s32.totalorder %s19, 0
    %p82 = por %p80, %p81
    %p83 = scmp.ne.s32.totalorder %s71, %s72
    %p84 = scmp.eq.s32.totalorder %s20, 3
    %p85 = por %p83, %p84
    %p87 = scmp.ne.s32.totalorder %s72, %s86
    %p88 = scmp.eq.s32.totalorder %s20, 0
    %p89 = por %p87, %p88
    %s91 = sadd.s32 %s90, 1
    %p94 = scmp.eq.s32.totalorder %s14, 3
    %p95 = scmp.ne.s32.totalorder %s90, %s92
    %p96 = scmp.eq.s32.totalorder %s14, 0
    %p97 = por %p95, %p96
    %p98 = scmp.ne.s32.totalorder %s90, %s92
    %p99 = scmp.eq.s32.totalorder %s19, 3
    %p100 = por %p98, %p99
    %p101 = scmp.ne.s32.totalorder %s92, %s93
    %p102 = scmp.eq.s32.totalorder %s19, 0
    %p103 = por %p101, %p102
    %p104 = scmp.ne.s32.totalorder %s92, %s93
    %p105 = scmp.eq.s32.totalorder %s20, 3
    %p106 = por %p104, %p105
    %p108 = scmp.ne.s32.totalorder %s93, %s107
    %p109 = scmp.eq.s32.totalorder %s20, 0
    %p110 = por %p108, %p109
    %s112 = sadd.s32 %s111, 1
    %p115 = scmp.eq.s32.totalorder %s14, 3
    %p116 = scmp.ne.s32.totalorder %s111, %s113
    %p117 = scmp.eq.s32.totalorder %s14, 0
    %p118 = por %p116, %p117
    %p119 = scmp.ne.s32.totalorder %s111, %s113
    %p120 = scmp.eq.s32.totalorder %s19, 3
    %p121 = por %p119, %p120
    %p122 = scmp.ne.s32.totalorder %s113, %s114
    %p123 = scmp.eq.s32.totalorder %s19, 0
    %p124 = por %p122, %p123
    %p125 = scmp.ne.s32.totalorder %s113, %s114
    %p126 = scmp.eq.s32.totalorder %s20, 3
    %p127 = por %p125, %p126
    %p129 = scmp.ne.s32.totalorder %s114, %s128
    %p130 = scmp.eq.s32.totalorder %s20, 0
    %p131 = por %p129, %p130
    %s133 = sadd.s32 %s132, 1
    %p136 = scmp.eq.s32.totalorder %s14, 3
    %p137 = scmp.ne.s32.totalorder %s132, %s134
    %p138 = scmp.eq.s32.totalorder %s14, 0
    %p139 = por %p137, %p138
    %p140 = scmp.ne.s32.totalorder %s132, %s134
    %p141 = scmp.eq.s32.totalorder %s19, 3
    %p142 = por %p140, %p141
    %p143 = scmp.ne.s32.totalorder %s134, %s135
    %p144 = scmp.eq.s32.totalorder %s19, 0
    %p145 = por %p143, %p144
    %p146 = scmp.ne.s32.totalorder %s134, %s135
    %p147 = scmp.eq.s32.totalorder %s20, 3
    %p148 = por %p146, %p147
    %p150 = scmp.ne.s32.totalorder %s135, %s149
    %p151 = scmp.eq.s32.totalorder %s20, 0
    %p152 = por %p150, %p151
    %s154 = sadd.s32 %s153, 1
    %p157 = scmp.eq.s32.totalorder %s14, 3
    %p158 = scmp.ne.s32.totalorder %s153, %s155
    %p159 = scmp.eq.s32.totalorder %s14, 0
    %p160 = por %p158, %p159
    %p161 = scmp.ne.s32.totalorder %s153, %s155
    %p162 = scmp.eq.s32.totalorder %s19, 3
    %p163 = por %p161, %p162
    %p164 = scmp.ne.s32.totalorder %s155, %s156
    %p165 = scmp.eq.s32.totalorder %s19, 0
    %p166 = por %p164, %p165
    %p167 = scmp.ne.s32.totalorder %s155, %s156
    %p168 = scmp.eq.s32.totalorder %s20, 3
    %p169 = por %p167, %p168
    %p171 = scmp.ne.s32.totalorder %s156, %s170
    %p172 = scmp.eq.s32.totalorder %s20, 0
    %p173 = por %p171, %p172
    %s175 = sadd.s32 %s174, 1
    %p178 = scmp.eq.s32.totalorder %s14, 3
    %p179 = scmp.ne.s32.totalorder %s174, %s176
    %p180 = scmp.eq.s32.totalorder %s14, 0
    %p181 = por %p179, %p180
    %p182 = scmp.ne.s32.totalorder %s174, %s176
    %p183 = scmp.eq.s32.totalorder %s19, 3
    %p184 = por %p182, %p183
    %p185 = scmp.ne.s32.totalorder %s176, %s177
    %p186 = scmp.eq.s32.totalorder %s19, 0
    %p187 = por %p185, %p186
    %p188 = scmp.ne.s32.totalorder %s176, %s177
    %p189 = scmp.eq.s32.totalorder %s20, 3
    %p190 = por %p188, %p189
    %p192 = scmp.ne.s32.totalorder %s177, %s191
    %p193 = scmp.eq.s32.totalorder %s20, 0
    %p194 = por %p192, %p193
    %s195 = ssub.s32 %s14, %s21
    %p196 = scmp.eq.s32.totalorder %s195, 0
    %s198 = sadd.s32 %s197, 1
    %s199 = scalar_select %p196, %s197, %s198
    %p202 = pneg %p196
    %p203 = scmp.eq.s32.totalorder %s14, 3
    %p204 = por %p202, %p203
    %p205 = scmp.ne.s32.totalorder %s197, %s200
    %p206 = scmp.eq.s32.totalorder %s14, 0
    %p207 = por %p205, %p206
    %p208 = scmp.ne.s32.totalorder %s197, %s200
    %p209 = scmp.eq.s32.totalorder %s19, 3
    %p210 = por %p208, %p209
    %p211 = scmp.ne.s32.totalorder %s200, %s201
    %p212 = scmp.eq.s32.totalorder %s19, 0
    %p213 = por %p211, %p212
    %p214 = scmp.ne.s32.totalorder %s200, %s201
    %p215 = scmp.eq.s32.totalorder %s20, 3
    %p216 = por %p214, %p215
    %p218 = scmp.ne.s32.totalorder %s201, %s217
    %p219 = scmp.eq.s32.totalorder %s20, 0
    %p220 = por %p218, %p219
    %p221 = scmp.le.s32.totalorder 1, %s14
    %p222 = scmp.lt.s32.totalorder %s14, 5
    %p223 = pnand %p221, %p222
    %p224 = pneg %p223
    // Predicated region
    $region9: #{model_forward.3} parent=5 // pred_check
      _
    $region10: #{model_forward.3} parent=5 // pred_check_branch
      %226 = sbr.rel (%p223) target = $region12
    $region11: #{model_forward.3} parent=5 // pred_region
      %s227 = ssub.s32 %s14, 1
      // Predicated region
      $region13: #{model_forward.3} parent=11 // pred_check
        %p228 = pneg %p61
      $region14: #{model_forward.3} parent=11 // pred_check_branch
        %230 = sbr.rel (%p228) target = $region16
      $region15: #{model_forward.3} parent=11 // pred_region
        _
      $region16: #{model_forward.3} parent=11 // pred_fallthru
        _
      // Predicated region
      $region17: #{model_forward.3} parent=11 // pred_check
        %p231 = pneg %p82
      $region18: #{model_forward.3} parent=11 // pred_check_branch
        %233 = sbr.rel (%p231) target = $region20
      $region19: #{model_forward.3} parent=11 // pred_region
        _
      $region20: #{model_forward.3} parent=11 // pred_fallthru
        _
      // Predicated region
      $region21: #{model_forward.3} parent=11 // pred_check
        %p234 = pneg %p103
      $region22: #{model_forward.3} parent=11 // pred_check_branch
        %236 = sbr.rel (%p234) target = $region24
      $region23: #{model_forward.3} parent=11 // pred_region
        _
      $region24: #{model_forward.3} parent=11 // pred_fallthru
        _
      // Predicated region
      $region25: #{model_forward.3} parent=11 // pred_check
        %p237 = pneg %p124
      $region26: #{model_forward.3} parent=11 // pred_check_branch
        %239 = sbr.rel (%p237) target = $region28
      $region27: #{model_forward.3} parent=11 // pred_region
        _
      $region28: #{model_forward.3} parent=11 // pred_fallthru
        _
      // Predicated region
      $region29: #{model_forward.3} parent=11 // pred_check
        %p240 = pneg %p145
      $region30: #{model_forward.3} parent=11 // pred_check_branch
        %242 = sbr.rel (%p240) target = $region32
      $region31: #{model_forward.3} parent=11 // pred_region
        _
      $region32: #{model_forward.3} parent=11 // pred_fallthru
        _
      // Predicated region
      $region33: #{model_forward.3} parent=11 // pred_check
        %p243 = pneg %p166
      $region34: #{model_forward.3} parent=11 // pred_check_branch
        %245 = sbr.rel (%p243) target = $region36
      $region35: #{model_forward.3} parent=11 // pred_region
        _
      $region36: #{model_forward.3} parent=11 // pred_fallthru
        _
      // Predicated region
      $region37: #{model_forward.3} parent=11 // pred_check
        %p246 = pneg %p187
      $region38: #{model_forward.3} parent=11 // pred_check_branch
        %248 = sbr.rel (%p246) target = $region40
      $region39: #{model_forward.3} parent=11 // pred_region
        _
      $region40: #{model_forward.3} parent=11 // pred_fallthru
        _
    $region12: #{model_forward.3} parent=5 // pred_fallthru
      _
    %p249 = scmp.lt.s32.totalorder %s14, 4
    // Predicated region
    $region41: #{model_forward.3} parent=5 // pred_check
      %p250 = pneg %p249
    $region42: #{model_forward.3} parent=5 // pred_check_branch
      %252 = sbr.rel (%p250) target = $region44
    $region43: #{model_forward.3} parent=5 // pred_region
      // Predicated region
      $region45: #{model_forward.3} parent=43 // pred_check
        %p253 = pneg %p34
      $region46: #{model_forward.3} parent=43 // pred_check_branch
        %255 = sbr.rel (%p253) target = $region48
      $region47: #{model_forward.3} parent=43 // pred_region
        %p256 = scmp.lt.s32.totalorder %s14, 3
        %s257 = scalar_select %p256, %s14, 3
        %s258 = smul.addr %s257, 39
        %s259 = smul.addr %s258, 8
        %s260 = scalar_lea.vmem %s0, %s259
      $region48: #{model_forward.3} parent=43 // pred_fallthru
        _
    $region44: #{model_forward.3} parent=5 // pred_fallthru
      _
    %p261 = scmp.le.s32.totalorder 1, %s14
    %p262 = scmp.lt.s32.totalorder %s14, 5
    %p263 = pnand %p261, %p262
    %p264 = pneg %p263
    // Predicated region
    $region49: #{model_forward.3} parent=5 // pred_check
      _
    $region50: #{model_forward.3} parent=5 // pred_check_branch
      %266 = sbr.rel (%p263) target = $region52
    $region51: #{model_forward.3} parent=5 // pred_region
      %s267 = ssub.s32 %s14, 1
      %p268 = scmp.lt.s32.totalorder %s19, 3
      %s269 = scalar_select %p268, %s19, 3
      %s270 = smul.addr %s269, 39
      %s271 = smul.addr %s270, 8
      %s272 = scalar_lea.vmem %s0, %s271
      %p273 = pneg %p40
      %p274 = pneg %p37
      %p275 = pneg %p61
      %p276 = pneg %p58
      %p277 = pneg %p82
      %p278 = pneg %p79
      %p279 = pneg %p103
      %p280 = pneg %p100
      %p281 = pneg %p124
      %p282 = pneg %p121
      %p283 = pneg %p145
      %p284 = pneg %p142
      %p285 = pneg %p166
      %p286 = pneg %p163
      %p287 = pneg %p187
      %p288 = pneg %p184
      %p289 = pneg %p213
      %p290 = pneg %p210
      %p291 = scmp.lt.s32.totalorder %s19, 3
      %s292 = scalar_select %p291, %s19, 3
      %s293 = smul.addr %s292, 48
      %s294 = smul.addr %s293, 8
      %s295 = scalar_lea.vmem %s8, %s294
      %p296 = scmp.lt.s32.totalorder %s19, 3
      %s297 = scalar_select %p296, %s19, 3
      %s298 = smul.addr %s297, 39
      %s299 = smul.addr %s298, 8
      %s300 = scalar_lea.vmem %s0, %s299
      %p301 = scmp.lt.s32.totalorder %s19, 3
      %s302 = scalar_select %p301, %s19, 3
      %s303 = smul.addr %s302, 48
      %s304 = smul.addr %s303, 8
      %s305 = scalar_lea.vmem %s8, %s304
      %v306 = vld [vmem:[%s300] sm:$0xff]
      %v307 = vld [vmem:[%s300 + $0x8] sm:$0xff]
      %v308 = vld [vmem:[%s300 + $0x10] sm:$0xff]
      %v309 = vld [vmem:[%s300 + $0x18] sm:$0xff]
      %v310 = vld [vmem:[%s300 + $0x20] sm:$0xff]
      %v311 = vld [vmem:[%s300 + $0x28] sm:$0xff]
      %v312 = vld [vmem:[%s300 + $0x30] sm:$0xff]
      %v313 = vld [vmem:[%s300 + $0x38] sm:$0xff]
      %v314 = vld [vmem:[%s300 + $0x40] sm:$0xff]
      %v315 = vld [vmem:[%s300 + $0x48] sm:$0xff]
      %v316 = vld [vmem:[%s300 + $0x50] sm:$0xff]
      %v317 = vld [vmem:[%s300 + $0x58] sm:$0xff]
      %v318 = vld [vmem:[%s300 + $0x60] sm:$0xff]
      %v319 = vld [vmem:[%s300 + $0x68] sm:$0xff]
      %v320 = vld [vmem:[%s300 + $0x70] sm:$0xff]
      %v321 = vld [vmem:[%s300 + $0x78] sm:$0xff]
      %v322 = vld [vmem:[%s300 + $0x80] sm:$0xff]
      %v323 = vld [vmem:[%s300 + $0x88] sm:$0xff]
      %v324 = vld [vmem:[%s300 + $0x90] sm:$0xff]
      %v325 = vld [vmem:[%s300 + $0x98] sm:$0xff]
      %v326 = vld [vmem:[%s300 + $0xa0] sm:$0xff]
      %v327 = vld [vmem:[%s300 + $0xa8] sm:$0xff]
      %v328 = vld [vmem:[%s300 + $0xb0] sm:$0xff]
      %v329 = vld [vmem:[%s300 + $0xb8] sm:$0xff]
      %v330 = vld [vmem:[%s300 + $0xc0] sm:$0xff]
      %v331 = vld [vmem:[%s300 + $0xc8] sm:$0xff]
      %v332 = vld [vmem:[%s300 + $0xd0] sm:$0xff]
      %v333 = vld [vmem:[%s300 + $0xd8] sm:$0xff]
      %v334 = vld [vmem:[%s300 + $0xe0] sm:$0xff]
      %v335 = vld [vmem:[%s300 + $0xe8] sm:$0xff]
      %v336 = vld [vmem:[%s300 + $0xf0] sm:$0xff]
      %v337 = vld [vmem:[%s300 + $0xf8] sm:$0xff]
      %v338 = vld [vmem:[%s300 + $0x100] sm:$0xff]
      %v339 = vld [vmem:[%s300 + $0x108] sm:$0xff]
      %v340 = vld [vmem:[%s300 + $0x110] sm:$0xff]
      %v341 = vld [vmem:[%s300 + $0x118] sm:$0xff]
      %v342 = vld [vmem:[%s300 + $0x120] sm:$0xf]
      %v343 = vld [vmem:[%s300 + $0x128] sm:$0xf]
      %v344 = vld [vmem:[%s300 + $0x130] sm:$0xf]
      %v345 = vlaneseq
      %v346 = vshrl.u32 %v345, 7
      %v347 = vadd.s32 %v346, 8
      %v348 = vadd.s32 %v346, 16
      %v349 = vadd.s32 %v346, 24
      %v350 = vadd.s32 %v346, 32
      %v351 = vadd.s32 %v346, 40
      %v352 = vadd.s32 %v346, 48
      %v353 = vadd.s32 %v346, 56
      %v354 = vadd.s32 %v346, 64
      %v355 = vadd.s32 %v346, 72
      %v356 = vadd.s32 %v346, 80
      %v357 = vadd.s32 %v346, 88
      %v358 = vadd.s32 %v346, 96
      %v359 = vlaneseq
      %v360 = vand.u32 %v359, 127
      %v361 = vadd.s32 %v360, 1
      %vm362 = vcmp.eq.s32.totalorder %v346, %v361
      %vm363 = vcmp.eq.s32.totalorder %v347, %v361
      %vm364 = vcmp.eq.s32.totalorder %v348, %v361
      %vm365 = vcmp.eq.s32.totalorder %v349, %v361
      %vm366 = vcmp.eq.s32.totalorder %v350, %v361
      %vm367 = vcmp.eq.s32.totalorder %v351, %v361
      %vm368 = vcmp.eq.s32.totalorder %v352, %v361
      %vm369 = vcmp.eq.s32.totalorder %v353, %v361
      %vm370 = vcmp.eq.s32.totalorder %v354, %v361
      %vm371 = vcmp.eq.s32.totalorder %v355, %v361
      %vm372 = vcmp.eq.s32.totalorder %v356, %v361
      %vm373 = vcmp.eq.s32.totalorder %v357, %v361
      %vm374 = vcmp.eq.s32.totalorder %v358, %v361
      %v375 = vsel %vm362, 1, 0
      %v376 = vsel %vm363, 1, 0
      %v377 = vsel %vm364, 1, 0
      %v378 = vsel %vm365, 1, 0
      %v379 = vsel %vm366, 1, 0
      %v380 = vsel %vm367, 1, 0
      %v381 = vsel %vm368, 1, 0
      %v382 = vsel %vm369, 1, 0
      %v383 = vsel %vm370, 1, 0
      %v384 = vsel %vm371, 1, 0
      %v385 = vsel %vm372, 1, 0
      %v386 = vsel %vm373, 1, 0
      %v387 = vsel %vm374, 1, 0
      %v388 = vcvt.s32.f32 %v375
      %v389 = vcvt.s32.f32 %v376
      %v390 = vcvt.s32.f32 %v377
      %v391 = vcvt.s32.f32 %v378
      %v392 = vcvt.s32.f32 %v379
      %v393 = vcvt.s32.f32 %v380
      %v394 = vcvt.s32.f32 %v381
      %v395 = vcvt.s32.f32 %v382
      %v396 = vcvt.s32.f32 %v383
      %v397 = vcvt.s32.f32 %v384
      %v398 = vcvt.s32.f32 %v385
      %v399 = vcvt.s32.f32 %v386
      %v400 = vcvt.s32.f32 %v387
      %v401 = vadd.s32 %v346, 1
      %v402 = vadd.s32 %v347, 1
      %v403 = vadd.s32 %v348, 1
      %v404 = vadd.s32 %v349, 1
      %v405 = vadd.s32 %v350, 1
      %v406 = vadd.s32 %v351, 1
      %v407 = vadd.s32 %v352, 1
      %v408 = vadd.s32 %v353, 1
      %v409 = vadd.s32 %v354, 1
      %v410 = vadd.s32 %v355, 1
      %v411 = vadd.s32 %v356, 1
      %v412 = vadd.s32 %v357, 1
      %v413 = vadd.s32 %v358, 1
      %vm414 = vcmp.eq.s32.totalorder %v401, %v360
      %vm415 = vcmp.eq.s32.totalorder %v402, %v360
      %vm416 = vcmp.eq.s32.totalorder %v403, %v360
      %vm417 = vcmp.eq.s32.totalorder %v404, %v360
      %vm418 = vcmp.eq.s32.totalorder %v405, %v360
      %vm419 = vcmp.eq.s32.totalorder %v406, %v360
      %vm420 = vcmp.eq.s32.totalorder %v407, %v360
      %vm421 = vcmp.eq.s32.totalorder %v408, %v360
      %vm422 = vcmp.eq.s32.totalorder %v409, %v360
      %vm423 = vcmp.eq.s32.totalorder %v410, %v360
      %vm424 = vcmp.eq.s32.totalorder %v411, %v360
      %vm425 = vcmp.eq.s32.totalorder %v412, %v360
      %vm426 = vcmp.eq.s32.totalorder %v413, %v360
      %v427 = vsel %vm414, 1, 0
      %v428 = vsel %vm415, 1, 0
      %v429 = vsel %vm416, 1, 0
      %v430 = vsel %vm417, 1, 0
      %v431 = vsel %vm418, 1, 0
      %v432 = vsel %vm419, 1, 0
      %v433 = vsel %vm420, 1, 0
      %v434 = vsel %vm421, 1, 0
      %v435 = vsel %vm422, 1, 0
      %v436 = vsel %vm423, 1, 0
      %v437 = vsel %vm424, 1, 0
      %v438 = vsel %vm425, 1, 0
      %v439 = vsel %vm426, 1, 0
      %v440 = vcvt.s32.f32 %v427
      %v441 = vcvt.s32.f32 %v428
      %v442 = vcvt.s32.f32 %v429
      %v443 = vcvt.s32.f32 %v430
      %v444 = vcvt.s32.f32 %v431
      %v445 = vcvt.s32.f32 %v432
      %v446 = vcvt.s32.f32 %v433
      %v447 = vcvt.s32.f32 %v434
      %v448 = vcvt.s32.f32 %v435
      %v449 = vcvt.s32.f32 %v436
      %v450 = vcvt.s32.f32 %v437
      %v451 = vcvt.s32.f32 %v438
      %v452 = vcvt.s32.f32 %v439
      %vm453 = vcmask 818176
      %v455 = vsel %vm453, %v388, 0
      %v458 = vsel %vm453, %v389, 0
      %v461 = vsel %vm453, %v390, 0
      %v464 = vsel %vm453, %v391, 0
      %v467 = vsel %vm453, %v392, 0
      %v470 = vsel %vm453, %v393, 0
      %v473 = vsel %vm453, %v394, 0
      %v476 = vsel %vm453, %v395, 0
      %v479 = vsel %vm453, %v396, 0
      %v482 = vsel %vm453, %v397, 0
      %v485 = vsel %vm453, %v398, 0
      %v488 = vsel %vm453, %v399, 0
      %v491 = vsel %vm453, %v400, 0
      %vm493 = vcmask 1043456
      %v495 = vsel %vm493, %v342, 0
      %v498 = vsel %vm493, %v343, 0
      %v501 = vsel %vm493, %v344, 0
      %503 = vmatprep.subr.mxu0 %v307
      %504 = vmatpush1.msra.mxu0 %v306
      %505 = vmatprep.subr.mxu0 %v310
      %506 = vmatpush1.msra.mxu0 %v309
      %507 = vmatprep.subr.mxu0 %v313
      %508 = vmatpush1.msra.mxu0 %v312
      %509 = vmatprep.subr.mxu0 %v316
      %510 = vmatpush1.msra.mxu0 %v315
      %511 = vmatprep.subr.mxu0 %v319
      %512 = vmatpush1.msra.mxu0 %v318
      %513 = vmatprep.subr.mxu0 %v322
      %514 = vmatpush1.msra.mxu0 %v321
      %515 = vmatprep.subr.mxu0 %v325
      %516 = vmatpush1.msra.mxu0 %v324
      %517 = vmatprep.subr.mxu0 %v328
      %518 = vmatpush1.msra.mxu0 %v327
      %519 = vmatprep.subr.mxu0 %v331
      %520 = vmatpush1.msra.mxu0 %v330
      %521 = vmatprep.subr.mxu0 %v334
      %522 = vmatpush1.msra.mxu0 %v333
      %523 = vmatprep.subr.mxu0 %v337
      %524 = vmatpush1.msra.mxu0 %v336
      %525 = vmatprep.subr.mxu0 %v340
      %526 = vmatpush1.msra.mxu0 %v339
      %527 = vmatprep.subr.mxu0 %v498
      %528 = vmatpush1.msra.mxu0 %v495
      %529 = vmatprep.subr.mxu0 0.0
      %530 = vmatpush1.msra.mxu0 0.0
      %531 = vmatprep.subr.mxu0 0.0
      %532 = vmatpush1.msra.mxu0 0.0
      %533 = vmatprep.subr.mxu0 0.0
      %534 = vmatpush1.msra.mxu0 0.0
      %535 = vmatprep.subr.mxu0 0.0
      %536 = vmatpush1.msra.mxu0 0.0
      %537 = vmatprep.subr.mxu0 0.0
      %538 = vmatpush1.msra.mxu0 0.0
      %539 = vmatprep.subr.mxu0 0.0
      %540 = vmatpush1.msra.mxu0 0.0
      %541 = vmatprep.subr.mxu0 0.0
      %542 = vmatpush1.msra.mxu0 0.0
      %543 = vmatprep.subr.mxu0 0.0
      %544 = vmatpush1.msra.mxu0 0.0
      %545 = vmatprep.subr.mxu0 0.0
      %546 = vmatpush1.msra.mxu0 0.0
      %547 = vmatprep.subr.mxu0 0.0
      %548 = vmatpush1.msra.mxu0 0.0
      %549 = vmatprep.subr.mxu0 0.0
      %550 = vmatpush1.msra.mxu0 0.0
      %551 = vmatprep.subr.mxu0 0.0
      %552 = vmatpush1.msra.mxu0 0.0
      %553 = vmatprep.subr.mxu0 0.0
      %554 = vmatpush1.msra.mxu0 0.0
      %555 = vmatprep.subr.mxu0 0.0
      %556 = vmatpush1.msra.mxu0 0.0
      %557 = vmatprep.subr.mxu0 0.0
      %558 = vmatpush1.msra.mxu0 0.0
      %559 = vmatprep.subr.mxu0 0.0
      %560 = vmatpush1.msra.mxu0 0.0
      %561 = vmatprep.subr.mxu0 0.0
      %562 = vmatpush1.msra.mxu0 0.0
      %563 = vmatprep.subr.mxu0 0.0
      %564 = vmatpush1.msra.mxu0 0.0
      %565 = vmatprep.subr.mxu0 0.0
      %566 = vmatpush1.msra.mxu0 0.0
      %567 = vmatprep.mubr.f32.mxu0 0.0
      %568 = vmatmul.mubr.f32.gmra.mrb[0].mxu0 %v455
      %v569 = vpop.f32.mrb[0].mxu0
      %v570 = vadd.f32 0.0, %v569
      %v571 = vpop.f32.mrb[0].mxu0
      %v572 = vadd.f32 0.0, %v571
      %573 = vmatprep.mubr.f32.mxu0 0.0
      %574 = vmatmul.mubr.f32.gmra.mrb[0].mxu0 %v458
      %v575 = vpop.f32.mrb[0].mxu0
      %v576 = vadd.f32 0.0, %v575
      %v577 = vpop.f32.mrb[0].mxu0
      %v578 = vadd.f32 0.0, %v577
      %579 = vmatprep.mubr.f32.mxu0 0.0
      %580 = vmatmul.mubr.f32.gmra.mrb[0].mxu0 %v461
      %v581 = vpop.f32.mrb[0].mxu0
      %v582 = vadd.f32 0.0, %v581
      %v583 = vpop.f32.mrb[0].mxu0
      %v584 = vadd.f32 0.0, %v583
      %585 = vmatprep.mubr.f32.mxu0 0.0
      %586 = vmatmul.mubr.f32.gmra.mrb[0].mxu0 %v464
      %v587 = vpop.f32.mrb[0].mxu0
      %v588 = vadd.f32 0.0, %v587
      %v589 = vpop.f32.mrb[0].mxu0
      %v590 = vadd.f32 0.0, %v589
      %591 = vmatprep.mubr.f32.mxu0 0.0
      %592 = vmatmul.mubr.f32.gmra.mrb[0].mxu0 %v467
      %v593 = vpop.f32.mrb[0].mxu0
      %v594 = vadd.f32 0.0, %v593
      %v595 = vpop.f32.mrb[0].mxu0
      %v596 = vadd.f32 0.0, %v595
      %597 = vmatprep.mubr.f32.mxu0 0.0
      %598 = vmatmul.mubr.f32.gmra.mrb[0].mxu0 %v470
      %v599 = vpop.f32.mrb[0].mxu0
      %v600 = vadd.f32 0.0, %v599
      %v601 = vpop.f32.mrb[0].mxu0
      %v602 = vadd.f32 0.0, %v601
      %603 = vmatprep.mubr.f32.mxu0 0.0
      %604 = vmatmul.mubr.f32.gmra.mrb[0].mxu0 %v473
      %v605 = vpop.f32.mrb[0].mxu0
      %v606 = vadd.f32 0.0, %v605
      %v607 = vpop.f32.mrb[0].mxu0
      %v608 = vadd.f32 0.0, %v607
      %609 = vmatprep.mubr.f32.mxu0 0.0
      %610 = vmatmul.mubr.f32.gmra.mrb[0].mxu0 %v476
      %v611 = vpop.f32.mrb[0].mxu0
      %v612 = vadd.f32 0.0, %v611
      %v613 = vpop.f32.mrb[0].mxu0
      %v614 = vadd.f32 0.0, %v613
      %615 = vmatprep.mubr.f32.mxu0 0.0
      %616 = vmatmul.mubr.f32.gmra.mrb[0].mxu0 %v479
      %v617 = vpop.f32.mrb[0].mxu0
      %v618 = vadd.f32 0.0, %v617
      %v619 = vpop.f32.mrb[0].mxu0
      %v620 = vadd.f32 0.0, %v619
      %621 = vmatprep.mubr.f32.mxu0 0.0
      %622 = vmatmul.mubr.f32.gmra.mrb[0].mxu0 %v482
      %v623 = vpop.f32.mrb[0].mxu0
      %v624 = vadd.f32 0.0, %v623
      %v625 = vpop.f32.mrb[0].mxu0
      %v626 = vadd.f32 0.0, %v625
      %627 = vmatprep.mubr.f32.mxu0 0.0
      %628 = vmatmul.mubr.f32.gmra.mrb[0].mxu0 %v485
      %v629 = vpop.f32.mrb[0].mxu0
      %v630 = vadd.f32 0.0, %v629
      %v631 = vpop.f32.mrb[0].mxu0
      %v632 = vadd.f32 0.0, %v631
      %633 = vmatprep.mubr.f32.mxu0 0.0
      %634 = vmatmul.mubr.f32.gmra.mrb[0].mxu0 %v488
      %v635 = vpop.f32.mrb[0].mxu0
      %v636 = vadd.f32 0.0, %v635
      %v637 = vpop.f32.mrb[0].mxu0
      %v638 = vadd.f32 0.0, %v637
      %639 = vmatprep.mubr.f32.mxu0 0.0
      %640 = vmatmul.mubr.f32.gmra.mrb[0].mxu0 %v491
      %v641 = vpop.f32.mrb[0].mxu0
      %v642 = vadd.f32 0.0, %v641
      %v643 = vpop.f32.mrb[0].mxu0
      %v644 = vadd.f32 0.0, %v643
      %645 = vdwg.mxu0
      %646 = vmatprep.subr.mxu0 0.0
      %647 = vmatpush1.msra.mxu0 %v308
      %648 = vmatprep.subr.mxu0 0.0
      %649 = vmatpush1.msra.mxu0 %v311
      %650 = vmatprep.subr.mxu0 0.0
      %651 = vmatpush1.msra.mxu0 %v314
      %652 = vmatprep.subr.mxu0 0.0
      %653 = vmatpush1.msra.mxu0 %v317
      %654 = vmatprep.subr.mxu0 0.0
      %655 = vmatpush1.msra.mxu0 %v320
      %656 = vmatprep.subr.mxu0 0.0
      %657 = vmatpush1.msra.mxu0 %v323
      %658 = vmatprep.subr.mxu0 0.0
      %659 = vmatpush1.msra.mxu0 %v326
      %660 = vmatprep.subr.mxu0 0.0
      %661 = vmatpush1.msra.mxu0 %v329
      %662 = vmatprep.subr.mxu0 0.0
      %663 = vmatpush1.msra.mxu0 %v332
      %664 = vmatprep.subr.mxu0 0.0
      %665 = vmatpush1.msra.mxu0 %v335
      %666 = vmatprep.subr.mxu0 0.0
      %667 = vmatpush1.msra.mxu0 %v338
      %668 = vmatprep.subr.mxu0 0.0
      %669 = vmatpush1.msra.mxu0 %v341
      %670 = vmatprep.subr.mxu0 0.0
      %671 = vmatpush1.msra.mxu0 %v501
      %672 = vmatprep.subr.mxu0 0.0
      %673 = vmatpush1.msra.mxu0 0.0
      %674 = vmatprep.subr.mxu0 0.0
      %675 = vmatpush1.msra.mxu0 0.0
      %676 = vmatprep.subr.mxu0 0.0
      %677 = vmatpush1.msra.mxu0 0.0
      %678 = vmatprep.subr.mxu0 0.0
      %679 = vmatpush1.msra.mxu0 0.0
      %680 = vmatprep.subr.mxu0 0.0
      %681 = vmatpush1.msra.mxu0 0.0
      %682 = vmatprep.subr.mxu0 0.0
      %683 = vmatpush1.msra.mxu0 0.0
      %684 = vmatprep.subr.mxu0 0.0
      %685 = vmatpush1.msra.mxu0 0.0
      %686 = vmatprep.subr.mxu0 0.0
      %687 = vmatpush1.msra.mxu0 0.0
      %688 = vmatprep.subr.mxu0 0.0
      %689 = vmatpush1.msra.mxu0 0.0
      %690 = vmatprep.subr.mxu0 0.0
      %691 = vmatpush1.msra.mxu0 0.0
      %692 = vmatprep.subr.mxu0 0.0
      %693 = vmatpush1.msra.mxu0 0.0
      %694 = vmatprep.subr.mxu0 0.0
      %695 = vmatpush1.msra.mxu0 0.0
      %696 = vmatprep.subr.mxu0 0.0
      %697 = vmatpush1.msra.mxu0 0.0
      %698 = vmatprep.subr.mxu0 0.0
      %699 = vmatpush1.msra.mxu0 0.0
      %700 = vmatprep.subr.mxu0 0.0
      %701 = vmatpush1.msra.mxu0 0.0
      %702 = vmatprep.subr.mxu0 0.0
      %703 = vmatpush1.msra.mxu0 0.0
      %704 = vmatprep.subr.mxu0 0.0
      %705 = vmatpush1.msra.mxu0 0.0
      %706 = vmatprep.subr.mxu0 0.0
      %707 = vmatpush1.msra.mxu0 0.0
      %708 = vmatprep.subr.mxu0 0.0
      %709 = vmatpush1.msra.mxu0 0.0
      %710 = vmatprep.mubr.f32.mxu0 0.0
      %711 = vmatmul.mubr.f32.gmra.mrb[0].mxu0 %v455
      %v712 = vpop.f32.mrb[0].mxu0
      %v713 = vadd.f32 0.0, %v712
      %v714 = vpop.f32.mrb[0].mxu0
      %715 = vmatprep.mubr.f32.mxu0 0.0
      %716 = vmatmul.mubr.f32.gmra.mrb[0].mxu0 %v458
      %v717 = vpop.f32.mrb[0].mxu0
      %v718 = vadd.f32 0.0, %v717
      %v719 = vpop.f32.mrb[0].mxu0
      %720 = vmatprep.mubr.f32.mxu0 0.0
      %721 = vmatmul.mubr.f32.gmra.mrb[0].mxu0 %v461
      %v722 = vpop.f32.mrb[0].mxu0
      %v723 = vadd.f32 0.0, %v722
      %v724 = vpop.f32.mrb[0].mxu0
      %725 = vmatprep.mubr.f32.mxu0 0.0
      %726 = vmatmul.mubr.f32.gmra.mrb[0].mxu0 %v464
      %v727 = vpop.f32.mrb[0].mxu0
      %v728 = vadd.f32 0.0, %v727
      %v729 = vpop.f32.mrb[0].mxu0
      %730 = vmatprep.mubr.f32.mxu0 0.0
      %731 = vmatmul.mubr.f32.gmra.mrb[0].mxu0 %v467
      %v732 = vpop.f32.mrb[0].mxu0
      %v733 = vadd.f32 0.0, %v732
      %v734 = vpop.f32.mrb[0].mxu0
      %735 = vmatprep.mubr.f32.mxu0 0.0
      %736 = vmatmul.mubr.f32.gmra.mrb[0].mxu0 %v470
      %v737 = vpop.f32.mrb[0].mxu0
      %v738 = vadd.f32 0.0, %v737
      %v739 = vpop.f32.mrb[0].mxu0
      %740 = vmatprep.mubr.f32.mxu0 0.0
      %741 = vmatmul.mubr.f32.gmra.mrb[0].mxu0 %v473
      %v742 = vpop.f32.mrb[0].mxu0
      %v743 = vadd.f32 0.0, %v742
      %v744 = vpop.f32.mrb[0].mxu0
      %745 = vmatprep.mubr.f32.mxu0 0.0
      %746 = vmatmul.mubr.f32.gmra.mrb[0].mxu0 %v476
      %v747 = vpop.f32.mrb[0].mxu0
      %v748 = vadd.f32 0.0, %v747
      %v749 = vpop.f32.mrb[0].mxu0
      %750 = vmatprep.mubr.f32.mxu0 0.0
      %751 = vmatmul.mubr.f32.gmra.mrb[0].mxu0 %v479
      %v752 = vpop.f32.mrb[0].mxu0
      %v753 = vadd.f32 0.0, %v752
      %v754 = vpop.f32.mrb[0].mxu0
      %755 = vmatprep.mubr.f32.mxu0 0.0
      %756 = vmatmul.mubr.f32.gmra.mrb[0].mxu0 %v482
      %v757 = vpop.f32.mrb[0].mxu0
      %v758 = vadd.f32 0.0, %v757
      %v759 = vpop.f32.mrb[0].mxu0
      %760 = vmatprep.mubr.f32.mxu0 0.0
      %761 = vmatmul.mubr.f32.gmra.mrb[0].mxu0 %v485
      %v762 = vpop.f32.mrb[0].mxu0
      %v763 = vadd.f32 0.0, %v762
      %v764 = vpop.f32.mrb[0].mxu0
      %765 = vmatprep.mubr.f32.mxu0 0.0
      %766 = vmatmul.mubr.f32.gmra.mrb[0].mxu0 %v488
      %v767 = vpop.f32.mrb[0].mxu0
      %v768 = vadd.f32 0.0, %v767
      %v769 = vpop.f32.mrb[0].mxu0
      %770 = vmatprep.mubr.f32.mxu0 0.0
      %771 = vmatmul.mubr.f32.gmra.mrb[0].mxu0 %v491
      %v772 = vpop.f32.mrb[0].mxu0
      %v773 = vadd.f32 0.0, %v772
      %v774 = vpop.f32.mrb[0].mxu0
      %775 = vdwg.mxu0
      %v777 = vsel %vm453, %v440, 0
      %v780 = vsel %vm453, %v441, 0
      %v783 = vsel %vm453, %v442, 0
      %v786 = vsel %vm453, %v443, 0
      %v789 = vsel %vm453, %v444, 0
      %v792 = vsel %vm453, %v445, 0
      %v795 = vsel %vm453, %v446, 0
      %v798 = vsel %vm453, %v447, 0
      %v801 = vsel %vm453, %v448, 0
      %v804 = vsel %vm453, %v449, 0
      %v807 = vsel %vm453, %v450, 0
      %v810 = vsel %vm453, %v451, 0
      %v813 = vsel %vm453, %v452, 0
      %815 = vmatprep.subr.mxu0 %v307
      %816 = vmatpush1.msra.mxu0 %v306
      %817 = vmatprep.subr.mxu0 %v310
      %818 = vmatpush1.msra.mxu0 %v309
      %819 = vmatprep.subr.mxu0 %v313
      %820 = vmatpush1.msra.mxu0 %v312
      %821 = vmatprep.subr.mxu0 %v316
      %822 = vmatpush1.msra.mxu0 %v315
      %823 = vmatprep.subr.mxu0 %v319
      %824 = vmatpush1.msra.mxu0 %v318
      %825 = vmatprep.subr.mxu0 %v322
      %826 = vmatpush1.msra.mxu0 %v321
      %827 = vmatprep.subr.mxu0 %v325
      %828 = vmatpush1.msra.mxu0 %v324
      %829 = vmatprep.subr.mxu0 %v328
      %830 = vmatpush1.msra.mxu0 %v327
      %831 = vmatprep.subr.mxu0 %v331
      %832 = vmatpush1.msra.mxu0 %v330
      %833 = vmatprep.subr.mxu0 %v334
      %834 = vmatpush1.msra.mxu0 %v333
      %835 = vmatprep.subr.mxu0 %v337
      %836 = vmatpush1.msra.mxu0 %v336
      %837 = vmatprep.subr.mxu0 %v340
      %838 = vmatpush1.msra.mxu0 %v339
      %839 = vmatprep.subr.mxu0 %v498
      %840 = vmatpush1.msra.mxu0 %v495
      %841 = vmatprep.subr.mxu0 0.0
      %842 = vmatpush1.msra.mxu0 0.0
      %843 = vmatprep.subr.mxu0 0.0
      %844 = vmatpush1.msra.mxu0 0.0
      %845 = vmatprep.subr.mxu0 0.0
      %846 = vmatpush1.msra.mxu0 0.0
      %847 = vmatprep.subr.mxu0 0.0
      %848 = vmatpush1.msra.mxu0 0.0
      %849 = vmatprep.subr.mxu0 0.0
      %850 = vmatpush1.msra.mxu0 0.0
      %851 = vmatprep.subr.mxu0 0.0
      %852 = vmatpush1.msra.mxu0 0.0
      %853 = vmatprep.subr.mxu0 0.0
      %854 = vmatpush1.msra.mxu0 0.0
      %855 = vmatprep.subr.mxu0 0.0
      %856 = vmatpush1.msra.mxu0 0.0
      %857 = vmatprep.subr.mxu0 0.0
      %858 = vmatpush1.msra.mxu0 0.0
      %859 = vmatprep.subr.mxu0 0.0
      %860 = vmatpush1.msra.mxu0 0.0
      %861 = vmatprep.subr.mxu0 0.0
      %862 = vmatpush1.msra.mxu0 0.0
      %863 = vmatprep.subr.mxu0 0.0
      %864 = vmatpush1.msra.mxu0 0.0
      %865 = vmatprep.subr.mxu0 0.0
      %866 = vmatpush1.msra.mxu0 0.0
      %867 = vmatprep.subr.mxu0 0.0
      %868 = vmatpush1.msra.mxu0 0.0
      %869 = vmatprep.subr.mxu0 0.0
      %870 = vmatpush1.msra.mxu0 0.0
      %871 = vmatprep.subr.mxu0 0.0
      %872 = vmatpush1.msra.mxu0 0.0
      %873 = vmatprep.subr.mxu0 0.0
      %874 = vmatpush1.msra.mxu0 0.0
      %875 = vmatprep.subr.mxu0 0.0
      %876 = vmatpush1.msra.mxu0 0.0
      %877 = vmatprep.subr.mxu0 0.0
      %878 = vmatpush1.msra.mxu0 0.0
      %879 = vmatprep.mubr.f32.mxu0 0.0
      %880 = vmatmul.mubr.f32.gmra.mrb[0].mxu0 %v777
      %v881 = vpop.f32.mrb[0].mxu0
      %v882 = vadd.f32 0.0, %v881
      %v883 = vpop.f32.mrb[0].mxu0
      %v884 = vadd.f32 0.0, %v883
      %885 = vmatprep.mubr.f32.mxu0 0.0
      %886 = vmatmul.mubr.f32.gmra.mrb[0].mxu0 %v780
      %v887 = vpop.f32.mrb[0].mxu0
      %v888 = vadd.f32 0.0, %v887
      %v889 = vpop.f32.mrb[0].mxu0
      %v890 = vadd.f32 0.0, %v889
      %891 = vmatprep.mubr.f32.mxu0 0.0
      %892 = vmatmul.mubr.f32.gmra.mrb[0].mxu0 %v783
      %v893 = vpop.f32.mrb[0].mxu0
      %v894 = vadd.f32 0.0, %v893
      %v895 = vpop.f32.mrb[0].mxu0
      %v896 = vadd.f32 0.0, %v895
      %897 = vmatprep.mubr.f32.mxu0 0.0
      %898 = vmatmul.mubr.f32.gmra.mrb[0].mxu0 %v786
      %v899 = vpop.f32.mrb[0].mxu0
      %v900 = vadd.f32 0.0, %v899
      %v901 = vpop.f32.mrb[0].mxu0
      %v902 = vadd.f32 0.0, %v901
      %903 = vmatprep.mubr.f32.mxu0 0.0
      %904 = vmatmul.mubr.f32.gmra.mrb[0].mxu0 %v789
      %v905 = vpop.f32.mrb[0].mxu0
      %v906 = vadd.f32 0.0, %v905
      %v907 = vpop.f32.mrb[0].mxu0
      %v908 = vadd.f32 0.0, %v907
      %909 = vmatprep.mubr.f32.mxu0 0.0
      %910 = vmatmul.mubr.f32.gmra.mrb[0].mxu0 %v792
      %v911 = vpop.f32.mrb[0].mxu0
      %v912 = vadd.f32 0.0, %v911
      %v913 = vpop.f32.mrb[0].mxu0
      %v914 = vadd.f32 0.0, %v913
      %915 = vmatprep.mubr.f32.mxu0 0.0
      %916 = vmatmul.mubr.f32.gmra.mrb[0].mxu0 %v795
      %v917 = vpop.f32.mrb[0].mxu0
      %v918 = vadd.f32 0.0, %v917
      %v919 = vpop.f32.mrb[0].mxu0
      %v920 = vadd.f32 0.0, %v919
      %921 = vmatprep.mubr.f32.mxu0 0.0
      %922 = vmatmul.mubr.f32.gmra.mrb[0].mxu0 %v798
      %v923 = vpop.f32.mrb[0].mxu0
      %v924 = vadd.f32 0.0, %v923
      %v925 = vpop.f32.mrb[0].mxu0
      %v926 = vadd.f32 0.0, %v925
      %927 = vmatprep.mubr.f32.mxu0 0.0
      %928 = vmatmul.mubr.f32.gmra.mrb[0].mxu0 %v801
      %v929 = vpop.f32.mrb[0].mxu0
      %v930 = vadd.f32 0.0, %v929
      %v931 = vpop.f32.mrb[0].mxu0
      %v932 = vadd.f32 0.0, %v931
      %933 = vmatprep.mubr.f32.mxu0 0.0
      %934 = vmatmul.mubr.f32.gmra.mrb[0].mxu0 %v804
      %v935 = vpop.f32.mrb[0].mxu0
      %v936 = vadd.f32 0.0, %v935
      %v937 = vpop.f32.mrb[0].mxu0
      %v938 = vadd.f32 0.0, %v937
      %939 = vmatprep.mubr.f32.mxu0 0.0
      %940 = vmatmul.mubr.f32.gmra.mrb[0].mxu0 %v807
      %v941 = vpop.f32.mrb[0].mxu0
      %v942 = vadd.f32 0.0, %v941
      %v943 = vpop.f32.mrb[0].mxu0
      %v944 = vadd.f32 0.0, %v943
      %945 = vmatprep.mubr.f32.mxu0 0.0
      %946 = vmatmul.mubr.f32.gmra.mrb[0].mxu0 %v810
      %v947 = vpop.f32.mrb[0].mxu0
      %v948 = vadd.f32 0.0, %v947
      %v949 = vpop.f32.mrb[0].mxu0
      %v950 = vadd.f32 0.0, %v949
      %951 = vmatprep.mubr.f32.mxu0 0.0
      %952 = vmatmul.mubr.f32.gmra.mrb[0].mxu0 %v813
      %v953 = vpop.f32.mrb[0].mxu0
      %v954 = vadd.f32 0.0, %v953
      %v955 = vpop.f32.mrb[0].mxu0
      %v956 = vadd.f32 0.0, %v955
      %957 = vdwg.mxu0
      %958 = vmatprep.subr.mxu0 0.0
      %959 = vmatpush1.msra.mxu0 %v308
      %960 = vmatprep.subr.mxu0 0.0
      %961 = vmatpush1.msra.mxu0 %v311
      %962 = vmatprep.subr.mxu0 0.0
      %963 = vmatpush1.msra.mxu0 %v314
      %964 = vmatprep.subr.mxu0 0.0
      %965 = vmatpush1.msra.mxu0 %v317
      %966 = vmatprep.subr.mxu0 0.0
      %967 = vmatpush1.msra.mxu0 %v320
      %968 = vmatprep.subr.mxu0 0.0
      %969 = vmatpush1.msra.mxu0 %v323
      %970 = vmatprep.subr.mxu0 0.0
      %971 = vmatpush1.msra.mxu0 %v326
      %972 = vmatprep.subr.mxu0 0.0
      %973 = vmatpush1.msra.mxu0 %v329
      %974 = vmatprep.subr.mxu0 0.0
      %975 = vmatpush1.msra.mxu0 %v332
      %976 = vmatprep.subr.mxu0 0.0
      %977 = vmatpush1.msra.mxu0 %v335
      %978 = vmatprep.subr.mxu0 0.0
      %979 = vmatpush1.msra.mxu0 %v338
      %980 = vmatprep.subr.mxu0 0.0
      %981 = vmatpush1.msra.mxu0 %v341
      %982 = vmatprep.subr.mxu0 0.0
      %983 = vmatpush1.msra.mxu0 %v501
      %984 = vmatprep.subr.mxu0 0.0
      %985 = vmatpush1.msra.mxu0 0.0
      %986 = vmatprep.subr.mxu0 0.0
      %987 = vmatpush1.msra.mxu0 0.0
      %988 = vmatprep.subr.mxu0 0.0
      %989 = vmatpush1.msra.mxu0 0.0
      %990 = vmatprep.subr.mxu0 0.0
      %991 = vmatpush1.msra.mxu0 0.0
      %992 = vmatprep.subr.mxu0 0.0
      %993 = vmatpush1.msra.mxu0 0.0
      %994 = vmatprep.subr.mxu0 0.0
      %995 = vmatpush1.msra.mxu0 0.0
      %996 = vmatprep.subr.mxu0 0.0
      %997 = vmatpush1.msra.mxu0 0.0
      %998 = vmatprep.subr.mxu0 0.0
      %999 = vmatpush1.msra.mxu0 0.0
      %1000 = vmatprep.subr.mxu0 0.0
      %1001 = vmatpush1.msra.mxu0 0.0
      %1002 = vmatprep.subr.mxu0 0.0
      %1003 = vmatpush1.msra.mxu0 0.0
      %1004 = vmatprep.subr.mxu0 0.0
      %1005 = vmatpush1.msra.mxu0 0.0
      %1006 = vmatprep.subr.mxu0 0.0
      %1007 = vmatpush1.msra.mxu0 0.0
      %1008 = vmatprep.subr.mxu0 0.0
      %1009 = vmatpush1.msra.mxu0 0.0
      %1010 = vmatprep.subr.mxu0 0.0
      %1011 = vmatpush1.msra.mxu0 0.0
      %1012 = vmatprep.subr.mxu0 0.0
      %1013 = vmatpush1.msra.mxu0 0.0
      %1014 = vmatprep.subr.mxu0 0.0
      %1015 = vmatpush1.msra.mxu0 0.0
      %1016 = vmatprep.subr.mxu0 0.0
      %1017 = vmatpush1.msra.mxu0 0.0
      %1018 = vmatprep.subr.mxu0 0.0
      %1019 = vmatpush1.msra.mxu0 0.0
      %1020 = vmatprep.subr.mxu0 0.0
      %1021 = vmatpush1.msra.mxu0 0.0
      %1022 = vmatprep.mubr.f32.mxu0 0.0
      %1023 = vmatmul.mubr.f32.gmra.mrb[0].mxu0 %v777
      %v1024 = vpop.f32.mrb[0].mxu0
      %v1025 = vadd.f32 0.0, %v1024
      %v1026 = vpop.f32.mrb[0].mxu0
      %1027 = vmatprep.mubr.f32.mxu0 0.0
      %1028 = vmatmul.mubr.f32.gmra.mrb[0].mxu0 %v780
      %v1029 = vpop.f32.mrb[0].mxu0
      %v1030 = vadd.f32 0.0, %v1029
      %v1031 = vpop.f32.mrb[0].mxu0
      %1032 = vmatprep.mubr.f32.mxu0 0.0
      %1033 = vmatmul.mubr.f32.gmra.mrb[0].mxu0 %v783
      %v1034 = vpop.f32.mrb[0].mxu0
      %v1035 = vadd.f32 0.0, %v1034
      %v1036 = vpop.f32.mrb[0].mxu0
      %1037 = vmatprep.mubr.f32.mxu0 0.0
      %1038 = vmatmul.mubr.f32.gmra.mrb[0].mxu0 %v786
      %v1039 = vpop.f32.mrb[0].mxu0
      %v1040 = vadd.f32 0.0, %v1039
      %v1041 = vpop.f32.mrb[0].mxu0
      %1042 = vmatprep.mubr.f32.mxu0 0.0
      %1043 = vmatmul.mubr.f32.gmra.mrb[0].mxu0 %v789
      %v1044 = vpop.f32.mrb[0].mxu0
      %v1045 = vadd.f32 0.0, %v1044
      %v1046 = vpop.f32.mrb[0].mxu0
      %1047 = vmatprep.mubr.f32.mxu0 0.0
      %1048 = vmatmul.mubr.f32.gmra.mrb[0].mxu0 %v792
      %v1049 = vpop.f32.mrb[0].mxu0
      %v1050 = vadd.f32 0.0, %v1049
      %v1051 = vpop.f32.mrb[0].mxu0
      %1052 = vmatprep.mubr.f32.mxu0 0.0
      %1053 = vmatmul.mubr.f32.gmra.mrb[0].mxu0 %v795
      %v1054 = vpop.f32.mrb[0].mxu0
      %v1055 = vadd.f32 0.0, %v1054
      %v1056 = vpop.f32.mrb[0].mxu0
      %1057 = vmatprep.mubr.f32.mxu0 0.0
      %1058 = vmatmul.mubr.f32.gmra.mrb[0].mxu0 %v798
      %v1059 = vpop.f32.mrb[0].mxu0
      %v1060 = vadd.f32 0.0, %v1059
      %v1061 = vpop.f32.mrb[0].mxu0
      %1062 = vmatprep.mubr.f32.mxu0 0.0
      %1063 = vmatmul.mubr.f32.gmra.mrb[0].mxu0 %v801
      %v1064 = vpop.f32.mrb[0].mxu0
      %v1065 = vadd.f32 0.0, %v1064
      %v1066 = vpop.f32.mrb[0].mxu0
      %1067 = vmatprep.mubr.f32.mxu0 0.0
      %1068 = vmatmul.mubr.f32.gmra.mrb[0].mxu0 %v804
      %v1069 = vpop.f32.mrb[0].mxu0
      %v1070 = vadd.f32 0.0, %v1069
      %v1071 = vpop.f32.mrb[0].mxu0
      %1072 = vmatprep.mubr.f32.mxu0 0.0
      %1073 = vmatmul.mubr.f32.gmra.mrb[0].mxu0 %v807
      %v1074 = vpop.f32.mrb[0].mxu0
      %v1075 = vadd.f32 0.0, %v1074
      %v1076 = vpop.f32.mrb[0].mxu0
      %1077 = vmatprep.mubr.f32.mxu0 0.0
      %1078 = vmatmul.mubr.f32.gmra.mrb[0].mxu0 %v810
      %v1079 = vpop.f32.mrb[0].mxu0
      %v1080 = vadd.f32 0.0, %v1079
      %v1081 = vpop.f32.mrb[0].mxu0
      %1082 = vmatprep.mubr.f32.mxu0 0.0
      %1083 = vmatmul.mubr.f32.gmra.mrb[0].mxu0 %v813
      %v1084 = vpop.f32.mrb[0].mxu0
      %v1085 = vadd.f32 0.0, %v1084
      %v1086 = vpop.f32.mrb[0].mxu0
      %1087 = vdwg.mxu0
      %v1088 = vld [vmem:[%s1] sm:$0xff]
      %v1089 = vld [vmem:[%s1 + $0x8] sm:$0xff]
      %v1090 = vld [vmem:[%s1 + $0x10] sm:$0xff]
      %v1091 = vld [vmem:[%s1 + $0x18] sm:$0xff]
      %v1092 = vld [vmem:[%s1 + $0x20] sm:$0xff]
      %v1093 = vld [vmem:[%s1 + $0x28] sm:$0xff]
      %v1094 = vld [vmem:[%s1 + $0x30] sm:$0xff]
      %v1095 = vld [vmem:[%s1 + $0x38] sm:$0xff]
      %v1096 = vld [vmem:[%s1 + $0x40] sm:$0xff]
      %v1097 = vld [vmem:[%s1 + $0x48] sm:$0xff]
      %v1098 = vld [vmem:[%s1 + $0x50] sm:$0xff]
      %v1099 = vld [vmem:[%s1 + $0x58] sm:$0xff]
      %v1100 = vld [vmem:[%s1 + $0x60] sm:$0xff]
      %v1101 = vld [vmem:[%s1 + $0x68] sm:$0xff]
      %v1102 = vld [vmem:[%s1 + $0x70] sm:$0xff]
      %v1103 = vld [vmem:[%s1 + $0x78] sm:$0xff]
      %v1104 = vld [vmem:[%s1 + $0x80] sm:$0xff]
      %v1105 = vld [vmem:[%s1 + $0x88] sm:$0xff]
      %v1106 = vld [vmem:[%s1 + $0x90] sm:$0xff]
      %v1107 = vld [vmem:[%s1 + $0x98] sm:$0xff]
      %v1108 = vld [vmem:[%s1 + $0xa0] sm:$0xff]
      %v1109 = vld [vmem:[%s1 + $0xa8] sm:$0xff]
      %v1110 = vld [vmem:[%s1 + $0xb0] sm:$0xff]
      %v1111 = vld [vmem:[%s1 + $0xb8] sm:$0xff]
      %v1112 = vld [vmem:[%s1 + $0xc0] sm:$0xff]
      %v1113 = vld [vmem:[%s1 + $0xc8] sm:$0xff]
      %v1114 = vld [vmem:[%s1 + $0xd0] sm:$0xff]
      %v1115 = vld [vmem:[%s1 + $0xd8] sm:$0xff]
      %v1116 = vld [vmem:[%s1 + $0xe0] sm:$0xff]
      %v1117 = vld [vmem:[%s1 + $0xe8] sm:$0xff]
      %v1118 = vld [vmem:[%s1 + $0xf0] sm:$0xff]
      %v1119 = vld [vmem:[%s1 + $0xf8] sm:$0xff]
      %v1120 = vld [vmem:[%s1 + $0x100] sm:$0xff]
      %v1121 = vld [vmem:[%s1 + $0x108] sm:$0xff]
      %v1122 = vld [vmem:[%s1 + $0x110] sm:$0xff]
      %v1123 = vld [vmem:[%s1 + $0x118] sm:$0xff]
      %v1124 = vld [vmem:[%s1 + $0x120] sm:$0xff]
      %v1125 = vld [vmem:[%s1 + $0x128] sm:$0xff]
      %v1126 = vld [vmem:[%s1 + $0x130] sm:$0xff]
      %v1127 = vld [vmem:[%s1 + $0x138] sm:$0xff]
      %v1128 = vld [vmem:[%s1 + $0x140] sm:$0xff]
      %v1129 = vld [vmem:[%s1 + $0x148] sm:$0xff]
      %v1130 = vld [vmem:[%s1 + $0x150] sm:$0xff]
      %v1131 = vld [vmem:[%s1 + $0x158] sm:$0xff]
      %v1132 = vld [vmem:[%s1 + $0x160] sm:$0xff]
      %v1133 = vld [vmem:[%s1 + $0x168] sm:$0xff]
      %v1134 = vld [vmem:[%s1 + $0x170] sm:$0xff]
      %v1135 = vld [vmem:[%s1 + $0x178] sm:$0xff]
      %v1136 = vld [vmem:[%s1 + $0x180] sm:$0xff]
      %v1137 = vld [vmem:[%s1 + $0x188] sm:$0xff]
      %v1138 = vld [vmem:[%s1 + $0x190] sm:$0xff]
      %v1139 = vld [vmem:[%s1 + $0x198] sm:$0xff]
      %v1140 = vld [vmem:[%s1 + $0x1a0] sm:$0xff]
      %v1141 = vld [vmem:[%s1 + $0x1a8] sm:$0xff]
      %v1142 = vld [vmem:[%s1 + $0x1b0] sm:$0xff]
      %v1143 = vld [vmem:[%s1 + $0x1b8] sm:$0xff]
      %v1144 = vld [vmem:[%s1 + $0x1c0] sm:$0xff]
      %v1145 = vld [vmem:[%s1 + $0x1c8] sm:$0xff]
      %v1146 = vld [vmem:[%s1 + $0x1d0] sm:$0xff]
      %v1147 = vld [vmem:[%s1 + $0x1d8] sm:$0xff]
      %v1148 = vld [vmem:[%s1 + $0x1e0] sm:$0xff]
      %v1149 = vld [vmem:[%s1 + $0x1e8] sm:$0xff]
      %v1150 = vld [vmem:[%s1 + $0x1f0] sm:$0xff]
      %v1151 = vld [vmem:[%s1 + $0x1f8] sm:$0xff]
      %v1152 = vld [vmem:[%s1 + $0x200] sm:$0xff]
      %v1153 = vld [vmem:[%s1 + $0x208] sm:$0xff]
      %v1154 = vld [vmem:[%s1 + $0x210] sm:$0xff]
      %v1155 = vld [vmem:[%s1 + $0x218] sm:$0xff]
      %v1156 = vld [vmem:[%s1 + $0x220] sm:$0xff]
      %v1157 = vld [vmem:[%s1 + $0x228] sm:$0xff]
      %v1158 = vld [vmem:[%s1 + $0x230] sm:$0xff]
      %v1159 = vld [vmem:[%s1 + $0x238] sm:$0xff]
      %v1160 = vld [vmem:[%s1 + $0x240] sm:$0xff]
      %v1161 = vld [vmem:[%s1 + $0x248] sm:$0xff]
      %v1162 = vld [vmem:[%s1 + $0x250] sm:$0xff]
      %v1163 = vld [vmem:[%s1 + $0x258] sm:$0xff]
      %v1164 = vld [vmem:[%s1 + $0x260] sm:$0xff]
      %v1165 = vld [vmem:[%s1 + $0x268] sm:$0xff]
      %v1166 = vld [vmem:[%s1 + $0x270] sm:$0xff]
      %v1167 = vld [vmem:[%s1 + $0x278] sm:$0xff]
      %v1168 = vld [vmem:[%s1 + $0x280] sm:$0xff]
      %v1169 = vld [vmem:[%s1 + $0x288] sm:$0xff]
      %v1170 = vld [vmem:[%s1 + $0x290] sm:$0xff]
      %v1171 = vld [vmem:[%s1 + $0x298] sm:$0xff]
      %v1172 = vld [vmem:[%s1 + $0x2a0] sm:$0xff]
      %v1173 = vld [vmem:[%s1 + $0x2a8] sm:$0xff]
      %v1174 = vld [vmem:[%s1 + $0x2b0] sm:$0xff]
      %v1175 = vld [vmem:[%s1 + $0x2b8] sm:$0xff]
      %v1176 = vld [vmem:[%s1 + $0x2c0] sm:$0xff]
      %v1177 = vld [vmem:[%s1 + $0x2c8] sm:$0xff]
      %v1178 = vld [vmem:[%s1 + $0x2d0] sm:$0xff]
      %v1179 = vld [vmem:[%s1 + $0x2d8] sm:$0xff]
      %v1180 = vld [vmem:[%s1 + $0x2e0] sm:$0xff]
      %v1181 = vld [vmem:[%s1 + $0x2e8] sm:$0xff]
      %v1182 = vld [vmem:[%s1 + $0x2f0] sm:$0xff]
      %v1183 = vld [vmem:[%s1 + $0x2f8] sm:$0xff]
      %v1184 = vld [vmem:[%s1 + $0x300] sm:$0xff]
      %v1185 = vld [vmem:[%s1 + $0x308] sm:$0xff]
      %v1186 = vld [vmem:[%s1 + $0x310] sm:$0xff]
      %v1187 = vld [vmem:[%s1 + $0x318] sm:$0xff]
      %v1188 = vld [vmem:[%s1 + $0x320] sm:$0xff]
      %v1189 = vld [vmem:[%s1 + $0x328] sm:$0xff]
      %v1190 = vld [vmem:[%s1 + $0x330] sm:$0xff]
      %v1191 = vld [vmem:[%s1 + $0x338] sm:$0xff]
      %v1192 = vld [vmem:[%s1 + $0x340] sm:$0xff]
      %v1193 = vld [vmem:[%s1 + $0x348] sm:$0xff]
      %v1194 = vld [vmem:[%s1 + $0x350] sm:$0xff]
      %v1195 = vld [vmem:[%s1 + $0x358] sm:$0xff]
      %v1196 = vld [vmem:[%s1 + $0x360] sm:$0xff]
      %v1197 = vld [vmem:[%s1 + $0x368] sm:$0xff]
      %v1198 = vld [vmem:[%s1 + $0x370] sm:$0xff]
      %v1199 = vld [vmem:[%s1 + $0x378] sm:$0xff]
      %v1200 = vld [vmem:[%s1 + $0x380] sm:$0xff]
      %v1201 = vld [vmem:[%s1 + $0x388] sm:$0xff]
      %v1202 = vld [vmem:[%s1 + $0x390] sm:$0xff]
      %v1203 = vld [vmem:[%s1 + $0x398] sm:$0xff]
      %v1204 = vld [vmem:[%s1 + $0x3a0] sm:$0xff]
      %v1205 = vld [vmem:[%s1 + $0x3a8] sm:$0xff]
      %v1206 = vld [vmem:[%s1 + $0x3b0] sm:$0xff]
      %v1207 = vld [vmem:[%s1 + $0x3b8] sm:$0xff]
      %v1208 = vld [vmem:[%s1 + $0x3c0] sm:$0xff]
      %v1209 = vld [vmem:[%s1 + $0x3c8] sm:$0xff]
      %v1210 = vld [vmem:[%s1 + $0x3d0] sm:$0xff]
      %v1211 = vld [vmem:[%s1 + $0x3d8] sm:$0xff]
      %v1212 = vld [vmem:[%s1 + $0x3e0] sm:$0xff]
      %v1213 = vld [vmem:[%s1 + $0x3e8] sm:$0xff]
      %v1214 = vld [vmem:[%s1 + $0x3f0] sm:$0xff]
      %v1215 = vld [vmem:[%s1 + $0x3f8] sm:$0xff]
      %v1216 = vld [vmem:[%s1 + $0x400] sm:$0xff]
      %v1217 = vld [vmem:[%s1 + $0x408] sm:$0xff]
      %v1218 = vld [vmem:[%s1 + $0x410] sm:$0xff]
      %v1219 = vld [vmem:[%s1 + $0x418] sm:$0xff]
      %v1220 = vld [vmem:[%s1 + $0x420] sm:$0xff]
      %v1221 = vld [vmem:[%s1 + $0x428] sm:$0xff]
      %v1222 = vld [vmem:[%s1 + $0x430] sm:$0xff]
      %v1223 = vld [vmem:[%s1 + $0x438] sm:$0xff]
      %v1224 = vld [vmem:[%s1 + $0x440] sm:$0xff]
      %v1225 = vld [vmem:[%s1 + $0x448] sm:$0xff]
      %v1226 = vld [vmem:[%s1 + $0x450] sm:$0xff]
      %v1227 = vld [vmem:[%s1 + $0x458] sm:$0xff]
      %v1228 = vld [vmem:[%s1 + $0x460] sm:$0xff]
      %v1229 = vld [vmem:[%s1 + $0x468] sm:$0xff]
      %v1230 = vld [vmem:[%s1 + $0x470] sm:$0xff]
      %v1231 = vld [vmem:[%s1 + $0x478] sm:$0xff]
      %s1232 = scalar_lea.vmem %s1, 1152
      %v1233 = vld [vmem:[%s1232] sm:$0xff]
      %v1234 = vld [vmem:[%s1232 + $0x8] sm:$0xff]
      %v1235 = vld [vmem:[%s1232 + $0x10] sm:$0xff]
      %v1236 = vld [vmem:[%s1232 + $0x18] sm:$0xff]
      %v1237 = vld [vmem:[%s1232 + $0x20] sm:$0xff]
      %v1238 = vld [vmem:[%s1232 + $0x28] sm:$0xff]
      %v1239 = vld [vmem:[%s1232 + $0x30] sm:$0xff]
      %v1240 = vld [vmem:[%s1232 + $0x38] sm:$0xff]
      %v1241 = vld [vmem:[%s1232 + $0x40] sm:$0xff]
      %v1242 = vld [vmem:[%s1232 + $0x48] sm:$0xff]
      %v1243 = vld [vmem:[%s1232 + $0x50] sm:$0xff]
      %v1244 = vld [vmem:[%s1232 + $0x58] sm:$0xff]
      %v1245 = vld [vmem:[%s1232 + $0x60] sm:$0xff]
      %v1246 = vld [vmem:[%s1232 + $0x68] sm:$0xff]
      %v1247 = vld [vmem:[%s1232 + $0x70] sm:$0xff]
      %v1248 = vld [vmem:[%s1232 + $0x78] sm:$0xff]
      %v1249 = vld [vmem:[%s1232 + $0x80] sm:$0xff]
      %v1250 = vld [vmem:[%s1232 + $0x88] sm:$0xff]
      %v1251 = vld [vmem:[%s1232 + $0x90] sm:$0xff]
      %v1252 = vld [vmem:[%s1232 + $0x98] sm:$0xff]
      %v1253 = vld [vmem:[%s1232 + $0xa0] sm:$0xff]
      %v1254 = vld [vmem:[%s1232 + $0xa8] sm:$0xff]
      %v1255 = vld [vmem:[%s1232 + $0xb0] sm:$0xff]
      %v1256 = vld [vmem:[%s1232 + $0xb8] sm:$0xff]
      %v1257 = vld [vmem:[%s1232 + $0xc0] sm:$0xff]
      %v1258 = vld [vmem:[%s1232 + $0xc8] sm:$0xff]
      %v1259 = vld [vmem:[%s1232 + $0xd0] sm:$0xff]
      %v1260 = vld [vmem:[%s1232 + $0xd8] sm:$0xff]
      %v1261 = vld [vmem:[%s1232 + $0xe0] sm:$0xff]
      %v1262 = vld [vmem:[%s1232 + $0xe8] sm:$0xff]
      %v1263 = vld [vmem:[%s1232 + $0xf0] sm:$0xff]
      %v1264 = vld [vmem:[%s1232 + $0xf8] sm:$0xff]
      %v1265 = vld [vmem:[%s1232 + $0x100] sm:$0xff]
      %v1266 = vld [vmem:[%s1232 + $0x108] sm:$0xff]
      %v1267 = vld [vmem:[%s1232 + $0x110] sm:$0xff]
      %v1268 = vld [vmem:[%s1232 + $0x118] sm:$0xff]
      %v1269 = vld [vmem:[%s1232 + $0x120] sm:$0xff]
      %v1270 = vld [vmem:[%s1232 + $0x128] sm:$0xff]
      %v1271 = vld [vmem:[%s1232 + $0x130] sm:$0xff]
      %v1272 = vld [vmem:[%s1232 + $0x138] sm:$0xff]
      %v1273 = vld [vmem:[%s1232 + $0x140] sm:$0xff]
      %v1274 = vld [vmem:[%s1232 + $0x148] sm:$0xff]
      %v1275 = vld [vmem:[%s1232 + $0x150] sm:$0xff]
      %v1276 = vld [vmem:[%s1232 + $0x158] sm:$0xff]
      %v1277 = vld [vmem:[%s1232 + $0x160] sm:$0xff]
      %v1278 = vld [vmem:[%s1232 + $0x168] sm:$0xff]
      %v1279 = vld [vmem:[%s1232 + $0x170] sm:$0xff]
      %v1280 = vld [vmem:[%s1232 + $0x178] sm:$0xff]
      %v1281 = vld [vmem:[%s1232 + $0x180] sm:$0xff]
      %v1282 = vld [vmem:[%s1232 + $0x188] sm:$0xff]
      %v1283 = vld [vmem:[%s1232 + $0x190] sm:$0xff]
      %v1284 = vld [vmem:[%s1232 + $0x198] sm:$0xff]
      %v1285 = vld [vmem:[%s1232 + $0x1a0] sm:$0xff]
      %v1286 = vld [vmem:[%s1232 + $0x1a8] sm:$0xff]
      %v1287 = vld [vmem:[%s1232 + $0x1b0] sm:$0xff]
      %v1288 = vld [vmem:[%s1232 + $0x1b8] sm:$0xff]
      %v1289 = vld [vmem:[%s1232 + $0x1c0] sm:$0xff]
      %v1290 = vld [vmem:[%s1232 + $0x1c8] sm:$0xff]
      %v1291 = vld [vmem:[%s1232 + $0x1d0] sm:$0xff]
      %v1292 = vld [vmem:[%s1232 + $0x1d8] sm:$0xff]
      %v1293 = vld [vmem:[%s1232 + $0x1e0] sm:$0xff]
      %v1294 = vld [vmem:[%s1232 + $0x1e8] sm:$0xff]
      %v1295 = vld [vmem:[%s1232 + $0x1f0] sm:$0xff]
      %v1296 = vld [vmem:[%s1232 + $0x1f8] sm:$0xff]
      %v1297 = vld [vmem:[%s1232 + $0x200] sm:$0xff]
      %v1298 = vld [vmem:[%s1232 + $0x208] sm:$0xff]
      %v1299 = vld [vmem:[%s1232 + $0x210] sm:$0xff]
      %v1300 = vld [vmem:[%s1232 + $0x218] sm:$0xff]
      %v1301 = vld [vmem:[%s1232 + $0x220] sm:$0xff]
      %v1302 = vld [vmem:[%s1232 + $0x228] sm:$0xff]
      %v1303 = vld [vmem:[%s1232 + $0x230] sm:$0xff]
      %v1304 = vld [vmem:[%s1232 + $0x238] sm:$0xff]
      %v1305 = vld [vmem:[%s1232 + $0x240] sm:$0xff]
      %v1306 = vld [vmem:[%s1232 + $0x248] sm:$0xff]
      %v1307 = vld [vmem:[%s1232 + $0x250] sm:$0xff]
      %v1308 = vld [vmem:[%s1232 + $0x258] sm:$0xff]
      %v1309 = vld [vmem:[%s1232 + $0x260] sm:$0xff]
      %v1310 = vld [vmem:[%s1232 + $0x268] sm:$0xff]
      %v1311 = vld [vmem:[%s1232 + $0x270] sm:$0xff]
      %v1312 = vld [vmem:[%s1232 + $0x278] sm:$0xff]
      %v1313 = vld [vmem:[%s1232 + $0x280] sm:$0xff]
      %v1314 = vld [vmem:[%s1232 + $0x288] sm:$0xff]
      %v1315 = vld [vmem:[%s1232 + $0x290] sm:$0xff]
      %v1316 = vld [vmem:[%s1232 + $0x298] sm:$0xff]
      %v1317 = vld [vmem:[%s1232 + $0x2a0] sm:$0xff]
      %v1318 = vld [vmem:[%s1232 + $0x2a8] sm:$0xff]
      %v1319 = vld [vmem:[%s1232 + $0x2b0] sm:$0xff]
      %v1320 = vld [vmem:[%s1232 + $0x2b8] sm:$0xff]
      %v1321 = vld [vmem:[%s1232 + $0x2c0] sm:$0xff]
      %v1322 = vld [vmem:[%s1232 + $0x2c8] sm:$0xff]
      %v1323 = vld [vmem:[%s1232 + $0x2d0] sm:$0xff]
      %v1324 = vld [vmem:[%s1232 + $0x2d8] sm:$0xff]
      %v1325 = vld [vmem:[%s1232 + $0x2e0] sm:$0xff]
      %v1326 = vld [vmem:[%s1232 + $0x2e8] sm:$0xff]
      %v1327 = vld [vmem:[%s1232 + $0x2f0] sm:$0xff]
      %v1328 = vld [vmem:[%s1232 + $0x2f8] sm:$0xff]
      %v1329 = vld [vmem:[%s1232 + $0x300] sm:$0xff]
      %v1330 = vld [vmem:[%s1232 + $0x308] sm:$0xff]
      %v1331 = vld [vmem:[%s1232 + $0x310] sm:$0xff]
      %v1332 = vld [vmem:[%s1232 + $0x318] sm:$0xff]
      %v1333 = vld [vmem:[%s1232 + $0x320] sm:$0xff]
      %v1334 = vld [vmem:[%s1232 + $0x328] sm:$0xff]
      %v1335 = vld [vmem:[%s1232 + $0x330] sm:$0xff]
      %v1336 = vld [vmem:[%s1232 + $0x338] sm:$0xff]
      %v1337 = vld [vmem:[%s1232 + $0x340] sm:$0xff]
      %v1338 = vld [vmem:[%s1232 + $0x348] sm:$0xff]
      %v1339 = vld [vmem:[%s1232 + $0x350] sm:$0xff]
      %v1340 = vld [vmem:[%s1232 + $0x358] sm:$0xff]
      %v1341 = vld [vmem:[%s1232 + $0x360] sm:$0xff]
      %v1342 = vld [vmem:[%s1232 + $0x368] sm:$0xff]
      %v1343 = vld [vmem:[%s1232 + $0x370] sm:$0xff]
      %v1344 = vld [vmem:[%s1232 + $0x378] sm:$0xff]
      %v1345 = vld [vmem:[%s1232 + $0x380] sm:$0xff]
      %v1346 = vld [vmem:[%s1232 + $0x388] sm:$0xff]
      %v1347 = vld [vmem:[%s1232 + $0x390] sm:$0xff]
      %v1348 = vld [vmem:[%s1232 + $0x398] sm:$0xff]
      %v1349 = vld [vmem:[%s1232 + $0x3a0] sm:$0xff]
      %v1350 = vld [vmem:[%s1232 + $0x3a8] sm:$0xff]
      %v1351 = vld [vmem:[%s1232 + $0x3b0] sm:$0xff]
      %v1352 = vld [vmem:[%s1232 + $0x3b8] sm:$0xff]
      %v1353 = vld [vmem:[%s1232 + $0x3c0] sm:$0xff]
      %v1354 = vld [vmem:[%s1232 + $0x3c8] sm:$0xff]
      %v1355 = vld [vmem:[%s1232 + $0x3d0] sm:$0xff]
      %v1356 = vld [vmem:[%s1232 + $0x3d8] sm:$0xff]
      %v1357 = vld [vmem:[%s1232 + $0x3e0] sm:$0xff]
      %v1358 = vld [vmem:[%s1232 + $0x3e8] sm:$0xff]
      %v1359 = vld [vmem:[%s1232 + $0x3f0] sm:$0xff]
      %v1360 = vld [vmem:[%s1232 + $0x3f8] sm:$0xff]
      %v1361 = vld [vmem:[%s1232 + $0x400] sm:$0xff]
      %v1362 = vld [vmem:[%s1232 + $0x408] sm:$0xff]
      %v1363 = vld [vmem:[%s1232 + $0x410] sm:$0xff]
      %v1364 = vld [vmem:[%s1232 + $0x418] sm:$0xff]
      %v1365 = vld [vmem:[%s1232 + $0x420] sm:$0xff]
      %v1366 = vld [vmem:[%s1232 + $0x428] sm:$0xff]
      %v1367 = vld [vmem:[%s1232 + $0x430] sm:$0xff]
      %v1368 = vld [vmem:[%s1232 + $0x438] sm:$0xff]
      %v1369 = vld [vmem:[%s1232 + $0x440] sm:$0xff]
      %v1370 = vld [vmem:[%s1232 + $0x448] sm:$0xff]
      %v1371 = vld [vmem:[%s1232 + $0x450] sm:$0xff]
      %v1372 = vld [vmem:[%s1232 + $0x458] sm:$0xff]
      %v1373 = vld [vmem:[%s1232 + $0x460] sm:$0xff]
      %v1374 = vld [vmem:[%s1232 + $0x468] sm:$0xff]
      %v1375 = vld [vmem:[%s1232 + $0x470] sm:$0xff]
      %v1376 = vld [vmem:[%s1232 + $0x478] sm:$0xff]
      %1377 = vmatprep.subr.mxu0 %v1234
      %1378 = vmatpush1.msra.mxu0 %v1233
      %1379 = vmatprep.subr.mxu0 %v1237
      %1380 = vmatpush1.msra.mxu0 %v1236
      %1381 = vmatprep.subr.mxu0 %v1240
      %1382 = vmatpush1.msra.mxu0 %v1239
      %1383 = vmatprep.subr.mxu0 %v1243
      %1384 = vmatpush1.msra.mxu0 %v1242
      %1385 = vmatprep.subr.mxu0 %v1246
      %1386 = vmatpush1.msra.mxu0 %v1245
      %1387 = vmatprep.subr.mxu0 %v1249
      %1388 = vmatpush1.msra.mxu0 %v1248
      %1389 = vmatprep.subr.mxu0 %v1252
      %1390 = vmatpush1.msra.mxu0 %v1251
      %1391 = vmatprep.subr.mxu0 %v1255
      %1392 = vmatpush1.msra.mxu0 %v1254
      %1393 = vmatprep.subr.mxu0 %v1258
      %1394 = vmatpush1.msra.mxu0 %v1257
      %1395 = vmatprep.subr.mxu0 %v1261
      %1396 = vmatpush1.msra.mxu0 %v1260
      %1397 = vmatprep.subr.mxu0 %v1264
      %1398 = vmatpush1.msra.mxu0 %v1263
      %1399 = vmatprep.subr.mxu0 %v1267
      %1400 = vmatpush1.msra.mxu0 %v1266
      %1401 = vmatprep.subr.mxu0 %v1270
      %1402 = vmatpush1.msra.mxu0 %v1269
      %1403 = vmatprep.subr.mxu0 %v1273
      %1404 = vmatpush1.msra.mxu0 %v1272
      %1405 = vmatprep.subr.mxu0 %v1276
      %1406 = vmatpush1.msra.mxu0 %v1275
      %1407 = vmatprep.subr.mxu0 %v1279
      %1408 = vmatpush1.msra.mxu0 %v1278
      %1409 = vmatprep.subr.mxu0 %v1282
      %1410 = vmatpush1.msra.mxu0 %v1281
      %1411 = vmatprep.subr.mxu0 %v1285
      %1412 = vmatpush1.msra.mxu0 %v1284
      %1413 = vmatprep.subr.mxu0 %v1288
      %1414 = vmatpush1.msra.mxu0 %v1287
      %1415 = vmatprep.subr.mxu0 %v1291
      %1416 = vmatpush1.msra.mxu0 %v1290
      %1417 = vmatprep.subr.mxu0 %v1294
      %1418 = vmatpush1.msra.mxu0 %v1293
      %1419 = vmatprep.subr.mxu0 %v1297
      %1420 = vmatpush1.msra.mxu0 %v1296
      %1421 = vmatprep.subr.mxu0 %v1300
      %1422 = vmatpush1.msra.mxu0 %v1299
      %1423 = vmatprep.subr.mxu0 %v1303
      %1424 = vmatpush1.msra.mxu0 %v1302
      %1425 = vmatprep.subr.mxu0 %v1306
      %1426 = vmatpush1.msra.mxu0 %v1305
      %1427 = vmatprep.subr.mxu0 %v1309
      %1428 = vmatpush1.msra.mxu0 %v1308
      %1429 = vmatprep.subr.mxu0 %v1312
      %1430 = vmatpush1.msra.mxu0 %v1311
      %1431 = vmatprep.subr.mxu0 %v1315
      %1432 = vmatpush1.msra.mxu0 %v1314
      %1433 = vmatprep.subr.mxu0 %v1318
      %1434 = vmatpush1.msra.mxu0 %v1317
      %1435 = vmatprep.subr.mxu0 %v1321
      %1436 = vmatpush1.msra.mxu0 %v1320
      %1437 = vmatprep.subr.mxu0 %v1324
      %1438 = vmatpush1.msra.mxu0 %v1323
      %1439 = vmatprep.subr.mxu0 %v1327
      %1440 = vmatpush1.msra.mxu0 %v1326
      %1441 = vmatprep.mubr.f32.mxu0 %v307
      %1442 = vmatmul.mubr.f32.gmra.mrb[0].mxu0 %v306
      %v1443 = vpop.f32.mrb[0].mxu0
      %v1444 = vadd.f32 0.0, %v1443
      %v1445 = vpop.f32.mrb[0].mxu0
      %v1446 = vadd.f32 0.0, %v1445
      %1447 = vmatprep.mubr.f32.mxu0 %v310
      %1448 = vmatmul.mubr.f32.gmra.mrb[0].mxu0 %v309
      %v1449 = vpop.f32.mrb[0].mxu0
      %v1450 = vadd.f32 0.0, %v1449
      %v1451 = vpop.f32.mrb[0].mxu0
      %v1452 = vadd.f32 0.0, %v1451
      %1453 = vmatprep.mubr.f32.mxu0 %v313
      %1454 = vmatmul.mubr.f32.gmra.mrb[0].mxu0 %v312
      %v1455 = vpop.f32.mrb[0].mxu0
      %v1456 = vadd.f32 0.0, %v1455
      %v1457 = vpop.f32.mrb[0].mxu0
      %v1458 = vadd.f32 0.0, %v1457
      %1459 = vmatprep.mubr.f32.mxu0 %v316
      %1460 = vmatmul.mubr.f32.gmra.mrb[0].mxu0 %v315
      %v1461 = vpop.f32.mrb[0].mxu0
      %v1462 = vadd.f32 0.0, %v1461
      %v1463 = vpop.f32.mrb[0].mxu0
      %v1464 = vadd.f32 0.0, %v1463
      %1465 = vmatprep.mubr.f32.mxu0 %v319
      %1466 = vmatmul.mubr.f32.gmra.mrb[0].mxu0 %v318
      %v1467 = vpop.f32.mrb[0].mxu0
      %v1468 = vadd.f32 0.0, %v1467
      %v1469 = vpop.f32.mrb[0].mxu0
      %v1470 = vadd.f32 0.0, %v1469
      %1471 = vmatprep.mubr.f32.mxu0 %v322
      %1472 = vmatmul.mubr.f32.gmra.mrb[0].mxu0 %v321
      %v1473 = vpop.f32.mrb[0].mxu0
      %v1474 = vadd.f32 0.0, %v1473
      %v1475 = vpop.f32.mrb[0].mxu0
      %v1476 = vadd.f32 0.0, %v1475
      %1477 = vmatprep.mubr.f32.mxu0 %v325
      %1478 = vmatmul.mubr.f32.gmra.mrb[0].mxu0 %v324
      %v1479 = vpop.f32.mrb[0].mxu0
      %v1480 = vadd.f32 0.0, %v1479
      %v1481 = vpop.f32.mrb[0].mxu0
      %v1482 = vadd.f32 0.0, %v1481
      %1483 = vmatprep.mubr.f32.mxu0 %v328
      %1484 = vmatmul.mubr.f32.gmra.mrb[0].mxu0 %v327
      %v1485 = vpop.f32.mrb[0].mxu0
      %v1486 = vadd.f32 0.0, %v1485
      %v1487 = vpop.f32.mrb[0].mxu0
      %v1488 = vadd.f32 0.0, %v1487
      %1489 = vmatprep.mubr.f32.mxu0 %v331
      %1490 = vmatmul.mubr.f32.gmra.mrb[0].mxu0 %v330
      %v1491 = vpop.f32.mrb[0].mxu0
      %v1492 = vadd.f32 0.0, %v1491
      %v1493 = vpop.f32.mrb[0].mxu0
      %v1494 = vadd.f32 0.0, %v1493
      %1495 = vmatprep.mubr.f32.mxu0 %v334
      %1496 = vmatmul.mubr.f32.gmra.mrb[0].mxu0 %v333
      %v1497 = vpop.f32.mrb[0].mxu0
      %v1498 = vadd.f32 0.0, %v1497
      %v1499 = vpop.f32.mrb[0].mxu0
      %v1500 = vadd.f32 0.0, %v1499
      %1501 = vmatprep.mubr.f32.mxu0 %v337
      %1502 = vmatmul.mubr.f32.gmra.mrb[0].mxu0 %v336
      %v1503 = vpop.f32.mrb[0].mxu0
      %v1504 = vadd.f32 0.0, %v1503
      %v1505 = vpop.f32.mrb[0].mxu0
      %v1506 = vadd.f32 0.0, %v1505
      %1507 = vmatprep.mubr.f32.mxu0 %v340
      %1508 = vmatmul.mubr.f32.gmra.mrb[0].mxu0 %v339
      %v1509 = vpop.f32.mrb[0].mxu0
      %v1510 = vadd.f32 0.0, %v1509
      %v1511 = vpop.f32.mrb[0].mxu0
      %v1512 = vadd.f32 0.0, %v1511
      %1513 = vmatprep.mubr.f32.mxu0 %v343
      %1514 = vmatmul.mubr.f32.gmra.mrb[0].mxu0 %v342
      %v1515 = vpop.f32.mrb[0].mxu0
      %v1516 = vadd.f32 0.0, %v1515
      %v1517 = vpop.f32.mrb[0].mxu0
      %v1518 = vadd.f32 0.0, %v1517
      %1519 = vdwg.mxu0
      %1520 = vmatprep.subr.mxu0 %v1330
      %1521 = vmatpush1.msra.mxu0 %v1329
      %1522 = vmatprep.subr.mxu0 %v1333
      %1523 = vmatpush1.msra.mxu0 %v1332
      %1524 = vmatprep.subr.mxu0 %v1336
      %1525 = vmatpush1.msra.mxu0 %v1335
      %1526 = vmatprep.subr.mxu0 %v1339
      %1527 = vmatpush1.msra.mxu0 %v1338
      %1528 = vmatprep.subr.mxu0 %v1342
      %1529 = vmatpush1.msra.mxu0 %v1341
      %1530 = vmatprep.subr.mxu0 %v1345
      %1531 = vmatpush1.msra.mxu0 %v1344
      %1532 = vmatprep.subr.mxu0 %v1348
      %1533 = vmatpush1.msra.mxu0 %v1347
      %1534 = vmatprep.subr.mxu0 %v1351
      %1535 = vmatpush1.msra.mxu0 %v1350
      %1536 = vmatprep.subr.mxu0 %v1354
      %1537 = vmatpush1.msra.mxu0 %v1353
      %1538 = vmatprep.subr.mxu0 %v1357
      %1539 = vmatpush1.msra.mxu0 %v1356
      %1540 = vmatprep.subr.mxu0 %v1360
      %1541 = vmatpush1.msra.mxu0 %v1359
      %1542 = vmatprep.subr.mxu0 %v1363
      %1543 = vmatpush1.msra.mxu0 %v1362
      %1544 = vmatprep.subr.mxu0 %v1366
      %1545 = vmatpush1.msra.mxu0 %v1365
      %1546 = vmatprep.subr.mxu0 %v1369
      %1547 = vmatpush1.msra.mxu0 %v1368
      %1548 = vmatprep.subr.mxu0 %v1372
      %1549 = vmatpush1.msra.mxu0 %v1371
      %1550 = vmatprep.subr.mxu0 %v1375
      %1551 = vmatpush1.msra.mxu0 %v1374
      %1552 = vmatprep.subr.mxu0 0.0
      %1553 = vmatpush1.msra.mxu0 0.0
      %1554 = vmatprep.subr.mxu0 0.0
      %1555 = vmatpush1.msra.mxu0 0.0
      %1556 = vmatprep.subr.mxu0 0.0
      %1557 = vmatpush1.msra.mxu0 0.0
      %1558 = vmatprep.subr.mxu0 0.0
      %1559 = vmatpush1.msra.mxu0 0.0
      %1560 = vmatprep.subr.mxu0 0.0
      %1561 = vmatpush1.msra.mxu0 0.0
      %1562 = vmatprep.subr.mxu0 0.0
      %1563 = vmatpush1.msra.mxu0 0.0
      %1564 = vmatprep.subr.mxu0 0.0
      %1565 = vmatpush1.msra.mxu0 0.0
      %1566 = vmatprep.subr.mxu0 0.0
      %1567 = vmatpush1.msra.mxu0 0.0
      %1568 = vmatprep.subr.mxu0 0.0
      %1569 = vmatpush1.msra.mxu0 0.0
      %1570 = vmatprep.subr.mxu0 0.0
      %1571 = vmatpush1.msra.mxu0 0.0
      %1572 = vmatprep.subr.mxu0 0.0
      %1573 = vmatpush1.msra.mxu0 0.0
      %1574 = vmatprep.subr.mxu0 0.0
      %1575 = vmatpush1.msra.mxu0 0.0
      %1576 = vmatprep.subr.mxu0 0.0
      %1577 = vmatpush1.msra.mxu0 0.0
      %1578 = vmatprep.subr.mxu0 0.0
      %1579 = vmatpush1.msra.mxu0 0.0
      %1580 = vmatprep.subr.mxu0 0.0
      %1581 = vmatpush1.msra.mxu0 0.0
      %1582 = vmatprep.subr.mxu0 0.0
      %1583 = vmatpush1.msra.mxu0 0.0
      %1584 = vmatprep.mubr.f32.mxu0 0.0
      %1585 = vmatmul.mubr.f32.gmra.mrb[0].mxu0 %v308
      %v1586 = vpop.f32.mrb[0].mxu0
      %v1587 = vadd.f32 %v1444, %v1586
      %v1588 = vpop.f32.mrb[0].mxu0
      %v1589 = vadd.f32 %v1446, %v1588
      %1590 = vmatprep.mubr.f32.mxu0 0.0
      %1591 = vmatmul.mubr.f32.gmra.mrb[0].mxu0 %v311
      %v1592 = vpop.f32.mrb[0].mxu0
      %v1593 = vadd.f32 %v1450, %v1592
      %v1594 = vpop.f32.mrb[0].mxu0
      %v1595 = vadd.f32 %v1452, %v1594
      %1596 = vmatprep.mubr.f32.mxu0 0.0
      %1597 = vmatmul.mubr.f32.gmra.mrb[0].mxu0 %v314
      %v1598 = vpop.f32.mrb[0].mxu0
      %v1599 = vadd.f32 %v1456, %v1598
      %v1600 = vpop.f32.mrb[0].mxu0
      %v1601 = vadd.f32 %v1458, %v1600
      %1602 = vmatprep.mubr.f32.mxu0 0.0
      %1603 = vmatmul.mubr.f32.gmra.mrb[0].mxu0 %v317
      %v1604 = vpop.f32.mrb[0].mxu0
      %v1605 = vadd.f32 %v1462, %v1604
      %v1606 = vpop.f32.mrb[0].mxu0
      %v1607 = vadd.f32 %v1464, %v1606
      %1608 = vmatprep.mubr.f32.mxu0 0.0
      %1609 = vmatmul.mubr.f32.gmra.mrb[0].mxu0 %v320
      %v1610 = vpop.f32.mrb[0].mxu0
      %v1611 = vadd.f32 %v1468, %v1610
      %v1612 = vpop.f32.mrb[0].mxu0
      %v1613 = vadd.f32 %v1470, %v1612
      %1614 = vmatprep.mubr.f32.mxu0 0.0
      %1615 = vmatmul.mubr.f32.gmra.mrb[0].mxu0 %v323
      %v1616 = vpop.f32.mrb[0].mxu0
      %v1617 = vadd.f32 %v1474, %v1616
      %v1618 = vpop.f32.mrb[0].mxu0
      %v1619 = vadd.f32 %v1476, %v1618
      %1620 = vmatprep.mubr.f32.mxu0 0.0
      %1621 = vmatmul.mubr.f32.gmra.mrb[0].mxu0 %v326
      %v1622 = vpop.f32.mrb[0].mxu0
      %v1623 = vadd.f32 %v1480, %v1622
      %v1624 = vpop.f32.mrb[0].mxu0
      %v1625 = vadd.f32 %v1482, %v1624
      %1626 = vmatprep.mubr.f32.mxu0 0.0
      %1627 = vmatmul.mubr.f32.gmra.mrb[0].mxu0 %v329
      %v1628 = vpop.f32.mrb[0].mxu0
      %v1629 = vadd.f32 %v1486, %v1628
      %v1630 = vpop.f32.mrb[0].mxu0
      %v1631 = vadd.f32 %v1488, %v1630
      %1632 = vmatprep.mubr.f32.mxu0 0.0
      %1633 = vmatmul.mubr.f32.gmra.mrb[0].mxu0 %v332
      %v1634 = vpop.f32.mrb[0].mxu0
      %v1635 = vadd.f32 %v1492, %v1634
      %v1636 = vpop.f32.mrb[0].mxu0
      %v1637 = vadd.f32 %v1494, %v1636
      %1638 = vmatprep.mubr.f32.mxu0 0.0
      %1639 = vmatmul.mubr.f32.gmra.mrb[0].mxu0 %v335
      %v1640 = vpop.f32.mrb[0].mxu0
      %v1641 = vadd.f32 %v1498, %v1640
      %v1642 = vpop.f32.mrb[0].mxu0
      %v1643 = vadd.f32 %v1500, %v1642
      %1644 = vmatprep.mubr.f32.mxu0 0.0
      %1645 = vmatmul.mubr.f32.gmra.mrb[0].mxu0 %v338
      %v1646 = vpop.f32.mrb[0].mxu0
      %v1647 = vadd.f32 %v1504, %v1646
      %v1648 = vpop.f32.mrb[0].mxu0
      %v1649 = vadd.f32 %v1506, %v1648
      %1650 = vmatprep.mubr.f32.mxu0 0.0
      %1651 = vmatmul.mubr.f32.gmra.mrb[0].mxu0 %v341
      %v1652 = vpop.f32.mrb[0].mxu0
      %v1653 = vadd.f32 %v1510, %v1652
      %v1654 = vpop.f32.mrb[0].mxu0
      %v1655 = vadd.f32 %v1512, %v1654
      %1656 = vmatprep.mubr.f32.mxu0 0.0
      %1657 = vmatmul.mubr.f32.gmra.mrb[0].mxu0 %v344
      %v1658 = vpop.f32.mrb[0].mxu0
      %v1659 = vadd.f32 %v1516, %v1658
      %v1660 = vpop.f32.mrb[0].mxu0
      %v1661 = vadd.f32 %v1518, %v1660
      %1662 = vdwg.mxu0
      %1663 = vmatprep.subr.mxu0 0.0
      %1664 = vmatpush1.msra.mxu0 %v1235
      %1665 = vmatprep.subr.mxu0 0.0
      %1666 = vmatpush1.msra.mxu0 %v1238
      %1667 = vmatprep.subr.mxu0 0.0
      %1668 = vmatpush1.msra.mxu0 %v1241
      %1669 = vmatprep.subr.mxu0 0.0
      %1670 = vmatpush1.msra.mxu0 %v1244
      %1671 = vmatprep.subr.mxu0 0.0
      %1672 = vmatpush1.msra.mxu0 %v1247
      %1673 = vmatprep.subr.mxu0 0.0
      %1674 = vmatpush1.msra.mxu0 %v1250
      %1675 = vmatprep.subr.mxu0 0.0
      %1676 = vmatpush1.msra.mxu0 %v1253
      %1677 = vmatprep.subr.mxu0 0.0
      %1678 = vmatpush1.msra.mxu0 %v1256
      %1679 = vmatprep.subr.mxu0 0.0
      %1680 = vmatpush1.msra.mxu0 %v1259
      %1681 = vmatprep.subr.mxu0 0.0
      %1682 = vmatpush1.msra.mxu0 %v1262
      %1683 = vmatprep.subr.mxu0 0.0
      %1684 = vmatpush1.msra.mxu0 %v1265
      %1685 = vmatprep.subr.mxu0 0.0
      %1686 = vmatpush1.msra.mxu0 %v1268
      %1687 = vmatprep.subr.mxu0 0.0
      %1688 = vmatpush1.msra.mxu0 %v1271
      %1689 = vmatprep.subr.mxu0 0.0
      %1690 = vmatpush1.msra.mxu0 %v1274
      %1691 = vmatprep.subr.mxu0 0.0
      %1692 = vmatpush1.msra.mxu0 %v1277
      %1693 = vmatprep.subr.mxu0 0.0
      %1694 = vmatpush1.msra.mxu0 %v1280
      %1695 = vmatprep.subr.mxu0 0.0
      %1696 = vmatpush1.msra.mxu0 %v1283
      %1697 = vmatprep.subr.mxu0 0.0
      %1698 = vmatpush1.msra.mxu0 %v1286
      %1699 = vmatprep.subr.mxu0 0.0
      %1700 = vmatpush1.msra.mxu0 %v1289
      %1701 = vmatprep.subr.mxu0 0.0
      %1702 = vmatpush1.msra.mxu0 %v1292
      %1703 = vmatprep.subr.mxu0 0.0
      %1704 = vmatpush1.msra.mxu0 %v1295
      %1705 = vmatprep.subr.mxu0 0.0
      %1706 = vmatpush1.msra.mxu0 %v1298
      %1707 = vmatprep.subr.mxu0 0.0
      %1708 = vmatpush1.msra.mxu0 %v1301
      %1709 = vmatprep.subr.mxu0 0.0
      %1710 = vmatpush1.msra.mxu0 %v1304
      %1711 = vmatprep.subr.mxu0 0.0
      %1712 = vmatpush1.msra.mxu0 %v1307
      %1713 = vmatprep.subr.mxu0 0.0
      %1714 = vmatpush1.msra.mxu0 %v1310
      %1715 = vmatprep.subr.mxu0 0.0
      %1716 = vmatpush1.msra.mxu0 %v1313
      %1717 = vmatprep.subr.mxu0 0.0
      %1718 = vmatpush1.msra.mxu0 %v1316
      %1719 = vmatprep.subr.mxu0 0.0
      %1720 = vmatpush1.msra.mxu0 %v1319
      %1721 = vmatprep.subr.mxu0 0.0
      %1722 = vmatpush1.msra.mxu0 %v1322
      %1723 = vmatprep.subr.mxu0 0.0
      %1724 = vmatpush1.msra.mxu0 %v1325
      %1725 = vmatprep.subr.mxu0 0.0
      %1726 = vmatpush1.msra.mxu0 %v1328
      %1727 = vmatprep.mubr.f32.mxu0 %v307
      %1728 = vmatmul.mubr.f32.gmra.mrb[0].mxu0 %v306
      %v1729 = vpop.f32.mrb[0].mxu0
      %v1730 = vadd.f32 0.0, %v1729
      %v1731 = vpop.f32.mrb[0].mxu0
      %1732 = vmatprep.mubr.f32.mxu0 %v310
      %1733 = vmatmul.mubr.f32.gmra.mrb[0].mxu0 %v309
      %v1734 = vpop.f32.mrb[0].mxu0
      %v1735 = vadd.f32 0.0, %v1734
      %v1736 = vpop.f32.mrb[0].mxu0
      %1737 = vmatprep.mubr.f32.mxu0 %v313
      %1738 = vmatmul.mubr.f32.gmra.mrb[0].mxu0 %v312
      %v1739 = vpop.f32.mrb[0].mxu0
      %v1740 = vadd.f32 0.0, %v1739
      %v1741 = vpop.f32.mrb[0].mxu0
      %1742 = vmatprep.mubr.f32.mxu0 %v316
      %1743 = vmatmul.mubr.f32.gmra.mrb[0].mxu0 %v315
      %v1744 = vpop.f32.mrb[0].mxu0
      %v1745 = vadd.f32 0.0, %v1744
      %v1746 = vpop.f32.mrb[0].mxu0
      %1747 = vmatprep.mubr.f32.mxu0 %v319
      %1748 = vmatmul.mubr.f32.gmra.mrb[0].mxu0 %v318
      %v1749 = vpop.f32.mrb[0].mxu0
      %v1750 = vadd.f32 0.0, %v1749
      %v1751 = vpop.f32.mrb[0].mxu0
      %1752 = vmatprep.mubr.f32.mxu0 %v322
      %1753 = vmatmul.mubr.f32.gmra.mrb[0].mxu0 %v321
      %v1754 = vpop.f32.mrb[0].mxu0
      %v1755 = vadd.f32 0.0, %v1754
      %v1756 = vpop.f32.mrb[0].mxu0
      %1757 = vmatprep.mubr.f32.mxu0 %v325
      %1758 = vmatmul.mubr.f32.gmra.mrb[0].mxu0 %v324
      %v1759 = vpop.f32.mrb[0].mxu0
      %v1760 = vadd.f32 0.0, %v1759
      %v1761 = vpop.f32.mrb[0].mxu0
      %1762 = vmatprep.mubr.f32.mxu0 %v328
      %1763 = vmatmul.mubr.f32.gmra.mrb[0].mxu0 %v327
      %v1764 = vpop.f32.mrb[0].mxu0
      %v1765 = vadd.f32 0.0, %v1764
      %v1766 = vpop.f32.mrb[0].mxu0
      %1767 = vmatprep.mubr.f32.mxu0 %v331
      %1768 = vmatmul.mubr.f32.gmra.mrb[0].mxu0 %v330
      %v1769 = vpop.f32.mrb[0].mxu0
      %v1770 = vadd.f32 0.0, %v1769
      %v1771 = vpop.f32.mrb[0].mxu0
      %1772 = vmatprep.mubr.f32.mxu0 %v334
      %1773 = vmatmul.mubr.f32.gmra.mrb[0].mxu0 %v333
      %v1774 = vpop.f32.mrb[0].mxu0
      %v1775 = vadd.f32 0.0, %v1774
      %v1776 = vpop.f32.mrb[0].mxu0
      %1777 = vmatprep.mubr.f32.mxu0 %v337
      %1778 = vmatmul.mubr.f32.gmra.mrb[0].mxu0 %v336
      %v1779 = vpop.f32.mrb[0].mxu0
      %v1780 = vadd.f32 0.0, %v1779
      %v1781 = vpop.f32.mrb[0].mxu0
      %1782 = vmatprep.mubr.f32.mxu0 %v340
      %1783 = vmatmul.mubr.f32.gmra.mrb[0].mxu0 %v339
      %v1784 = vpop.f32.mrb[0].mxu0
      %v1785 = vadd.f32 0.0, %v1784
      %v1786 = vpop.f32.mrb[0].mxu0
      %1787 = vmatprep.mubr.f32.mxu0 %v343
      %1788 = vmatmul.mubr.f32.gmra.mrb[0].mxu0 %v342
      %v1789 = vpop.f32.mrb[0].mxu0
      %v1790 = vadd.f32 0.0, %v1789
      %v1791 = vpop.f32.mrb[0].mxu0
      %1792 = vdwg.mxu0
      %1793 = vmatprep.subr.mxu0 0.0
      %1794 = vmatpush1.msra.mxu0 %v1331
      %1795 = vmatprep.subr.mxu0 0.0
      %1796 = vmatpush1.msra.mxu0 %v1334
      %1797 = vmatprep.subr.mxu0 0.0
      %1798 = vmatpush1.msra.mxu0 %v1337
      %1799 = vmatprep.subr.mxu0 0.0
      %1800 = vmatpush1.msra.mxu0 %v1340
      %1801 = vmatprep.subr.mxu0 0.0
      %1802 = vmatpush1.msra.mxu0 %v1343
      %1803 = vmatprep.subr.mxu0 0.0
      %1804 = vmatpush1.msra.mxu0 %v1346
      %1805 = vmatprep.subr.mxu0 0.0
      %1806 = vmatpush1.msra.mxu0 %v1349
      %1807 = vmatprep.subr.mxu0 0.0
      %1808 = vmatpush1.msra.mxu0 %v1352
      %1809 = vmatprep.subr.mxu0 0.0
      %1810 = vmatpush1.msra.mxu0 %v1355
      %1811 = vmatprep.subr.mxu0 0.0
      %1812 = vmatpush1.msra.mxu0 %v1358
      %1813 = vmatprep.subr.mxu0 0.0
      %1814 = vmatpush1.msra.mxu0 %v1361
      %1815 = vmatprep.subr.mxu0 0.0
      %1816 = vmatpush1.msra.mxu0 %v1364
      %1817 = vmatprep.subr.mxu0 0.0
      %1818 = vmatpush1.msra.mxu0 %v1367
      %1819 = vmatprep.subr.mxu0 0.0
      %1820 = vmatpush1.msra.mxu0 %v1370
      %1821 = vmatprep.subr.mxu0 0.0
      %1822 = vmatpush1.msra.mxu0 %v1373
      %1823 = vmatprep.subr.mxu0 0.0
      %1824 = vmatpush1.msra.mxu0 %v1376
      %1825 = vmatprep.subr.mxu0 0.0
      %1826 = vmatpush1.msra.mxu0 0.0
      %1827 = vmatprep.subr.mxu0 0.0
      %1828 = vmatpush1.msra.mxu0 0.0
      %1829 = vmatprep.subr.mxu0 0.0
      %1830 = vmatpush1.msra.mxu0 0.0
      %1831 = vmatprep.subr.mxu0 0.0
      %1832 = vmatpush1.msra.mxu0 0.0
      %1833 = vmatprep.subr.mxu0 0.0
      %1834 = vmatpush1.msra.mxu0 0.0
      %1835 = vmatprep.subr.mxu0 0.0
      %1836 = vmatpush1.msra.mxu0 0.0
      %1837 = vmatprep.subr.mxu0 0.0
      %1838 = vmatpush1.msra.mxu0 0.0
      %1839 = vmatprep.subr.mxu0 0.0
      %1840 = vmatpush1.msra.mxu0 0.0
      %1841 = vmatprep.subr.mxu0 0.0
      %1842 = vmatpush1.msra.mxu0 0.0
      %1843 = vmatprep.subr.mxu0 0.0
      %1844 = vmatpush1.msra.mxu0 0.0
      %1845 = vmatprep.subr.mxu0 0.0
      %1846 = vmatpush1.msra.mxu0 0.0
      %1847 = vmatprep.subr.mxu0 0.0
      %1848 = vmatpush1.msra.mxu0 0.0
      %1849 = vmatprep.subr.mxu0 0.0
      %1850 = vmatpush1.msra.mxu0 0.0
      %1851 = vmatprep.subr.mxu0 0.0
      %1852 = vmatpush1.msra.mxu0 0.0
      %1853 = vmatprep.subr.mxu0 0.0
      %1854 = vmatpush1.msra.mxu0 0.0
      %1855 = vmatprep.subr.mxu0 0.0
      %1856 = vmatpush1.msra.mxu0 0.0
      %1857 = vmatprep.mubr.f32.mxu0 0.0
      %1858 = vmatmul.mubr.f32.gmra.mrb[0].mxu0 %v308
      %v1859 = vpop.f32.mrb[0].mxu0
      %v1860 = vadd.f32 %v1730, %v1859
      %v1861 = vpop.f32.mrb[0].mxu0
      %1862 = vmatprep.mubr.f32.mxu0 0.0
      %1863 = vmatmul.mubr.f32.gmra.mrb[0].mxu0 %v311
      %v1864 = vpop.f32.mrb[0].mxu0
      %v1865 = vadd.f32 %v1735, %v1864
      %v1866 = vpop.f32.mrb[0].mxu0
      %1867 = vmatprep.mubr.f32.mxu0 0.0
      %1868 = vmatmul.mubr.f32.gmra.mrb[0].mxu0 %v314
      %v1869 = vpop.f32.mrb[0].mxu0
      %v1870 = vadd.f32 %v1740, %v1869
      %v1871 = vpop.f32.mrb[0].mxu0
      %1872 = vmatprep.mubr.f32.mxu0 0.0
      %1873 = vmatmul.mubr.f32.gmra.mrb[0].mxu0 %v317
      %v1874 = vpop.f32.mrb[0].mxu0
      %v1875 = vadd.f32 %v1745, %v1874
      %v1876 = vpop.f32.mrb[0].mxu0
      %1877 = vmatprep.mubr.f32.mxu0 0.0
      %1878 = vmatmul.mubr.f32.gmra.mrb[0].mxu0 %v320
      %v1879 = vpop.f32.mrb[0].mxu0
      %v1880 = vadd.f32 %v1750, %v1879
      %v1881 = vpop.f32.mrb[0].mxu0
      %1882 = vmatprep.mubr.f32.mxu0 0.0
      %1883 = vmatmul.mubr.f32.gmra.mrb[0].mxu0 %v323
      %v1884 = vpop.f32.mrb[0].mxu0
      %v1885 = vadd.f32 %v1755, %v1884
      %v1886 = vpop.f32.mrb[0].mxu0
      %1887 = vmatprep.mubr.f32.mxu0 0.0
      %1888 = vmatmul.mubr.f32.gmra.mrb[0].mxu0 %v326
      %v1889 = vpop.f32.mrb[0].mxu0
      %v1890 = vadd.f32 %v1760, %v1889
      %v1891 = vpop.f32.mrb[0].mxu0
      %1892 = vmatprep.mubr.f32.mxu0 0.0
      %1893 = vmatmul.mubr.f32.gmra.mrb[0].mxu0 %v329
      %v1894 = vpop.f32.mrb[0].mxu0
      %v1895 = vadd.f32 %v1765, %v1894
      %v1896 = vpop.f32.mrb[0].mxu0
      %1897 = vmatprep.mubr.f32.mxu0 0.0
      %1898 = vmatmul.mubr.f32.gmra.mrb[0].mxu0 %v332
      %v1899 = vpop.f32.mrb[0].mxu0
      %v1900 = vadd.f32 %v1770, %v1899
      %v1901 = vpop.f32.mrb[0].mxu0
      %1902 = vmatprep.mubr.f32.mxu0 0.0
      %1903 = vmatmul.mubr.f32.gmra.mrb[0].mxu0 %v335
      %v1904 = vpop.f32.mrb[0].mxu0
      %v1905 = vadd.f32 %v1775, %v1904
      %v1906 = vpop.f32.mrb[0].mxu0
      %1907 = vmatprep.mubr.f32.mxu0 0.0
      %1908 = vmatmul.mubr.f32.gmra.mrb[0].mxu0 %v338
      %v1909 = vpop.f32.mrb[0].mxu0
      %v1910 = vadd.f32 %v1780, %v1909
      %v1911 = vpop.f32.mrb[0].mxu0
      %1912 = vmatprep.mubr.f32.mxu0 0.0
      %1913 = vmatmul.mubr.f32.gmra.mrb[0].mxu0 %v341
      %v1914 = vpop.f32.mrb[0].mxu0
      %v1915 = vadd.f32 %v1785, %v1914
      %v1916 = vpop.f32.mrb[0].mxu0
      %1917 = vmatprep.mubr.f32.mxu0 0.0
      %1918 = vmatmul.mubr.f32.gmra.mrb[0].mxu0 %v344
      %v1919 = vpop.f32.mrb[0].mxu0
      %v1920 = vadd.f32 %v1790, %v1919
      %v1921 = vpop.f32.mrb[0].mxu0
      %1922 = vdwg.mxu0
      %1923 = vmatprep.subr.mxu0 %v1089
      %1924 = vmatpush1.msra.mxu0 %v1088
      %1925 = vmatprep.subr.mxu0 %v1092
      %1926 = vmatpush1.msra.mxu0 %v1091
      %1927 = vmatprep.subr.mxu0 %v1095
      %1928 = vmatpush1.msra.mxu0 %v1094
      %1929 = vmatprep.subr.mxu0 %v1098
      %1930 = vmatpush1.msra.mxu0 %v1097
      %1931 = vmatprep.subr.mxu0 %v1101
      %1932 = vmatpush1.msra.mxu0 %v1100
      %1933 = vmatprep.subr.mxu0 %v1104
      %1934 = vmatpush1.msra.mxu0 %v1103
      %1935 = vmatprep.subr.mxu0 %v1107
      %1936 = vmatpush1.msra.mxu0 %v1106
      %1937 = vmatprep.subr.mxu0 %v1110
      %1938 = vmatpush1.msra.mxu0 %v1109
      %1939 = vmatprep.subr.mxu0 %v1113
      %1940 = vmatpush1.msra.mxu0 %v1112
      %1941 = vmatprep.subr.mxu0 %v1116
      %1942 = vmatpush1.msra.mxu0 %v1115
      %1943 = vmatprep.subr.mxu0 %v1119
      %1944 = vmatpush1.msra.mxu0 %v1118
      %1945 = vmatprep.subr.mxu0 %v1122
      %1946 = vmatpush1.msra.mxu0 %v1121
      %1947 = vmatprep.subr.mxu0 %v1125
      %1948 = vmatpush1.msra.mxu0 %v1124
      %1949 = vmatprep.subr.mxu0 %v1128
      %1950 = vmatpush1.msra.mxu0 %v1127
      %1951 = vmatprep.subr.mxu0 %v1131
      %1952 = vmatpush1.msra.mxu0 %v1130
      %1953 = vmatprep.subr.mxu0 %v1134
      %1954 = vmatpush1.msra.mxu0 %v1133
      %1955 = vmatprep.subr.mxu0 %v1137
      %1956 = vmatpush1.msra.mxu0 %v1136
      %1957 = vmatprep.subr.mxu0 %v1140
      %1958 = vmatpush1.msra.mxu0 %v1139
      %1959 = vmatprep.subr.mxu0 %v1143
      %1960 = vmatpush1.msra.mxu0 %v1142
      %1961 = vmatprep.subr.mxu0 %v1146
      %1962 = vmatpush1.msra.mxu0 %v1145
      %1963 = vmatprep.subr.mxu0 %v1149
      %1964 = vmatpush1.msra.mxu0 %v1148
      %1965 = vmatprep.subr.mxu0 %v1152
      %1966 = vmatpush1.msra.mxu0 %v1151
      %1967 = vmatprep.subr.mxu0 %v1155
      %1968 = vmatpush1.msra.mxu0 %v1154
      %1969 = vmatprep.subr.mxu0 %v1158
      %1970 = vmatpush1.msra.mxu0 %v1157
      %1971 = vmatprep.subr.mxu0 %v1161
      %1972 = vmatpush1.msra.mxu0 %v1160
      %1973 = vmatprep.subr.mxu0 %v1164
      %1974 = vmatpush1.msra.mxu0 %v1163
      %1975 = vmatprep.subr.mxu0 %v1167
      %1976 = vmatpush1.msra.mxu0 %v1166
      %1977 = vmatprep.subr.mxu0 %v1170
      %1978 = vmatpush1.msra.mxu0 %v1169
      %1979 = vmatprep.subr.mxu0 %v1173
      %1980 = vmatpush1.msra.mxu0 %v1172
      %1981 = vmatprep.subr.mxu0 %v1176
      %1982 = vmatpush1.msra.mxu0 %v1175
      %1983 = vmatprep.subr.mxu0 %v1179
      %1984 = vmatpush1.msra.mxu0 %v1178
      %1985 = vmatprep.subr.mxu0 %v1182
      %1986 = vmatpush1.msra.mxu0 %v1181
      %1987 = vmatprep.mubr.f32.mxu0 %v572
      %1988 = vmatmul.mubr.f32.gmra.mrb[0].mxu0 %v570
      %v1989 = vpop.f32.mrb[0].mxu0
      %v1990 = vadd.f32 %v1587, %v1989
      %v1991 = vpop.f32.mrb[0].mxu0
      %v1992 = vadd.f32 %v1589, %v1991
      %1993 = vmatprep.mubr.f32.mxu0 %v578
      %1994 = vmatmul.mubr.f32.gmra.mrb[0].mxu0 %v576
      %v1995 = vpop.f32.mrb[0].mxu0
      %v1996 = vadd.f32 %v1593, %v1995
      %v1997 = vpop.f32.mrb[0].mxu0
      %v1998 = vadd.f32 %v1595, %v1997
      %1999 = vmatprep.mubr.f32.mxu0 %v584
      %2000 = vmatmul.mubr.f32.gmra.mrb[0].mxu0 %v582
      %v2001 = vpop.f32.mrb[0].mxu0
      %v2002 = vadd.f32 %v1599, %v2001
      %v2003 = vpop.f32.mrb[0].mxu0
      %v2004 = vadd.f32 %v1601, %v2003
      %2005 = vmatprep.mubr.f32.mxu0 %v590
      %2006 = vmatmul.mubr.f32.gmra.mrb[0].mxu0 %v588
      %v2007 = vpop.f32.mrb[0].mxu0
      %v2008 = vadd.f32 %v1605, %v2007
      %v2009 = vpop.f32.mrb[0].mxu0
      %v2010 = vadd.f32 %v1607, %v2009
      %2011 = vmatprep.mubr.f32.mxu0 %v596
      %2012 = vmatmul.mubr.f32.gmra.mrb[0].mxu0 %v594
      %v2013 = vpop.f32.mrb[0].mxu0
      %v2014 = vadd.f32 %v1611, %v2013
      %v2015 = vpop.f32.mrb[0].mxu0
      %v2016 = vadd.f32 %v1613, %v2015
      %2017 = vmatprep.mubr.f32.mxu0 %v602
      %2018 = vmatmul.mubr.f32.gmra.mrb[0].mxu0 %v600
      %v2019 = vpop.f32.mrb[0].mxu0
      %v2020 = vadd.f32 %v1617, %v2019
      %v2021 = vpop.f32.mrb[0].mxu0
      %v2022 = vadd.f32 %v1619, %v2021
      %2023 = vmatprep.mubr.f32.mxu0 %v608
      %2024 = vmatmul.mubr.f32.gmra.mrb[0].mxu0 %v606
      %v2025 = vpop.f32.mrb[0].mxu0
      %v2026 = vadd.f32 %v1623, %v2025
      %v2027 = vpop.f32.mrb[0].mxu0
      %v2028 = vadd.f32 %v1625, %v2027
      %2029 = vmatprep.mubr.f32.mxu0 %v614
      %2030 = vmatmul.mubr.f32.gmra.mrb[0].mxu0 %v612
      %v2031 = vpop.f32.mrb[0].mxu0
      %v2032 = vadd.f32 %v1629, %v2031
      %v2033 = vpop.f32.mrb[0].mxu0
      %v2034 = vadd.f32 %v1631, %v2033
      %2035 = vmatprep.mubr.f32.mxu0 %v620
      %2036 = vmatmul.mubr.f32.gmra.mrb[0].mxu0 %v618
      %v2037 = vpop.f32.mrb[0].mxu0
      %v2038 = vadd.f32 %v1635, %v2037
      %v2039 = vpop.f32.mrb[0].mxu0
      %v2040 = vadd.f32 %v1637, %v2039
      %2041 = vmatprep.mubr.f32.mxu0 %v626
      %2042 = vmatmul.mubr.f32.gmra.mrb[0].mxu0 %v624
      %v2043 = vpop.f32.mrb[0].mxu0
      %v2044 = vadd.f32 %v1641, %v2043
      %v2045 = vpop.f32.mrb[0].mxu0
      %v2046 = vadd.f32 %v1643, %v2045
      %2047 = vmatprep.mubr.f32.mxu0 %v632
      %2048 = vmatmul.mubr.f32.gmra.mrb[0].mxu0 %v630
      %v2049 = vpop.f32.mrb[0].mxu0
      %v2050 = vadd.f32 %v1647, %v2049
      %v2051 = vpop.f32.mrb[0].mxu0
      %v2052 = vadd.f32 %v1649, %v2051
      %2053 = vmatprep.mubr.f32.mxu0 %v638
      %2054 = vmatmul.mubr.f32.gmra.mrb[0].mxu0 %v636
      %v2055 = vpop.f32.mrb[0].mxu0
      %v2056 = vadd.f32 %v1653, %v2055
      %v2057 = vpop.f32.mrb[0].mxu0
      %v2058 = vadd.f32 %v1655, %v2057
      %2059 = vmatprep.mubr.f32.mxu0 %v644
      %2060 = vmatmul.mubr.f32.gmra.mrb[0].mxu0 %v642
      %v2061 = vpop.f32.mrb[0].mxu0
      %v2062 = vadd.f32 %v1659, %v2061
      %v2063 = vpop.f32.mrb[0].mxu0
      %v2064 = vadd.f32 %v1661, %v2063
      %2065 = vdwg.mxu0
      %2066 = vmatprep.subr.mxu0 %v1185
      %2067 = vmatpush1.msra.mxu0 %v1184
      %2068 = vmatprep.subr.mxu0 %v1188
      %2069 = vmatpush1.msra.mxu0 %v1187
      %2070 = vmatprep.subr.mxu0 %v1191
      %2071 = vmatpush1.msra.mxu0 %v1190
      %2072 = vmatprep.subr.mxu0 %v1194
      %2073 = vmatpush1.msra.mxu0 %v1193
      %2074 = vmatprep.subr.mxu0 %v1197
      %2075 = vmatpush1.msra.mxu0 %v1196
      %2076 = vmatprep.subr.mxu0 %v1200
      %2077 = vmatpush1.msra.mxu0 %v1199
      %2078 = vmatprep.subr.mxu0 %v1203
      %2079 = vmatpush1.msra.mxu0 %v1202
      %2080 = vmatprep.subr.mxu0 %v1206
      %2081 = vmatpush1.msra.mxu0 %v1205
      %2082 = vmatprep.subr.mxu0 %v1209
      %2083 = vmatpush1.msra.mxu0 %v1208
      %2084 = vmatprep.subr.mxu0 %v1212
      %2085 = vmatpush1.msra.mxu0 %v1211
      %2086 = vmatprep.subr.mxu0 %v1215
      %2087 = vmatpush1.msra.mxu0 %v1214
      %2088 = vmatprep.subr.mxu0 %v1218
      %2089 = vmatpush1.msra.mxu0 %v1217
      %2090 = vmatprep.subr.mxu0 %v1221
      %2091 = vmatpush1.msra.mxu0 %v1220
      %2092 = vmatprep.subr.mxu0 %v1224
      %2093 = vmatpush1.msra.mxu0 %v1223
      %2094 = vmatprep.subr.mxu0 %v1227
      %2095 = vmatpush1.msra.mxu0 %v1226
      %2096 = vmatprep.subr.mxu0 %v1230
      %2097 = vmatpush1.msra.mxu0 %v1229
      %2098 = vmatprep.subr.mxu0 0.0
      %2099 = vmatpush1.msra.mxu0 0.0
      %2100 = vmatprep.subr.mxu0 0.0
      %2101 = vmatpush1.msra.mxu0 0.0
      %2102 = vmatprep.subr.mxu0 0.0
      %2103 = vmatpush1.msra.mxu0 0.0
      %2104 = vmatprep.subr.mxu0 0.0
      %2105 = vmatpush1.msra.mxu0 0.0
      %2106 = vmatprep.subr.mxu0 0.0
      %2107 = vmatpush1.msra.mxu0 0.0
      %2108 = vmatprep.subr.mxu0 0.0
      %2109 = vmatpush1.msra.mxu0 0.0
      %2110 = vmatprep.subr.mxu0 0.0
      %2111 = vmatpush1.msra.mxu0 0.0
      %2112 = vmatprep.subr.mxu0 0.0
      %2113 = vmatpush1.msra.mxu0 0.0
      %2114 = vmatprep.subr.mxu0 0.0
      %2115 = vmatpush1.msra.mxu0 0.0
      %2116 = vmatprep.subr.mxu0 0.0
      %2117 = vmatpush1.msra.mxu0 0.0
      %2118 = vmatprep.subr.mxu0 0.0
      %2119 = vmatpush1.msra.mxu0 0.0
      %2120 = vmatprep.subr.mxu0 0.0
      %2121 = vmatpush1.msra.mxu0 0.0
      %2122 = vmatprep.subr.mxu0 0.0
      %2123 = vmatpush1.msra.mxu0 0.0
      %2124 = vmatprep.subr.mxu0 0.0
      %2125 = vmatpush1.msra.mxu0 0.0
      %2126 = vmatprep.subr.mxu0 0.0
      %2127 = vmatpush1.msra.mxu0 0.0
      %2128 = vmatprep.subr.mxu0 0.0
      %2129 = vmatpush1.msra.mxu0 0.0
      %2130 = vmatprep.mubr.f32.mxu0 0.0
      %2131 = vmatmul.mubr.f32.gmra.mrb[0].mxu0 %v713
      %v2132 = vpop.f32.mrb[0].mxu0
      %v2133 = vadd.f32 %v1990, %v2132
      %v2134 = vpop.f32.mrb[0].mxu0
      %v2135 = vadd.f32 %v1992, %v2134
      %2136 = vmatprep.mubr.f32.mxu0 0.0
      %2137 = vmatmul.mubr.f32.gmra.mrb[0].mxu0 %v718
      %v2138 = vpop.f32.mrb[0].mxu0
      %v2139 = vadd.f32 %v1996, %v2138
      %v2140 = vpop.f32.mrb[0].mxu0
      %v2141 = vadd.f32 %v1998, %v2140
      %2142 = vmatprep.mubr.f32.mxu0 0.0
      %2143 = vmatmul.mubr.f32.gmra.mrb[0].mxu0 %v723
      %v2144 = vpop.f32.mrb[0].mxu0
      %v2145 = vadd.f32 %v2002, %v2144
      %v2146 = vpop.f32.mrb[0].mxu0
      %v2147 = vadd.f32 %v2004, %v2146
      %2148 = vmatprep.mubr.f32.mxu0 0.0
      %2149 = vmatmul.mubr.f32.gmra.mrb[0].mxu0 %v728
      %v2150 = vpop.f32.mrb[0].mxu0
      %v2151 = vadd.f32 %v2008, %v2150
      %v2152 = vpop.f32.mrb[0].mxu0
      %v2153 = vadd.f32 %v2010, %v2152
      %2154 = vmatprep.mubr.f32.mxu0 0.0
      %2155 = vmatmul.mubr.f32.gmra.mrb[0].mxu0 %v733
      %v2156 = vpop.f32.mrb[0].mxu0
      %v2157 = vadd.f32 %v2014, %v2156
      %v2158 = vpop.f32.mrb[0].mxu0
      %v2159 = vadd.f32 %v2016, %v2158
      %2160 = vmatprep.mubr.f32.mxu0 0.0
      %2161 = vmatmul.mubr.f32.gmra.mrb[0].mxu0 %v738
      %v2162 = vpop.f32.mrb[0].mxu0
      %v2163 = vadd.f32 %v2020, %v2162
      %v2164 = vpop.f32.mrb[0].mxu0
      %v2165 = vadd.f32 %v2022, %v2164
      %2166 = vmatprep.mubr.f32.mxu0 0.0
      %2167 = vmatmul.mubr.f32.gmra.mrb[0].mxu0 %v743
      %v2168 = vpop.f32.mrb[0].mxu0
      %v2169 = vadd.f32 %v2026, %v2168
      %v2170 = vpop.f32.mrb[0].mxu0
      %v2171 = vadd.f32 %v2028, %v2170
      %2172 = vmatprep.mubr.f32.mxu0 0.0
      %2173 = vmatmul.mubr.f32.gmra.mrb[0].mxu0 %v748
      %v2174 = vpop.f32.mrb[0].mxu0
      %v2175 = vadd.f32 %v2032, %v2174
      %v2176 = vpop.f32.mrb[0].mxu0
      %v2177 = vadd.f32 %v2034, %v2176
      %2178 = vmatprep.mubr.f32.mxu0 0.0
      %2179 = vmatmul.mubr.f32.gmra.mrb[0].mxu0 %v753
      %v2180 = vpop.f32.mrb[0].mxu0
      %v2181 = vadd.f32 %v2038, %v2180
      %v2182 = vpop.f32.mrb[0].mxu0
      %v2183 = vadd.f32 %v2040, %v2182
      %2184 = vmatprep.mubr.f32.mxu0 0.0
      %2185 = vmatmul.mubr.f32.gmra.mrb[0].mxu0 %v758
      %v2186 = vpop.f32.mrb[0].mxu0
      %v2187 = vadd.f32 %v2044, %v2186
      %v2188 = vpop.f32.mrb[0].mxu0
      %v2189 = vadd.f32 %v2046, %v2188
      %2190 = vmatprep.mubr.f32.mxu0 0.0
      %2191 = vmatmul.mubr.f32.gmra.mrb[0].mxu0 %v763
      %v2192 = vpop.f32.mrb[0].mxu0
      %v2193 = vadd.f32 %v2050, %v2192
      %v2194 = vpop.f32.mrb[0].mxu0
      %v2195 = vadd.f32 %v2052, %v2194
      %2196 = vmatprep.mubr.f32.mxu0 0.0
      %2197 = vmatmul.mubr.f32.gmra.mrb[0].mxu0 %v768
      %v2198 = vpop.f32.mrb[0].mxu0
      %v2199 = vadd.f32 %v2056, %v2198
      %v2200 = vpop.f32.mrb[0].mxu0
      %v2201 = vadd.f32 %v2058, %v2200
      %2202 = vmatprep.mubr.f32.mxu0 0.0
      %2203 = vmatmul.mubr.f32.gmra.mrb[0].mxu0 %v773
      %v2204 = vpop.f32.mrb[0].mxu0
      %v2205 = vadd.f32 %v2062, %v2204
      %v2206 = vpop.f32.mrb[0].mxu0
      %v2207 = vadd.f32 %v2064, %v2206
      %2208 = vdwg.mxu0
      %2209 = vmatprep.subr.mxu0 0.0
      %2210 = vmatpush1.msra.mxu0 %v1090
      %2211 = vmatprep.subr.mxu0 0.0
      %2212 = vmatpush1.msra.mxu0 %v1093
      %2213 = vmatprep.subr.mxu0 0.0
      %2214 = vmatpush1.msra.mxu0 %v1096
      %2215 = vmatprep.subr.mxu0 0.0
      %2216 = vmatpush1.msra.mxu0 %v1099
      %2217 = vmatprep.subr.mxu0 0.0
      %2218 = vmatpush1.msra.mxu0 %v1102
      %2219 = vmatprep.subr.mxu0 0.0
      %2220 = vmatpush1.msra.mxu0 %v1105
      %2221 = vmatprep.subr.mxu0 0.0
      %2222 = vmatpush1.msra.mxu0 %v1108
      %2223 = vmatprep.subr.mxu0 0.0
      %2224 = vmatpush1.msra.mxu0 %v1111
      %2225 = vmatprep.subr.mxu0 0.0
      %2226 = vmatpush1.msra.mxu0 %v1114
      %2227 = vmatprep.subr.mxu0 0.0
      %2228 = vmatpush1.msra.mxu0 %v1117
      %2229 = vmatprep.subr.mxu0 0.0
      %2230 = vmatpush1.msra.mxu0 %v1120
      %2231 = vmatprep.subr.mxu0 0.0
      %2232 = vmatpush1.msra.mxu0 %v1123
      %2233 = vmatprep.subr.mxu0 0.0
      %2234 = vmatpush1.msra.mxu0 %v1126
      %2235 = vmatprep.subr.mxu0 0.0
      %2236 = vmatpush1.msra.mxu0 %v1129
      %2237 = vmatprep.subr.mxu0 0.0
      %2238 = vmatpush1.msra.mxu0 %v1132
      %2239 = vmatprep.subr.mxu0 0.0
      %2240 = vmatpush1.msra.mxu0 %v1135
      %2241 = vmatprep.subr.mxu0 0.0
      %2242 = vmatpush1.msra.mxu0 %v1138
      %2243 = vmatprep.subr.mxu0 0.0
      %2244 = vmatpush1.msra.mxu0 %v1141
      %2245 = vmatprep.subr.mxu0 0.0
      %2246 = vmatpush1.msra.mxu0 %v1144
      %2247 = vmatprep.subr.mxu0 0.0
      %2248 = vmatpush1.msra.mxu0 %v1147
      %2249 = vmatprep.subr.mxu0 0.0
      %2250 = vmatpush1.msra.mxu0 %v1150
      %2251 = vmatprep.subr.mxu0 0.0
      %2252 = vmatpush1.msra.mxu0 %v1153
      %2253 = vmatprep.subr.mxu0 0.0
      %2254 = vmatpush1.msra.mxu0 %v1156
      %2255 = vmatprep.subr.mxu0 0.0
      %2256 = vmatpush1.msra.mxu0 %v1159
      %2257 = vmatprep.subr.mxu0 0.0
      %2258 = vmatpush1.msra.mxu0 %v1162
      %2259 = vmatprep.subr.mxu0 0.0
      %2260 = vmatpush1.msra.mxu0 %v1165
      %2261 = vmatprep.subr.mxu0 0.0
      %2262 = vmatpush1.msra.mxu0 %v1168
      %2263 = vmatprep.subr.mxu0 0.0
      %2264 = vmatpush1.msra.mxu0 %v1171
      %2265 = vmatprep.subr.mxu0 0.0
      %2266 = vmatpush1.msra.mxu0 %v1174
      %2267 = vmatprep.subr.mxu0 0.0
      %2268 = vmatpush1.msra.mxu0 %v1177
      %2269 = vmatprep.subr.mxu0 0.0
      %2270 = vmatpush1.msra.mxu0 %v1180
      %2271 = vmatprep.subr.mxu0 0.0
      %2272 = vmatpush1.msra.mxu0 %v1183
      %2273 = vmatprep.mubr.f32.mxu0 %v572
      %2274 = vmatmul.mubr.f32.gmra.mrb[0].mxu0 %v570
      %v2275 = vpop.f32.mrb[0].mxu0
      %v2276 = vadd.f32 %v1860, %v2275
      %v2277 = vpop.f32.mrb[0].mxu0
      %2278 = vmatprep.mubr.f32.mxu0 %v578
      %2279 = vmatmul.mubr.f32.gmra.mrb[0].mxu0 %v576
      %v2280 = vpop.f32.mrb[0].mxu0
      %v2281 = vadd.f32 %v1865, %v2280
      %v2282 = vpop.f32.mrb[0].mxu0
      %2283 = vmatprep.mubr.f32.mxu0 %v584
      %2284 = vmatmul.mubr.f32.gmra.mrb[0].mxu0 %v582
      %v2285 = vpop.f32.mrb[0].mxu0
      %v2286 = vadd.f32 %v1870, %v2285
      %v2287 = vpop.f32.mrb[0].mxu0
      %2288 = vmatprep.mubr.f32.mxu0 %v590
      %2289 = vmatmul.mubr.f32.gmra.mrb[0].mxu0 %v588
      %v2290 = vpop.f32.mrb[0].mxu0
      %v2291 = vadd.f32 %v1875, %v2290
      %v2292 = vpop.f32.mrb[0].mxu0
      %2293 = vmatprep.mubr.f32.mxu0 %v596
      %2294 = vmatmul.mubr.f32.gmra.mrb[0].mxu0 %v594
      %v2295 = vpop.f32.mrb[0].mxu0
      %v2296 = vadd.f32 %v1880, %v2295
      %v2297 = vpop.f32.mrb[0].mxu0
      %2298 = vmatprep.mubr.f32.mxu0 %v602
      %2299 = vmatmul.mubr.f32.gmra.mrb[0].mxu0 %v600
      %v2300 = vpop.f32.mrb[0].mxu0
      %v2301 = vadd.f32 %v1885, %v2300
      %v2302 = vpop.f32.mrb[0].mxu0
      %2303 = vmatprep.mubr.f32.mxu0 %v608
      %2304 = vmatmul.mubr.f32.gmra.mrb[0].mxu0 %v606
      %v2305 = vpop.f32.mrb[0].mxu0
      %v2306 = vadd.f32 %v1890, %v2305
      %v2307 = vpop.f32.mrb[0].mxu0
      %2308 = vmatprep.mubr.f32.mxu0 %v614
      %2309 = vmatmul.mubr.f32.gmra.mrb[0].mxu0 %v612
      %v2310 = vpop.f32.mrb[0].mxu0
      %v2311 = vadd.f32 %v1895, %v2310
      %v2312 = vpop.f32.mrb[0].mxu0
      %2313 = vmatprep.mubr.f32.mxu0 %v620
      %2314 = vmatmul.mubr.f32.gmra.mrb[0].mxu0 %v618
      %v2315 = vpop.f32.mrb[0].mxu0
      %v2316 = vadd.f32 %v1900, %v2315
      %v2317 = vpop.f32.mrb[0].mxu0
      %2318 = vmatprep.mubr.f32.mxu0 %v626
      %2319 = vmatmul.mubr.f32.gmra.mrb[0].mxu0 %v624
      %v2320 = vpop.f32.mrb[0].mxu0
      %v2321 = vadd.f32 %v1905, %v2320
      %v2322 = vpop.f32.mrb[0].mxu0
      %2323 = vmatprep.mubr.f32.mxu0 %v632
      %2324 = vmatmul.mubr.f32.gmra.mrb[0].mxu0 %v630
      %v2325 = vpop.f32.mrb[0].mxu0
      %v2326 = vadd.f32 %v1910, %v2325
      %v2327 = vpop.f32.mrb[0].mxu0
      %2328 = vmatprep.mubr.f32.mxu0 %v638
      %2329 = vmatmul.mubr.f32.gmra.mrb[0].mxu0 %v636
      %v2330 = vpop.f32.mrb[0].mxu0
      %v2331 = vadd.f32 %v1915, %v2330
      %v2332 = vpop.f32.mrb[0].mxu0
      %2333 = vmatprep.mubr.f32.mxu0 %v644
      %2334 = vmatmul.mubr.f32.gmra.mrb[0].mxu0 %v642
      %v2335 = vpop.f32.mrb[0].mxu0
      %v2336 = vadd.f32 %v1920, %v2335
      %v2337 = vpop.f32.mrb[0].mxu0
      %2338 = vdwg.mxu0
      %2339 = vmatprep.subr.mxu0 0.0
      %2340 = vmatpush1.msra.mxu0 %v1186
      %2341 = vmatprep.subr.mxu0 0.0
      %2342 = vmatpush1.msra.mxu0 %v1189
      %2343 = vmatprep.subr.mxu0 0.0
      %2344 = vmatpush1.msra.mxu0 %v1192
      %2345 = vmatprep.subr.mxu0 0.0
      %2346 = vmatpush1.msra.mxu0 %v1195
      %2347 = vmatprep.subr.mxu0 0.0
      %2348 = vmatpush1.msra.mxu0 %v1198
      %2349 = vmatprep.subr.mxu0 0.0
      %2350 = vmatpush1.msra.mxu0 %v1201
      %2351 = vmatprep.subr.mxu0 0.0
      %2352 = vmatpush1.msra.mxu0 %v1204
      %2353 = vmatprep.subr.mxu0 0.0
      %2354 = vmatpush1.msra.mxu0 %v1207
      %2355 = vmatprep.subr.mxu0 0.0
      %2356 = vmatpush1.msra.mxu0 %v1210
      %2357 = vmatprep.subr.mxu0 0.0
      %2358 = vmatpush1.msra.mxu0 %v1213
      %2359 = vmatprep.subr.mxu0 0.0
      %2360 = vmatpush1.msra.mxu0 %v1216
      %2361 = vmatprep.subr.mxu0 0.0
      %2362 = vmatpush1.msra.mxu0 %v1219
      %2363 = vmatprep.subr.mxu0 0.0
      %2364 = vmatpush1.msra.mxu0 %v1222
      %2365 = vmatprep.subr.mxu0 0.0
      %2366 = vmatpush1.msra.mxu0 %v1225
      %2367 = vmatprep.subr.mxu0 0.0
      %2368 = vmatpush1.msra.mxu0 %v1228
      %2369 = vmatprep.subr.mxu0 0.0
      %2370 = vmatpush1.msra.mxu0 %v1231
      %2371 = vmatprep.subr.mxu0 0.0
      %2372 = vmatpush1.msra.mxu0 0.0
      %2373 = vmatprep.subr.mxu0 0.0
      %2374 = vmatpush1.msra.mxu0 0.0
      %2375 = vmatprep.subr.mxu0 0.0
      %2376 = vmatpush1.msra.mxu0 0.0
      %2377 = vmatprep.subr.mxu0 0.0
      %2378 = vmatpush1.msra.mxu0 0.0
      %2379 = vmatprep.subr.mxu0 0.0
      %2380 = vmatpush1.msra.mxu0 0.0
      %2381 = vmatprep.subr.mxu0 0.0
      %2382 = vmatpush1.msra.mxu0 0.0
      %2383 = vmatprep.subr.mxu0 0.0
      %2384 = vmatpush1.msra.mxu0 0.0
      %2385 = vmatprep.subr.mxu0 0.0
      %2386 = vmatpush1.msra.mxu0 0.0
      %2387 = vmatprep.subr.mxu0 0.0
      %2388 = vmatpush1.msra.mxu0 0.0
      %2389 = vmatprep.subr.mxu0 0.0
      %2390 = vmatpush1.msra.mxu0 0.0
      %2391 = vmatprep.subr.mxu0 0.0
      %2392 = vmatpush1.msra.mxu0 0.0
      %2393 = vmatprep.subr.mxu0 0.0
      %2394 = vmatpush1.msra.mxu0 0.0
      %2395 = vmatprep.subr.mxu0 0.0
      %2396 = vmatpush1.msra.mxu0 0.0
      %2397 = vmatprep.subr.mxu0 0.0
      %2398 = vmatpush1.msra.mxu0 0.0
      %2399 = vmatprep.subr.mxu0 0.0
      %2400 = vmatpush1.msra.mxu0 0.0
      %2401 = vmatprep.subr.mxu0 0.0
      %2402 = vmatpush1.msra.mxu0 0.0
      %2403 = vmatprep.mubr.f32.mxu0 0.0
      %2404 = vmatmul.mubr.f32.gmra.mrb[0].mxu0 %v713
      %v2405 = vpop.f32.mrb[0].mxu0
      %v2406 = vadd.f32 %v2276, %v2405
      %v2407 = vpop.f32.mrb[0].mxu0
      %2408 = vmatprep.mubr.f32.mxu0 0.0
      %2409 = vmatmul.mubr.f32.gmra.mrb[0].mxu0 %v718
      %v2410 = vpop.f32.mrb[0].mxu0
      %v2411 = vadd.f32 %v2281, %v2410
      %v2412 = vpop.f32.mrb[0].mxu0
      %2413 = vmatprep.mubr.f32.mxu0 0.0
      %2414 = vmatmul.mubr.f32.gmra.mrb[0].mxu0 %v723
      %v2415 = vpop.f32.mrb[0].mxu0
      %v2416 = vadd.f32 %v2286, %v2415
      %v2417 = vpop.f32.mrb[0].mxu0
      %2418 = vmatprep.mubr.f32.mxu0 0.0
      %2419 = vmatmul.mubr.f32.gmra.mrb[0].mxu0 %v728
      %v2420 = vpop.f32.mrb[0].mxu0
      %v2421 = vadd.f32 %v2291, %v2420
      %v2422 = vpop.f32.mrb[0].mxu0
      %2423 = vmatprep.mubr.f32.mxu0 0.0
      %2424 = vmatmul.mubr.f32.gmra.mrb[0].mxu0 %v733
      %v2425 = vpop.f32.mrb[0].mxu0
      %v2426 = vadd.f32 %v2296, %v2425
      %v2427 = vpop.f32.mrb[0].mxu0
      %2428 = vmatprep.mubr.f32.mxu0 0.0
      %2429 = vmatmul.mubr.f32.gmra.mrb[0].mxu0 %v738
      %v2430 = vpop.f32.mrb[0].mxu0
      %v2431 = vadd.f32 %v2301, %v2430
      %v2432 = vpop.f32.mrb[0].mxu0
      %2433 = vmatprep.mubr.f32.mxu0 0.0
      %2434 = vmatmul.mubr.f32.gmra.mrb[0].mxu0 %v743
      %v2435 = vpop.f32.mrb[0].mxu0
      %v2436 = vadd.f32 %v2306, %v2435
      %v2437 = vpop.f32.mrb[0].mxu0
      %2438 = vmatprep.mubr.f32.mxu0 0.0
      %2439 = vmatmul.mubr.f32.gmra.mrb[0].mxu0 %v748
      %v2440 = vpop.f32.mrb[0].mxu0
      %v2441 = vadd.f32 %v2311, %v2440
      %v2442 = vpop.f32.mrb[0].mxu0
      %2443 = vmatprep.mubr.f32.mxu0 0.0
      %2444 = vmatmul.mubr.f32.gmra.mrb[0].mxu0 %v753
      %v2445 = vpop.f32.mrb[0].mxu0
      %v2446 = vadd.f32 %v2316, %v2445
      %v2447 = vpop.f32.mrb[0].mxu0
      %2448 = vmatprep.mubr.f32.mxu0 0.0
      %2449 = vmatmul.mubr.f32.gmra.mrb[0].mxu0 %v758
      %v2450 = vpop.f32.mrb[0].mxu0
      %v2451 = vadd.f32 %v2321, %v2450
      %v2452 = vpop.f32.mrb[0].mxu0
      %2453 = vmatprep.mubr.f32.mxu0 0.0
      %2454 = vmatmul.mubr.f32.gmra.mrb[0].mxu0 %v763
      %v2455 = vpop.f32.mrb[0].mxu0
      %v2456 = vadd.f32 %v2326, %v2455
      %v2457 = vpop.f32.mrb[0].mxu0
      %2458 = vmatprep.mubr.f32.mxu0 0.0
      %2459 = vmatmul.mubr.f32.gmra.mrb[0].mxu0 %v768
      %v2460 = vpop.f32.mrb[0].mxu0
      %v2461 = vadd.f32 %v2331, %v2460
      %v2462 = vpop.f32.mrb[0].mxu0
      %2463 = vmatprep.mubr.f32.mxu0 0.0
      %2464 = vmatmul.mubr.f32.gmra.mrb[0].mxu0 %v773
      %v2465 = vpop.f32.mrb[0].mxu0
      %v2466 = vadd.f32 %v2336, %v2465
      %v2467 = vpop.f32.mrb[0].mxu0
      %2468 = vdwg.mxu0
      %s2469 = scalar_lea.vmem %s1, 2304
      %v2470 = vld [vmem:[%s2469] sm:$0xff]
      %v2471 = vld [vmem:[%s2469 + $0x8] sm:$0xff]
      %v2472 = vld [vmem:[%s2469 + $0x10] sm:$0xff]
      %v2473 = vld [vmem:[%s2469 + $0x18] sm:$0xff]
      %v2474 = vld [vmem:[%s2469 + $0x20] sm:$0xff]
      %v2475 = vld [vmem:[%s2469 + $0x28] sm:$0xff]
      %v2476 = vld [vmem:[%s2469 + $0x30] sm:$0xff]
      %v2477 = vld [vmem:[%s2469 + $0x38] sm:$0xff]
      %v2478 = vld [vmem:[%s2469 + $0x40] sm:$0xff]
      %v2479 = vld [vmem:[%s2469 + $0x48] sm:$0xff]
      %v2480 = vld [vmem:[%s2469 + $0x50] sm:$0xff]
      %v2481 = vld [vmem:[%s2469 + $0x58] sm:$0xff]
      %v2482 = vld [vmem:[%s2469 + $0x60] sm:$0xff]
      %v2483 = vld [vmem:[%s2469 + $0x68] sm:$0xff]
      %v2484 = vld [vmem:[%s2469 + $0x70] sm:$0xff]
      %v2485 = vld [vmem:[%s2469 + $0x78] sm:$0xff]
      %v2486 = vld [vmem:[%s2469 + $0x80] sm:$0xff]
      %v2487 = vld [vmem:[%s2469 + $0x88] sm:$0xff]
      %v2488 = vld [vmem:[%s2469 + $0x90] sm:$0xff]
      %v2489 = vld [vmem:[%s2469 + $0x98] sm:$0xff]
      %v2490 = vld [vmem:[%s2469 + $0xa0] sm:$0xff]
      %v2491 = vld [vmem:[%s2469 + $0xa8] sm:$0xff]
      %v2492 = vld [vmem:[%s2469 + $0xb0] sm:$0xff]
      %v2493 = vld [vmem:[%s2469 + $0xb8] sm:$0xff]
      %v2494 = vld [vmem:[%s2469 + $0xc0] sm:$0xff]
      %v2495 = vld [vmem:[%s2469 + $0xc8] sm:$0xff]
      %v2496 = vld [vmem:[%s2469 + $0xd0] sm:$0xff]
      %v2497 = vld [vmem:[%s2469 + $0xd8] sm:$0xff]
      %v2498 = vld [vmem:[%s2469 + $0xe0] sm:$0xff]
      %v2499 = vld [vmem:[%s2469 + $0xe8] sm:$0xff]
      %v2500 = vld [vmem:[%s2469 + $0xf0] sm:$0xff]
      %v2501 = vld [vmem:[%s2469 + $0xf8] sm:$0xff]
      %v2502 = vld [vmem:[%s2469 + $0x100] sm:$0xff]
      %v2503 = vld [vmem:[%s2469 + $0x108] sm:$0xff]
      %v2504 = vld [vmem:[%s2469 + $0x110] sm:$0xff]
      %v2505 = vld [vmem:[%s2469 + $0x118] sm:$0xff]
      %v2506 = vld [vmem:[%s2469 + $0x120] sm:$0xff]
      %v2507 = vld [vmem:[%s2469 + $0x128] sm:$0xff]
      %v2508 = vld [vmem:[%s2469 + $0x130] sm:$0xff]
      %v2509 = vld [vmem:[%s2469 + $0x138] sm:$0xff]
      %v2510 = vld [vmem:[%s2469 + $0x140] sm:$0xff]
      %v2511 = vld [vmem:[%s2469 + $0x148] sm:$0xff]
      %v2512 = vld [vmem:[%s2469 + $0x150] sm:$0xff]
      %v2513 = vld [vmem:[%s2469 + $0x158] sm:$0xff]
      %v2514 = vld [vmem:[%s2469 + $0x160] sm:$0xff]
      %v2515 = vld [vmem:[%s2469 + $0x168] sm:$0xff]
      %v2516 = vld [vmem:[%s2469 + $0x170] sm:$0xff]
      %v2517 = vld [vmem:[%s2469 + $0x178] sm:$0xff]
      %v2518 = vld [vmem:[%s2469 + $0x180] sm:$0xff]
      %v2519 = vld [vmem:[%s2469 + $0x188] sm:$0xff]
      %v2520 = vld [vmem:[%s2469 + $0x190] sm:$0xff]
      %v2521 = vld [vmem:[%s2469 + $0x198] sm:$0xff]
      %v2522 = vld [vmem:[%s2469 + $0x1a0] sm:$0xff]
      %v2523 = vld [vmem:[%s2469 + $0x1a8] sm:$0xff]
      %v2524 = vld [vmem:[%s2469 + $0x1b0] sm:$0xff]
      %v2525 = vld [vmem:[%s2469 + $0x1b8] sm:$0xff]
      %v2526 = vld [vmem:[%s2469 + $0x1c0] sm:$0xff]
      %v2527 = vld [vmem:[%s2469 + $0x1c8] sm:$0xff]
      %v2528 = vld [vmem:[%s2469 + $0x1d0] sm:$0xff]
      %v2529 = vld [vmem:[%s2469 + $0x1d8] sm:$0xff]
      %v2530 = vld [vmem:[%s2469 + $0x1e0] sm:$0xff]
      %v2531 = vld [vmem:[%s2469 + $0x1e8] sm:$0xff]
      %v2532 = vld [vmem:[%s2469 + $0x1f0] sm:$0xff]
      %v2533 = vld [vmem:[%s2469 + $0x1f8] sm:$0xff]
      %v2534 = vld [vmem:[%s2469 + $0x200] sm:$0xff]
      %v2535 = vld [vmem:[%s2469 + $0x208] sm:$0xff]
      %v2536 = vld [vmem:[%s2469 + $0x210] sm:$0xff]
      %v2537 = vld [vmem:[%s2469 + $0x218] sm:$0xff]
      %v2538 = vld [vmem:[%s2469 + $0x220] sm:$0xff]
      %v2539 = vld [vmem:[%s2469 + $0x228] sm:$0xff]
      %v2540 = vld [vmem:[%s2469 + $0x230] sm:$0xff]
      %v2541 = vld [vmem:[%s2469 + $0x238] sm:$0xff]
      %v2542 = vld [vmem:[%s2469 + $0x240] sm:$0xff]
      %v2543 = vld [vmem:[%s2469 + $0x248] sm:$0xff]
      %v2544 = vld [vmem:[%s2469 + $0x250] sm:$0xff]
      %v2545 = vld [vmem:[%s2469 + $0x258] sm:$0xff]
      %v2546 = vld [vmem:[%s2469 + $0x260] sm:$0xff]
      %v2547 = vld [vmem:[%s2469 + $0x268] sm:$0xff]
      %v2548 = vld [vmem:[%s2469 + $0x270] sm:$0xff]
      %v2549 = vld [vmem:[%s2469 + $0x278] sm:$0xff]
      %v2550 = vld [vmem:[%s2469 + $0x280] sm:$0xff]
      %v2551 = vld [vmem:[%s2469 + $0x288] sm:$0xff]
      %v2552 = vld [vmem:[%s2469 + $0x290] sm:$0xff]
      %v2553 = vld [vmem:[%s2469 + $0x298] sm:$0xff]
      %v2554 = vld [vmem:[%s2469 + $0x2a0] sm:$0xff]
      %v2555 = vld [vmem:[%s2469 + $0x2a8] sm:$0xff]
      %v2556 = vld [vmem:[%s2469 + $0x2b0] sm:$0xff]
      %v2557 = vld [vmem:[%s2469 + $0x2b8] sm:$0xff]
      %v2558 = vld [vmem:[%s2469 + $0x2c0] sm:$0xff]
      %v2559 = vld [vmem:[%s2469 + $0x2c8] sm:$0xff]
      %v2560 = vld [vmem:[%s2469 + $0x2d0] sm:$0xff]
      %v2561 = vld [vmem:[%s2469 + $0x2d8] sm:$0xff]
      %v2562 = vld [vmem:[%s2469 + $0x2e0] sm:$0xff]
      %v2563 = vld [vmem:[%s2469 + $0x2e8] sm:$0xff]
      %v2564 = vld [vmem:[%s2469 + $0x2f0] sm:$0xff]
      %v2565 = vld [vmem:[%s2469 + $0x2f8] sm:$0xff]
      %v2566 = vld [vmem:[%s2469 + $0x300] sm:$0xff]
      %v2567 = vld [vmem:[%s2469 + $0x308] sm:$0xff]
      %v2568 = vld [vmem:[%s2469 + $0x310] sm:$0xff]
      %v2569 = vld [vmem:[%s2469 + $0x318] sm:$0xff]
      %v2570 = vld [vmem:[%s2469 + $0x320] sm:$0xff]
      %v2571 = vld [vmem:[%s2469 + $0x328] sm:$0xff]
      %v2572 = vld [vmem:[%s2469 + $0x330] sm:$0xff]
      %v2573 = vld [vmem:[%s2469 + $0x338] sm:$0xff]
      %v2574 = vld [vmem:[%s2469 + $0x340] sm:$0xff]
      %v2575 = vld [vmem:[%s2469 + $0x348] sm:$0xff]
      %v2576 = vld [vmem:[%s2469 + $0x350] sm:$0xff]
      %v2577 = vld [vmem:[%s2469 + $0x358] sm:$0xff]
      %v2578 = vld [vmem:[%s2469 + $0x360] sm:$0xff]
      %v2579 = vld [vmem:[%s2469 + $0x368] sm:$0xff]
      %v2580 = vld [vmem:[%s2469 + $0x370] sm:$0xff]
      %v2581 = vld [vmem:[%s2469 + $0x378] sm:$0xff]
      %v2582 = vld [vmem:[%s2469 + $0x380] sm:$0xff]
      %v2583 = vld [vmem:[%s2469 + $0x388] sm:$0xff]
      %v2584 = vld [vmem:[%s2469 + $0x390] sm:$0xff]
      %v2585 = vld [vmem:[%s2469 + $0x398] sm:$0xff]
      %v2586 = vld [vmem:[%s2469 + $0x3a0] sm:$0xff]
      %v2587 = vld [vmem:[%s2469 + $0x3a8] sm:$0xff]
      %v2588 = vld [vmem:[%s2469 + $0x3b0] sm:$0xff]
      %v2589 = vld [vmem:[%s2469 + $0x3b8] sm:$0xff]
      %v2590 = vld [vmem:[%s2469 + $0x3c0] sm:$0xff]
      %v2591 = vld [vmem:[%s2469 + $0x3c8] sm:$0xff]
      %v2592 = vld [vmem:[%s2469 + $0x3d0] sm:$0xff]
      %v2593 = vld [vmem:[%s2469 + $0x3d8] sm:$0xff]
      %v2594 = vld [vmem:[%s2469 + $0x3e0] sm:$0xff]
      %v2595 = vld [vmem:[%s2469 + $0x3e8] sm:$0xff]
      %v2596 = vld [vmem:[%s2469 + $0x3f0] sm:$0xff]
      %v2597 = vld [vmem:[%s2469 + $0x3f8] sm:$0xff]
      %v2598 = vld [vmem:[%s2469 + $0x400] sm:$0xff]
      %v2599 = vld [vmem:[%s2469 + $0x408] sm:$0xff]
      %v2600 = vld [vmem:[%s2469 + $0x410] sm:$0xff]
      %v2601 = vld [vmem:[%s2469 + $0x418] sm:$0xff]
      %v2602 = vld [vmem:[%s2469 + $0x420] sm:$0xff]
      %v2603 = vld [vmem:[%s2469 + $0x428] sm:$0xff]
      %v2604 = vld [vmem:[%s2469 + $0x430] sm:$0xff]
      %v2605 = vld [vmem:[%s2469 + $0x438] sm:$0xff]
      %v2606 = vld [vmem:[%s2469 + $0x440] sm:$0xff]
      %v2607 = vld [vmem:[%s2469 + $0x448] sm:$0xff]
      %v2608 = vld [vmem:[%s2469 + $0x450] sm:$0xff]
      %v2609 = vld [vmem:[%s2469 + $0x458] sm:$0xff]
      %v2610 = vld [vmem:[%s2469 + $0x460] sm:$0xff]
      %v2611 = vld [vmem:[%s2469 + $0x468] sm:$0xff]
      %v2612 = vld [vmem:[%s2469 + $0x470] sm:$0xff]
      %v2613 = vld [vmem:[%s2469 + $0x478] sm:$0xff]
      %2614 = vmatprep.subr.mxu0 %v2471
      %2615 = vmatpush1.msra.mxu0 %v2470
      %2616 = vmatprep.subr.mxu0 %v2474
      %2617 = vmatpush1.msra.mxu0 %v2473
      %2618 = vmatprep.subr.mxu0 %v2477
      %2619 = vmatpush1.msra.mxu0 %v2476
      %2620 = vmatprep.subr.mxu0 %v2480
      %2621 = vmatpush1.msra.mxu0 %v2479
      %2622 = vmatprep.subr.mxu0 %v2483
      %2623 = vmatpush1.msra.mxu0 %v2482
      %2624 = vmatprep.subr.mxu0 %v2486
      %2625 = vmatpush1.msra.mxu0 %v2485
      %2626 = vmatprep.subr.mxu0 %v2489
      %2627 = vmatpush1.msra.mxu0 %v2488
      %2628 = vmatprep.subr.mxu0 %v2492
      %2629 = vmatpush1.msra.mxu0 %v2491
      %2630 = vmatprep.subr.mxu0 %v2495
      %2631 = vmatpush1.msra.mxu0 %v2494
      %2632 = vmatprep.subr.mxu0 %v2498
      %2633 = vmatpush1.msra.mxu0 %v2497
      %2634 = vmatprep.subr.mxu0 %v2501
      %2635 = vmatpush1.msra.mxu0 %v2500
      %2636 = vmatprep.subr.mxu0 %v2504
      %2637 = vmatpush1.msra.mxu0 %v2503
      %2638 = vmatprep.subr.mxu0 %v2507
      %2639 = vmatpush1.msra.mxu0 %v2506
      %2640 = vmatprep.subr.mxu0 %v2510
      %2641 = vmatpush1.msra.mxu0 %v2509
      %2642 = vmatprep.subr.mxu0 %v2513
      %2643 = vmatpush1.msra.mxu0 %v2512
      %2644 = vmatprep.subr.mxu0 %v2516
      %2645 = vmatpush1.msra.mxu0 %v2515
      %2646 = vmatprep.subr.mxu0 %v2519
      %2647 = vmatpush1.msra.mxu0 %v2518
      %2648 = vmatprep.subr.mxu0 %v2522
      %2649 = vmatpush1.msra.mxu0 %v2521
      %2650 = vmatprep.subr.mxu0 %v2525
      %2651 = vmatpush1.msra.mxu0 %v2524
      %2652 = vmatprep.subr.mxu0 %v2528
      %2653 = vmatpush1.msra.mxu0 %v2527
      %2654 = vmatprep.subr.mxu0 %v2531
      %2655 = vmatpush1.msra.mxu0 %v2530
      %2656 = vmatprep.subr.mxu0 %v2534
      %2657 = vmatpush1.msra.mxu0 %v2533
      %2658 = vmatprep.subr.mxu0 %v2537
      %2659 = vmatpush1.msra.mxu0 %v2536
      %2660 = vmatprep.subr.mxu0 %v2540
      %2661 = vmatpush1.msra.mxu0 %v2539
      %2662 = vmatprep.subr.mxu0 %v2543
      %2663 = vmatpush1.msra.mxu0 %v2542
      %2664 = vmatprep.subr.mxu0 %v2546
      %2665 = vmatpush1.msra.mxu0 %v2545
      %2666 = vmatprep.subr.mxu0 %v2549
      %2667 = vmatpush1.msra.mxu0 %v2548
      %2668 = vmatprep.subr.mxu0 %v2552
      %2669 = vmatpush1.msra.mxu0 %v2551
      %2670 = vmatprep.subr.mxu0 %v2555
      %2671 = vmatpush1.msra.mxu0 %v2554
      %2672 = vmatprep.subr.mxu0 %v2558
      %2673 = vmatpush1.msra.mxu0 %v2557
      %2674 = vmatprep.subr.mxu0 %v2561
      %2675 = vmatpush1.msra.mxu0 %v2560
      %2676 = vmatprep.subr.mxu0 %v2564
      %2677 = vmatpush1.msra.mxu0 %v2563
      %2678 = vmatprep.mubr.f32.mxu0 %v884
      %2679 = vmatmul.mubr.f32.gmra.mrb[0].mxu0 %v882
      %v2680 = vpop.f32.mrb[0].mxu0
      %v2681 = vadd.f32 0.0, %v2680
      %v2682 = vpop.f32.mrb[0].mxu0
      %v2683 = vadd.f32 0.0, %v2682
      %2684 = vmatprep.mubr.f32.mxu0 %v890
      %2685 = vmatmul.mubr.f32.gmra.mrb[0].mxu0 %v888
      %v2686 = vpop.f32.mrb[0].mxu0
      %v2687 = vadd.f32 0.0, %v2686
      %v2688 = vpop.f32.mrb[0].mxu0
      %v2689 = vadd.f32 0.0, %v2688
      %2690 = vmatprep.mubr.f32.mxu0 %v896
      %2691 = vmatmul.mubr.f32.gmra.mrb[0].mxu0 %v894
      %v2692 = vpop.f32.mrb[0].mxu0
      %v2693 = vadd.f32 0.0, %v2692
      %v2694 = vpop.f32.mrb[0].mxu0
      %v2695 = vadd.f32 0.0, %v2694
      %2696 = vmatprep.mubr.f32.mxu0 %v902
      %2697 = vmatmul.mubr.f32.gmra.mrb[0].mxu0 %v900
      %v2698 = vpop.f32.mrb[0].mxu0
      %v2699 = vadd.f32 0.0, %v2698
      %v2700 = vpop.f32.mrb[0].mxu0
      %v2701 = vadd.f32 0.0, %v2700
      %2702 = vmatprep.mubr.f32.mxu0 %v908
      %2703 = vmatmul.mubr.f32.gmra.mrb[0].mxu0 %v906
      %v2704 = vpop.f32.mrb[0].mxu0
      %v2705 = vadd.f32 0.0, %v2704
      %v2706 = vpop.f32.mrb[0].mxu0
      %v2707 = vadd.f32 0.0, %v2706
      %2708 = vmatprep.mubr.f32.mxu0 %v914
      %2709 = vmatmul.mubr.f32.gmra.mrb[0].mxu0 %v912
      %v2710 = vpop.f32.mrb[0].mxu0
      %v2711 = vadd.f32 0.0, %v2710
      %v2712 = vpop.f32.mrb[0].mxu0
      %v2713 = vadd.f32 0.0, %v2712
      %2714 = vmatprep.mubr.f32.mxu0 %v920
      %2715 = vmatmul.mubr.f32.gmra.mrb[0].mxu0 %v918
      %v2716 = vpop.f32.mrb[0].mxu0
      %v2717 = vadd.f32 0.0, %v2716
      %v2718 = vpop.f32.mrb[0].mxu0
      %v2719 = vadd.f32 0.0, %v2718
      %2720 = vmatprep.mubr.f32.mxu0 %v926
      %2721 = vmatmul.mubr.f32.gmra.mrb[0].mxu0 %v924
      %v2722 = vpop.f32.mrb[0].mxu0
      %v2723 = vadd.f32 0.0, %v2722
      %v2724 = vpop.f32.mrb[0].mxu0
      %v2725 = vadd.f32 0.0, %v2724
      %2726 = vmatprep.mubr.f32.mxu0 %v932
      %2727 = vmatmul.mubr.f32.gmra.mrb[0].mxu0 %v930
      %v2728 = vpop.f32.mrb[0].mxu0
      %v2729 = vadd.f32 0.0, %v2728
      %v2730 = vpop.f32.mrb[0].mxu0
      %v2731 = vadd.f32 0.0, %v2730
      %2732 = vmatprep.mubr.f32.mxu0 %v938
      %2733 = vmatmul.mubr.f32.gmra.mrb[0].mxu0 %v936
      %v2734 = vpop.f32.mrb[0].mxu0
      %v2735 = vadd.f32 0.0, %v2734
      %v2736 = vpop.f32.mrb[0].mxu0
      %v2737 = vadd.f32 0.0, %v2736
      %2738 = vmatprep.mubr.f32.mxu0 %v944
      %2739 = vmatmul.mubr.f32.gmra.mrb[0].mxu0 %v942
      %v2740 = vpop.f32.mrb[0].mxu0
      %v2741 = vadd.f32 0.0, %v2740
      %v2742 = vpop.f32.mrb[0].mxu0
      %v2743 = vadd.f32 0.0, %v2742
      %2744 = vmatprep.mubr.f32.mxu0 %v950
      %2745 = vmatmul.mubr.f32.gmra.mrb[0].mxu0 %v948
      %v2746 = vpop.f32.mrb[0].mxu0
      %v2747 = vadd.f32 0.0, %v2746
      %v2748 = vpop.f32.mrb[0].mxu0
      %v2749 = vadd.f32 0.0, %v2748
      %2750 = vmatprep.mubr.f32.mxu0 %v956
      %2751 = vmatmul.mubr.f32.gmra.mrb[0].mxu0 %v954
      %v2752 = vpop.f32.mrb[0].mxu0
      %v2753 = vadd.f32 0.0, %v2752
      %v2754 = vpop.f32.mrb[0].mxu0
      %v2755 = vadd.f32 0.0, %v2754
      %2756 = vdwg.mxu0
      %2757 = vmatprep.subr.mxu0 %v2567
      %2758 = vmatpush1.msra.mxu0 %v2566
      %2759 = vmatprep.subr.mxu0 %v2570
      %2760 = vmatpush1.msra.mxu0 %v2569
      %2761 = vmatprep.subr.mxu0 %v2573
      %2762 = vmatpush1.msra.mxu0 %v2572
      %2763 = vmatprep.subr.mxu0 %v2576
      %2764 = vmatpush1.msra.mxu0 %v2575
      %2765 = vmatprep.subr.mxu0 %v2579
      %2766 = vmatpush1.msra.mxu0 %v2578
      %2767 = vmatprep.subr.mxu0 %v2582
      %2768 = vmatpush1.msra.mxu0 %v2581
      %2769 = vmatprep.subr.mxu0 %v2585
      %2770 = vmatpush1.msra.mxu0 %v2584
      %2771 = vmatprep.subr.mxu0 %v2588
      %2772 = vmatpush1.msra.mxu0 %v2587
      %2773 = vmatprep.subr.mxu0 %v2591
      %2774 = vmatpush1.msra.mxu0 %v2590
      %2775 = vmatprep.subr.mxu0 %v2594
      %2776 = vmatpush1.msra.mxu0 %v2593
      %2777 = vmatprep.subr.mxu0 %v2597
      %2778 = vmatpush1.msra.mxu0 %v2596
      %2779 = vmatprep.subr.mxu0 %v2600
      %2780 = vmatpush1.msra.mxu0 %v2599
      %2781 = vmatprep.subr.mxu0 %v2603
      %2782 = vmatpush1.msra.mxu0 %v2602
      %2783 = vmatprep.subr.mxu0 %v2606
      %2784 = vmatpush1.msra.mxu0 %v2605
      %2785 = vmatprep.subr.mxu0 %v2609
      %2786 = vmatpush1.msra.mxu0 %v2608
      %2787 = vmatprep.subr.mxu0 %v2612
      %2788 = vmatpush1.msra.mxu0 %v2611
      %2789 = vmatprep.subr.mxu0 0.0
      %2790 = vmatpush1.msra.mxu0 0.0
      %2791 = vmatprep.subr.mxu0 0.0
      %2792 = vmatpush1.msra.mxu0 0.0
      %2793 = vmatprep.subr.mxu0 0.0
      %2794 = vmatpush1.msra.mxu0 0.0
      %2795 = vmatprep.subr.mxu0 0.0
      %2796 = vmatpush1.msra.mxu0 0.0
      %2797 = vmatprep.subr.mxu0 0.0
      %2798 = vmatpush1.msra.mxu0 0.0
      %2799 = vmatprep.subr.mxu0 0.0
      %2800 = vmatpush1.msra.mxu0 0.0
      %2801 = vmatprep.subr.mxu0 0.0
      %2802 = vmatpush1.msra.mxu0 0.0
      %2803 = vmatprep.subr.mxu0 0.0
      %2804 = vmatpush1.msra.mxu0 0.0
      %2805 = vmatprep.subr.mxu0 0.0
      %2806 = vmatpush1.msra.mxu0 0.0
      %2807 = vmatprep.subr.mxu0 0.0
      %2808 = vmatpush1.msra.mxu0 0.0
      %2809 = vmatprep.subr.mxu0 0.0
      %2810 = vmatpush1.msra.mxu0 0.0
      %2811 = vmatprep.subr.mxu0 0.0
      %2812 = vmatpush1.msra.mxu0 0.0
      %2813 = vmatprep.subr.mxu0 0.0
      %2814 = vmatpush1.msra.mxu0 0.0
      %2815 = vmatprep.subr.mxu0 0.0
      %2816 = vmatpush1.msra.mxu0 0.0
      %2817 = vmatprep.subr.mxu0 0.0
      %2818 = vmatpush1.msra.mxu0 0.0
      %2819 = vmatprep.subr.mxu0 0.0
      %2820 = vmatpush1.msra.mxu0 0.0
      %2821 = vmatprep.mubr.f32.mxu0 0.0
      %2822 = vmatmul.mubr.f32.gmra.mrb[0].mxu0 %v1025
      %v2823 = vpop.f32.mrb[0].mxu0
      %v2824 = vadd.f32 %v2681, %v2823
      %v2825 = vpop.f32.mrb[0].mxu0
      %v2826 = vadd.f32 %v2683, %v2825
      %2827 = vmatprep.mubr.f32.mxu0 0.0
      %2828 = vmatmul.mubr.f32.gmra.mrb[0].mxu0 %v1030
      %v2829 = vpop.f32.mrb[0].mxu0
      %v2830 = vadd.f32 %v2687, %v2829
      %v2831 = vpop.f32.mrb[0].mxu0
      %v2832 = vadd.f32 %v2689, %v2831
      %2833 = vmatprep.mubr.f32.mxu0 0.0
      %2834 = vmatmul.mubr.f32.gmra.mrb[0].mxu0 %v1035
      %v2835 = vpop.f32.mrb[0].mxu0
      %v2836 = vadd.f32 %v2693, %v2835
      %v2837 = vpop.f32.mrb[0].mxu0
      %v2838 = vadd.f32 %v2695, %v2837
      %2839 = vmatprep.mubr.f32.mxu0 0.0
      %2840 = vmatmul.mubr.f32.gmra.mrb[0].mxu0 %v1040
      %v2841 = vpop.f32.mrb[0].mxu0
      %v2842 = vadd.f32 %v2699, %v2841
      %v2843 = vpop.f32.mrb[0].mxu0
      %v2844 = vadd.f32 %v2701, %v2843
      %2845 = vmatprep.mubr.f32.mxu0 0.0
      %2846 = vmatmul.mubr.f32.gmra.mrb[0].mxu0 %v1045
      %v2847 = vpop.f32.mrb[0].mxu0
      %v2848 = vadd.f32 %v2705, %v2847
      %v2849 = vpop.f32.mrb[0].mxu0
      %v2850 = vadd.f32 %v2707, %v2849
      %2851 = vmatprep.mubr.f32.mxu0 0.0
      %2852 = vmatmul.mubr.f32.gmra.mrb[0].mxu0 %v1050
      %v2853 = vpop.f32.mrb[0].mxu0
      %v2854 = vadd.f32 %v2711, %v2853
      %v2855 = vpop.f32.mrb[0].mxu0
      %v2856 = vadd.f32 %v2713, %v2855
      %2857 = vmatprep.mubr.f32.mxu0 0.0
      %2858 = vmatmul.mubr.f32.gmra.mrb[0].mxu0 %v1055
      %v2859 = vpop.f32.mrb[0].mxu0
      %v2860 = vadd.f32 %v2717, %v2859
      %v2861 = vpop.f32.mrb[0].mxu0
      %v2862 = vadd.f32 %v2719, %v2861
      %2863 = vmatprep.mubr.f32.mxu0 0.0
      %2864 = vmatmul.mubr.f32.gmra.mrb[0].mxu0 %v1060
      %v2865 = vpop.f32.mrb[0].mxu0
      %v2866 = vadd.f32 %v2723, %v2865
      %v2867 = vpop.f32.mrb[0].mxu0
      %v2868 = vadd.f32 %v2725, %v2867
      %2869 = vmatprep.mubr.f32.mxu0 0.0
      %2870 = vmatmul.mubr.f32.gmra.mrb[0].mxu0 %v1065
      %v2871 = vpop.f32.mrb[0].mxu0
      %v2872 = vadd.f32 %v2729, %v2871
      %v2873 = vpop.f32.mrb[0].mxu0
      %v2874 = vadd.f32 %v2731, %v2873
      %2875 = vmatprep.mubr.f32.mxu0 0.0
      %2876 = vmatmul.mubr.f32.gmra.mrb[0].mxu0 %v1070
      %v2877 = vpop.f32.mrb[0].mxu0
      %v2878 = vadd.f32 %v2735, %v2877
      %v2879 = vpop.f32.mrb[0].mxu0
      %v2880 = vadd.f32 %v2737, %v2879
      %2881 = vmatprep.mubr.f32.mxu0 0.0
      %2882 = vmatmul.mubr.f32.gmra.mrb[0].mxu0 %v1075
      %v2883 = vpop.f32.mrb[0].mxu0
      %v2884 = vadd.f32 %v2741, %v2883
      %v2885 = vpop.f32.mrb[0].mxu0
      %v2886 = vadd.f32 %v2743, %v2885
      %2887 = vmatprep.mubr.f32.mxu0 0.0
      %2888 = vmatmul.mubr.f32.gmra.mrb[0].mxu0 %v1080
      %v2889 = vpop.f32.mrb[0].mxu0
      %v2890 = vadd.f32 %v2747, %v2889
      %v2891 = vpop.f32.mrb[0].mxu0
      %v2892 = vadd.f32 %v2749, %v2891
      %2893 = vmatprep.mubr.f32.mxu0 0.0
      %2894 = vmatmul.mubr.f32.gmra.mrb[0].mxu0 %v1085
      %v2895 = vpop.f32.mrb[0].mxu0
      %v2896 = vadd.f32 %v2753, %v2895
      %v2897 = vpop.f32.mrb[0].mxu0
      %v2898 = vadd.f32 %v2755, %v2897
      %2899 = vdwg.mxu0
      %2900 = vmatprep.subr.mxu0 0.0
      %2901 = vmatpush1.msra.mxu0 %v2472
      %2902 = vmatprep.subr.mxu0 0.0
      %2903 = vmatpush1.msra.mxu0 %v2475
      %2904 = vmatprep.subr.mxu0 0.0
      %2905 = vmatpush1.msra.mxu0 %v2478
      %2906 = vmatprep.subr.mxu0 0.0
      %2907 = vmatpush1.msra.mxu0 %v2481
      %2908 = vmatprep.subr.mxu0 0.0
      %2909 = vmatpush1.msra.mxu0 %v2484
      %2910 = vmatprep.subr.mxu0 0.0
      %2911 = vmatpush1.msra.mxu0 %v2487
      %2912 = vmatprep.subr.mxu0 0.0
      %2913 = vmatpush1.msra.mxu0 %v2490
      %2914 = vmatprep.subr.mxu0 0.0
      %2915 = vmatpush1.msra.mxu0 %v2493
      %2916 = vmatprep.subr.mxu0 0.0
      %2917 = vmatpush1.msra.mxu0 %v2496
      %2918 = vmatprep.subr.mxu0 0.0
      %2919 = vmatpush1.msra.mxu0 %v2499
      %2920 = vmatprep.subr.mxu0 0.0
      %2921 = vmatpush1.msra.mxu0 %v2502
      %2922 = vmatprep.subr.mxu0 0.0
      %2923 = vmatpush1.msra.mxu0 %v2505
      %2924 = vmatprep.subr.mxu0 0.0
      %2925 = vmatpush1.msra.mxu0 %v2508
      %2926 = vmatprep.subr.mxu0 0.0
      %2927 = vmatpush1.msra.mxu0 %v2511
      %2928 = vmatprep.subr.mxu0 0.0
      %2929 = vmatpush1.msra.mxu0 %v2514
      %2930 = vmatprep.subr.mxu0 0.0
      %2931 = vmatpush1.msra.mxu0 %v2517
      %2932 = vmatprep.subr.mxu0 0.0
      %2933 = vmatpush1.msra.mxu0 %v2520
      %2934 = vmatprep.subr.mxu0 0.0
      %2935 = vmatpush1.msra.mxu0 %v2523
      %2936 = vmatprep.subr.mxu0 0.0
      %2937 = vmatpush1.msra.mxu0 %v2526
      %2938 = vmatprep.subr.mxu0 0.0
      %2939 = vmatpush1.msra.mxu0 %v2529
      %2940 = vmatprep.subr.mxu0 0.0
      %2941 = vmatpush1.msra.mxu0 %v2532
      %2942 = vmatprep.subr.mxu0 0.0
      %2943 = vmatpush1.msra.mxu0 %v2535
      %2944 = vmatprep.subr.mxu0 0.0
      %2945 = vmatpush1.msra.mxu0 %v2538
      %2946 = vmatprep.subr.mxu0 0.0
      %2947 = vmatpush1.msra.mxu0 %v2541
      %2948 = vmatprep.subr.mxu0 0.0
      %2949 = vmatpush1.msra.mxu0 %v2544
      %2950 = vmatprep.subr.mxu0 0.0
      %2951 = vmatpush1.msra.mxu0 %v2547
      %2952 = vmatprep.subr.mxu0 0.0
      %2953 = vmatpush1.msra.mxu0 %v2550
      %2954 = vmatprep.subr.mxu0 0.0
      %2955 = vmatpush1.msra.mxu0 %v2553
      %2956 = vmatprep.subr.mxu0 0.0
      %2957 = vmatpush1.msra.mxu0 %v2556
      %2958 = vmatprep.subr.mxu0 0.0
      %2959 = vmatpush1.msra.mxu0 %v2559
      %2960 = vmatprep.subr.mxu0 0.0
      %2961 = vmatpush1.msra.mxu0 %v2562
      %2962 = vmatprep.subr.mxu0 0.0
      %2963 = vmatpush1.msra.mxu0 %v2565
      %2964 = vmatprep.mubr.f32.mxu0 %v884
      %2965 = vmatmul.mubr.f32.gmra.mrb[0].mxu0 %v882
      %v2966 = vpop.f32.mrb[0].mxu0
      %v2967 = vadd.f32 0.0, %v2966
      %v2968 = vpop.f32.mrb[0].mxu0
      %2969 = vmatprep.mubr.f32.mxu0 %v890
      %2970 = vmatmul.mubr.f32.gmra.mrb[0].mxu0 %v888
      %v2971 = vpop.f32.mrb[0].mxu0
      %v2972 = vadd.f32 0.0, %v2971
      %v2973 = vpop.f32.mrb[0].mxu0
      %2974 = vmatprep.mubr.f32.mxu0 %v896
      %2975 = vmatmul.mubr.f32.gmra.mrb[0].mxu0 %v894
      %v2976 = vpop.f32.mrb[0].mxu0
      %v2977 = vadd.f32 0.0, %v2976
      %v2978 = vpop.f32.mrb[0].mxu0
      %2979 = vmatprep.mubr.f32.mxu0 %v902
      %2980 = vmatmul.mubr.f32.gmra.mrb[0].mxu0 %v900
      %v2981 = vpop.f32.mrb[0].mxu0
      %v2982 = vadd.f32 0.0, %v2981
      %v2983 = vpop.f32.mrb[0].mxu0
      %2984 = vmatprep.mubr.f32.mxu0 %v908
      %2985 = vmatmul.mubr.f32.gmra.mrb[0].mxu0 %v906
      %v2986 = vpop.f32.mrb[0].mxu0
      %v2987 = vadd.f32 0.0, %v2986
      %v2988 = vpop.f32.mrb[0].mxu0
      %2989 = vmatprep.mubr.f32.mxu0 %v914
      %2990 = vmatmul.mubr.f32.gmra.mrb[0].mxu0 %v912
      %v2991 = vpop.f32.mrb[0].mxu0
      %v2992 = vadd.f32 0.0, %v2991
      %v2993 = vpop.f32.mrb[0].mxu0
      %2994 = vmatprep.mubr.f32.mxu0 %v920
      %2995 = vmatmul.mubr.f32.gmra.mrb[0].mxu0 %v918
      %v2996 = vpop.f32.mrb[0].mxu0
      %v2997 = vadd.f32 0.0, %v2996
      %v2998 = vpop.f32.mrb[0].mxu0
      %2999 = vmatprep.mubr.f32.mxu0 %v926
      %3000 = vmatmul.mubr.f32.gmra.mrb[0].mxu0 %v924
      %v3001 = vpop.f32.mrb[0].mxu0
      %v3002 = vadd.f32 0.0, %v3001
      %v3003 = vpop.f32.mrb[0].mxu0
      %3004 = vmatprep.mubr.f32.mxu0 %v932
      %3005 = vmatmul.mubr.f32.gmra.mrb[0].mxu0 %v930
      %v3006 = vpop.f32.mrb[0].mxu0
      %v3007 = vadd.f32 0.0, %v3006
      %v3008 = vpop.f32.mrb[0].mxu0
      %3009 = vmatprep.mubr.f32.mxu0 %v938
      %3010 = vmatmul.mubr.f32.gmra.mrb[0].mxu0 %v936
      %v3011 = vpop.f32.mrb[0].mxu0
      %v3012 = vadd.f32 0.0, %v3011
      %v3013 = vpop.f32.mrb[0].mxu0
      %3014 = vmatprep.mubr.f32.mxu0 %v944
      %3015 = vmatmul.mubr.f32.gmra.mrb[0].mxu0 %v942
      %v3016 = vpop.f32.mrb[0].mxu0
      %v3017 = vadd.f32 0.0, %v3016
      %v3018 = vpop.f32.mrb[0].mxu0
      %3019 = vmatprep.mubr.f32.mxu0 %v950
      %3020 = vmatmul.mubr.f32.gmra.mrb[0].mxu0 %v948
      %v3021 = vpop.f32.mrb[0].mxu0
      %v3022 = vadd.f32 0.0, %v3021
      %v3023 = vpop.f32.mrb[0].mxu0
      %3024 = vmatprep.mubr.f32.mxu0 %v956
      %3025 = vmatmul.mubr.f32.gmra.mrb[0].mxu0 %v954
      %v3026 = vpop.f32.mrb[0].mxu0
      %v3027 = vadd.f32 0.0, %v3026
      %v3028 = vpop.f32.mrb[0].mxu0
      %3029 = vdwg.mxu0
      %3030 = vmatprep.subr.mxu0 0.0
      %3031 = vmatpush1.msra.mxu0 %v2568
      %3032 = vmatprep.subr.mxu0 0.0
      %3033 = vmatpush1.msra.mxu0 %v2571
      %3034 = vmatprep.subr.mxu0 0.0
      %3035 = vmatpush1.msra.mxu0 %v2574
      %3036 = vmatprep.subr.mxu0 0.0
      %3037 = vmatpush1.msra.mxu0 %v2577
      %3038 = vmatprep.subr.mxu0 0.0
      %3039 = vmatpush1.msra.mxu0 %v2580
      %3040 = vmatprep.subr.mxu0 0.0
      %3041 = vmatpush1.msra.mxu0 %v2583
      %3042 = vmatprep.subr.mxu0 0.0
      %3043 = vmatpush1.msra.mxu0 %v2586
      %3044 = vmatprep.subr.mxu0 0.0
      %3045 = vmatpush1.msra.mxu0 %v2589
      %3046 = vmatprep.subr.mxu0 0.0
      %3047 = vmatpush1.msra.mxu0 %v2592
      %3048 = vmatprep.subr.mxu0 0.0
      %3049 = vmatpush1.msra.mxu0 %v2595
      %3050 = vmatprep.subr.mxu0 0.0
      %3051 = vmatpush1.msra.mxu0 %v2598
      %3052 = vmatprep.subr.mxu0 0.0
      %3053 = vmatpush1.msra.mxu0 %v2601
      %3054 = vmatprep.subr.mxu0 0.0
      %3055 = vmatpush1.msra.mxu0 %v2604
      %3056 = vmatprep.subr.mxu0 0.0
      %3057 = vmatpush1.msra.mxu0 %v2607
      %3058 = vmatprep.subr.mxu0 0.0
      %3059 = vmatpush1.msra.mxu0 %v2610
      %3060 = vmatprep.subr.mxu0 0.0
      %3061 = vmatpush1.msra.mxu0 %v2613
      %3062 = vmatprep.subr.mxu0 0.0
      %3063 = vmatpush1.msra.mxu0 0.0
      %3064 = vmatprep.subr.mxu0 0.0
      %3065 = vmatpush1.msra.mxu0 0.0
      %3066 = vmatprep.subr.mxu0 0.0
      %3067 = vmatpush1.msra.mxu0 0.0
      %3068 = vmatprep.subr.mxu0 0.0
      %3069 = vmatpush1.msra.mxu0 0.0
      %3070 = vmatprep.subr.mxu0 0.0
      %3071 = vmatpush1.msra.mxu0 0.0
      %3072 = vmatprep.subr.mxu0 0.0
      %3073 = vmatpush1.msra.mxu0 0.0
      %3074 = vmatprep.subr.mxu0 0.0
      %3075 = vmatpush1.msra.mxu0 0.0
      %3076 = vmatprep.subr.mxu0 0.0
      %3077 = vmatpush1.msra.mxu0 0.0
      %3078 = vmatprep.subr.mxu0 0.0
      %3079 = vmatpush1.msra.mxu0 0.0
      %3080 = vmatprep.subr.mxu0 0.0
      %3081 = vmatpush1.msra.mxu0 0.0
      %3082 = vmatprep.subr.mxu0 0.0
      %3083 = vmatpush1.msra.mxu0 0.0
      %3084 = vmatprep.subr.mxu0 0.0
      %3085 = vmatpush1.msra.mxu0 0.0
      %3086 = vmatprep.subr.mxu0 0.0
      %3087 = vmatpush1.msra.mxu0 0.0
      %3088 = vmatprep.subr.mxu0 0.0
      %3089 = vmatpush1.msra.mxu0 0.0
      %3090 = vmatprep.subr.mxu0 0.0
      %3091 = vmatpush1.msra.mxu0 0.0
      %3092 = vmatprep.subr.mxu0 0.0
      %3093 = vmatpush1.msra.mxu0 0.0
      %3094 = vmatprep.mubr.f32.mxu0 0.0
      %3095 = vmatmul.mubr.f32.gmra.mrb[0].mxu0 %v1025
      %v3096 = vpop.f32.mrb[0].mxu0
      %v3097 = vadd.f32 %v2967, %v3096
      %v3098 = vpop.f32.mrb[0].mxu0
      %3099 = vmatprep.mubr.f32.mxu0 0.0
      %3100 = vmatmul.mubr.f32.gmra.mrb[0].mxu0 %v1030
      %v3101 = vpop.f32.mrb[0].mxu0
      %v3102 = vadd.f32 %v2972, %v3101
      %v3103 = vpop.f32.mrb[0].mxu0
      %3104 = vmatprep.mubr.f32.mxu0 0.0
      %3105 = vmatmul.mubr.f32.gmra.mrb[0].mxu0 %v1035
      %v3106 = vpop.f32.mrb[0].mxu0
      %v3107 = vadd.f32 %v2977, %v3106
      %v3108 = vpop.f32.mrb[0].mxu0
      %3109 = vmatprep.mubr.f32.mxu0 0.0
      %3110 = vmatmul.mubr.f32.gmra.mrb[0].mxu0 %v1040
      %v3111 = vpop.f32.mrb[0].mxu0
      %v3112 = vadd.f32 %v2982, %v3111
      %v3113 = vpop.f32.mrb[0].mxu0
      %3114 = vmatprep.mubr.f32.mxu0 0.0
      %3115 = vmatmul.mubr.f32.gmra.mrb[0].mxu0 %v1045
      %v3116 = vpop.f32.mrb[0].mxu0
      %v3117 = vadd.f32 %v2987, %v3116
      %v3118 = vpop.f32.mrb[0].mxu0
      %3119 = vmatprep.mubr.f32.mxu0 0.0
      %3120 = vmatmul.mubr.f32.gmra.mrb[0].mxu0 %v1050
      %v3121 = vpop.f32.mrb[0].mxu0
      %v3122 = vadd.f32 %v2992, %v3121
      %v3123 = vpop.f32.mrb[0].mxu0
      %3124 = vmatprep.mubr.f32.mxu0 0.0
      %3125 = vmatmul.mubr.f32.gmra.mrb[0].mxu0 %v1055
      %v3126 = vpop.f32.mrb[0].mxu0
      %v3127 = vadd.f32 %v2997, %v3126
      %v3128 = vpop.f32.mrb[0].mxu0
      %3129 = vmatprep.mubr.f32.mxu0 0.0
      %3130 = vmatmul.mubr.f32.gmra.mrb[0].mxu0 %v1060
      %v3131 = vpop.f32.mrb[0].mxu0
      %v3132 = vadd.f32 %v3002, %v3131
      %v3133 = vpop.f32.mrb[0].mxu0
      %3134 = vmatprep.mubr.f32.mxu0 0.0
      %3135 = vmatmul.mubr.f32.gmra.mrb[0].mxu0 %v1065
      %v3136 = vpop.f32.mrb[0].mxu0
      %v3137 = vadd.f32 %v3007, %v3136
      %v3138 = vpop.f32.mrb[0].mxu0
      %3139 = vmatprep.mubr.f32.mxu0 0.0
      %3140 = vmatmul.mubr.f32.gmra.mrb[0].mxu0 %v1070
      %v3141 = vpop.f32.mrb[0].mxu0
      %v3142 = vadd.f32 %v3012, %v3141
      %v3143 = vpop.f32.mrb[0].mxu0
      %3144 = vmatprep.mubr.f32.mxu0 0.0
      %3145 = vmatmul.mubr.f32.gmra.mrb[0].mxu0 %v1075
      %v3146 = vpop.f32.mrb[0].mxu0
      %v3147 = vadd.f32 %v3017, %v3146
      %v3148 = vpop.f32.mrb[0].mxu0
      %3149 = vmatprep.mubr.f32.mxu0 0.0
      %3150 = vmatmul.mubr.f32.gmra.mrb[0].mxu0 %v1080
      %v3151 = vpop.f32.mrb[0].mxu0
      %v3152 = vadd.f32 %v3022, %v3151
      %v3153 = vpop.f32.mrb[0].mxu0
      %3154 = vmatprep.mubr.f32.mxu0 0.0
      %3155 = vmatmul.mubr.f32.gmra.mrb[0].mxu0 %v1085
      %v3156 = vpop.f32.mrb[0].mxu0
      %v3157 = vadd.f32 %v3027, %v3156
      %v3158 = vpop.f32.mrb[0].mxu0
      %3159 = vdwg.mxu0
      %v3160 = vadd.f32 %v2133, %v2824
      %v3161 = vadd.f32 %v2135, %v2826
      %v3162 = vadd.f32 %v2406, %v3097
      %v3163 = vadd.f32 %v2139, %v2830
      %v3164 = vadd.f32 %v2141, %v2832
      %v3165 = vadd.f32 %v2411, %v3102
      %v3166 = vadd.f32 %v2145, %v2836
      %v3167 = vadd.f32 %v2147, %v2838
      %v3168 = vadd.f32 %v2416, %v3107
      %v3169 = vadd.f32 %v2151, %v2842
      %v3170 = vadd.f32 %v2153, %v2844
      %v3171 = vadd.f32 %v2421, %v3112
      %v3172 = vadd.f32 %v2157, %v2848
      %v3173 = vadd.f32 %v2159, %v2850
      %v3174 = vadd.f32 %v2426, %v3117
      %v3175 = vadd.f32 %v2163, %v2854
      %v3176 = vadd.f32 %v2165, %v2856
      %v3177 = vadd.f32 %v2431, %v3122
      %v3178 = vadd.f32 %v2169, %v2860
      %v3179 = vadd.f32 %v2171, %v2862
      %v3180 = vadd.f32 %v2436, %v3127
      %v3181 = vadd.f32 %v2175, %v2866
      %v3182 = vadd.f32 %v2177, %v2868
      %v3183 = vadd.f32 %v2441, %v3132
      %v3184 = vadd.f32 %v2181, %v2872
      %v3185 = vadd.f32 %v2183, %v2874
      %v3186 = vadd.f32 %v2446, %v3137
      %v3187 = vadd.f32 %v2187, %v2878
      %v3188 = vadd.f32 %v2189, %v2880
      %v3189 = vadd.f32 %v2451, %v3142
      %v3190 = vadd.f32 %v2193, %v2884
      %v3191 = vadd.f32 %v2195, %v2886
      %v3192 = vadd.f32 %v2456, %v3147
      %v3193 = vadd.f32 %v2199, %v2890
      %v3194 = vadd.f32 %v2201, %v2892
      %v3195 = vadd.f32 %v2461, %v3152
      %v3196 = vadd.f32 %v2205, %v2896
      %v3197 = vadd.f32 %v2207, %v2898
      %v3198 = vadd.f32 %v2466, %v3157
      %v3199 = vld [vmem:[%s2] sm:$0x7]
      %v3201 = vlaneseq
      %v3202 = vshrl.u32 %v3201, 7
      %v3203 = vsub.s32 0, %v3202
      %v3204 = vrot.slane %v3199, %v3203
      %v3205 = vlaneseq
      %v3206 = vshrl.u32 %v3205, 7
      %v3207 = vsub.s32 1, %v3206
      %v3208 = vrot.slane %v3199, %v3207
      %v3209 = vlaneseq
      %v3210 = vshrl.u32 %v3209, 7
      %v3211 = vsub.s32 2, %v3210
      %v3212 = vrot.slane %v3199, %v3211
      %v3216 = vadd.f32 %v3160, %v3204
      %v3217 = vadd.f32 %v3161, %v3208
      %v3218 = vadd.f32 %v3162, %v3212
      %v3219 = vadd.f32 %v3163, %v3204
      %v3220 = vadd.f32 %v3164, %v3208
      %v3221 = vadd.f32 %v3165, %v3212
      %v3222 = vadd.f32 %v3166, %v3204
      %v3223 = vadd.f32 %v3167, %v3208
      %v3224 = vadd.f32 %v3168, %v3212
      %v3225 = vadd.f32 %v3169, %v3204
      %v3226 = vadd.f32 %v3170, %v3208
      %v3227 = vadd.f32 %v3171, %v3212
      %v3228 = vadd.f32 %v3172, %v3204
      %v3229 = vadd.f32 %v3173, %v3208
      %v3230 = vadd.f32 %v3174, %v3212
      %v3231 = vadd.f32 %v3175, %v3204
      %v3232 = vadd.f32 %v3176, %v3208
      %v3233 = vadd.f32 %v3177, %v3212
      %v3234 = vadd.f32 %v3178, %v3204
      %v3235 = vadd.f32 %v3179, %v3208
      %v3236 = vadd.f32 %v3180, %v3212
      %v3237 = vadd.f32 %v3181, %v3204
      %v3238 = vadd.f32 %v3182, %v3208
      %v3239 = vadd.f32 %v3183, %v3212
      %v3240 = vadd.f32 %v3184, %v3204
      %v3241 = vadd.f32 %v3185, %v3208
      %v3242 = vadd.f32 %v3186, %v3212
      %v3243 = vadd.f32 %v3187, %v3204
      %v3244 = vadd.f32 %v3188, %v3208
      %v3245 = vadd.f32 %v3189, %v3212
      %v3246 = vadd.f32 %v3190, %v3204
      %v3247 = vadd.f32 %v3191, %v3208
      %v3248 = vadd.f32 %v3192, %v3212
      %v3249 = vadd.f32 %v3193, %v3204
      %v3250 = vadd.f32 %v3194, %v3208
      %v3251 = vadd.f32 %v3195, %v3212
      %v3252 = vadd.f32 %v3196, %v3204
      %v3253 = vadd.f32 %v3197, %v3208
      %v3254 = vadd.f32 %v3198, %v3212
      %v3255 = vmul.f32 %v3216, 0.5
      %v3256 = vmul.f32 %v3217, 0.5
      %v3257 = vmul.f32 %v3218, 0.5
      %v3258 = vmul.f32 %v3219, 0.5
      %v3259 = vmul.f32 %v3220, 0.5
      %v3260 = vmul.f32 %v3221, 0.5
      %v3261 = vmul.f32 %v3222, 0.5
      %v3262 = vmul.f32 %v3223, 0.5
      %v3263 = vmul.f32 %v3224, 0.5
      %v3264 = vmul.f32 %v3225, 0.5
      %v3265 = vmul.f32 %v3226, 0.5
      %v3266 = vmul.f32 %v3227, 0.5
      %v3267 = vmul.f32 %v3228, 0.5
      %v3268 = vmul.f32 %v3229, 0.5
      %v3269 = vmul.f32 %v3230, 0.5
      %v3270 = vmul.f32 %v3231, 0.5
      %v3271 = vmul.f32 %v3232, 0.5
      %v3272 = vmul.f32 %v3233, 0.5
      %v3273 = vmul.f32 %v3234, 0.5
      %v3274 = vmul.f32 %v3235, 0.5
      %v3275 = vmul.f32 %v3236, 0.5
      %v3276 = vmul.f32 %v3237, 0.5
      %v3277 = vmul.f32 %v3238, 0.5
      %v3278 = vmul.f32 %v3239, 0.5
      %v3279 = vmul.f32 %v3240, 0.5
      %v3280 = vmul.f32 %v3241, 0.5
      %v3281 = vmul.f32 %v3242, 0.5
      %v3282 = vmul.f32 %v3243, 0.5
      %v3283 = vmul.f32 %v3244, 0.5
      %v3284 = vmul.f32 %v3245, 0.5
      %v3285 = vmul.f32 %v3246, 0.5
      %v3286 = vmul.f32 %v3247, 0.5
      %v3287 = vmul.f32 %v3248, 0.5
      %v3288 = vmul.f32 %v3249, 0.5
      %v3289 = vmul.f32 %v3250, 0.5
      %v3290 = vmul.f32 %v3251, 0.5
      %v3291 = vmul.f32 %v3252, 0.5
      %v3292 = vmul.f32 %v3253, 0.5
      %v3293 = vmul.f32 %v3254, 0.5
      %v3294 = vmul.f32 %v3216, 0.70710677
      %v3295 = vmul.f32 %v3217, 0.70710677
      %v3296 = vmul.f32 %v3218, 0.70710677
      %v3297 = vmul.f32 %v3219, 0.70710677
      %v3298 = vmul.f32 %v3220, 0.70710677
      %v3299 = vmul.f32 %v3221, 0.70710677
      %v3300 = vmul.f32 %v3222, 0.70710677
      %v3301 = vmul.f32 %v3223, 0.70710677
      %v3302 = vmul.f32 %v3224, 0.70710677
      %v3303 = vmul.f32 %v3225, 0.70710677
      %v3304 = vmul.f32 %v3226, 0.70710677
      %v3305 = vmul.f32 %v3227, 0.70710677
      %v3306 = vmul.f32 %v3228, 0.70710677
      %v3307 = vmul.f32 %v3229, 0.70710677
      %v3308 = vmul.f32 %v3230, 0.70710677
      %v3309 = vmul.f32 %v3231, 0.70710677
      %v3310 = vmul.f32 %v3232, 0.70710677
      %v3311 = vmul.f32 %v3233, 0.70710677
      %v3312 = vmul.f32 %v3234, 0.70710677
      %v3313 = vmul.f32 %v3235, 0.70710677
      %v3314 = vmul.f32 %v3236, 0.70710677
      %v3315 = vmul.f32 %v3237, 0.70710677
      %v3316 = vmul.f32 %v3238, 0.70710677
      %v3317 = vmul.f32 %v3239, 0.70710677
      %v3318 = vmul.f32 %v3240, 0.70710677
      %v3319 = vmul.f32 %v3241, 0.70710677
      %v3320 = vmul.f32 %v3242, 0.70710677
      %v3321 = vmul.f32 %v3243, 0.70710677
      %v3322 = vmul.f32 %v3244, 0.70710677
      %v3323 = vmul.f32 %v3245, 0.70710677
      %v3324 = vmul.f32 %v3246, 0.70710677
      %v3325 = vmul.f32 %v3247, 0.70710677
      %v3326 = vmul.f32 %v3248, 0.70710677
      %v3327 = vmul.f32 %v3249, 0.70710677
      %v3328 = vmul.f32 %v3250, 0.70710677
      %v3329 = vmul.f32 %v3251, 0.70710677
      %v3330 = vmul.f32 %v3252, 0.70710677
      %v3331 = vmul.f32 %v3253, 0.70710677
      %v3332 = vmul.f32 %v3254, 0.70710677
      %v3333 = verf.f32.pop %v3294
      %v3334 = verf.f32.pop %v3295
      %v3335 = verf.f32.pop %v3296
      %v3336 = verf.f32.pop %v3297
      %v3337 = verf.f32.pop %v3298
      %v3338 = verf.f32.pop %v3299
      %v3339 = verf.f32.pop %v3300
      %v3340 = verf.f32.pop %v3301
      %v3341 = verf.f32.pop %v3302
      %v3342 = verf.f32.pop %v3303
      %v3343 = verf.f32.pop %v3304
      %v3344 = verf.f32.pop %v3305
      %v3345 = verf.f32.pop %v3306
      %v3346 = verf.f32.pop %v3307
      %v3347 = verf.f32.pop %v3308
      %v3348 = verf.f32.pop %v3309
      %v3349 = verf.f32.pop %v3310
      %v3350 = verf.f32.pop %v3311
      %v3351 = verf.f32.pop %v3312
      %v3352 = verf.f32.pop %v3313
      %v3353 = verf.f32.pop %v3314
      %v3354 = verf.f32.pop %v3315
      %v3355 = verf.f32.pop %v3316
      %v3356 = verf.f32.pop %v3317
      %v3357 = verf.f32.pop %v3318
      %v3358 = verf.f32.pop %v3319
      %v3359 = verf.f32.pop %v3320
      %v3360 = verf.f32.pop %v3321
      %v3361 = verf.f32.pop %v3322
      %v3362 = verf.f32.pop %v3323
      %v3363 = verf.f32.pop %v3324
      %v3364 = verf.f32.pop %v3325
      %v3365 = verf.f32.pop %v3326
      %v3366 = verf.f32.pop %v3327
      %v3367 = verf.f32.pop %v3328
      %v3368 = verf.f32.pop %v3329
      %v3369 = verf.f32.pop %v3330
      %v3370 = verf.f32.pop %v3331
      %v3371 = verf.f32.pop %v3332
      %v3372 = vadd.f32 %v3333, 1.0
      %v3373 = vadd.f32 %v3334, 1.0
      %v3374 = vadd.f32 %v3335, 1.0
      %v3375 = vadd.f32 %v3336, 1.0
      %v3376 = vadd.f32 %v3337, 1.0
      %v3377 = vadd.f32 %v3338, 1.0
      %v3378 = vadd.f32 %v3339, 1.0
      %v3379 = vadd.f32 %v3340, 1.0
      %v3380 = vadd.f32 %v3341, 1.0
      %v3381 = vadd.f32 %v3342, 1.0
      %v3382 = vadd.f32 %v3343, 1.0
      %v3383 = vadd.f32 %v3344, 1.0
      %v3384 = vadd.f32 %v3345, 1.0
      %v3385 = vadd.f32 %v3346, 1.0
      %v3386 = vadd.f32 %v3347, 1.0
      %v3387 = vadd.f32 %v3348, 1.0
      %v3388 = vadd.f32 %v3349, 1.0
      %v3389 = vadd.f32 %v3350, 1.0
      %v3390 = vadd.f32 %v3351, 1.0
      %v3391 = vadd.f32 %v3352, 1.0
      %v3392 = vadd.f32 %v3353, 1.0
      %v3393 = vadd.f32 %v3354, 1.0
      %v3394 = vadd.f32 %v3355, 1.0
      %v3395 = vadd.f32 %v3356, 1.0
      %v3396 = vadd.f32 %v3357, 1.0
      %v3397 = vadd.f32 %v3358, 1.0
      %v3398 = vadd.f32 %v3359, 1.0
      %v3399 = vadd.f32 %v3360, 1.0
      %v3400 = vadd.f32 %v3361, 1.0
      %v3401 = vadd.f32 %v3362, 1.0
      %v3402 = vadd.f32 %v3363, 1.0
      %v3403 = vadd.f32 %v3364, 1.0
      %v3404 = vadd.f32 %v3365, 1.0
      %v3405 = vadd.f32 %v3366, 1.0
      %v3406 = vadd.f32 %v3367, 1.0
      %v3407 = vadd.f32 %v3368, 1.0
      %v3408 = vadd.f32 %v3369, 1.0
      %v3409 = vadd.f32 %v3370, 1.0
      %v3410 = vadd.f32 %v3371, 1.0
      %v3411 = vmul.f32 %v3255, %v3372
      %v3412 = vmul.f32 %v3256, %v3373
      %v3413 = vmul.f32 %v3257, %v3374
      %v3414 = vmul.f32 %v3258, %v3375
      %v3415 = vmul.f32 %v3259, %v3376
      %v3416 = vmul.f32 %v3260, %v3377
      %v3417 = vmul.f32 %v3261, %v3378
      %v3418 = vmul.f32 %v3262, %v3379
      %v3419 = vmul.f32 %v3263, %v3380
      %v3420 = vmul.f32 %v3264, %v3381
      %v3421 = vmul.f32 %v3265, %v3382
      %v3422 = vmul.f32 %v3266, %v3383
      %v3423 = vmul.f32 %v3267, %v3384
      %v3424 = vmul.f32 %v3268, %v3385
      %v3425 = vmul.f32 %v3269, %v3386
      %v3426 = vmul.f32 %v3270, %v3387
      %v3427 = vmul.f32 %v3271, %v3388
      %v3428 = vmul.f32 %v3272, %v3389
      %v3429 = vmul.f32 %v3273, %v3390
      %v3430 = vmul.f32 %v3274, %v3391
      %v3431 = vmul.f32 %v3275, %v3392
      %v3432 = vmul.f32 %v3276, %v3393
      %v3433 = vmul.f32 %v3277, %v3394
      %v3434 = vmul.f32 %v3278, %v3395
      %v3435 = vmul.f32 %v3279, %v3396
      %v3436 = vmul.f32 %v3280, %v3397
      %v3437 = vmul.f32 %v3281, %v3398
      %v3438 = vmul.f32 %v3282, %v3399
      %v3439 = vmul.f32 %v3283, %v3400
      %v3440 = vmul.f32 %v3284, %v3401
      %v3441 = vmul.f32 %v3285, %v3402
      %v3442 = vmul.f32 %v3286, %v3403
      %v3443 = vmul.f32 %v3287, %v3404
      %v3444 = vmul.f32 %v3288, %v3405
      %v3445 = vmul.f32 %v3289, %v3406
      %v3446 = vmul.f32 %v3290, %v3407
      %v3447 = vmul.f32 %v3291, %v3408
      %v3448 = vmul.f32 %v3292, %v3409
      %v3449 = vmul.f32 %v3293, %v3410
      %v3451 = vsel %vm493, %v3447, 0
      %v3454 = vsel %vm493, %v3448, 0
      %v3457 = vsel %vm493, %v3449, 0
      %3459 = vmatprep.subr.mxu0 %v3412
      %3460 = vmatpush1.msra.mxu0 %v3411
      %3461 = vmatprep.subr.mxu0 %v3415
      %3462 = vmatpush1.msra.mxu0 %v3414
      %3463 = vmatprep.subr.mxu0 %v3418
      %3464 = vmatpush1.msra.mxu0 %v3417
      %3465 = vmatprep.subr.mxu0 %v3421
      %3466 = vmatpush1.msra.mxu0 %v3420
      %3467 = vmatprep.subr.mxu0 %v3424
      %3468 = vmatpush1.msra.mxu0 %v3423
      %3469 = vmatprep.subr.mxu0 %v3427
      %3470 = vmatpush1.msra.mxu0 %v3426
      %3471 = vmatprep.subr.mxu0 %v3430
      %3472 = vmatpush1.msra.mxu0 %v3429
      %3473 = vmatprep.subr.mxu0 %v3433
      %3474 = vmatpush1.msra.mxu0 %v3432
      %3475 = vmatprep.subr.mxu0 %v3436
      %3476 = vmatpush1.msra.mxu0 %v3435
      %3477 = vmatprep.subr.mxu0 %v3439
      %3478 = vmatpush1.msra.mxu0 %v3438
      %3479 = vmatprep.subr.mxu0 %v3442
      %3480 = vmatpush1.msra.mxu0 %v3441
      %3481 = vmatprep.subr.mxu0 %v3445
      %3482 = vmatpush1.msra.mxu0 %v3444
      %3483 = vmatprep.subr.mxu0 %v3454
      %3484 = vmatpush1.msra.mxu0 %v3451
      %3485 = vmatprep.subr.mxu0 0.0
      %3486 = vmatpush1.msra.mxu0 0.0
      %3487 = vmatprep.subr.mxu0 0.0
      %3488 = vmatpush1.msra.mxu0 0.0
      %3489 = vmatprep.subr.mxu0 0.0
      %3490 = vmatpush1.msra.mxu0 0.0
      %3491 = vmatprep.subr.mxu0 0.0
      %3492 = vmatpush1.msra.mxu0 0.0
      %3493 = vmatprep.subr.mxu0 0.0
      %3494 = vmatpush1.msra.mxu0 0.0
      %3495 = vmatprep.subr.mxu0 0.0
      %3496 = vmatpush1.msra.mxu0 0.0
      %3497 = vmatprep.subr.mxu0 0.0
      %3498 = vmatpush1.msra.mxu0 0.0
      %3499 = vmatprep.subr.mxu0 0.0
      %3500 = vmatpush1.msra.mxu0 0.0
      %3501 = vmatprep.subr.mxu0 0.0
      %3502 = vmatpush1.msra.mxu0 0.0
      %3503 = vmatprep.subr.mxu0 0.0
      %3504 = vmatpush1.msra.mxu0 0.0
      %3505 = vmatprep.subr.mxu0 0.0
      %3506 = vmatpush1.msra.mxu0 0.0
      %3507 = vmatprep.subr.mxu0 0.0
      %3508 = vmatpush1.msra.mxu0 0.0
      %3509 = vmatprep.subr.mxu0 0.0
      %3510 = vmatpush1.msra.mxu0 0.0
      %3511 = vmatprep.subr.mxu0 0.0
      %3512 = vmatpush1.msra.mxu0 0.0
      %3513 = vmatprep.subr.mxu0 0.0
      %3514 = vmatpush1.msra.mxu0 0.0
      %3515 = vmatprep.subr.mxu0 0.0
      %3516 = vmatpush1.msra.mxu0 0.0
      %3517 = vmatprep.subr.mxu0 0.0
      %3518 = vmatpush1.msra.mxu0 0.0
      %3519 = vmatprep.subr.mxu0 0.0
      %3520 = vmatpush1.msra.mxu0 0.0
      %3521 = vmatprep.subr.mxu0 0.0
      %3522 = vmatpush1.msra.mxu0 0.0
      %3523 = vmatprep.mubr.f32.mxu0 0.0
      %3524 = vmatmul.mubr.f32.gmra.mrb[0].mxu0 %v455
      %v3525 = vpop.f32.mrb[0].mxu0
      %v3526 = vadd.f32 0.0, %v3525
      %v3527 = vpop.f32.mrb[0].mxu0
      %v3528 = vadd.f32 0.0, %v3527
      %3529 = vmatprep.mubr.f32.mxu0 0.0
      %3530 = vmatmul.mubr.f32.gmra.mrb[0].mxu0 %v458
      %v3531 = vpop.f32.mrb[0].mxu0
      %v3532 = vadd.f32 0.0, %v3531
      %v3533 = vpop.f32.mrb[0].mxu0
      %v3534 = vadd.f32 0.0, %v3533
      %3535 = vmatprep.mubr.f32.mxu0 0.0
      %3536 = vmatmul.mubr.f32.gmra.mrb[0].mxu0 %v461
      %v3537 = vpop.f32.mrb[0].mxu0
      %v3538 = vadd.f32 0.0, %v3537
      %v3539 = vpop.f32.mrb[0].mxu0
      %v3540 = vadd.f32 0.0, %v3539
      %3541 = vmatprep.mubr.f32.mxu0 0.0
      %3542 = vmatmul.mubr.f32.gmra.mrb[0].mxu0 %v464
      %v3543 = vpop.f32.mrb[0].mxu0
      %v3544 = vadd.f32 0.0, %v3543
      %v3545 = vpop.f32.mrb[0].mxu0
      %v3546 = vadd.f32 0.0, %v3545
      %3547 = vmatprep.mubr.f32.mxu0 0.0
      %3548 = vmatmul.mubr.f32.gmra.mrb[0].mxu0 %v467
      %v3549 = vpop.f32.mrb[0].mxu0
      %v3550 = vadd.f32 0.0, %v3549
      %v3551 = vpop.f32.mrb[0].mxu0
      %v3552 = vadd.f32 0.0, %v3551
      %3553 = vmatprep.mubr.f32.mxu0 0.0
      %3554 = vmatmul.mubr.f32.gmra.mrb[0].mxu0 %v470
      %v3555 = vpop.f32.mrb[0].mxu0
      %v3556 = vadd.f32 0.0, %v3555
      %v3557 = vpop.f32.mrb[0].mxu0
      %v3558 = vadd.f32 0.0, %v3557
      %3559 = vmatprep.mubr.f32.mxu0 0.0
      %3560 = vmatmul.mubr.f32.gmra.mrb[0].mxu0 %v473
      %v3561 = vpop.f32.mrb[0].mxu0
      %v3562 = vadd.f32 0.0, %v3561
      %v3563 = vpop.f32.mrb[0].mxu0
      %v3564 = vadd.f32 0.0, %v3563
      %3565 = vmatprep.mubr.f32.mxu0 0.0
      %3566 = vmatmul.mubr.f32.gmra.mrb[0].mxu0 %v476
      %v3567 = vpop.f32.mrb[0].mxu0
      %v3568 = vadd.f32 0.0, %v3567
      %v3569 = vpop.f32.mrb[0].mxu0
      %v3570 = vadd.f32 0.0, %v3569
      %3571 = vmatprep.mubr.f32.mxu0 0.0
      %3572 = vmatmul.mubr.f32.gmra.mrb[0].mxu0 %v479
      %v3573 = vpop.f32.mrb[0].mxu0
      %v3574 = vadd.f32 0.0, %v3573
      %v3575 = vpop.f32.mrb[0].mxu0
      %v3576 = vadd.f32 0.0, %v3575
      %3577 = vmatprep.mubr.f32.mxu0 0.0
      %3578 = vmatmul.mubr.f32.gmra.mrb[0].mxu0 %v482
      %v3579 = vpop.f32.mrb[0].mxu0
      %v3580 = vadd.f32 0.0, %v3579
      %v3581 = vpop.f32.mrb[0].mxu0
      %v3582 = vadd.f32 0.0, %v3581
      %3583 = vmatprep.mubr.f32.mxu0 0.0
      %3584 = vmatmul.mubr.f32.gmra.mrb[0].mxu0 %v485
      %v3585 = vpop.f32.mrb[0].mxu0
      %v3586 = vadd.f32 0.0, %v3585
      %v3587 = vpop.f32.mrb[0].mxu0
      %v3588 = vadd.f32 0.0, %v3587
      %3589 = vmatprep.mubr.f32.mxu0 0.0
      %3590 = vmatmul.mubr.f32.gmra.mrb[0].mxu0 %v488
      %v3591 = vpop.f32.mrb[0].mxu0
      %v3592 = vadd.f32 0.0, %v3591
      %v3593 = vpop.f32.mrb[0].mxu0
      %v3594 = vadd.f32 0.0, %v3593
      %3595 = vmatprep.mubr.f32.mxu0 0.0
      %3596 = vmatmul.mubr.f32.gmra.mrb[0].mxu0 %v491
      %v3597 = vpop.f32.mrb[0].mxu0
      %v3598 = vadd.f32 0.0, %v3597
      %v3599 = vpop.f32.mrb[0].mxu0
      %v3600 = vadd.f32 0.0, %v3599
      %3601 = vdwg.mxu0
      %3602 = vmatprep.subr.mxu0 0.0
      %3603 = vmatpush1.msra.mxu0 %v3413
      %3604 = vmatprep.subr.mxu0 0.0
      %3605 = vmatpush1.msra.mxu0 %v3416
      %3606 = vmatprep.subr.mxu0 0.0
      %3607 = vmatpush1.msra.mxu0 %v3419
      %3608 = vmatprep.subr.mxu0 0.0
      %3609 = vmatpush1.msra.mxu0 %v3422
      %3610 = vmatprep.subr.mxu0 0.0
      %3611 = vmatpush1.msra.mxu0 %v3425
      %3612 = vmatprep.subr.mxu0 0.0
      %3613 = vmatpush1.msra.mxu0 %v3428
      %3614 = vmatprep.subr.mxu0 0.0
      %3615 = vmatpush1.msra.mxu0 %v3431
      %3616 = vmatprep.subr.mxu0 0.0
      %3617 = vmatpush1.msra.mxu0 %v3434
      %3618 = vmatprep.subr.mxu0 0.0
      %3619 = vmatpush1.msra.mxu0 %v3437
      %3620 = vmatprep.subr.mxu0 0.0
      %3621 = vmatpush1.msra.mxu0 %v3440
      %3622 = vmatprep.subr.mxu0 0.0
      %3623 = vmatpush1.msra.mxu0 %v3443
      %3624 = vmatprep.subr.mxu0 0.0
      %3625 = vmatpush1.msra.mxu0 %v3446
      %3626 = vmatprep.subr.mxu0 0.0
      %3627 = vmatpush1.msra.mxu0 %v3457
      %3628 = vmatprep.subr.mxu0 0.0
      %3629 = vmatpush1.msra.mxu0 0.0
      %3630 = vmatprep.subr.mxu0 0.0
      %3631 = vmatpush1.msra.mxu0 0.0
      %3632 = vmatprep.subr.mxu0 0.0
      %3633 = vmatpush1.msra.mxu0 0.0
      %3634 = vmatprep.subr.mxu0 0.0
      %3635 = vmatpush1.msra.mxu0 0.0
      %3636 = vmatprep.subr.mxu0 0.0
      %3637 = vmatpush1.msra.mxu0 0.0
      %3638 = vmatprep.subr.mxu0 0.0
      %3639 = vmatpush1.msra.mxu0 0.0
      %3640 = vmatprep.subr.mxu0 0.0
      %3641 = vmatpush1.msra.mxu0 0.0
      %3642 = vmatprep.subr.mxu0 0.0
      %3643 = vmatpush1.msra.mxu0 0.0
      %3644 = vmatprep.subr.mxu0 0.0
      %3645 = vmatpush1.msra.mxu0 0.0
      %3646 = vmatprep.subr.mxu0 0.0
      %3647 = vmatpush1.msra.mxu0 0.0
      %3648 = vmatprep.subr.mxu0 0.0
      %3649 = vmatpush1.msra.mxu0 0.0
      %3650 = vmatprep.subr.mxu0 0.0
      %3651 = vmatpush1.msra.mxu0 0.0
      %3652 = vmatprep.subr.mxu0 0.0
      %3653 = vmatpush1.msra.mxu0 0.0
      %3654 = vmatprep.subr.mxu0 0.0
      %3655 = vmatpush1.msra.mxu0 0.0
      %3656 = vmatprep.subr.mxu0 0.0
      %3657 = vmatpush1.msra.mxu0 0.0
      %3658 = vmatprep.subr.mxu0 0.0
      %3659 = vmatpush1.msra.mxu0 0.0
      %3660 = vmatprep.subr.mxu0 0.0
      %3661 = vmatpush1.msra.mxu0 0.0
      %3662 = vmatprep.subr.mxu0 0.0
      %3663 = vmatpush1.msra.mxu0 0.0
      %3664 = vmatprep.subr.mxu0 0.0
      %3665 = vmatpush1.msra.mxu0 0.0
      %3666 = vmatprep.mubr.f32.mxu0 0.0
      %3667 = vmatmul.mubr.f32.gmra.mrb[0].mxu0 %v455
      %v3668 = vpop.f32.mrb[0].mxu0
      %v3669 = vadd.f32 0.0, %v3668
      %v3670 = vpop.f32.mrb[0].mxu0
      %3671 = vmatprep.mubr.f32.mxu0 0.0
      %3672 = vmatmul.mubr.f32.gmra.mrb[0].mxu0 %v458
      %v3673 = vpop.f32.mrb[0].mxu0
      %v3674 = vadd.f32 0.0, %v3673
      %v3675 = vpop.f32.mrb[0].mxu0
      %3676 = vmatprep.mubr.f32.mxu0 0.0
      %3677 = vmatmul.mubr.f32.gmra.mrb[0].mxu0 %v461
      %v3678 = vpop.f32.mrb[0].mxu0
      %v3679 = vadd.f32 0.0, %v3678
      %v3680 = vpop.f32.mrb[0].mxu0
      %3681 = vmatprep.mubr.f32.mxu0 0.0
      %3682 = vmatmul.mubr.f32.gmra.mrb[0].mxu0 %v464
      %v3683 = vpop.f32.mrb[0].mxu0
      %v3684 = vadd.f32 0.0, %v3683
      %v3685 = vpop.f32.mrb[0].mxu0
      %3686 = vmatprep.mubr.f32.mxu0 0.0
      %3687 = vmatmul.mubr.f32.gmra.mrb[0].mxu0 %v467
      %v3688 = vpop.f32.mrb[0].mxu0
      %v3689 = vadd.f32 0.0, %v3688
      %v3690 = vpop.f32.mrb[0].mxu0
      %3691 = vmatprep.mubr.f32.mxu0 0.0
      %3692 = vmatmul.mubr.f32.gmra.mrb[0].mxu0 %v470
      %v3693 = vpop.f32.mrb[0].mxu0
      %v3694 = vadd.f32 0.0, %v3693
      %v3695 = vpop.f32.mrb[0].mxu0
      %3696 = vmatprep.mubr.f32.mxu0 0.0
      %3697 = vmatmul.mubr.f32.gmra.mrb[0].mxu0 %v473
      %v3698 = vpop.f32.mrb[0].mxu0
      %v3699 = vadd.f32 0.0, %v3698
      %v3700 = vpop.f32.mrb[0].mxu0
      %3701 = vmatprep.mubr.f32.mxu0 0.0
      %3702 = vmatmul.mubr.f32.gmra.mrb[0].mxu0 %v476
      %v3703 = vpop.f32.mrb[0].mxu0
      %v3704 = vadd.f32 0.0, %v3703
      %v3705 = vpop.f32.mrb[0].mxu0
      %3706 = vmatprep.mubr.f32.mxu0 0.0
      %3707 = vmatmul.mubr.f32.gmra.mrb[0].mxu0 %v479
      %v3708 = vpop.f32.mrb[0].mxu0
      %v3709 = vadd.f32 0.0, %v3708
      %v3710 = vpop.f32.mrb[0].mxu0
      %3711 = vmatprep.mubr.f32.mxu0 0.0
      %3712 = vmatmul.mubr.f32.gmra.mrb[0].mxu0 %v482
      %v3713 = vpop.f32.mrb[0].mxu0
      %v3714 = vadd.f32 0.0, %v3713
      %v3715 = vpop.f32.mrb[0].mxu0
      %3716 = vmatprep.mubr.f32.mxu0 0.0
      %3717 = vmatmul.mubr.f32.gmra.mrb[0].mxu0 %v485
      %v3718 = vpop.f32.mrb[0].mxu0
      %v3719 = vadd.f32 0.0, %v3718
      %v3720 = vpop.f32.mrb[0].mxu0
      %3721 = vmatprep.mubr.f32.mxu0 0.0
      %3722 = vmatmul.mubr.f32.gmra.mrb[0].mxu0 %v488
      %v3723 = vpop.f32.mrb[0].mxu0
      %v3724 = vadd.f32 0.0, %v3723
      %v3725 = vpop.f32.mrb[0].mxu0
      %3726 = vmatprep.mubr.f32.mxu0 0.0
      %3727 = vmatmul.mubr.f32.gmra.mrb[0].mxu0 %v491
      %v3728 = vpop.f32.mrb[0].mxu0
      %v3729 = vadd.f32 0.0, %v3728
      %v3730 = vpop.f32.mrb[0].mxu0
      %3731 = vdwg.mxu0
      %3732 = vmatprep.subr.mxu0 %v3412
      %3733 = vmatpush1.msra.mxu0 %v3411
      %3734 = vmatprep.subr.mxu0 %v3415
      %3735 = vmatpush1.msra.mxu0 %v3414
      %3736 = vmatprep.subr.mxu0 %v3418
      %3737 = vmatpush1.msra.mxu0 %v3417
      %3738 = vmatprep.subr.mxu0 %v3421
      %3739 = vmatpush1.msra.mxu0 %v3420
      %3740 = vmatprep.subr.mxu0 %v3424
      %3741 = vmatpush1.msra.mxu0 %v3423
      %3742 = vmatprep.subr.mxu0 %v3427
      %3743 = vmatpush1.msra.mxu0 %v3426
      %3744 = vmatprep.subr.mxu0 %v3430
      %3745 = vmatpush1.msra.mxu0 %v3429
      %3746 = vmatprep.subr.mxu0 %v3433
      %3747 = vmatpush1.msra.mxu0 %v3432
      %3748 = vmatprep.subr.mxu0 %v3436
      %3749 = vmatpush1.msra.mxu0 %v3435
      %3750 = vmatprep.subr.mxu0 %v3439
      %3751 = vmatpush1.msra.mxu0 %v3438
      %3752 = vmatprep.subr.mxu0 %v3442
      %3753 = vmatpush1.msra.mxu0 %v3441
      %3754 = vmatprep.subr.mxu0 %v3445
      %3755 = vmatpush1.msra.mxu0 %v3444
      %3756 = vmatprep.subr.mxu0 %v3454
      %3757 = vmatpush1.msra.mxu0 %v3451
      %3758 = vmatprep.subr.mxu0 0.0
      %3759 = vmatpush1.msra.mxu0 0.0
      %3760 = vmatprep.subr.mxu0 0.0
      %3761 = vmatpush1.msra.mxu0 0.0
      %3762 = vmatprep.subr.mxu0 0.0
      %3763 = vmatpush1.msra.mxu0 0.0
      %3764 = vmatprep.subr.mxu0 0.0
      %3765 = vmatpush1.msra.mxu0 0.0
      %3766 = vmatprep.subr.mxu0 0.0
      %3767 = vmatpush1.msra.mxu0 0.0
      %3768 = vmatprep.subr.mxu0 0.0
      %3769 = vmatpush1.msra.mxu0 0.0
      %3770 = vmatprep.subr.mxu0 0.0
      %3771 = vmatpush1.msra.mxu0 0.0
      %3772 = vmatprep.subr.mxu0 0.0
      %3773 = vmatpush1.msra.mxu0 0.0
      %3774 = vmatprep.subr.mxu0 0.0
      %3775 = vmatpush1.msra.mxu0 0.0
      %3776 = vmatprep.subr.mxu0 0.0
      %3777 = vmatpush1.msra.mxu0 0.0
      %3778 = vmatprep.subr.mxu0 0.0
      %3779 = vmatpush1.msra.mxu0 0.0
      %3780 = vmatprep.subr.mxu0 0.0
      %3781 = vmatpush1.msra.mxu0 0.0
      %3782 = vmatprep.subr.mxu0 0.0
      %3783 = vmatpush1.msra.mxu0 0.0
      %3784 = vmatprep.subr.mxu0 0.0
      %3785 = vmatpush1.msra.mxu0 0.0
      %3786 = vmatprep.subr.mxu0 0.0
      %3787 = vmatpush1.msra.mxu0 0.0
      %3788 = vmatprep.subr.mxu0 0.0
      %3789 = vmatpush1.msra.mxu0 0.0
      %3790 = vmatprep.subr.mxu0 0.0
      %3791 = vmatpush1.msra.mxu0 0.0
      %3792 = vmatprep.subr.mxu0 0.0
      %3793 = vmatpush1.msra.mxu0 0.0
      %3794 = vmatprep.subr.mxu0 0.0
      %3795 = vmatpush1.msra.mxu0 0.0
      %3796 = vmatprep.mubr.f32.mxu0 0.0
      %3797 = vmatmul.mubr.f32.gmra.mrb[0].mxu0 %v777
      %v3798 = vpop.f32.mrb[0].mxu0
      %v3799 = vadd.f32 0.0, %v3798
      %v3800 = vpop.f32.mrb[0].mxu0
      %v3801 = vadd.f32 0.0, %v3800
      %3802 = vmatprep.mubr.f32.mxu0 0.0
      %3803 = vmatmul.mubr.f32.gmra.mrb[0].mxu0 %v780
      %v3804 = vpop.f32.mrb[0].mxu0
      %v3805 = vadd.f32 0.0, %v3804
      %v3806 = vpop.f32.mrb[0].mxu0
      %v3807 = vadd.f32 0.0, %v3806
      %3808 = vmatprep.mubr.f32.mxu0 0.0
      %3809 = vmatmul.mubr.f32.gmra.mrb[0].mxu0 %v783
      %v3810 = vpop.f32.mrb[0].mxu0
      %v3811 = vadd.f32 0.0, %v3810
      %v3812 = vpop.f32.mrb[0].mxu0
      %v3813 = vadd.f32 0.0, %v3812
      %3814 = vmatprep.mubr.f32.mxu0 0.0
      %3815 = vmatmul.mubr.f32.gmra.mrb[0].mxu0 %v786
      %v3816 = vpop.f32.mrb[0].mxu0
      %v3817 = vadd.f32 0.0, %v3816
      %v3818 = vpop.f32.mrb[0].mxu0
      %v3819 = vadd.f32 0.0, %v3818
      %3820 = vmatprep.mubr.f32.mxu0 0.0
      %3821 = vmatmul.mubr.f32.gmra.mrb[0].mxu0 %v789
      %v3822 = vpop.f32.mrb[0].mxu0
      %v3823 = vadd.f32 0.0, %v3822
      %v3824 = vpop.f32.mrb[0].mxu0
      %v3825 = vadd.f32 0.0, %v3824
      %3826 = vmatprep.mubr.f32.mxu0 0.0
      %3827 = vmatmul.mubr.f32.gmra.mrb[0].mxu0 %v792
      %v3828 = vpop.f32.mrb[0].mxu0
      %v3829 = vadd.f32 0.0, %v3828
      %v3830 = vpop.f32.mrb[0].mxu0
      %v3831 = vadd.f32 0.0, %v3830
      %3832 = vmatprep.mubr.f32.mxu0 0.0
      %3833 = vmatmul.mubr.f32.gmra.mrb[0].mxu0 %v795
      %v3834 = vpop.f32.mrb[0].mxu0
      %v3835 = vadd.f32 0.0, %v3834
      %v3836 = vpop.f32.mrb[0].mxu0
      %v3837 = vadd.f32 0.0, %v3836
      %3838 = vmatprep.mubr.f32.mxu0 0.0
      %3839 = vmatmul.mubr.f32.gmra.mrb[0].mxu0 %v798
      %v3840 = vpop.f32.mrb[0].mxu0
      %v3841 = vadd.f32 0.0, %v3840
      %v3842 = vpop.f32.mrb[0].mxu0
      %v3843 = vadd.f32 0.0, %v3842
      %3844 = vmatprep.mubr.f32.mxu0 0.0
      %3845 = vmatmul.mubr.f32.gmra.mrb[0].mxu0 %v801
      %v3846 = vpop.f32.mrb[0].mxu0
      %v3847 = vadd.f32 0.0, %v3846
      %v3848 = vpop.f32.mrb[0].mxu0
      %v3849 = vadd.f32 0.0, %v3848
      %3850 = vmatprep.mubr.f32.mxu0 0.0
      %3851 = vmatmul.mubr.f32.gmra.mrb[0].mxu0 %v804
      %v3852 = vpop.f32.mrb[0].mxu0
      %v3853 = vadd.f32 0.0, %v3852
      %v3854 = vpop.f32.mrb[0].mxu0
      %v3855 = vadd.f32 0.0, %v3854
      %3856 = vmatprep.mubr.f32.mxu0 0.0
      %3857 = vmatmul.mubr.f32.gmra.mrb[0].mxu0 %v807
      %v3858 = vpop.f32.mrb[0].mxu0
      %v3859 = vadd.f32 0.0, %v3858
      %v3860 = vpop.f32.mrb[0].mxu0
      %v3861 = vadd.f32 0.0, %v3860
      %3862 = vmatprep.mubr.f32.mxu0 0.0
      %3863 = vmatmul.mubr.f32.gmra.mrb[0].mxu0 %v810
      %v3864 = vpop.f32.mrb[0].mxu0
      %v3865 = vadd.f32 0.0, %v3864
      %v3866 = vpop.f32.mrb[0].mxu0
      %v3867 = vadd.f32 0.0, %v3866
      %3868 = vmatprep.mubr.f32.mxu0 0.0
      %3869 = vmatmul.mubr.f32.gmra.mrb[0].mxu0 %v813
      %v3870 = vpop.f32.mrb[0].mxu0
      %v3871 = vadd.f32 0.0, %v3870
      %v3872 = vpop.f32.mrb[0].mxu0
      %v3873 = vadd.f32 0.0, %v3872
      %3874 = vdwg.mxu0
      %3875 = vmatprep.subr.mxu0 0.0
      %3876 = vmatpush1.msra.mxu0 %v3413
      %3877 = vmatprep.subr.mxu0 0.0
      %3878 = vmatpush1.msra.mxu0 %v3416
      %3879 = vmatprep.subr.mxu0 0.0
      %3880 = vmatpush1.msra.mxu0 %v3419
      %3881 = vmatprep.subr.mxu0 0.0
      %3882 = vmatpush1.msra.mxu0 %v3422
      %3883 = vmatprep.subr.mxu0 0.0
      %3884 = vmatpush1.msra.mxu0 %v3425
      %3885 = vmatprep.subr.mxu0 0.0
      %3886 = vmatpush1.msra.mxu0 %v3428
      %3887 = vmatprep.subr.mxu0 0.0
      %3888 = vmatpush1.msra.mxu0 %v3431
      %3889 = vmatprep.subr.mxu0 0.0
      %3890 = vmatpush1.msra.mxu0 %v3434
      %3891 = vmatprep.subr.mxu0 0.0
      %3892 = vmatpush1.msra.mxu0 %v3437
      %3893 = vmatprep.subr.mxu0 0.0
      %3894 = vmatpush1.msra.mxu0 %v3440
      %3895 = vmatprep.subr.mxu0 0.0
      %3896 = vmatpush1.msra.mxu0 %v3443
      %3897 = vmatprep.subr.mxu0 0.0
      %3898 = vmatpush1.msra.mxu0 %v3446
      %3899 = vmatprep.subr.mxu0 0.0
      %3900 = vmatpush1.msra.mxu0 %v3457
      %3901 = vmatprep.subr.mxu0 0.0
      %3902 = vmatpush1.msra.mxu0 0.0
      %3903 = vmatprep.subr.mxu0 0.0
      %3904 = vmatpush1.msra.mxu0 0.0
      %3905 = vmatprep.subr.mxu0 0.0
      %3906 = vmatpush1.msra.mxu0 0.0
      %3907 = vmatprep.subr.mxu0 0.0
      %3908 = vmatpush1.msra.mxu0 0.0
      %3909 = vmatprep.subr.mxu0 0.0
      %3910 = vmatpush1.msra.mxu0 0.0
      %3911 = vmatprep.subr.mxu0 0.0
      %3912 = vmatpush1.msra.mxu0 0.0
      %3913 = vmatprep.subr.mxu0 0.0
      %3914 = vmatpush1.msra.mxu0 0.0
      %3915 = vmatprep.subr.mxu0 0.0
      %3916 = vmatpush1.msra.mxu0 0.0
      %3917 = vmatprep.subr.mxu0 0.0
      %3918 = vmatpush1.msra.mxu0 0.0
      %3919 = vmatprep.subr.mxu0 0.0
      %3920 = vmatpush1.msra.mxu0 0.0
      %3921 = vmatprep.subr.mxu0 0.0
      %3922 = vmatpush1.msra.mxu0 0.0
      %3923 = vmatprep.subr.mxu0 0.0
      %3924 = vmatpush1.msra.mxu0 0.0
      %3925 = vmatprep.subr.mxu0 0.0
      %3926 = vmatpush1.msra.mxu0 0.0
      %3927 = vmatprep.subr.mxu0 0.0
      %3928 = vmatpush1.msra.mxu0 0.0
      %3929 = vmatprep.subr.mxu0 0.0
      %3930 = vmatpush1.msra.mxu0 0.0
      %3931 = vmatprep.subr.mxu0 0.0
      %3932 = vmatpush1.msra.mxu0 0.0
      %3933 = vmatprep.subr.mxu0 0.0
      %3934 = vmatpush1.msra.mxu0 0.0
      %3935 = vmatprep.subr.mxu0 0.0
      %3936 = vmatpush1.msra.mxu0 0.0
      %3937 = vmatprep.subr.mxu0 0.0
      %3938 = vmatpush1.msra.mxu0 0.0
      %3939 = vmatprep.mubr.f32.mxu0 0.0
      %3940 = vmatmul.mubr.f32.gmra.mrb[0].mxu0 %v777
      %v3941 = vpop.f32.mrb[0].mxu0
      %v3942 = vadd.f32 0.0, %v3941
      %v3943 = vpop.f32.mrb[0].mxu0
      %3944 = vmatprep.mubr.f32.mxu0 0.0
      %3945 = vmatmul.mubr.f32.gmra.mrb[0].mxu0 %v780
      %v3946 = vpop.f32.mrb[0].mxu0
      %v3947 = vadd.f32 0.0, %v3946
      %v3948 = vpop.f32.mrb[0].mxu0
      %3949 = vmatprep.mubr.f32.mxu0 0.0
      %3950 = vmatmul.mubr.f32.gmra.mrb[0].mxu0 %v783
      %v3951 = vpop.f32.mrb[0].mxu0
      %v3952 = vadd.f32 0.0, %v3951
      %v3953 = vpop.f32.mrb[0].mxu0
      %3954 = vmatprep.mubr.f32.mxu0 0.0
      %3955 = vmatmul.mubr.f32.gmra.mrb[0].mxu0 %v786
      %v3956 = vpop.f32.mrb[0].mxu0
      %v3957 = vadd.f32 0.0, %v3956
      %v3958 = vpop.f32.mrb[0].mxu0
      %3959 = vmatprep.mubr.f32.mxu0 0.0
      %3960 = vmatmul.mubr.f32.gmra.mrb[0].mxu0 %v789
      %v3961 = vpop.f32.mrb[0].mxu0
      %v3962 = vadd.f32 0.0, %v3961
      %v3963 = vpop.f32.mrb[0].mxu0
      %3964 = vmatprep.mubr.f32.mxu0 0.0
      %3965 = vmatmul.mubr.f32.gmra.mrb[0].mxu0 %v792
      %v3966 = vpop.f32.mrb[0].mxu0
      %v3967 = vadd.f32 0.0, %v3966
      %v3968 = vpop.f32.mrb[0].mxu0
      %3969 = vmatprep.mubr.f32.mxu0 0.0
      %3970 = vmatmul.mubr.f32.gmra.mrb[0].mxu0 %v795
      %v3971 = vpop.f32.mrb[0].mxu0
      %v3972 = vadd.f32 0.0, %v3971
      %v3973 = vpop.f32.mrb[0].mxu0
      %3974 = vmatprep.mubr.f32.mxu0 0.0
      %3975 = vmatmul.mubr.f32.gmra.mrb[0].mxu0 %v798
      %v3976 = vpop.f32.mrb[0].mxu0
      %v3977 = vadd.f32 0.0, %v3976
      %v3978 = vpop.f32.mrb[0].mxu0
      %3979 = vmatprep.mubr.f32.mxu0 0.0
      %3980 = vmatmul.mubr.f32.gmra.mrb[0].mxu0 %v801
      %v3981 = vpop.f32.mrb[0].mxu0
      %v3982 = vadd.f32 0.0, %v3981
      %v3983 = vpop.f32.mrb[0].mxu0
      %3984 = vmatprep.mubr.f32.mxu0 0.0
      %3985 = vmatmul.mubr.f32.gmra.mrb[0].mxu0 %v804
      %v3986 = vpop.f32.mrb[0].mxu0
      %v3987 = vadd.f32 0.0, %v3986
      %v3988 = vpop.f32.mrb[0].mxu0
      %3989 = vmatprep.mubr.f32.mxu0 0.0
      %3990 = vmatmul.mubr.f32.gmra.mrb[0].mxu0 %v807
      %v3991 = vpop.f32.mrb[0].mxu0
      %v3992 = vadd.f32 0.0, %v3991
      %v3993 = vpop.f32.mrb[0].mxu0
      %3994 = vmatprep.mubr.f32.mxu0 0.0
      %3995 = vmatmul.mubr.f32.gmra.mrb[0].mxu0 %v810
      %v3996 = vpop.f32.mrb[0].mxu0
      %v3997 = vadd.f32 0.0, %v3996
      %v3998 = vpop.f32.mrb[0].mxu0
      %3999 = vmatprep.mubr.f32.mxu0 0.0
      %4000 = vmatmul.mubr.f32.gmra.mrb[0].mxu0 %v813
      %v4001 = vpop.f32.mrb[0].mxu0
      %v4002 = vadd.f32 0.0, %v4001
      %v4003 = vpop.f32.mrb[0].mxu0
      %4004 = vdwg.mxu0
      %v4005 = vld [vmem:[%s3] sm:$0xff]
      %v4006 = vld [vmem:[%s3 + $0x8] sm:$0xff]
      %v4007 = vld [vmem:[%s3 + $0x10] sm:$0xff]
      %v4008 = vld [vmem:[%s3 + $0x18] sm:$0xff]
      %v4009 = vld [vmem:[%s3 + $0x20] sm:$0xff]
      %v4010 = vld [vmem:[%s3 + $0x28] sm:$0xff]
      %v4011 = vld [vmem:[%s3 + $0x30] sm:$0xff]
      %v4012 = vld [vmem:[%s3 + $0x38] sm:$0xff]
      %v4013 = vld [vmem:[%s3 + $0x40] sm:$0xff]
      %v4014 = vld [vmem:[%s3 + $0x48] sm:$0xff]
      %v4015 = vld [vmem:[%s3 + $0x50] sm:$0xff]
      %v4016 = vld [vmem:[%s3 + $0x58] sm:$0xff]
      %v4017 = vld [vmem:[%s3 + $0x60] sm:$0xff]
      %v4018 = vld [vmem:[%s3 + $0x68] sm:$0xff]
      %v4019 = vld [vmem:[%s3 + $0x70] sm:$0xff]
      %v4020 = vld [vmem:[%s3 + $0x78] sm:$0xff]
      %v4021 = vld [vmem:[%s3 + $0x80] sm:$0xff]
      %v4022 = vld [vmem:[%s3 + $0x88] sm:$0xff]
      %v4023 = vld [vmem:[%s3 + $0x90] sm:$0xff]
      %v4024 = vld [vmem:[%s3 + $0x98] sm:$0xff]
      %v4025 = vld [vmem:[%s3 + $0xa0] sm:$0xff]
      %v4026 = vld [vmem:[%s3 + $0xa8] sm:$0xff]
      %v4027 = vld [vmem:[%s3 + $0xb0] sm:$0xff]
      %v4028 = vld [vmem:[%s3 + $0xb8] sm:$0xff]
      %v4029 = vld [vmem:[%s3 + $0xc0] sm:$0xff]
      %v4030 = vld [vmem:[%s3 + $0xc8] sm:$0xff]
      %v4031 = vld [vmem:[%s3 + $0xd0] sm:$0xff]
      %v4032 = vld [vmem:[%s3 + $0xd8] sm:$0xff]
      %v4033 = vld [vmem:[%s3 + $0xe0] sm:$0xff]
      %v4034 = vld [vmem:[%s3 + $0xe8] sm:$0xff]
      %v4035 = vld [vmem:[%s3 + $0xf0] sm:$0xff]
      %v4036 = vld [vmem:[%s3 + $0xf8] sm:$0xff]
      %v4037 = vld [vmem:[%s3 + $0x100] sm:$0xff]
      %v4038 = vld [vmem:[%s3 + $0x108] sm:$0xff]
      %v4039 = vld [vmem:[%s3 + $0x110] sm:$0xff]
      %v4040 = vld [vmem:[%s3 + $0x118] sm:$0xff]
      %v4041 = vld [vmem:[%s3 + $0x120] sm:$0xff]
      %v4042 = vld [vmem:[%s3 + $0x128] sm:$0xff]
      %v4043 = vld [vmem:[%s3 + $0x130] sm:$0xff]
      %v4044 = vld [vmem:[%s3 + $0x138] sm:$0xff]
      %v4045 = vld [vmem:[%s3 + $0x140] sm:$0xff]
      %v4046 = vld [vmem:[%s3 + $0x148] sm:$0xff]
      %v4047 = vld [vmem:[%s3 + $0x150] sm:$0xff]
      %v4048 = vld [vmem:[%s3 + $0x158] sm:$0xff]
      %v4049 = vld [vmem:[%s3 + $0x160] sm:$0xff]
      %v4050 = vld [vmem:[%s3 + $0x168] sm:$0xff]
      %v4051 = vld [vmem:[%s3 + $0x170] sm:$0xff]
      %v4052 = vld [vmem:[%s3 + $0x178] sm:$0xff]
      %v4053 = vld [vmem:[%s3 + $0x180] sm:$0xff]
      %v4054 = vld [vmem:[%s3 + $0x188] sm:$0xff]
      %v4055 = vld [vmem:[%s3 + $0x190] sm:$0xff]
      %v4056 = vld [vmem:[%s3 + $0x198] sm:$0xff]
      %v4057 = vld [vmem:[%s3 + $0x1a0] sm:$0xff]
      %v4058 = vld [vmem:[%s3 + $0x1a8] sm:$0xff]
      %v4059 = vld [vmem:[%s3 + $0x1b0] sm:$0xff]
      %v4060 = vld [vmem:[%s3 + $0x1b8] sm:$0xff]
      %v4061 = vld [vmem:[%s3 + $0x1c0] sm:$0xff]
      %v4062 = vld [vmem:[%s3 + $0x1c8] sm:$0xff]
      %v4063 = vld [vmem:[%s3 + $0x1d0] sm:$0xff]
      %v4064 = vld [vmem:[%s3 + $0x1d8] sm:$0xff]
      %v4065 = vld [vmem:[%s3 + $0x1e0] sm:$0xff]
      %v4066 = vld [vmem:[%s3 + $0x1e8] sm:$0xff]
      %v4067 = vld [vmem:[%s3 + $0x1f0] sm:$0xff]
      %v4068 = vld [vmem:[%s3 + $0x1f8] sm:$0xff]
      %v4069 = vld [vmem:[%s3 + $0x200] sm:$0xff]
      %v4070 = vld [vmem:[%s3 + $0x208] sm:$0xff]
      %v4071 = vld [vmem:[%s3 + $0x210] sm:$0xff]
      %v4072 = vld [vmem:[%s3 + $0x218] sm:$0xff]
      %v4073 = vld [vmem:[%s3 + $0x220] sm:$0xff]
      %v4074 = vld [vmem:[%s3 + $0x228] sm:$0xff]
      %v4075 = vld [vmem:[%s3 + $0x230] sm:$0xff]
      %v4076 = vld [vmem:[%s3 + $0x238] sm:$0xff]
      %v4077 = vld [vmem:[%s3 + $0x240] sm:$0xff]
      %v4078 = vld [vmem:[%s3 + $0x248] sm:$0xff]
      %v4079 = vld [vmem:[%s3 + $0x250] sm:$0xff]
      %v4080 = vld [vmem:[%s3 + $0x258] sm:$0xff]
      %v4081 = vld [vmem:[%s3 + $0x260] sm:$0xff]
      %v4082 = vld [vmem:[%s3 + $0x268] sm:$0xff]
      %v4083 = vld [vmem:[%s3 + $0x270] sm:$0xff]
      %v4084 = vld [vmem:[%s3 + $0x278] sm:$0xff]
      %v4085 = vld [vmem:[%s3 + $0x280] sm:$0xff]
      %v4086 = vld [vmem:[%s3 + $0x288] sm:$0xff]
      %v4087 = vld [vmem:[%s3 + $0x290] sm:$0xff]
      %v4088 = vld [vmem:[%s3 + $0x298] sm:$0xff]
      %v4089 = vld [vmem:[%s3 + $0x2a0] sm:$0xff]
      %v4090 = vld [vmem:[%s3 + $0x2a8] sm:$0xff]
      %v4091 = vld [vmem:[%s3 + $0x2b0] sm:$0xff]
      %v4092 = vld [vmem:[%s3 + $0x2b8] sm:$0xff]
      %v4093 = vld [vmem:[%s3 + $0x2c0] sm:$0xff]
      %v4094 = vld [vmem:[%s3 + $0x2c8] sm:$0xff]
      %v4095 = vld [vmem:[%s3 + $0x2d0] sm:$0xff]
      %v4096 = vld [vmem:[%s3 + $0x2d8] sm:$0xff]
      %v4097 = vld [vmem:[%s3 + $0x2e0] sm:$0xff]
      %v4098 = vld [vmem:[%s3 + $0x2e8] sm:$0xff]
      %v4099 = vld [vmem:[%s3 + $0x2f0] sm:$0xff]
      %v4100 = vld [vmem:[%s3 + $0x2f8] sm:$0xff]
      %v4101 = vld [vmem:[%s3 + $0x300] sm:$0xff]
      %v4102 = vld [vmem:[%s3 + $0x308] sm:$0xff]
      %v4103 = vld [vmem:[%s3 + $0x310] sm:$0xff]
      %v4104 = vld [vmem:[%s3 + $0x318] sm:$0xff]
      %v4105 = vld [vmem:[%s3 + $0x320] sm:$0xff]
      %v4106 = vld [vmem:[%s3 + $0x328] sm:$0xff]
      %v4107 = vld [vmem:[%s3 + $0x330] sm:$0xff]
      %v4108 = vld [vmem:[%s3 + $0x338] sm:$0xff]
      %v4109 = vld [vmem:[%s3 + $0x340] sm:$0xff]
      %v4110 = vld [vmem:[%s3 + $0x348] sm:$0xff]
      %v4111 = vld [vmem:[%s3 + $0x350] sm:$0xff]
      %v4112 = vld [vmem:[%s3 + $0x358] sm:$0xff]
      %v4113 = vld [vmem:[%s3 + $0x360] sm:$0xff]
      %v4114 = vld [vmem:[%s3 + $0x368] sm:$0xff]
      %v4115 = vld [vmem:[%s3 + $0x370] sm:$0xff]
      %v4116 = vld [vmem:[%s3 + $0x378] sm:$0xff]
      %v4117 = vld [vmem:[%s3 + $0x380] sm:$0xff]
      %v4118 = vld [vmem:[%s3 + $0x388] sm:$0xff]
      %v4119 = vld [vmem:[%s3 + $0x390] sm:$0xff]
      %v4120 = vld [vmem:[%s3 + $0x398] sm:$0xff]
      %v4121 = vld [vmem:[%s3 + $0x3a0] sm:$0xff]
      %v4122 = vld [vmem:[%s3 + $0x3a8] sm:$0xff]
      %v4123 = vld [vmem:[%s3 + $0x3b0] sm:$0xff]
      %v4124 = vld [vmem:[%s3 + $0x3b8] sm:$0xff]
      %v4125 = vld [vmem:[%s3 + $0x3c0] sm:$0xff]
      %v4126 = vld [vmem:[%s3 + $0x3c8] sm:$0xff]
      %v4127 = vld [vmem:[%s3 + $0x3d0] sm:$0xff]
      %v4128 = vld [vmem:[%s3 + $0x3d8] sm:$0xff]
      %v4129 = vld [vmem:[%s3 + $0x3e0] sm:$0xff]
      %v4130 = vld [vmem:[%s3 + $0x3e8] sm:$0xff]
      %v4131 = vld [vmem:[%s3 + $0x3f0] sm:$0xff]
      %v4132 = vld [vmem:[%s3 + $0x3f8] sm:$0xff]
      %v4133 = vld [vmem:[%s3 + $0x400] sm:$0xff]
      %v4134 = vld [vmem:[%s3 + $0x408] sm:$0xff]
      %v4135 = vld [vmem:[%s3 + $0x410] sm:$0xff]
      %v4136 = vld [vmem:[%s3 + $0x418] sm:$0xff]
      %v4137 = vld [vmem:[%s3 + $0x420] sm:$0xff]
      %v4138 = vld [vmem:[%s3 + $0x428] sm:$0xff]
      %v4139 = vld [vmem:[%s3 + $0x430] sm:$0xff]
      %v4140 = vld [vmem:[%s3 + $0x438] sm:$0xff]
      %v4141 = vld [vmem:[%s3 + $0x440] sm:$0xff]
      %v4142 = vld [vmem:[%s3 + $0x448] sm:$0xff]
      %v4143 = vld [vmem:[%s3 + $0x450] sm:$0xff]
      %v4144 = vld [vmem:[%s3 + $0x458] sm:$0xff]
      %v4145 = vld [vmem:[%s3 + $0x460] sm:$0xff]
      %v4146 = vld [vmem:[%s3 + $0x468] sm:$0xff]
      %v4147 = vld [vmem:[%s3 + $0x470] sm:$0xff]
      %v4148 = vld [vmem:[%s3 + $0x478] sm:$0xff]
      %s4149 = scalar_lea.vmem %s3, 1152
      %v4150 = vld [vmem:[%s4149] sm:$0xff]
      %v4151 = vld [vmem:[%s4149 + $0x8] sm:$0xff]
      %v4152 = vld [vmem:[%s4149 + $0x10] sm:$0xff]
      %v4153 = vld [vmem:[%s4149 + $0x18] sm:$0xff]
      %v4154 = vld [vmem:[%s4149 + $0x20] sm:$0xff]
      %v4155 = vld [vmem:[%s4149 + $0x28] sm:$0xff]
      %v4156 = vld [vmem:[%s4149 + $0x30] sm:$0xff]
      %v4157 = vld [vmem:[%s4149 + $0x38] sm:$0xff]
      %v4158 = vld [vmem:[%s4149 + $0x40] sm:$0xff]
      %v4159 = vld [vmem:[%s4149 + $0x48] sm:$0xff]
      %v4160 = vld [vmem:[%s4149 + $0x50] sm:$0xff]
      %v4161 = vld [vmem:[%s4149 + $0x58] sm:$0xff]
      %v4162 = vld [vmem:[%s4149 + $0x60] sm:$0xff]
      %v4163 = vld [vmem:[%s4149 + $0x68] sm:$0xff]
      %v4164 = vld [vmem:[%s4149 + $0x70] sm:$0xff]
      %v4165 = vld [vmem:[%s4149 + $0x78] sm:$0xff]
      %v4166 = vld [vmem:[%s4149 + $0x80] sm:$0xff]
      %v4167 = vld [vmem:[%s4149 + $0x88] sm:$0xff]
      %v4168 = vld [vmem:[%s4149 + $0x90] sm:$0xff]
      %v4169 = vld [vmem:[%s4149 + $0x98] sm:$0xff]
      %v4170 = vld [vmem:[%s4149 + $0xa0] sm:$0xff]
      %v4171 = vld [vmem:[%s4149 + $0xa8] sm:$0xff]
      %v4172 = vld [vmem:[%s4149 + $0xb0] sm:$0xff]
      %v4173 = vld [vmem:[%s4149 + $0xb8] sm:$0xff]
      %v4174 = vld [vmem:[%s4149 + $0xc0] sm:$0xff]
      %v4175 = vld [vmem:[%s4149 + $0xc8] sm:$0xff]
      %v4176 = vld [vmem:[%s4149 + $0xd0] sm:$0xff]
      %v4177 = vld [vmem:[%s4149 + $0xd8] sm:$0xff]
      %v4178 = vld [vmem:[%s4149 + $0xe0] sm:$0xff]
      %v4179 = vld [vmem:[%s4149 + $0xe8] sm:$0xff]
      %v4180 = vld [vmem:[%s4149 + $0xf0] sm:$0xff]
      %v4181 = vld [vmem:[%s4149 + $0xf8] sm:$0xff]
      %v4182 = vld [vmem:[%s4149 + $0x100] sm:$0xff]
      %v4183 = vld [vmem:[%s4149 + $0x108] sm:$0xff]
      %v4184 = vld [vmem:[%s4149 + $0x110] sm:$0xff]
      %v4185 = vld [vmem:[%s4149 + $0x118] sm:$0xff]
      %v4186 = vld [vmem:[%s4149 + $0x120] sm:$0xff]
      %v4187 = vld [vmem:[%s4149 + $0x128] sm:$0xff]
      %v4188 = vld [vmem:[%s4149 + $0x130] sm:$0xff]
      %v4189 = vld [vmem:[%s4149 + $0x138] sm:$0xff]
      %v4190 = vld [vmem:[%s4149 + $0x140] sm:$0xff]
      %v4191 = vld [vmem:[%s4149 + $0x148] sm:$0xff]
      %v4192 = vld [vmem:[%s4149 + $0x150] sm:$0xff]
      %v4193 = vld [vmem:[%s4149 + $0x158] sm:$0xff]
      %v4194 = vld [vmem:[%s4149 + $0x160] sm:$0xff]
      %v4195 = vld [vmem:[%s4149 + $0x168] sm:$0xff]
      %v4196 = vld [vmem:[%s4149 + $0x170] sm:$0xff]
      %v4197 = vld [vmem:[%s4149 + $0x178] sm:$0xff]
      %v4198 = vld [vmem:[%s4149 + $0x180] sm:$0xff]
      %v4199 = vld [vmem:[%s4149 + $0x188] sm:$0xff]
      %v4200 = vld [vmem:[%s4149 + $0x190] sm:$0xff]
      %v4201 = vld [vmem:[%s4149 + $0x198] sm:$0xff]
      %v4202 = vld [vmem:[%s4149 + $0x1a0] sm:$0xff]
      %v4203 = vld [vmem:[%s4149 + $0x1a8] sm:$0xff]
      %v4204 = vld [vmem:[%s4149 + $0x1b0] sm:$0xff]
      %v4205 = vld [vmem:[%s4149 + $0x1b8] sm:$0xff]
      %v4206 = vld [vmem:[%s4149 + $0x1c0] sm:$0xff]
      %v4207 = vld [vmem:[%s4149 + $0x1c8] sm:$0xff]
      %v4208 = vld [vmem:[%s4149 + $0x1d0] sm:$0xff]
      %v4209 = vld [vmem:[%s4149 + $0x1d8] sm:$0xff]
      %v4210 = vld [vmem:[%s4149 + $0x1e0] sm:$0xff]
      %v4211 = vld [vmem:[%s4149 + $0x1e8] sm:$0xff]
      %v4212 = vld [vmem:[%s4149 + $0x1f0] sm:$0xff]
      %v4213 = vld [vmem:[%s4149 + $0x1f8] sm:$0xff]
      %v4214 = vld [vmem:[%s4149 + $0x200] sm:$0xff]
      %v4215 = vld [vmem:[%s4149 + $0x208] sm:$0xff]
      %v4216 = vld [vmem:[%s4149 + $0x210] sm:$0xff]
      %v4217 = vld [vmem:[%s4149 + $0x218] sm:$0xff]
      %v4218 = vld [vmem:[%s4149 + $0x220] sm:$0xff]
      %v4219 = vld [vmem:[%s4149 + $0x228] sm:$0xff]
      %v4220 = vld [vmem:[%s4149 + $0x230] sm:$0xff]
      %v4221 = vld [vmem:[%s4149 + $0x238] sm:$0xff]
      %v4222 = vld [vmem:[%s4149 + $0x240] sm:$0xff]
      %v4223 = vld [vmem:[%s4149 + $0x248] sm:$0xff]
      %v4224 = vld [vmem:[%s4149 + $0x250] sm:$0xff]
      %v4225 = vld [vmem:[%s4149 + $0x258] sm:$0xff]
      %v4226 = vld [vmem:[%s4149 + $0x260] sm:$0xff]
      %v4227 = vld [vmem:[%s4149 + $0x268] sm:$0xff]
      %v4228 = vld [vmem:[%s4149 + $0x270] sm:$0xff]
      %v4229 = vld [vmem:[%s4149 + $0x278] sm:$0xff]
      %v4230 = vld [vmem:[%s4149 + $0x280] sm:$0xff]
      %v4231 = vld [vmem:[%s4149 + $0x288] sm:$0xff]
      %v4232 = vld [vmem:[%s4149 + $0x290] sm:$0xff]
      %v4233 = vld [vmem:[%s4149 + $0x298] sm:$0xff]
      %v4234 = vld [vmem:[%s4149 + $0x2a0] sm:$0xff]
      %v4235 = vld [vmem:[%s4149 + $0x2a8] sm:$0xff]
      %v4236 = vld [vmem:[%s4149 + $0x2b0] sm:$0xff]
      %v4237 = vld [vmem:[%s4149 + $0x2b8] sm:$0xff]
      %v4238 = vld [vmem:[%s4149 + $0x2c0] sm:$0xff]
      %v4239 = vld [vmem:[%s4149 + $0x2c8] sm:$0xff]
      %v4240 = vld [vmem:[%s4149 + $0x2d0] sm:$0xff]
      %v4241 = vld [vmem:[%s4149 + $0x2d8] sm:$0xff]
      %v4242 = vld [vmem:[%s4149 + $0x2e0] sm:$0xff]
      %v4243 = vld [vmem:[%s4149 + $0x2e8] sm:$0xff]
      %v4244 = vld [vmem:[%s4149 + $0x2f0] sm:$0xff]
      %v4245 = vld [vmem:[%s4149 + $0x2f8] sm:$0xff]
      %v4246 = vld [vmem:[%s4149 + $0x300] sm:$0xff]
      %v4247 = vld [vmem:[%s4149 + $0x308] sm:$0xff]
      %v4248 = vld [vmem:[%s4149 + $0x310] sm:$0xff]
      %v4249 = vld [vmem:[%s4149 + $0x318] sm:$0xff]
      %v4250 = vld [vmem:[%s4149 + $0x320] sm:$0xff]
      %v4251 = vld [vmem:[%s4149 + $0x328] sm:$0xff]
      %v4252 = vld [vmem:[%s4149 + $0x330] sm:$0xff]
      %v4253 = vld [vmem:[%s4149 + $0x338] sm:$0xff]
      %v4254 = vld [vmem:[%s4149 + $0x340] sm:$0xff]
      %v4255 = vld [vmem:[%s4149 + $0x348] sm:$0xff]
      %v4256 = vld [vmem:[%s4149 + $0x350] sm:$0xff]
      %v4257 = vld [vmem:[%s4149 + $0x358] sm:$0xff]
      %v4258 = vld [vmem:[%s4149 + $0x360] sm:$0xff]
      %v4259 = vld [vmem:[%s4149 + $0x368] sm:$0xff]
      %v4260 = vld [vmem:[%s4149 + $0x370] sm:$0xff]
      %v4261 = vld [vmem:[%s4149 + $0x378] sm:$0xff]
      %v4262 = vld [vmem:[%s4149 + $0x380] sm:$0xff]
      %v4263 = vld [vmem:[%s4149 + $0x388] sm:$0xff]
      %v4264 = vld [vmem:[%s4149 + $0x390] sm:$0xff]
      %v4265 = vld [vmem:[%s4149 + $0x398] sm:$0xff]
      %v4266 = vld [vmem:[%s4149 + $0x3a0] sm:$0xff]
      %v4267 = vld [vmem:[%s4149 + $0x3a8] sm:$0xff]
      %v4268 = vld [vmem:[%s4149 + $0x3b0] sm:$0xff]
      %v4269 = vld [vmem:[%s4149 + $0x3b8] sm:$0xff]
      %v4270 = vld [vmem:[%s4149 + $0x3c0] sm:$0xff]
      %v4271 = vld [vmem:[%s4149 + $0x3c8] sm:$0xff]
      %v4272 = vld [vmem:[%s4149 + $0x3d0] sm:$0xff]
      %v4273 = vld [vmem:[%s4149 + $0x3d8] sm:$0xff]
      %v4274 = vld [vmem:[%s4149 + $0x3e0] sm:$0xff]
      %v4275 = vld [vmem:[%s4149 + $0x3e8] sm:$0xff]
      %v4276 = vld [vmem:[%s4149 + $0x3f0] sm:$0xff]
      %v4277 = vld [vmem:[%s4149 + $0x3f8] sm:$0xff]
      %v4278 = vld [vmem:[%s4149 + $0x400] sm:$0xff]
      %v4279 = vld [vmem:[%s4149 + $0x408] sm:$0xff]
      %v4280 = vld [vmem:[%s4149 + $0x410] sm:$0xff]
      %v4281 = vld [vmem:[%s4149 + $0x418] sm:$0xff]
      %v4282 = vld [vmem:[%s4149 + $0x420] sm:$0xff]
      %v4283 = vld [vmem:[%s4149 + $0x428] sm:$0xff]
      %v4284 = vld [vmem:[%s4149 + $0x430] sm:$0xff]
      %v4285 = vld [vmem:[%s4149 + $0x438] sm:$0xff]
      %v4286 = vld [vmem:[%s4149 + $0x440] sm:$0xff]
      %v4287 = vld [vmem:[%s4149 + $0x448] sm:$0xff]
      %v4288 = vld [vmem:[%s4149 + $0x450] sm:$0xff]
      %v4289 = vld [vmem:[%s4149 + $0x458] sm:$0xff]
      %v4290 = vld [vmem:[%s4149 + $0x460] sm:$0xff]
      %v4291 = vld [vmem:[%s4149 + $0x468] sm:$0xff]
      %v4292 = vld [vmem:[%s4149 + $0x470] sm:$0xff]
      %v4293 = vld [vmem:[%s4149 + $0x478] sm:$0xff]
      %4294 = vmatprep.subr.mxu0 %v4151
      %4295 = vmatpush1.msra.mxu0 %v4150
      %4296 = vmatprep.subr.mxu0 %v4154
      %4297 = vmatpush1.msra.mxu0 %v4153
      %4298 = vmatprep.subr.mxu0 %v4157
      %4299 = vmatpush1.msra.mxu0 %v4156
      %4300 = vmatprep.subr.mxu0 %v4160
      %4301 = vmatpush1.msra.mxu0 %v4159
      %4302 = vmatprep.subr.mxu0 %v4163
      %4303 = vmatpush1.msra.mxu0 %v4162
      %4304 = vmatprep.subr.mxu0 %v4166
      %4305 = vmatpush1.msra.mxu0 %v4165
      %4306 = vmatprep.subr.mxu0 %v4169
      %4307 = vmatpush1.msra.mxu0 %v4168
      %4308 = vmatprep.subr.mxu0 %v4172
      %4309 = vmatpush1.msra.mxu0 %v4171
      %4310 = vmatprep.subr.mxu0 %v4175
      %4311 = vmatpush1.msra.mxu0 %v4174
      %4312 = vmatprep.subr.mxu0 %v4178
      %4313 = vmatpush1.msra.mxu0 %v4177
      %4314 = vmatprep.subr.mxu0 %v4181
      %4315 = vmatpush1.msra.mxu0 %v4180
      %4316 = vmatprep.subr.mxu0 %v4184
      %4317 = vmatpush1.msra.mxu0 %v4183
      %4318 = vmatprep.subr.mxu0 %v4187
      %4319 = vmatpush1.msra.mxu0 %v4186
      %4320 = vmatprep.subr.mxu0 %v4190
      %4321 = vmatpush1.msra.mxu0 %v4189
      %4322 = vmatprep.subr.mxu0 %v4193
      %4323 = vmatpush1.msra.mxu0 %v4192
      %4324 = vmatprep.subr.mxu0 %v4196
      %4325 = vmatpush1.msra.mxu0 %v4195
      %4326 = vmatprep.subr.mxu0 %v4199
      %4327 = vmatpush1.msra.mxu0 %v4198
      %4328 = vmatprep.subr.mxu0 %v4202
      %4329 = vmatpush1.msra.mxu0 %v4201
      %4330 = vmatprep.subr.mxu0 %v4205
      %4331 = vmatpush1.msra.mxu0 %v4204
      %4332 = vmatprep.subr.mxu0 %v4208
      %4333 = vmatpush1.msra.mxu0 %v4207
      %4334 = vmatprep.subr.mxu0 %v4211
      %4335 = vmatpush1.msra.mxu0 %v4210
      %4336 = vmatprep.subr.mxu0 %v4214
      %4337 = vmatpush1.msra.mxu0 %v4213
      %4338 = vmatprep.subr.mxu0 %v4217
      %4339 = vmatpush1.msra.mxu0 %v4216
      %4340 = vmatprep.subr.mxu0 %v4220
      %4341 = vmatpush1.msra.mxu0 %v4219
      %4342 = vmatprep.subr.mxu0 %v4223
      %4343 = vmatpush1.msra.mxu0 %v4222
      %4344 = vmatprep.subr.mxu0 %v4226
      %4345 = vmatpush1.msra.mxu0 %v4225
      %4346 = vmatprep.subr.mxu0 %v4229
      %4347 = vmatpush1.msra.mxu0 %v4228
      %4348 = vmatprep.subr.mxu0 %v4232
      %4349 = vmatpush1.msra.mxu0 %v4231
      %4350 = vmatprep.subr.mxu0 %v4235
      %4351 = vmatpush1.msra.mxu0 %v4234
      %4352 = vmatprep.subr.mxu0 %v4238
      %4353 = vmatpush1.msra.mxu0 %v4237
      %4354 = vmatprep.subr.mxu0 %v4241
      %4355 = vmatpush1.msra.mxu0 %v4240
      %4356 = vmatprep.subr.mxu0 %v4244
      %4357 = vmatpush1.msra.mxu0 %v4243
      %4358 = vmatprep.mubr.f32.mxu0 %v3412
      %4359 = vmatmul.mubr.f32.gmra.mrb[0].mxu0 %v3411
      %v4360 = vpop.f32.mrb[0].mxu0
      %v4361 = vadd.f32 0.0, %v4360
      %v4362 = vpop.f32.mrb[0].mxu0
      %v4363 = vadd.f32 0.0, %v4362
      %4364 = vmatprep.mubr.f32.mxu0 %v3415
      %4365 = vmatmul.mubr.f32.gmra.mrb[0].mxu0 %v3414
      %v4366 = vpop.f32.mrb[0].mxu0
      %v4367 = vadd.f32 0.0, %v4366
      %v4368 = vpop.f32.mrb[0].mxu0
      %v4369 = vadd.f32 0.0, %v4368
      %4370 = vmatprep.mubr.f32.mxu0 %v3418
      %4371 = vmatmul.mubr.f32.gmra.mrb[0].mxu0 %v3417
      %v4372 = vpop.f32.mrb[0].mxu0
      %v4373 = vadd.f32 0.0, %v4372
      %v4374 = vpop.f32.mrb[0].mxu0
      %v4375 = vadd.f32 0.0, %v4374
      %4376 = vmatprep.mubr.f32.mxu0 %v3421
      %4377 = vmatmul.mubr.f32.gmra.mrb[0].mxu0 %v3420
      %v4378 = vpop.f32.mrb[0].mxu0
      %v4379 = vadd.f32 0.0, %v4378
      %v4380 = vpop.f32.mrb[0].mxu0
      %v4381 = vadd.f32 0.0, %v4380
      %4382 = vmatprep.mubr.f32.mxu0 %v3424
      %4383 = vmatmul.mubr.f32.gmra.mrb[0].mxu0 %v3423
      %v4384 = vpop.f32.mrb[0].mxu0
      %v4385 = vadd.f32 0.0, %v4384
      %v4386 = vpop.f32.mrb[0].mxu0
      %v4387 = vadd.f32 0.0, %v4386
      %4388 = vmatprep.mubr.f32.mxu0 %v3427
      %4389 = vmatmul.mubr.f32.gmra.mrb[0].mxu0 %v3426
      %v4390 = vpop.f32.mrb[0].mxu0
      %v4391 = vadd.f32 0.0, %v4390
      %v4392 = vpop.f32.mrb[0].mxu0
      %v4393 = vadd.f32 0.0, %v4392
      %4394 = vmatprep.mubr.f32.mxu0 %v3430
      %4395 = vmatmul.mubr.f32.gmra.mrb[0].mxu0 %v3429
      %v4396 = vpop.f32.mrb[0].mxu0
      %v4397 = vadd.f32 0.0, %v4396
      %v4398 = vpop.f32.mrb[0].mxu0
      %v4399 = vadd.f32 0.0, %v4398
      %4400 = vmatprep.mubr.f32.mxu0 %v3433
      %4401 = vmatmul.mubr.f32.gmra.mrb[0].mxu0 %v3432
      %v4402 = vpop.f32.mrb[0].mxu0
      %v4403 = vadd.f32 0.0, %v4402
      %v4404 = vpop.f32.mrb[0].mxu0
      %v4405 = vadd.f32 0.0, %v4404
      %4406 = vmatprep.mubr.f32.mxu0 %v3436
      %4407 = vmatmul.mubr.f32.gmra.mrb[0].mxu0 %v3435
      %v4408 = vpop.f32.mrb[0].mxu0
      %v4409 = vadd.f32 0.0, %v4408
      %v4410 = vpop.f32.mrb[0].mxu0
      %v4411 = vadd.f32 0.0, %v4410
      %4412 = vmatprep.mubr.f32.mxu0 %v3439
      %4413 = vmatmul.mubr.f32.gmra.mrb[0].mxu0 %v3438
      %v4414 = vpop.f32.mrb[0].mxu0
      %v4415 = vadd.f32 0.0, %v4414
      %v4416 = vpop.f32.mrb[0].mxu0
      %v4417 = vadd.f32 0.0, %v4416
      %4418 = vmatprep.mubr.f32.mxu0 %v3442
      %4419 = vmatmul.mubr.f32.gmra.mrb[0].mxu0 %v3441
      %v4420 = vpop.f32.mrb[0].mxu0
      %v4421 = vadd.f32 0.0, %v4420
      %v4422 = vpop.f32.mrb[0].mxu0
      %v4423 = vadd.f32 0.0, %v4422
      %4424 = vmatprep.mubr.f32.mxu0 %v3445
      %4425 = vmatmul.mubr.f32.gmra.mrb[0].mxu0 %v3444
      %v4426 = vpop.f32.mrb[0].mxu0
      %v4427 = vadd.f32 0.0, %v4426
      %v4428 = vpop.f32.mrb[0].mxu0
      %v4429 = vadd.f32 0.0, %v4428
      %4430 = vmatprep.mubr.f32.mxu0 %v3448
      %4431 = vmatmul.mubr.f32.gmra.mrb[0].mxu0 %v3447
      %v4432 = vpop.f32.mrb[0].mxu0
      %v4433 = vadd.f32 0.0, %v4432
      %v4434 = vpop.f32.mrb[0].mxu0
      %v4435 = vadd.f32 0.0, %v4434
      %4436 = vdwg.mxu0
      %4437 = vmatprep.subr.mxu0 %v4247
      %4438 = vmatpush1.msra.mxu0 %v4246
      %4439 = vmatprep.subr.mxu0 %v4250
      %4440 = vmatpush1.msra.mxu0 %v4249
      %4441 = vmatprep.subr.mxu0 %v4253
      %4442 = vmatpush1.msra.mxu0 %v4252
      %4443 = vmatprep.subr.mxu0 %v4256
      %4444 = vmatpush1.msra.mxu0 %v4255
      %4445 = vmatprep.subr.mxu0 %v4259
      %4446 = vmatpush1.msra.mxu0 %v4258
      %4447 = vmatprep.subr.mxu0 %v4262
      %4448 = vmatpush1.msra.mxu0 %v4261
      %4449 = vmatprep.subr.mxu0 %v4265
      %4450 = vmatpush1.msra.mxu0 %v4264
      %4451 = vmatprep.subr.mxu0 %v4268
      %4452 = vmatpush1.msra.mxu0 %v4267
      %4453 = vmatprep.subr.mxu0 %v4271
      %4454 = vmatpush1.msra.mxu0 %v4270
      %4455 = vmatprep.subr.mxu0 %v4274
      %4456 = vmatpush1.msra.mxu0 %v4273
      %4457 = vmatprep.subr.mxu0 %v4277
      %4458 = vmatpush1.msra.mxu0 %v4276
      %4459 = vmatprep.subr.mxu0 %v4280
      %4460 = vmatpush1.msra.mxu0 %v4279
      %4461 = vmatprep.subr.mxu0 %v4283
      %4462 = vmatpush1.msra.mxu0 %v4282
      %4463 = vmatprep.subr.mxu0 %v4286
      %4464 = vmatpush1.msra.mxu0 %v4285
      %4465 = vmatprep.subr.mxu0 %v4289
      %4466 = vmatpush1.msra.mxu0 %v4288
      %4467 = vmatprep.subr.mxu0 %v4292
      %4468 = vmatpush1.msra.mxu0 %v4291
      %4469 = vmatprep.subr.mxu0 0.0
      %4470 = vmatpush1.msra.mxu0 0.0
      %4471 = vmatprep.subr.mxu0 0.0
      %4472 = vmatpush1.msra.mxu0 0.0
      %4473 = vmatprep.subr.mxu0 0.0
      %4474 = vmatpush1.msra.mxu0 0.0
      %4475 = vmatprep.subr.mxu0 0.0
      %4476 = vmatpush1.msra.mxu0 0.0
      %4477 = vmatprep.subr.mxu0 0.0
      %4478 = vmatpush1.msra.mxu0 0.0
      %4479 = vmatprep.subr.mxu0 0.0
      %4480 = vmatpush1.msra.mxu0 0.0
      %4481 = vmatprep.subr.mxu0 0.0
      %4482 = vmatpush1.msra.mxu0 0.0
      %4483 = vmatprep.subr.mxu0 0.0
      %4484 = vmatpush1.msra.mxu0 0.0
      %4485 = vmatprep.subr.mxu0 0.0
      %4486 = vmatpush1.msra.mxu0 0.0
      %4487 = vmatprep.subr.mxu0 0.0
      %4488 = vmatpush1.msra.mxu0 0.0
      %4489 = vmatprep.subr.mxu0 0.0
      %4490 = vmatpush1.msra.mxu0 0.0
      %4491 = vmatprep.subr.mxu0 0.0
      %4492 = vmatpush1.msra.mxu0 0.0
      %4493 = vmatprep.subr.mxu0 0.0
      %4494 = vmatpush1.msra.mxu0 0.0
      %4495 = vmatprep.subr.mxu0 0.0
      %4496 = vmatpush1.msra.mxu0 0.0
      %4497 = vmatprep.subr.mxu0 0.0
      %4498 = vmatpush1.msra.mxu0 0.0
      %4499 = vmatprep.subr.mxu0 0.0
      %4500 = vmatpush1.msra.mxu0 0.0
      %4501 = vmatprep.mubr.f32.mxu0 0.0
      %4502 = vmatmul.mubr.f32.gmra.mrb[0].mxu0 %v3413
      %v4503 = vpop.f32.mrb[0].mxu0
      %v4504 = vadd.f32 %v4361, %v4503
      %v4505 = vpop.f32.mrb[0].mxu0
      %v4506 = vadd.f32 %v4363, %v4505
      %4507 = vmatprep.mubr.f32.mxu0 0.0
      %4508 = vmatmul.mubr.f32.gmra.mrb[0].mxu0 %v3416
      %v4509 = vpop.f32.mrb[0].mxu0
      %v4510 = vadd.f32 %v4367, %v4509
      %v4511 = vpop.f32.mrb[0].mxu0
      %v4512 = vadd.f32 %v4369, %v4511
      %4513 = vmatprep.mubr.f32.mxu0 0.0
      %4514 = vmatmul.mubr.f32.gmra.mrb[0].mxu0 %v3419
      %v4515 = vpop.f32.mrb[0].mxu0
      %v4516 = vadd.f32 %v4373, %v4515
      %v4517 = vpop.f32.mrb[0].mxu0
      %v4518 = vadd.f32 %v4375, %v4517
      %4519 = vmatprep.mubr.f32.mxu0 0.0
      %4520 = vmatmul.mubr.f32.gmra.mrb[0].mxu0 %v3422
      %v4521 = vpop.f32.mrb[0].mxu0
      %v4522 = vadd.f32 %v4379, %v4521
      %v4523 = vpop.f32.mrb[0].mxu0
      %v4524 = vadd.f32 %v4381, %v4523
      %4525 = vmatprep.mubr.f32.mxu0 0.0
      %4526 = vmatmul.mubr.f32.gmra.mrb[0].mxu0 %v3425
      %v4527 = vpop.f32.mrb[0].mxu0
      %v4528 = vadd.f32 %v4385, %v4527
      %v4529 = vpop.f32.mrb[0].mxu0
      %v4530 = vadd.f32 %v4387, %v4529
      %4531 = vmatprep.mubr.f32.mxu0 0.0
      %4532 = vmatmul.mubr.f32.gmra.mrb[0].mxu0 %v3428
      %v4533 = vpop.f32.mrb[0].mxu0
      %v4534 = vadd.f32 %v4391, %v4533
      %v4535 = vpop.f32.mrb[0].mxu0
      %v4536 = vadd.f32 %v4393, %v4535
      %4537 = vmatprep.mubr.f32.mxu0 0.0
      %4538 = vmatmul.mubr.f32.gmra.mrb[0].mxu0 %v3431
      %v4539 = vpop.f32.mrb[0].mxu0
      %v4540 = vadd.f32 %v4397, %v4539
      %v4541 = vpop.f32.mrb[0].mxu0
      %v4542 = vadd.f32 %v4399, %v4541
      %4543 = vmatprep.mubr.f32.mxu0 0.0
      %4544 = vmatmul.mubr.f32.gmra.mrb[0].mxu0 %v3434
      %v4545 = vpop.f32.mrb[0].mxu0
      %v4546 = vadd.f32 %v4403, %v4545
      %v4547 = vpop.f32.mrb[0].mxu0
      %v4548 = vadd.f32 %v4405, %v4547
      %4549 = vmatprep.mubr.f32.mxu0 0.0
      %4550 = vmatmul.mubr.f32.gmra.mrb[0].mxu0 %v3437
      %v4551 = vpop.f32.mrb[0].mxu0
      %v4552 = vadd.f32 %v4409, %v4551
      %v4553 = vpop.f32.mrb[0].mxu0
      %v4554 = vadd.f32 %v4411, %v4553
      %4555 = vmatprep.mubr.f32.mxu0 0.0
      %4556 = vmatmul.mubr.f32.gmra.mrb[0].mxu0 %v3440
      %v4557 = vpop.f32.mrb[0].mxu0
      %v4558 = vadd.f32 %v4415, %v4557
      %v4559 = vpop.f32.mrb[0].mxu0
      %v4560 = vadd.f32 %v4417, %v4559
      %4561 = vmatprep.mubr.f32.mxu0 0.0
      %4562 = vmatmul.mubr.f32.gmra.mrb[0].mxu0 %v3443
      %v4563 = vpop.f32.mrb[0].mxu0
      %v4564 = vadd.f32 %v4421, %v4563
      %v4565 = vpop.f32.mrb[0].mxu0
      %v4566 = vadd.f32 %v4423, %v4565
      %4567 = vmatprep.mubr.f32.mxu0 0.0
      %4568 = vmatmul.mubr.f32.gmra.mrb[0].mxu0 %v3446
      %v4569 = vpop.f32.mrb[0].mxu0
      %v4570 = vadd.f32 %v4427, %v4569
      %v4571 = vpop.f32.mrb[0].mxu0
      %v4572 = vadd.f32 %v4429, %v4571
      %4573 = vmatprep.mubr.f32.mxu0 0.0
      %4574 = vmatmul.mubr.f32.gmra.mrb[0].mxu0 %v3449
      %v4575 = vpop.f32.mrb[0].mxu0
      %v4576 = vadd.f32 %v4433, %v4575
      %v4577 = vpop.f32.mrb[0].mxu0
      %v4578 = vadd.f32 %v4435, %v4577
      %4579 = vdwg.mxu0
      %4580 = vmatprep.subr.mxu0 0.0
      %4581 = vmatpush1.msra.mxu0 %v4152
      %4582 = vmatprep.subr.mxu0 0.0
      %4583 = vmatpush1.msra.mxu0 %v4155
      %4584 = vmatprep.subr.mxu0 0.0
      %4585 = vmatpush1.msra.mxu0 %v4158
      %4586 = vmatprep.subr.mxu0 0.0
      %4587 = vmatpush1.msra.mxu0 %v4161
      %4588 = vmatprep.subr.mxu0 0.0
      %4589 = vmatpush1.msra.mxu0 %v4164
      %4590 = vmatprep.subr.mxu0 0.0
      %4591 = vmatpush1.msra.mxu0 %v4167
      %4592 = vmatprep.subr.mxu0 0.0
      %4593 = vmatpush1.msra.mxu0 %v4170
      %4594 = vmatprep.subr.mxu0 0.0
      %4595 = vmatpush1.msra.mxu0 %v4173
      %4596 = vmatprep.subr.mxu0 0.0
      %4597 = vmatpush1.msra.mxu0 %v4176
      %4598 = vmatprep.subr.mxu0 0.0
      %4599 = vmatpush1.msra.mxu0 %v4179
      %4600 = vmatprep.subr.mxu0 0.0
      %4601 = vmatpush1.msra.mxu0 %v4182
      %4602 = vmatprep.subr.mxu0 0.0
      %4603 = vmatpush1.msra.mxu0 %v4185
      %4604 = vmatprep.subr.mxu0 0.0
      %4605 = vmatpush1.msra.mxu0 %v4188
      %4606 = vmatprep.subr.mxu0 0.0
      %4607 = vmatpush1.msra.mxu0 %v4191
      %4608 = vmatprep.subr.mxu0 0.0
      %4609 = vmatpush1.msra.mxu0 %v4194
      %4610 = vmatprep.subr.mxu0 0.0
      %4611 = vmatpush1.msra.mxu0 %v4197
      %4612 = vmatprep.subr.mxu0 0.0
      %4613 = vmatpush1.msra.mxu0 %v4200
      %4614 = vmatprep.subr.mxu0 0.0
      %4615 = vmatpush1.msra.mxu0 %v4203
      %4616 = vmatprep.subr.mxu0 0.0
      %4617 = vmatpush1.msra.mxu0 %v4206
      %4618 = vmatprep.subr.mxu0 0.0
      %4619 = vmatpush1.msra.mxu0 %v4209
      %4620 = vmatprep.subr.mxu0 0.0
      %4621 = vmatpush1.msra.mxu0 %v4212
      %4622 = vmatprep.subr.mxu0 0.0
      %4623 = vmatpush1.msra.mxu0 %v4215
      %4624 = vmatprep.subr.mxu0 0.0
      %4625 = vmatpush1.msra.mxu0 %v4218
      %4626 = vmatprep.subr.mxu0 0.0
      %4627 = vmatpush1.msra.mxu0 %v4221
      %4628 = vmatprep.subr.mxu0 0.0
      %4629 = vmatpush1.msra.mxu0 %v4224
      %4630 = vmatprep.subr.mxu0 0.0
      %4631 = vmatpush1.msra.mxu0 %v4227
      %4632 = vmatprep.subr.mxu0 0.0
      %4633 = vmatpush1.msra.mxu0 %v4230
      %4634 = vmatprep.subr.mxu0 0.0
      %4635 = vmatpush1.msra.mxu0 %v4233
      %4636 = vmatprep.subr.mxu0 0.0
      %4637 = vmatpush1.msra.mxu0 %v4236
      %4638 = vmatprep.subr.mxu0 0.0
      %4639 = vmatpush1.msra.mxu0 %v4239
      %4640 = vmatprep.subr.mxu0 0.0
      %4641 = vmatpush1.msra.mxu0 %v4242
      %4642 = vmatprep.subr.mxu0 0.0
      %4643 = vmatpush1.msra.mxu0 %v4245
      %4644 = vmatprep.mubr.f32.mxu0 %v3412
      %4645 = vmatmul.mubr.f32.gmra.mrb[0].mxu0 %v3411
      %v4646 = vpop.f32.mrb[0].mxu0
      %v4647 = vadd.f32 0.0, %v4646
      %v4648 = vpop.f32.mrb[0].mxu0
      %4649 = vmatprep.mubr.f32.mxu0 %v3415
      %4650 = vmatmul.mubr.f32.gmra.mrb[0].mxu0 %v3414
      %v4651 = vpop.f32.mrb[0].mxu0
      %v4652 = vadd.f32 0.0, %v4651
      %v4653 = vpop.f32.mrb[0].mxu0
      %4654 = vmatprep.mubr.f32.mxu0 %v3418
      %4655 = vmatmul.mubr.f32.gmra.mrb[0].mxu0 %v3417
      %v4656 = vpop.f32.mrb[0].mxu0
      %v4657 = vadd.f32 0.0, %v4656
      %v4658 = vpop.f32.mrb[0].mxu0
      %4659 = vmatprep.mubr.f32.mxu0 %v3421
      %4660 = vmatmul.mubr.f32.gmra.mrb[0].mxu0 %v3420
      %v4661 = vpop.f32.mrb[0].mxu0
      %v4662 = vadd.f32 0.0, %v4661
      %v4663 = vpop.f32.mrb[0].mxu0
      %4664 = vmatprep.mubr.f32.mxu0 %v3424
      %4665 = vmatmul.mubr.f32.gmra.mrb[0].mxu0 %v3423
      %v4666 = vpop.f32.mrb[0].mxu0
      %v4667 = vadd.f32 0.0, %v4666
      %v4668 = vpop.f32.mrb[0].mxu0
      %4669 = vmatprep.mubr.f32.mxu0 %v3427
      %4670 = vmatmul.mubr.f32.gmra.mrb[0].mxu0 %v3426
      %v4671 = vpop.f32.mrb[0].mxu0
      %v4672 = vadd.f32 0.0, %v4671
      %v4673 = vpop.f32.mrb[0].mxu0
      %4674 = vmatprep.mubr.f32.mxu0 %v3430
      %4675 = vmatmul.mubr.f32.gmra.mrb[0].mxu0 %v3429
      %v4676 = vpop.f32.mrb[0].mxu0
      %v4677 = vadd.f32 0.0, %v4676
      %v4678 = vpop.f32.mrb[0].mxu0
      %4679 = vmatprep.mubr.f32.mxu0 %v3433
      %4680 = vmatmul.mubr.f32.gmra.mrb[0].mxu0 %v3432
      %v4681 = vpop.f32.mrb[0].mxu0
      %v4682 = vadd.f32 0.0, %v4681
      %v4683 = vpop.f32.mrb[0].mxu0
      %4684 = vmatprep.mubr.f32.mxu0 %v3436
      %4685 = vmatmul.mubr.f32.gmra.mrb[0].mxu0 %v3435
      %v4686 = vpop.f32.mrb[0].mxu0
      %v4687 = vadd.f32 0.0, %v4686
      %v4688 = vpop.f32.mrb[0].mxu0
      %4689 = vmatprep.mubr.f32.mxu0 %v3439
      %4690 = vmatmul.mubr.f32.gmra.mrb[0].mxu0 %v3438
      %v4691 = vpop.f32.mrb[0].mxu0
      %v4692 = vadd.f32 0.0, %v4691
      %v4693 = vpop.f32.mrb[0].mxu0
      %4694 = vmatprep.mubr.f32.mxu0 %v3442
      %4695 = vmatmul.mubr.f32.gmra.mrb[0].mxu0 %v3441
      %v4696 = vpop.f32.mrb[0].mxu0
      %v4697 = vadd.f32 0.0, %v4696
      %v4698 = vpop.f32.mrb[0].mxu0
      %4699 = vmatprep.mubr.f32.mxu0 %v3445
      %4700 = vmatmul.mubr.f32.gmra.mrb[0].mxu0 %v3444
      %v4701 = vpop.f32.mrb[0].mxu0
      %v4702 = vadd.f32 0.0, %v4701
      %v4703 = vpop.f32.mrb[0].mxu0
      %4704 = vmatprep.mubr.f32.mxu0 %v3448
      %4705 = vmatmul.mubr.f32.gmra.mrb[0].mxu0 %v3447
      %v4706 = vpop.f32.mrb[0].mxu0
      %v4707 = vadd.f32 0.0, %v4706
      %v4708 = vpop.f32.mrb[0].mxu0
      %4709 = vdwg.mxu0
      %4710 = vmatprep.subr.mxu0 0.0
      %4711 = vmatpush1.msra.mxu0 %v4248
      %4712 = vmatprep.subr.mxu0 0.0
      %4713 = vmatpush1.msra.mxu0 %v4251
      %4714 = vmatprep.subr.mxu0 0.0
      %4715 = vmatpush1.msra.mxu0 %v4254
      %4716 = vmatprep.subr.mxu0 0.0
      %4717 = vmatpush1.msra.mxu0 %v4257
      %4718 = vmatprep.subr.mxu0 0.0
      %4719 = vmatpush1.msra.mxu0 %v4260
      %4720 = vmatprep.subr.mxu0 0.0
      %4721 = vmatpush1.msra.mxu0 %v4263
      %4722 = vmatprep.subr.mxu0 0.0
      %4723 = vmatpush1.msra.mxu0 %v4266
      %4724 = vmatprep.subr.mxu0 0.0
      %4725 = vmatpush1.msra.mxu0 %v4269
      %4726 = vmatprep.subr.mxu0 0.0
      %4727 = vmatpush1.msra.mxu0 %v4272
      %4728 = vmatprep.subr.mxu0 0.0
      %4729 = vmatpush1.msra.mxu0 %v4275
      %4730 = vmatprep.subr.mxu0 0.0
      %4731 = vmatpush1.msra.mxu0 %v4278
      %4732 = vmatprep.subr.mxu0 0.0
      %4733 = vmatpush1.msra.mxu0 %v4281
      %4734 = vmatprep.subr.mxu0 0.0
      %4735 = vmatpush1.msra.mxu0 %v4284
      %4736 = vmatprep.subr.mxu0 0.0
      %4737 = vmatpush1.msra.mxu0 %v4287
      %4738 = vmatprep.subr.mxu0 0.0
      %4739 = vmatpush1.msra.mxu0 %v4290
      %4740 = vmatprep.subr.mxu0 0.0
      %4741 = vmatpush1.msra.mxu0 %v4293
      %4742 = vmatprep.subr.mxu0 0.0
      %4743 = vmatpush1.msra.mxu0 0.0
      %4744 = vmatprep.subr.mxu0 0.0
      %4745 = vmatpush1.msra.mxu0 0.0
      %4746 = vmatprep.subr.mxu0 0.0
      %4747 = vmatpush1.msra.mxu0 0.0
      %4748 = vmatprep.subr.mxu0 0.0
      %4749 = vmatpush1.msra.mxu0 0.0
      %4750 = vmatprep.subr.mxu0 0.0
      %4751 = vmatpush1.msra.mxu0 0.0
      %4752 = vmatprep.subr.mxu0 0.0
      %4753 = vmatpush1.msra.mxu0 0.0
      %4754 = vmatprep.subr.mxu0 0.0
      %4755 = vmatpush1.msra.mxu0 0.0
      %4756 = vmatprep.subr.mxu0 0.0
      %4757 = vmatpush1.msra.mxu0 0.0
      %4758 = vmatprep.subr.mxu0 0.0
      %4759 = vmatpush1.msra.mxu0 0.0
      %4760 = vmatprep.subr.mxu0 0.0
      %4761 = vmatpush1.msra.mxu0 0.0
      %4762 = vmatprep.subr.mxu0 0.0
      %4763 = vmatpush1.msra.mxu0 0.0
      %4764 = vmatprep.subr.mxu0 0.0
      %4765 = vmatpush1.msra.mxu0 0.0
      %4766 = vmatprep.subr.mxu0 0.0
      %4767 = vmatpush1.msra.mxu0 0.0
      %4768 = vmatprep.subr.mxu0 0.0
      %4769 = vmatpush1.msra.mxu0 0.0
      %4770 = vmatprep.subr.mxu0 0.0
      %4771 = vmatpush1.msra.mxu0 0.0
      %4772 = vmatprep.subr.mxu0 0.0
      %4773 = vmatpush1.msra.mxu0 0.0
      %4774 = vmatprep.mubr.f32.mxu0 0.0
      %4775 = vmatmul.mubr.f32.gmra.mrb[0].mxu0 %v3413
      %v4776 = vpop.f32.mrb[0].mxu0
      %v4777 = vadd.f32 %v4647, %v4776
      %v4778 = vpop.f32.mrb[0].mxu0
      %4779 = vmatprep.mubr.f32.mxu0 0.0
      %4780 = vmatmul.mubr.f32.gmra.mrb[0].mxu0 %v3416
      %v4781 = vpop.f32.mrb[0].mxu0
      %v4782 = vadd.f32 %v4652, %v4781
      %v4783 = vpop.f32.mrb[0].mxu0
      %4784 = vmatprep.mubr.f32.mxu0 0.0
      %4785 = vmatmul.mubr.f32.gmra.mrb[0].mxu0 %v3419
      %v4786 = vpop.f32.mrb[0].mxu0
      %v4787 = vadd.f32 %v4657, %v4786
      %v4788 = vpop.f32.mrb[0].mxu0
      %4789 = vmatprep.mubr.f32.mxu0 0.0
      %4790 = vmatmul.mubr.f32.gmra.mrb[0].mxu0 %v3422
      %v4791 = vpop.f32.mrb[0].mxu0
      %v4792 = vadd.f32 %v4662, %v4791
      %v4793 = vpop.f32.mrb[0].mxu0
      %4794 = vmatprep.mubr.f32.mxu0 0.0
      %4795 = vmatmul.mubr.f32.gmra.mrb[0].mxu0 %v3425
      %v4796 = vpop.f32.mrb[0].mxu0
      %v4797 = vadd.f32 %v4667, %v4796
      %v4798 = vpop.f32.mrb[0].mxu0
      %4799 = vmatprep.mubr.f32.mxu0 0.0
      %4800 = vmatmul.mubr.f32.gmra.mrb[0].mxu0 %v3428
      %v4801 = vpop.f32.mrb[0].mxu0
      %v4802 = vadd.f32 %v4672, %v4801
      %v4803 = vpop.f32.mrb[0].mxu0
      %4804 = vmatprep.mubr.f32.mxu0 0.0
      %4805 = vmatmul.mubr.f32.gmra.mrb[0].mxu0 %v3431
      %v4806 = vpop.f32.mrb[0].mxu0
      %v4807 = vadd.f32 %v4677, %v4806
      %v4808 = vpop.f32.mrb[0].mxu0
      %4809 = vmatprep.mubr.f32.mxu0 0.0
      %4810 = vmatmul.mubr.f32.gmra.mrb[0].mxu0 %v3434
      %v4811 = vpop.f32.mrb[0].mxu0
      %v4812 = vadd.f32 %v4682, %v4811
      %v4813 = vpop.f32.mrb[0].mxu0
      %4814 = vmatprep.mubr.f32.mxu0 0.0
      %4815 = vmatmul.mubr.f32.gmra.mrb[0].mxu0 %v3437
      %v4816 = vpop.f32.mrb[0].mxu0
      %v4817 = vadd.f32 %v4687, %v4816
      %v4818 = vpop.f32.mrb[0].mxu0
      %4819 = vmatprep.mubr.f32.mxu0 0.0
      %4820 = vmatmul.mubr.f32.gmra.mrb[0].mxu0 %v3440
      %v4821 = vpop.f32.mrb[0].mxu0
      %v4822 = vadd.f32 %v4692, %v4821
      %v4823 = vpop.f32.mrb[0].mxu0
      %4824 = vmatprep.mubr.f32.mxu0 0.0
      %4825 = vmatmul.mubr.f32.gmra.mrb[0].mxu0 %v3443
      %v4826 = vpop.f32.mrb[0].mxu0
      %v4827 = vadd.f32 %v4697, %v4826
      %v4828 = vpop.f32.mrb[0].mxu0
      %4829 = vmatprep.mubr.f32.mxu0 0.0
      %4830 = vmatmul.mubr.f32.gmra.mrb[0].mxu0 %v3446
      %v4831 = vpop.f32.mrb[0].mxu0
      %v4832 = vadd.f32 %v4702, %v4831
      %v4833 = vpop.f32.mrb[0].mxu0
      %4834 = vmatprep.mubr.f32.mxu0 0.0
      %4835 = vmatmul.mubr.f32.gmra.mrb[0].mxu0 %v3449
      %v4836 = vpop.f32.mrb[0].mxu0
      %v4837 = vadd.f32 %v4707, %v4836
      %v4838 = vpop.f32.mrb[0].mxu0
      %4839 = vdwg.mxu0
      %4840 = vmatprep.subr.mxu0 %v4006
      %4841 = vmatpush1.msra.mxu0 %v4005
      %4842 = vmatprep.subr.mxu0 %v4009
      %4843 = vmatpush1.msra.mxu0 %v4008
      %4844 = vmatprep.subr.mxu0 %v4012
      %4845 = vmatpush1.msra.mxu0 %v4011
      %4846 = vmatprep.subr.mxu0 %v4015
      %4847 = vmatpush1.msra.mxu0 %v4014
      %4848 = vmatprep.subr.mxu0 %v4018
      %4849 = vmatpush1.msra.mxu0 %v4017
      %4850 = vmatprep.subr.mxu0 %v4021
      %4851 = vmatpush1.msra.mxu0 %v4020
      %4852 = vmatprep.subr.mxu0 %v4024
      %4853 = vmatpush1.msra.mxu0 %v4023
      %4854 = vmatprep.subr.mxu0 %v4027
      %4855 = vmatpush1.msra.mxu0 %v4026
      %4856 = vmatprep.subr.mxu0 %v4030
      %4857 = vmatpush1.msra.mxu0 %v4029
      %4858 = vmatprep.subr.mxu0 %v4033
      %4859 = vmatpush1.msra.mxu0 %v4032
      %4860 = vmatprep.subr.mxu0 %v4036
      %4861 = vmatpush1.msra.mxu0 %v4035
      %4862 = vmatprep.subr.mxu0 %v4039
      %4863 = vmatpush1.msra.mxu0 %v4038
      %4864 = vmatprep.subr.mxu0 %v4042
      %4865 = vmatpush1.msra.mxu0 %v4041
      %4866 = vmatprep.subr.mxu0 %v4045
      %4867 = vmatpush1.msra.mxu0 %v4044
      %4868 = vmatprep.subr.mxu0 %v4048
      %4869 = vmatpush1.msra.mxu0 %v4047
      %4870 = vmatprep.subr.mxu0 %v4051
      %4871 = vmatpush1.msra.mxu0 %v4050
      %4872 = vmatprep.subr.mxu0 %v4054
      %4873 = vmatpush1.msra.mxu0 %v4053
      %4874 = vmatprep.subr.mxu0 %v4057
      %4875 = vmatpush1.msra.mxu0 %v4056
      %4876 = vmatprep.subr.mxu0 %v4060
      %4877 = vmatpush1.msra.mxu0 %v4059
      %4878 = vmatprep.subr.mxu0 %v4063
      %4879 = vmatpush1.msra.mxu0 %v4062
      %4880 = vmatprep.subr.mxu0 %v4066
      %4881 = vmatpush1.msra.mxu0 %v4065
      %4882 = vmatprep.subr.mxu0 %v4069
      %4883 = vmatpush1.msra.mxu0 %v4068
      %4884 = vmatprep.subr.mxu0 %v4072
      %4885 = vmatpush1.msra.mxu0 %v4071
      %4886 = vmatprep.subr.mxu0 %v4075
      %4887 = vmatpush1.msra.mxu0 %v4074
      %4888 = vmatprep.subr.mxu0 %v4078
      %4889 = vmatpush1.msra.mxu0 %v4077
      %4890 = vmatprep.subr.mxu0 %v4081
      %4891 = vmatpush1.msra.mxu0 %v4080
      %4892 = vmatprep.subr.mxu0 %v4084
      %4893 = vmatpush1.msra.mxu0 %v4083
      %4894 = vmatprep.subr.mxu0 %v4087
      %4895 = vmatpush1.msra.mxu0 %v4086
      %4896 = vmatprep.subr.mxu0 %v4090
      %4897 = vmatpush1.msra.mxu0 %v4089
      %4898 = vmatprep.subr.mxu0 %v4093
      %4899 = vmatpush1.msra.mxu0 %v4092
      %4900 = vmatprep.subr.mxu0 %v4096
      %4901 = vmatpush1.msra.mxu0 %v4095
      %4902 = vmatprep.subr.mxu0 %v4099
      %4903 = vmatpush1.msra.mxu0 %v4098
      %4904 = vmatprep.mubr.f32.mxu0 %v3528
      %4905 = vmatmul.mubr.f32.gmra.mrb[0].mxu0 %v3526
      %v4906 = vpop.f32.mrb[0].mxu0
      %v4907 = vadd.f32 %v4504, %v4906
      %v4908 = vpop.f32.mrb[0].mxu0
      %v4909 = vadd.f32 %v4506, %v4908
      %4910 = vmatprep.mubr.f32.mxu0 %v3534
      %4911 = vmatmul.mubr.f32.gmra.mrb[0].mxu0 %v3532
      %v4912 = vpop.f32.mrb[0].mxu0
      %v4913 = vadd.f32 %v4510, %v4912
      %v4914 = vpop.f32.mrb[0].mxu0
      %v4915 = vadd.f32 %v4512, %v4914
      %4916 = vmatprep.mubr.f32.mxu0 %v3540
      %4917 = vmatmul.mubr.f32.gmra.mrb[0].mxu0 %v3538
      %v4918 = vpop.f32.mrb[0].mxu0
      %v4919 = vadd.f32 %v4516, %v4918
      %v4920 = vpop.f32.mrb[0].mxu0
      %v4921 = vadd.f32 %v4518, %v4920
      %4922 = vmatprep.mubr.f32.mxu0 %v3546
      %4923 = vmatmul.mubr.f32.gmra.mrb[0].mxu0 %v3544
      %v4924 = vpop.f32.mrb[0].mxu0
      %v4925 = vadd.f32 %v4522, %v4924
      %v4926 = vpop.f32.mrb[0].mxu0
      %v4927 = vadd.f32 %v4524, %v4926
      %4928 = vmatprep.mubr.f32.mxu0 %v3552
      %4929 = vmatmul.mubr.f32.gmra.mrb[0].mxu0 %v3550
      %v4930 = vpop.f32.mrb[0].mxu0
      %v4931 = vadd.f32 %v4528, %v4930
      %v4932 = vpop.f32.mrb[0].mxu0
      %v4933 = vadd.f32 %v4530, %v4932
      %4934 = vmatprep.mubr.f32.mxu0 %v3558
      %4935 = vmatmul.mubr.f32.gmra.mrb[0].mxu0 %v3556
      %v4936 = vpop.f32.mrb[0].mxu0
      %v4937 = vadd.f32 %v4534, %v4936
      %v4938 = vpop.f32.mrb[0].mxu0
      %v4939 = vadd.f32 %v4536, %v4938
      %4940 = vmatprep.mubr.f32.mxu0 %v3564
      %4941 = vmatmul.mubr.f32.gmra.mrb[0].mxu0 %v3562
      %v4942 = vpop.f32.mrb[0].mxu0
      %v4943 = vadd.f32 %v4540, %v4942
      %v4944 = vpop.f32.mrb[0].mxu0
      %v4945 = vadd.f32 %v4542, %v4944
      %4946 = vmatprep.mubr.f32.mxu0 %v3570
      %4947 = vmatmul.mubr.f32.gmra.mrb[0].mxu0 %v3568
      %v4948 = vpop.f32.mrb[0].mxu0
      %v4949 = vadd.f32 %v4546, %v4948
      %v4950 = vpop.f32.mrb[0].mxu0
      %v4951 = vadd.f32 %v4548, %v4950
      %4952 = vmatprep.mubr.f32.mxu0 %v3576
      %4953 = vmatmul.mubr.f32.gmra.mrb[0].mxu0 %v3574
      %v4954 = vpop.f32.mrb[0].mxu0
      %v4955 = vadd.f32 %v4552, %v4954
      %v4956 = vpop.f32.mrb[0].mxu0
      %v4957 = vadd.f32 %v4554, %v4956
      %4958 = vmatprep.mubr.f32.mxu0 %v3582
      %4959 = vmatmul.mubr.f32.gmra.mrb[0].mxu0 %v3580
      %v4960 = vpop.f32.mrb[0].mxu0
      %v4961 = vadd.f32 %v4558, %v4960
      %v4962 = vpop.f32.mrb[0].mxu0
      %v4963 = vadd.f32 %v4560, %v4962
      %4964 = vmatprep.mubr.f32.mxu0 %v3588
      %4965 = vmatmul.mubr.f32.gmra.mrb[0].mxu0 %v3586
      %v4966 = vpop.f32.mrb[0].mxu0
      %v4967 = vadd.f32 %v4564, %v4966
      %v4968 = vpop.f32.mrb[0].mxu0
      %v4969 = vadd.f32 %v4566, %v4968
      %4970 = vmatprep.mubr.f32.mxu0 %v3594
      %4971 = vmatmul.mubr.f32.gmra.mrb[0].mxu0 %v3592
      %v4972 = vpop.f32.mrb[0].mxu0
      %v4973 = vadd.f32 %v4570, %v4972
      %v4974 = vpop.f32.mrb[0].mxu0
      %v4975 = vadd.f32 %v4572, %v4974
      %4976 = vmatprep.mubr.f32.mxu0 %v3600
      %4977 = vmatmul.mubr.f32.gmra.mrb[0].mxu0 %v3598
      %v4978 = vpop.f32.mrb[0].mxu0
      %v4979 = vadd.f32 %v4576, %v4978
      %v4980 = vpop.f32.mrb[0].mxu0
      %v4981 = vadd.f32 %v4578, %v4980
      %4982 = vdwg.mxu0
      %4983 = vmatprep.subr.mxu0 %v4102
      %4984 = vmatpush1.msra.mxu0 %v4101
      %4985 = vmatprep.subr.mxu0 %v4105
      %4986 = vmatpush1.msra.mxu0 %v4104
      %4987 = vmatprep.subr.mxu0 %v4108
      %4988 = vmatpush1.msra.mxu0 %v4107
      %4989 = vmatprep.subr.mxu0 %v4111
      %4990 = vmatpush1.msra.mxu0 %v4110
      %4991 = vmatprep.subr.mxu0 %v4114
      %4992 = vmatpush1.msra.mxu0 %v4113
      %4993 = vmatprep.subr.mxu0 %v4117
      %4994 = vmatpush1.msra.mxu0 %v4116
      %4995 = vmatprep.subr.mxu0 %v4120
      %4996 = vmatpush1.msra.mxu0 %v4119
      %4997 = vmatprep.subr.mxu0 %v4123
      %4998 = vmatpush1.msra.mxu0 %v4122
      %4999 = vmatprep.subr.mxu0 %v4126
      %5000 = vmatpush1.msra.mxu0 %v4125
      %5001 = vmatprep.subr.mxu0 %v4129
      %5002 = vmatpush1.msra.mxu0 %v4128
      %5003 = vmatprep.subr.mxu0 %v4132
      %5004 = vmatpush1.msra.mxu0 %v4131
      %5005 = vmatprep.subr.mxu0 %v4135
      %5006 = vmatpush1.msra.mxu0 %v4134
      %5007 = vmatprep.subr.mxu0 %v4138
      %5008 = vmatpush1.msra.mxu0 %v4137
      %5009 = vmatprep.subr.mxu0 %v4141
      %5010 = vmatpush1.msra.mxu0 %v4140
      %5011 = vmatprep.subr.mxu0 %v4144
      %5012 = vmatpush1.msra.mxu0 %v4143
      %5013 = vmatprep.subr.mxu0 %v4147
      %5014 = vmatpush1.msra.mxu0 %v4146
      %5015 = vmatprep.subr.mxu0 0.0
      %5016 = vmatpush1.msra.mxu0 0.0
      %5017 = vmatprep.subr.mxu0 0.0
      %5018 = vmatpush1.msra.mxu0 0.0
      %5019 = vmatprep.subr.mxu0 0.0
      %5020 = vmatpush1.msra.mxu0 0.0
      %5021 = vmatprep.subr.mxu0 0.0
      %5022 = vmatpush1.msra.mxu0 0.0
      %5023 = vmatprep.subr.mxu0 0.0
      %5024 = vmatpush1.msra.mxu0 0.0
      %5025 = vmatprep.subr.mxu0 0.0
      %5026 = vmatpush1.msra.mxu0 0.0
      %5027 = vmatprep.subr.mxu0 0.0
      %5028 = vmatpush1.msra.mxu0 0.0
      %5029 = vmatprep.subr.mxu0 0.0
      %5030 = vmatpush1.msra.mxu0 0.0
      %5031 = vmatprep.subr.mxu0 0.0
      %5032 = vmatpush1.msra.mxu0 0.0
      %5033 = vmatprep.subr.mxu0 0.0
      %5034 = vmatpush1.msra.mxu0 0.0
      %5035 = vmatprep.subr.mxu0 0.0
      %5036 = vmatpush1.msra.mxu0 0.0
      %5037 = vmatprep.subr.mxu0 0.0
      %5038 = vmatpush1.msra.mxu0 0.0
      %5039 = vmatprep.subr.mxu0 0.0
      %5040 = vmatpush1.msra.mxu0 0.0
      %5041 = vmatprep.subr.mxu0 0.0
      %5042 = vmatpush1.msra.mxu0 0.0
      %5043 = vmatprep.subr.mxu0 0.0
      %5044 = vmatpush1.msra.mxu0 0.0
      %5045 = vmatprep.subr.mxu0 0.0
      %5046 = vmatpush1.msra.mxu0 0.0
      %5047 = vmatprep.mubr.f32.mxu0 0.0
      %5048 = vmatmul.mubr.f32.gmra.mrb[0].mxu0 %v3669
      %v5049 = vpop.f32.mrb[0].mxu0
      %v5050 = vadd.f32 %v4907, %v5049
      %v5051 = vpop.f32.mrb[0].mxu0
      %v5052 = vadd.f32 %v4909, %v5051
      %5053 = vmatprep.mubr.f32.mxu0 0.0
      %5054 = vmatmul.mubr.f32.gmra.mrb[0].mxu0 %v3674
      %v5055 = vpop.f32.mrb[0].mxu0
      %v5056 = vadd.f32 %v4913, %v5055
      %v5057 = vpop.f32.mrb[0].mxu0
      %v5058 = vadd.f32 %v4915, %v5057
      %5059 = vmatprep.mubr.f32.mxu0 0.0
      %5060 = vmatmul.mubr.f32.gmra.mrb[0].mxu0 %v3679
      %v5061 = vpop.f32.mrb[0].mxu0
      %v5062 = vadd.f32 %v4919, %v5061
      %v5063 = vpop.f32.mrb[0].mxu0
      %v5064 = vadd.f32 %v4921, %v5063
      %5065 = vmatprep.mubr.f32.mxu0 0.0
      %5066 = vmatmul.mubr.f32.gmra.mrb[0].mxu0 %v3684
      %v5067 = vpop.f32.mrb[0].mxu0
      %v5068 = vadd.f32 %v4925, %v5067
      %v5069 = vpop.f32.mrb[0].mxu0
      %v5070 = vadd.f32 %v4927, %v5069
      %5071 = vmatprep.mubr.f32.mxu0 0.0
      %5072 = vmatmul.mubr.f32.gmra.mrb[0].mxu0 %v3689
      %v5073 = vpop.f32.mrb[0].mxu0
      %v5074 = vadd.f32 %v4931, %v5073
      %v5075 = vpop.f32.mrb[0].mxu0
      %v5076 = vadd.f32 %v4933, %v5075
      %5077 = vmatprep.mubr.f32.mxu0 0.0
      %5078 = vmatmul.mubr.f32.gmra.mrb[0].mxu0 %v3694
      %v5079 = vpop.f32.mrb[0].mxu0
      %v5080 = vadd.f32 %v4937, %v5079
      %v5081 = vpop.f32.mrb[0].mxu0
      %v5082 = vadd.f32 %v4939, %v5081
      %5083 = vmatprep.mubr.f32.mxu0 0.0
      %5084 = vmatmul.mubr.f32.gmra.mrb[0].mxu0 %v3699
      %v5085 = vpop.f32.mrb[0].mxu0
      %v5086 = vadd.f32 %v4943, %v5085
      %v5087 = vpop.f32.mrb[0].mxu0
      %v5088 = vadd.f32 %v4945, %v5087
      %5089 = vmatprep.mubr.f32.mxu0 0.0
      %5090 = vmatmul.mubr.f32.gmra.mrb[0].mxu0 %v3704
      %v5091 = vpop.f32.mrb[0].mxu0
      %v5092 = vadd.f32 %v4949, %v5091
      %v5093 = vpop.f32.mrb[0].mxu0
      %v5094 = vadd.f32 %v4951, %v5093
      %5095 = vmatprep.mubr.f32.mxu0 0.0
      %5096 = vmatmul.mubr.f32.gmra.mrb[0].mxu0 %v3709
      %v5097 = vpop.f32.mrb[0].mxu0
      %v5098 = vadd.f32 %v4955, %v5097
      %v5099 = vpop.f32.mrb[0].mxu0
      %v5100 = vadd.f32 %v4957, %v5099
      %5101 = vmatprep.mubr.f32.mxu0 0.0
      %5102 = vmatmul.mubr.f32.gmra.mrb[0].mxu0 %v3714
      %v5103 = vpop.f32.mrb[0].mxu0
      %v5104 = vadd.f32 %v4961, %v5103
      %v5105 = vpop.f32.mrb[0].mxu0
      %v5106 = vadd.f32 %v4963, %v5105
      %5107 = vmatprep.mubr.f32.mxu0 0.0
      %5108 = vmatmul.mubr.f32.gmra.mrb[0].mxu0 %v3719
      %v5109 = vpop.f32.mrb[0].mxu0
      %v5110 = vadd.f32 %v4967, %v5109
      %v5111 = vpop.f32.mrb[0].mxu0
      %v5112 = vadd.f32 %v4969, %v5111
      %5113 = vmatprep.mubr.f32.mxu0 0.0
      %5114 = vmatmul.mubr.f32.gmra.mrb[0].mxu0 %v3724
      %v5115 = vpop.f32.mrb[0].mxu0
      %v5116 = vadd.f32 %v4973, %v5115
      %v5117 = vpop.f32.mrb[0].mxu0
      %v5118 = vadd.f32 %v4975, %v5117
      %5119 = vmatprep.mubr.f32.mxu0 0.0
      %5120 = vmatmul.mubr.f32.gmra.mrb[0].mxu0 %v3729
      %v5121 = vpop.f32.mrb[0].mxu0
      %v5122 = vadd.f32 %v4979, %v5121
      %v5123 = vpop.f32.mrb[0].mxu0
      %v5124 = vadd.f32 %v4981, %v5123
      %5125 = vdwg.mxu0
      %5126 = vmatprep.subr.mxu0 0.0
      %5127 = vmatpush1.msra.mxu0 %v4007
      %5128 = vmatprep.subr.mxu0 0.0
      %5129 = vmatpush1.msra.mxu0 %v4010
      %5130 = vmatprep.subr.mxu0 0.0
      %5131 = vmatpush1.msra.mxu0 %v4013
      %5132 = vmatprep.subr.mxu0 0.0
      %5133 = vmatpush1.msra.mxu0 %v4016
      %5134 = vmatprep.subr.mxu0 0.0
      %5135 = vmatpush1.msra.mxu0 %v4019
      %5136 = vmatprep.subr.mxu0 0.0
      %5137 = vmatpush1.msra.mxu0 %v4022
      %5138 = vmatprep.subr.mxu0 0.0
      %5139 = vmatpush1.msra.mxu0 %v4025
      %5140 = vmatprep.subr.mxu0 0.0
      %5141 = vmatpush1.msra.mxu0 %v4028
      %5142 = vmatprep.subr.mxu0 0.0
      %5143 = vmatpush1.msra.mxu0 %v4031
      %5144 = vmatprep.subr.mxu0 0.0
      %5145 = vmatpush1.msra.mxu0 %v4034
      %5146 = vmatprep.subr.mxu0 0.0
      %5147 = vmatpush1.msra.mxu0 %v4037
      %5148 = vmatprep.subr.mxu0 0.0
      %5149 = vmatpush1.msra.mxu0 %v4040
      %5150 = vmatprep.subr.mxu0 0.0
      %5151 = vmatpush1.msra.mxu0 %v4043
      %5152 = vmatprep.subr.mxu0 0.0
      %5153 = vmatpush1.msra.mxu0 %v4046
      %5154 = vmatprep.subr.mxu0 0.0
      %5155 = vmatpush1.msra.mxu0 %v4049
      %5156 = vmatprep.subr.mxu0 0.0
      %5157 = vmatpush1.msra.mxu0 %v4052
      %5158 = vmatprep.subr.mxu0 0.0
      %5159 = vmatpush1.msra.mxu0 %v4055
      %5160 = vmatprep.subr.mxu0 0.0
      %5161 = vmatpush1.msra.mxu0 %v4058
      %5162 = vmatprep.subr.mxu0 0.0
      %5163 = vmatpush1.msra.mxu0 %v4061
      %5164 = vmatprep.subr.mxu0 0.0
      %5165 = vmatpush1.msra.mxu0 %v4064
      %5166 = vmatprep.subr.mxu0 0.0
      %5167 = vmatpush1.msra.mxu0 %v4067
      %5168 = vmatprep.subr.mxu0 0.0
      %5169 = vmatpush1.msra.mxu0 %v4070
      %5170 = vmatprep.subr.mxu0 0.0
      %5171 = vmatpush1.msra.mxu0 %v4073
      %5172 = vmatprep.subr.mxu0 0.0
      %5173 = vmatpush1.msra.mxu0 %v4076
      %5174 = vmatprep.subr.mxu0 0.0
      %5175 = vmatpush1.msra.mxu0 %v4079
      %5176 = vmatprep.subr.mxu0 0.0
      %5177 = vmatpush1.msra.mxu0 %v4082
      %5178 = vmatprep.subr.mxu0 0.0
      %5179 = vmatpush1.msra.mxu0 %v4085
      %5180 = vmatprep.subr.mxu0 0.0
      %5181 = vmatpush1.msra.mxu0 %v4088
      %5182 = vmatprep.subr.mxu0 0.0
      %5183 = vmatpush1.msra.mxu0 %v4091
      %5184 = vmatprep.subr.mxu0 0.0
      %5185 = vmatpush1.msra.mxu0 %v4094
      %5186 = vmatprep.subr.mxu0 0.0
      %5187 = vmatpush1.msra.mxu0 %v4097
      %5188 = vmatprep.subr.mxu0 0.0
      %5189 = vmatpush1.msra.mxu0 %v4100
      %5190 = vmatprep.mubr.f32.mxu0 %v3528
      %5191 = vmatmul.mubr.f32.gmra.mrb[0].mxu0 %v3526
      %v5192 = vpop.f32.mrb[0].mxu0
      %v5193 = vadd.f32 %v4777, %v5192
      %v5194 = vpop.f32.mrb[0].mxu0
      %5195 = vmatprep.mubr.f32.mxu0 %v3534
      %5196 = vmatmul.mubr.f32.gmra.mrb[0].mxu0 %v3532
      %v5197 = vpop.f32.mrb[0].mxu0
      %v5198 = vadd.f32 %v4782, %v5197
      %v5199 = vpop.f32.mrb[0].mxu0
      %5200 = vmatprep.mubr.f32.mxu0 %v3540
      %5201 = vmatmul.mubr.f32.gmra.mrb[0].mxu0 %v3538
      %v5202 = vpop.f32.mrb[0].mxu0
      %v5203 = vadd.f32 %v4787, %v5202
      %v5204 = vpop.f32.mrb[0].mxu0
      %5205 = vmatprep.mubr.f32.mxu0 %v3546
      %5206 = vmatmul.mubr.f32.gmra.mrb[0].mxu0 %v3544
      %v5207 = vpop.f32.mrb[0].mxu0
      %v5208 = vadd.f32 %v4792, %v5207
      %v5209 = vpop.f32.mrb[0].mxu0
      %5210 = vmatprep.mubr.f32.mxu0 %v3552
      %5211 = vmatmul.mubr.f32.gmra.mrb[0].mxu0 %v3550
      %v5212 = vpop.f32.mrb[0].mxu0
      %v5213 = vadd.f32 %v4797, %v5212
      %v5214 = vpop.f32.mrb[0].mxu0
      %5215 = vmatprep.mubr.f32.mxu0 %v3558
      %5216 = vmatmul.mubr.f32.gmra.mrb[0].mxu0 %v3556
      %v5217 = vpop.f32.mrb[0].mxu0
      %v5218 = vadd.f32 %v4802, %v5217
      %v5219 = vpop.f32.mrb[0].mxu0
      %5220 = vmatprep.mubr.f32.mxu0 %v3564
      %5221 = vmatmul.mubr.f32.gmra.mrb[0].mxu0 %v3562
      %v5222 = vpop.f32.mrb[0].mxu0
      %v5223 = vadd.f32 %v4807, %v5222
      %v5224 = vpop.f32.mrb[0].mxu0
      %5225 = vmatprep.mubr.f32.mxu0 %v3570
      %5226 = vmatmul.mubr.f32.gmra.mrb[0].mxu0 %v3568
      %v5227 = vpop.f32.mrb[0].mxu0
      %v5228 = vadd.f32 %v4812, %v5227
      %v5229 = vpop.f32.mrb[0].mxu0
      %5230 = vmatprep.mubr.f32.mxu0 %v3576
      %5231 = vmatmul.mubr.f32.gmra.mrb[0].mxu0 %v3574
      %v5232 = vpop.f32.mrb[0].mxu0
      %v5233 = vadd.f32 %v4817, %v5232
      %v5234 = vpop.f32.mrb[0].mxu0
      %5235 = vmatprep.mubr.f32.mxu0 %v3582
      %5236 = vmatmul.mubr.f32.gmra.mrb[0].mxu0 %v3580
      %v5237 = vpop.f32.mrb[0].mxu0
      %v5238 = vadd.f32 %v4822, %v5237
      %v5239 = vpop.f32.mrb[0].mxu0
      %5240 = vmatprep.mubr.f32.mxu0 %v3588
      %5241 = vmatmul.mubr.f32.gmra.mrb[0].mxu0 %v3586
      %v5242 = vpop.f32.mrb[0].mxu0
      %v5243 = vadd.f32 %v4827, %v5242
      %v5244 = vpop.f32.mrb[0].mxu0
      %5245 = vmatprep.mubr.f32.mxu0 %v3594
      %5246 = vmatmul.mubr.f32.gmra.mrb[0].mxu0 %v3592
      %v5247 = vpop.f32.mrb[0].mxu0
      %v5248 = vadd.f32 %v4832, %v5247
      %v5249 = vpop.f32.mrb[0].mxu0
      %5250 = vmatprep.mubr.f32.mxu0 %v3600
      %5251 = vmatmul.mubr.f32.gmra.mrb[0].mxu0 %v3598
      %v5252 = vpop.f32.mrb[0].mxu0
      %v5253 = vadd.f32 %v4837, %v5252
      %v5254 = vpop.f32.mrb[0].mxu0
      %5255 = vdwg.mxu0
      %5256 = vmatprep.subr.mxu0 0.0
      %5257 = vmatpush1.msra.mxu0 %v4103
      %5258 = vmatprep.subr.mxu0 0.0
      %5259 = vmatpush1.msra.mxu0 %v4106
      %5260 = vmatprep.subr.mxu0 0.0
      %5261 = vmatpush1.msra.mxu0 %v4109
      %5262 = vmatprep.subr.mxu0 0.0
      %5263 = vmatpush1.msra.mxu0 %v4112
      %5264 = vmatprep.subr.mxu0 0.0
      %5265 = vmatpush1.msra.mxu0 %v4115
      %5266 = vmatprep.subr.mxu0 0.0
      %5267 = vmatpush1.msra.mxu0 %v4118
      %5268 = vmatprep.subr.mxu0 0.0
      %5269 = vmatpush1.msra.mxu0 %v4121
      %5270 = vmatprep.subr.mxu0 0.0
      %5271 = vmatpush1.msra.mxu0 %v4124
      %5272 = vmatprep.subr.mxu0 0.0
      %5273 = vmatpush1.msra.mxu0 %v4127
      %5274 = vmatprep.subr.mxu0 0.0
      %5275 = vmatpush1.msra.mxu0 %v4130
      %5276 = vmatprep.subr.mxu0 0.0
      %5277 = vmatpush1.msra.mxu0 %v4133
      %5278 = vmatprep.subr.mxu0 0.0
      %5279 = vmatpush1.msra.mxu0 %v4136
      %5280 = vmatprep.subr.mxu0 0.0
      %5281 = vmatpush1.msra.mxu0 %v4139
      %5282 = vmatprep.subr.mxu0 0.0
      %5283 = vmatpush1.msra.mxu0 %v4142
      %5284 = vmatprep.subr.mxu0 0.0
      %5285 = vmatpush1.msra.mxu0 %v4145
      %5286 = vmatprep.subr.mxu0 0.0
      %5287 = vmatpush1.msra.mxu0 %v4148
      %5288 = vmatprep.subr.mxu0 0.0
      %5289 = vmatpush1.msra.mxu0 0.0
      %5290 = vmatprep.subr.mxu0 0.0
      %5291 = vmatpush1.msra.mxu0 0.0
      %5292 = vmatprep.subr.mxu0 0.0
      %5293 = vmatpush1.msra.mxu0 0.0
      %5294 = vmatprep.subr.mxu0 0.0
      %5295 = vmatpush1.msra.mxu0 0.0
      %5296 = vmatprep.subr.mxu0 0.0
      %5297 = vmatpush1.msra.mxu0 0.0
      %5298 = vmatprep.subr.mxu0 0.0
      %5299 = vmatpush1.msra.mxu0 0.0
      %5300 = vmatprep.subr.mxu0 0.0
      %5301 = vmatpush1.msra.mxu0 0.0
      %5302 = vmatprep.subr.mxu0 0.0
      %5303 = vmatpush1.msra.mxu0 0.0
      %5304 = vmatprep.subr.mxu0 0.0
      %5305 = vmatpush1.msra.mxu0 0.0
      %5306 = vmatprep.subr.mxu0 0.0
      %5307 = vmatpush1.msra.mxu0 0.0
      %5308 = vmatprep.subr.mxu0 0.0
      %5309 = vmatpush1.msra.mxu0 0.0
      %5310 = vmatprep.subr.mxu0 0.0
      %5311 = vmatpush1.msra.mxu0 0.0
      %5312 = vmatprep.subr.mxu0 0.0
      %5313 = vmatpush1.msra.mxu0 0.0
      %5314 = vmatprep.subr.mxu0 0.0
      %5315 = vmatpush1.msra.mxu0 0.0
      %5316 = vmatprep.subr.mxu0 0.0
      %5317 = vmatpush1.msra.mxu0 0.0
      %5318 = vmatprep.subr.mxu0 0.0
      %5319 = vmatpush1.msra.mxu0 0.0
      %5320 = vmatprep.mubr.f32.mxu0 0.0
      %5321 = vmatmul.mubr.f32.gmra.mrb[0].mxu0 %v3669
      %v5322 = vpop.f32.mrb[0].mxu0
      %v5323 = vadd.f32 %v5193, %v5322
      %v5324 = vpop.f32.mrb[0].mxu0
      %5325 = vmatprep.mubr.f32.mxu0 0.0
      %5326 = vmatmul.mubr.f32.gmra.mrb[0].mxu0 %v3674
      %v5327 = vpop.f32.mrb[0].mxu0
      %v5328 = vadd.f32 %v5198, %v5327
      %v5329 = vpop.f32.mrb[0].mxu0
      %5330 = vmatprep.mubr.f32.mxu0 0.0
      %5331 = vmatmul.mubr.f32.gmra.mrb[0].mxu0 %v3679
      %v5332 = vpop.f32.mrb[0].mxu0
      %v5333 = vadd.f32 %v5203, %v5332
      %v5334 = vpop.f32.mrb[0].mxu0
      %5335 = vmatprep.mubr.f32.mxu0 0.0
      %5336 = vmatmul.mubr.f32.gmra.mrb[0].mxu0 %v3684
      %v5337 = vpop.f32.mrb[0].mxu0
      %v5338 = vadd.f32 %v5208, %v5337
      %v5339 = vpop.f32.mrb[0].mxu0
      %5340 = vmatprep.mubr.f32.mxu0 0.0
      %5341 = vmatmul.mubr.f32.gmra.mrb[0].mxu0 %v3689
      %v5342 = vpop.f32.mrb[0].mxu0
      %v5343 = vadd.f32 %v5213, %v5342
      %v5344 = vpop.f32.mrb[0].mxu0
      %5345 = vmatprep.mubr.f32.mxu0 0.0
      %5346 = vmatmul.mubr.f32.gmra.mrb[0].mxu0 %v3694
      %v5347 = vpop.f32.mrb[0].mxu0
      %v5348 = vadd.f32 %v5218, %v5347
      %v5349 = vpop.f32.mrb[0].mxu0
      %5350 = vmatprep.mubr.f32.mxu0 0.0
      %5351 = vmatmul.mubr.f32.gmra.mrb[0].mxu0 %v3699
      %v5352 = vpop.f32.mrb[0].mxu0
      %v5353 = vadd.f32 %v5223, %v5352
      %v5354 = vpop.f32.mrb[0].mxu0
      %5355 = vmatprep.mubr.f32.mxu0 0.0
      %5356 = vmatmul.mubr.f32.gmra.mrb[0].mxu0 %v3704
      %v5357 = vpop.f32.mrb[0].mxu0
      %v5358 = vadd.f32 %v5228, %v5357
      %v5359 = vpop.f32.mrb[0].mxu0
      %5360 = vmatprep.mubr.f32.mxu0 0.0
      %5361 = vmatmul.mubr.f32.gmra.mrb[0].mxu0 %v3709
      %v5362 = vpop.f32.mrb[0].mxu0
      %v5363 = vadd.f32 %v5233, %v5362
      %v5364 = vpop.f32.mrb[0].mxu0
      %5365 = vmatprep.mubr.f32.mxu0 0.0
      %5366 = vmatmul.mubr.f32.gmra.mrb[0].mxu0 %v3714
      %v5367 = vpop.f32.mrb[0].mxu0
      %v5368 = vadd.f32 %v5238, %v5367
      %v5369 = vpop.f32.mrb[0].mxu0
      %5370 = vmatprep.mubr.f32.mxu0 0.0
      %5371 = vmatmul.mubr.f32.gmra.mrb[0].mxu0 %v3719
      %v5372 = vpop.f32.mrb[0].mxu0
      %v5373 = vadd.f32 %v5243, %v5372
      %v5374 = vpop.f32.mrb[0].mxu0
      %5375 = vmatprep.mubr.f32.mxu0 0.0
      %5376 = vmatmul.mubr.f32.gmra.mrb[0].mxu0 %v3724
      %v5377 = vpop.f32.mrb[0].mxu0
      %v5378 = vadd.f32 %v5248, %v5377
      %v5379 = vpop.f32.mrb[0].mxu0
      %5380 = vmatprep.mubr.f32.mxu0 0.0
      %5381 = vmatmul.mubr.f32.gmra.mrb[0].mxu0 %v3729
      %v5382 = vpop.f32.mrb[0].mxu0
      %v5383 = vadd.f32 %v5253, %v5382
      %v5384 = vpop.f32.mrb[0].mxu0
      %5385 = vdwg.mxu0
      %s5386 = scalar_lea.vmem %s3, 2304
      %v5387 = vld [vmem:[%s5386] sm:$0xff]
      %v5388 = vld [vmem:[%s5386 + $0x8] sm:$0xff]
      %v5389 = vld [vmem:[%s5386 + $0x10] sm:$0xff]
      %v5390 = vld [vmem:[%s5386 + $0x18] sm:$0xff]
      %v5391 = vld [vmem:[%s5386 + $0x20] sm:$0xff]
      %v5392 = vld [vmem:[%s5386 + $0x28] sm:$0xff]
      %v5393 = vld [vmem:[%s5386 + $0x30] sm:$0xff]
      %v5394 = vld [vmem:[%s5386 + $0x38] sm:$0xff]
      %v5395 = vld [vmem:[%s5386 + $0x40] sm:$0xff]
      %v5396 = vld [vmem:[%s5386 + $0x48] sm:$0xff]
      %v5397 = vld [vmem:[%s5386 + $0x50] sm:$0xff]
      %v5398 = vld [vmem:[%s5386 + $0x58] sm:$0xff]
      %v5399 = vld [vmem:[%s5386 + $0x60] sm:$0xff]
      %v5400 = vld [vmem:[%s5386 + $0x68] sm:$0xff]
      %v5401 = vld [vmem:[%s5386 + $0x70] sm:$0xff]
      %v5402 = vld [vmem:[%s5386 + $0x78] sm:$0xff]
      %v5403 = vld [vmem:[%s5386 + $0x80] sm:$0xff]
      %v5404 = vld [vmem:[%s5386 + $0x88] sm:$0xff]
      %v5405 = vld [vmem:[%s5386 + $0x90] sm:$0xff]
      %v5406 = vld [vmem:[%s5386 + $0x98] sm:$0xff]
      %v5407 = vld [vmem:[%s5386 + $0xa0] sm:$0xff]
      %v5408 = vld [vmem:[%s5386 + $0xa8] sm:$0xff]
      %v5409 = vld [vmem:[%s5386 + $0xb0] sm:$0xff]
      %v5410 = vld [vmem:[%s5386 + $0xb8] sm:$0xff]
      %v5411 = vld [vmem:[%s5386 + $0xc0] sm:$0xff]
      %v5412 = vld [vmem:[%s5386 + $0xc8] sm:$0xff]
      %v5413 = vld [vmem:[%s5386 + $0xd0] sm:$0xff]
      %v5414 = vld [vmem:[%s5386 + $0xd8] sm:$0xff]
      %v5415 = vld [vmem:[%s5386 + $0xe0] sm:$0xff]
      %v5416 = vld [vmem:[%s5386 + $0xe8] sm:$0xff]
      %v5417 = vld [vmem:[%s5386 + $0xf0] sm:$0xff]
      %v5418 = vld [vmem:[%s5386 + $0xf8] sm:$0xff]
      %v5419 = vld [vmem:[%s5386 + $0x100] sm:$0xff]
      %v5420 = vld [vmem:[%s5386 + $0x108] sm:$0xff]
      %v5421 = vld [vmem:[%s5386 + $0x110] sm:$0xff]
      %v5422 = vld [vmem:[%s5386 + $0x118] sm:$0xff]
      %v5423 = vld [vmem:[%s5386 + $0x120] sm:$0xff]
      %v5424 = vld [vmem:[%s5386 + $0x128] sm:$0xff]
      %v5425 = vld [vmem:[%s5386 + $0x130] sm:$0xff]
      %v5426 = vld [vmem:[%s5386 + $0x138] sm:$0xff]
      %v5427 = vld [vmem:[%s5386 + $0x140] sm:$0xff]
      %v5428 = vld [vmem:[%s5386 + $0x148] sm:$0xff]
      %v5429 = vld [vmem:[%s5386 + $0x150] sm:$0xff]
      %v5430 = vld [vmem:[%s5386 + $0x158] sm:$0xff]
      %v5431 = vld [vmem:[%s5386 + $0x160] sm:$0xff]
      %v5432 = vld [vmem:[%s5386 + $0x168] sm:$0xff]
      %v5433 = vld [vmem:[%s5386 + $0x170] sm:$0xff]
      %v5434 = vld [vmem:[%s5386 + $0x178] sm:$0xff]
      %v5435 = vld [vmem:[%s5386 + $0x180] sm:$0xff]
      %v5436 = vld [vmem:[%s5386 + $0x188] sm:$0xff]
      %v5437 = vld [vmem:[%s5386 + $0x190] sm:$0xff]
      %v5438 = vld [vmem:[%s5386 + $0x198] sm:$0xff]
      %v5439 = vld [vmem:[%s5386 + $0x1a0] sm:$0xff]
      %v5440 = vld [vmem:[%s5386 + $0x1a8] sm:$0xff]
      %v5441 = vld [vmem:[%s5386 + $0x1b0] sm:$0xff]
      %v5442 = vld [vmem:[%s5386 + $0x1b8] sm:$0xff]
      %v5443 = vld [vmem:[%s5386 + $0x1c0] sm:$0xff]
      %v5444 = vld [vmem:[%s5386 + $0x1c8] sm:$0xff]
      %v5445 = vld [vmem:[%s5386 + $0x1d0] sm:$0xff]
      %v5446 = vld [vmem:[%s5386 + $0x1d8] sm:$0xff]
      %v5447 = vld [vmem:[%s5386 + $0x1e0] sm:$0xff]
      %v5448 = vld [vmem:[%s5386 + $0x1e8] sm:$0xff]
      %v5449 = vld [vmem:[%s5386 + $0x1f0] sm:$0xff]
      %v5450 = vld [vmem:[%s5386 + $0x1f8] sm:$0xff]
      %v5451 = vld [vmem:[%s5386 + $0x200] sm:$0xff]
      %v5452 = vld [vmem:[%s5386 + $0x208] sm:$0xff]
      %v5453 = vld [vmem:[%s5386 + $0x210] sm:$0xff]
      %v5454 = vld [vmem:[%s5386 + $0x218] sm:$0xff]
      %v5455 = vld [vmem:[%s5386 + $0x220] sm:$0xff]
      %v5456 = vld [vmem:[%s5386 + $0x228] sm:$0xff]
      %v5457 = vld [vmem:[%s5386 + $0x230] sm:$0xff]
      %v5458 = vld [vmem:[%s5386 + $0x238] sm:$0xff]
      %v5459 = vld [vmem:[%s5386 + $0x240] sm:$0xff]
      %v5460 = vld [vmem:[%s5386 + $0x248] sm:$0xff]
      %v5461 = vld [vmem:[%s5386 + $0x250] sm:$0xff]
      %v5462 = vld [vmem:[%s5386 + $0x258] sm:$0xff]
      %v5463 = vld [vmem:[%s5386 + $0x260] sm:$0xff]
      %v5464 = vld [vmem:[%s5386 + $0x268] sm:$0xff]
      %v5465 = vld [vmem:[%s5386 + $0x270] sm:$0xff]
      %v5466 = vld [vmem:[%s5386 + $0x278] sm:$0xff]
      %v5467 = vld [vmem:[%s5386 + $0x280] sm:$0xff]
      %v5468 = vld [vmem:[%s5386 + $0x288] sm:$0xff]
      %v5469 = vld [vmem:[%s5386 + $0x290] sm:$0xff]
      %v5470 = vld [vmem:[%s5386 + $0x298] sm:$0xff]
      %v5471 = vld [vmem:[%s5386 + $0x2a0] sm:$0xff]
      %v5472 = vld [vmem:[%s5386 + $0x2a8] sm:$0xff]
      %v5473 = vld [vmem:[%s5386 + $0x2b0] sm:$0xff]
      %v5474 = vld [vmem:[%s5386 + $0x2b8] sm:$0xff]
      %v5475 = vld [vmem:[%s5386 + $0x2c0] sm:$0xff]
      %v5476 = vld [vmem:[%s5386 + $0x2c8] sm:$0xff]
      %v5477 = vld [vmem:[%s5386 + $0x2d0] sm:$0xff]
      %v5478 = vld [vmem:[%s5386 + $0x2d8] sm:$0xff]
      %v5479 = vld [vmem:[%s5386 + $0x2e0] sm:$0xff]
      %v5480 = vld [vmem:[%s5386 + $0x2e8] sm:$0xff]
      %v5481 = vld [vmem:[%s5386 + $0x2f0] sm:$0xff]
      %v5482 = vld [vmem:[%s5386 + $0x2f8] sm:$0xff]
      %v5483 = vld [vmem:[%s5386 + $0x300] sm:$0xff]
      %v5484 = vld [vmem:[%s5386 + $0x308] sm:$0xff]
      %v5485 = vld [vmem:[%s5386 + $0x310] sm:$0xff]
      %v5486 = vld [vmem:[%s5386 + $0x318] sm:$0xff]
      %v5487 = vld [vmem:[%s5386 + $0x320] sm:$0xff]
      %v5488 = vld [vmem:[%s5386 + $0x328] sm:$0xff]
      %v5489 = vld [vmem:[%s5386 + $0x330] sm:$0xff]
      %v5490 = vld [vmem:[%s5386 + $0x338] sm:$0xff]
      %v5491 = vld [vmem:[%s5386 + $0x340] sm:$0xff]
      %v5492 = vld [vmem:[%s5386 + $0x348] sm:$0xff]
      %v5493 = vld [vmem:[%s5386 + $0x350] sm:$0xff]
      %v5494 = vld [vmem:[%s5386 + $0x358] sm:$0xff]
      %v5495 = vld [vmem:[%s5386 + $0x360] sm:$0xff]
      %v5496 = vld [vmem:[%s5386 + $0x368] sm:$0xff]
      %v5497 = vld [vmem:[%s5386 + $0x370] sm:$0xff]
      %v5498 = vld [vmem:[%s5386 + $0x378] sm:$0xff]
      %v5499 = vld [vmem:[%s5386 + $0x380] sm:$0xff]
      %v5500 = vld [vmem:[%s5386 + $0x388] sm:$0xff]
      %v5501 = vld [vmem:[%s5386 + $0x390] sm:$0xff]
      %v5502 = vld [vmem:[%s5386 + $0x398] sm:$0xff]
      %v5503 = vld [vmem:[%s5386 + $0x3a0] sm:$0xff]
      %v5504 = vld [vmem:[%s5386 + $0x3a8] sm:$0xff]
      %v5505 = vld [vmem:[%s5386 + $0x3b0] sm:$0xff]
      %v5506 = vld [vmem:[%s5386 + $0x3b8] sm:$0xff]
      %v5507 = vld [vmem:[%s5386 + $0x3c0] sm:$0xff]
      %v5508 = vld [vmem:[%s5386 + $0x3c8] sm:$0xff]
      %v5509 = vld [vmem:[%s5386 + $0x3d0] sm:$0xff]
      %v5510 = vld [vmem:[%s5386 + $0x3d8] sm:$0xff]
      %v5511 = vld [vmem:[%s5386 + $0x3e0] sm:$0xff]
      %v5512 = vld [vmem:[%s5386 + $0x3e8] sm:$0xff]
      %v5513 = vld [vmem:[%s5386 + $0x3f0] sm:$0xff]
      %v5514 = vld [vmem:[%s5386 + $0x3f8] sm:$0xff]
      %v5515 = vld [vmem:[%s5386 + $0x400] sm:$0xff]
      %v5516 = vld [vmem:[%s5386 + $0x408] sm:$0xff]
      %v5517 = vld [vmem:[%s5386 + $0x410] sm:$0xff]
      %v5518 = vld [vmem:[%s5386 + $0x418] sm:$0xff]
      %v5519 = vld [vmem:[%s5386 + $0x420] sm:$0xff]
      %v5520 = vld [vmem:[%s5386 + $0x428] sm:$0xff]
      %v5521 = vld [vmem:[%s5386 + $0x430] sm:$0xff]
      %v5522 = vld [vmem:[%s5386 + $0x438] sm:$0xff]
      %v5523 = vld [vmem:[%s5386 + $0x440] sm:$0xff]
      %v5524 = vld [vmem:[%s5386 + $0x448] sm:$0xff]
      %v5525 = vld [vmem:[%s5386 + $0x450] sm:$0xff]
      %v5526 = vld [vmem:[%s5386 + $0x458] sm:$0xff]
      %v5527 = vld [vmem:[%s5386 + $0x460] sm:$0xff]
      %v5528 = vld [vmem:[%s5386 + $0x468] sm:$0xff]
      %v5529 = vld [vmem:[%s5386 + $0x470] sm:$0xff]
      %v5530 = vld [vmem:[%s5386 + $0x478] sm:$0xff]
      %5531 = vmatprep.subr.mxu0 %v5388
      %5532 = vmatpush1.msra.mxu0 %v5387
      %5533 = vmatprep.subr.mxu0 %v5391
      %5534 = vmatpush1.msra.mxu0 %v5390
      %5535 = vmatprep.subr.mxu0 %v5394
      %5536 = vmatpush1.msra.mxu0 %v5393
      %5537 = vmatprep.subr.mxu0 %v5397
      %5538 = vmatpush1.msra.mxu0 %v5396
      %5539 = vmatprep.subr.mxu0 %v5400
      %5540 = vmatpush1.msra.mxu0 %v5399
      %5541 = vmatprep.subr.mxu0 %v5403
      %5542 = vmatpush1.msra.mxu0 %v5402
      %5543 = vmatprep.subr.mxu0 %v5406
      %5544 = vmatpush1.msra.mxu0 %v5405
      %5545 = vmatprep.subr.mxu0 %v5409
      %5546 = vmatpush1.msra.mxu0 %v5408
      %5547 = vmatprep.subr.mxu0 %v5412
      %5548 = vmatpush1.msra.mxu0 %v5411
      %5549 = vmatprep.subr.mxu0 %v5415
      %5550 = vmatpush1.msra.mxu0 %v5414
      %5551 = vmatprep.subr.mxu0 %v5418
      %5552 = vmatpush1.msra.mxu0 %v5417
      %5553 = vmatprep.subr.mxu0 %v5421
      %5554 = vmatpush1.msra.mxu0 %v5420
      %5555 = vmatprep.subr.mxu0 %v5424
      %5556 = vmatpush1.msra.mxu0 %v5423
      %5557 = vmatprep.subr.mxu0 %v5427
      %5558 = vmatpush1.msra.mxu0 %v5426
      %5559 = vmatprep.subr.mxu0 %v5430
      %5560 = vmatpush1.msra.mxu0 %v5429
      %5561 = vmatprep.subr.mxu0 %v5433
      %5562 = vmatpush1.msra.mxu0 %v5432
      %5563 = vmatprep.subr.mxu0 %v5436
      %5564 = vmatpush1.msra.mxu0 %v5435
      %5565 = vmatprep.subr.mxu0 %v5439
      %5566 = vmatpush1.msra.mxu0 %v5438
      %5567 = vmatprep.subr.mxu0 %v5442
      %5568 = vmatpush1.msra.mxu0 %v5441
      %5569 = vmatprep.subr.mxu0 %v5445
      %5570 = vmatpush1.msra.mxu0 %v5444
      %5571 = vmatprep.subr.mxu0 %v5448
      %5572 = vmatpush1.msra.mxu0 %v5447
      %5573 = vmatprep.subr.mxu0 %v5451
      %5574 = vmatpush1.msra.mxu0 %v5450
      %5575 = vmatprep.subr.mxu0 %v5454
      %5576 = vmatpush1.msra.mxu0 %v5453
      %5577 = vmatprep.subr.mxu0 %v5457
      %5578 = vmatpush1.msra.mxu0 %v5456
      %5579 = vmatprep.subr.mxu0 %v5460
      %5580 = vmatpush1.msra.mxu0 %v5459
      %5581 = vmatprep.subr.mxu0 %v5463
      %5582 = vmatpush1.msra.mxu0 %v5462
      %5583 = vmatprep.subr.mxu0 %v5466
      %5584 = vmatpush1.msra.mxu0 %v5465
      %5585 = vmatprep.subr.mxu0 %v5469
      %5586 = vmatpush1.msra.mxu0 %v5468
      %5587 = vmatprep.subr.mxu0 %v5472
      %5588 = vmatpush1.msra.mxu0 %v5471
      %5589 = vmatprep.subr.mxu0 %v5475
      %5590 = vmatpush1.msra.mxu0 %v5474
      %5591 = vmatprep.subr.mxu0 %v5478
      %5592 = vmatpush1.msra.mxu0 %v5477
      %5593 = vmatprep.subr.mxu0 %v5481
      %5594 = vmatpush1.msra.mxu0 %v5480
      %5595 = vmatprep.mubr.f32.mxu0 %v3801
      %5596 = vmatmul.mubr.f32.gmra.mrb[0].mxu0 %v3799
      %v5597 = vpop.f32.mrb[0].mxu0
      %v5598 = vadd.f32 0.0, %v5597
      %v5599 = vpop.f32.mrb[0].mxu0
      %v5600 = vadd.f32 0.0, %v5599
      %5601 = vmatprep.mubr.f32.mxu0 %v3807
      %5602 = vmatmul.mubr.f32.gmra.mrb[0].mxu0 %v3805
      %v5603 = vpop.f32.mrb[0].mxu0
      %v5604 = vadd.f32 0.0, %v5603
      %v5605 = vpop.f32.mrb[0].mxu0
      %v5606 = vadd.f32 0.0, %v5605
      %5607 = vmatprep.mubr.f32.mxu0 %v3813
      %5608 = vmatmul.mubr.f32.gmra.mrb[0].mxu0 %v3811
      %v5609 = vpop.f32.mrb[0].mxu0
      %v5610 = vadd.f32 0.0, %v5609
      %v5611 = vpop.f32.mrb[0].mxu0
      %v5612 = vadd.f32 0.0, %v5611
      %5613 = vmatprep.mubr.f32.mxu0 %v3819
      %5614 = vmatmul.mubr.f32.gmra.mrb[0].mxu0 %v3817
      %v5615 = vpop.f32.mrb[0].mxu0
      %v5616 = vadd.f32 0.0, %v5615
      %v5617 = vpop.f32.mrb[0].mxu0
      %v5618 = vadd.f32 0.0, %v5617
      %5619 = vmatprep.mubr.f32.mxu0 %v3825
      %5620 = vmatmul.mubr.f32.gmra.mrb[0].mxu0 %v3823
      %v5621 = vpop.f32.mrb[0].mxu0
      %v5622 = vadd.f32 0.0, %v5621
      %v5623 = vpop.f32.mrb[0].mxu0
      %v5624 = vadd.f32 0.0, %v5623
      %5625 = vmatprep.mubr.f32.mxu0 %v3831
      %5626 = vmatmul.mubr.f32.gmra.mrb[0].mxu0 %v3829
      %v5627 = vpop.f32.mrb[0].mxu0
      %v5628 = vadd.f32 0.0, %v5627
      %v5629 = vpop.f32.mrb[0].mxu0
      %v5630 = vadd.f32 0.0, %v5629
      %5631 = vmatprep.mubr.f32.mxu0 %v3837
      %5632 = vmatmul.mubr.f32.gmra.mrb[0].mxu0 %v3835
      %v5633 = vpop.f32.mrb[0].mxu0
      %v5634 = vadd.f32 0.0, %v5633
      %v5635 = vpop.f32.mrb[0].mxu0
      %v5636 = vadd.f32 0.0, %v5635
      %5637 = vmatprep.mubr.f32.mxu0 %v3843
      %5638 = vmatmul.mubr.f32.gmra.mrb[0].mxu0 %v3841
      %v5639 = vpop.f32.mrb[0].mxu0
      %v5640 = vadd.f32 0.0, %v5639
      %v5641 = vpop.f32.mrb[0].mxu0
      %v5642 = vadd.f32 0.0, %v5641
      %5643 = vmatprep.mubr.f32.mxu0 %v3849
      %5644 = vmatmul.mubr.f32.gmra.mrb[0].mxu0 %v3847
      %v5645 = vpop.f32.mrb[0].mxu0
      %v5646 = vadd.f32 0.0, %v5645
      %v5647 = vpop.f32.mrb[0].mxu0
      %v5648 = vadd.f32 0.0, %v5647
      %5649 = vmatprep.mubr.f32.mxu0 %v3855
      %5650 = vmatmul.mubr.f32.gmra.mrb[0].mxu0 %v3853
      %v5651 = vpop.f32.mrb[0].mxu0
      %v5652 = vadd.f32 0.0, %v5651
      %v5653 = vpop.f32.mrb[0].mxu0
      %v5654 = vadd.f32 0.0, %v5653
      %5655 = vmatprep.mubr.f32.mxu0 %v3861
      %5656 = vmatmul.mubr.f32.gmra.mrb[0].mxu0 %v3859
      %v5657 = vpop.f32.mrb[0].mxu0
      %v5658 = vadd.f32 0.0, %v5657
      %v5659 = vpop.f32.mrb[0].mxu0
      %v5660 = vadd.f32 0.0, %v5659
      %5661 = vmatprep.mubr.f32.mxu0 %v3867
      %5662 = vmatmul.mubr.f32.gmra.mrb[0].mxu0 %v3865
      %v5663 = vpop.f32.mrb[0].mxu0
      %v5664 = vadd.f32 0.0, %v5663
      %v5665 = vpop.f32.mrb[0].mxu0
      %v5666 = vadd.f32 0.0, %v5665
      %5667 = vmatprep.mubr.f32.mxu0 %v3873
      %5668 = vmatmul.mubr.f32.gmra.mrb[0].mxu0 %v3871
      %v5669 = vpop.f32.mrb[0].mxu0
      %v5670 = vadd.f32 0.0, %v5669
      %v5671 = vpop.f32.mrb[0].mxu0
      %v5672 = vadd.f32 0.0, %v5671
      %5673 = vdwg.mxu0
      %5674 = vmatprep.subr.mxu0 %v5484
      %5675 = vmatpush1.msra.mxu0 %v5483
      %5676 = vmatprep.subr.mxu0 %v5487
      %5677 = vmatpush1.msra.mxu0 %v5486
      %5678 = vmatprep.subr.mxu0 %v5490
      %5679 = vmatpush1.msra.mxu0 %v5489
      %5680 = vmatprep.subr.mxu0 %v5493
      %5681 = vmatpush1.msra.mxu0 %v5492
      %5682 = vmatprep.subr.mxu0 %v5496
      %5683 = vmatpush1.msra.mxu0 %v5495
      %5684 = vmatprep.subr.mxu0 %v5499
      %5685 = vmatpush1.msra.mxu0 %v5498
      %5686 = vmatprep.subr.mxu0 %v5502
      %5687 = vmatpush1.msra.mxu0 %v5501
      %5688 = vmatprep.subr.mxu0 %v5505
      %5689 = vmatpush1.msra.mxu0 %v5504
      %5690 = vmatprep.subr.mxu0 %v5508
      %5691 = vmatpush1.msra.mxu0 %v5507
      %5692 = vmatprep.subr.mxu0 %v5511
      %5693 = vmatpush1.msra.mxu0 %v5510
      %5694 = vmatprep.subr.mxu0 %v5514
      %5695 = vmatpush1.msra.mxu0 %v5513
      %5696 = vmatprep.subr.mxu0 %v5517
      %5697 = vmatpush1.msra.mxu0 %v5516
      %5698 = vmatprep.subr.mxu0 %v5520
      %5699 = vmatpush1.msra.mxu0 %v5519
      %5700 = vmatprep.subr.mxu0 %v5523
      %5701 = vmatpush1.msra.mxu0 %v5522
      %5702 = vmatprep.subr.mxu0 %v5526
      %5703 = vmatpush1.msra.mxu0 %v5525
      %5704 = vmatprep.subr.mxu0 %v5529
      %5705 = vmatpush1.msra.mxu0 %v5528
      %5706 = vmatprep.subr.mxu0 0.0
      %5707 = vmatpush1.msra.mxu0 0.0
      %5708 = vmatprep.subr.mxu0 0.0
      %5709 = vmatpush1.msra.mxu0 0.0
      %5710 = vmatprep.subr.mxu0 0.0
      %5711 = vmatpush1.msra.mxu0 0.0
      %5712 = vmatprep.subr.mxu0 0.0
      %5713 = vmatpush1.msra.mxu0 0.0
      %5714 = vmatprep.subr.mxu0 0.0
      %5715 = vmatpush1.msra.mxu0 0.0
      %5716 = vmatprep.subr.mxu0 0.0
      %5717 = vmatpush1.msra.mxu0 0.0
      %5718 = vmatprep.subr.mxu0 0.0
      %5719 = vmatpush1.msra.mxu0 0.0
      %5720 = vmatprep.subr.mxu0 0.0
      %5721 = vmatpush1.msra.mxu0 0.0
      %5722 = vmatprep.subr.mxu0 0.0
      %5723 = vmatpush1.msra.mxu0 0.0
      %5724 = vmatprep.subr.mxu0 0.0
      %5725 = vmatpush1.msra.mxu0 0.0
      %5726 = vmatprep.subr.mxu0 0.0
      %5727 = vmatpush1.msra.mxu0 0.0
      %5728 = vmatprep.subr.mxu0 0.0
      %5729 = vmatpush1.msra.mxu0 0.0
      %5730 = vmatprep.subr.mxu0 0.0
      %5731 = vmatpush1.msra.mxu0 0.0
      %5732 = vmatprep.subr.mxu0 0.0
      %5733 = vmatpush1.msra.mxu0 0.0
      %5734 = vmatprep.subr.mxu0 0.0
      %5735 = vmatpush1.msra.mxu0 0.0
      %5736 = vmatprep.subr.mxu0 0.0
      %5737 = vmatpush1.msra.mxu0 0.0
      %5738 = vmatprep.mubr.f32.mxu0 0.0
      %5739 = vmatmul.mubr.f32.gmra.mrb[0].mxu0 %v3942
      %v5740 = vpop.f32.mrb[0].mxu0
      %v5741 = vadd.f32 %v5598, %v5740
      %v5742 = vpop.f32.mrb[0].mxu0
      %v5743 = vadd.f32 %v5600, %v5742
      %5744 = vmatprep.mubr.f32.mxu0 0.0
      %5745 = vmatmul.mubr.f32.gmra.mrb[0].mxu0 %v3947
      %v5746 = vpop.f32.mrb[0].mxu0
      %v5747 = vadd.f32 %v5604, %v5746
      %v5748 = vpop.f32.mrb[0].mxu0
      %v5749 = vadd.f32 %v5606, %v5748
      %5750 = vmatprep.mubr.f32.mxu0 0.0
      %5751 = vmatmul.mubr.f32.gmra.mrb[0].mxu0 %v3952
      %v5752 = vpop.f32.mrb[0].mxu0
      %v5753 = vadd.f32 %v5610, %v5752
      %v5754 = vpop.f32.mrb[0].mxu0
      %v5755 = vadd.f32 %v5612, %v5754
      %5756 = vmatprep.mubr.f32.mxu0 0.0
      %5757 = vmatmul.mubr.f32.gmra.mrb[0].mxu0 %v3957
      %v5758 = vpop.f32.mrb[0].mxu0
      %v5759 = vadd.f32 %v5616, %v5758
      %v5760 = vpop.f32.mrb[0].mxu0
      %v5761 = vadd.f32 %v5618, %v5760
      %5762 = vmatprep.mubr.f32.mxu0 0.0
      %5763 = vmatmul.mubr.f32.gmra.mrb[0].mxu0 %v3962
      %v5764 = vpop.f32.mrb[0].mxu0
      %v5765 = vadd.f32 %v5622, %v5764
      %v5766 = vpop.f32.mrb[0].mxu0
      %v5767 = vadd.f32 %v5624, %v5766
      %5768 = vmatprep.mubr.f32.mxu0 0.0
      %5769 = vmatmul.mubr.f32.gmra.mrb[0].mxu0 %v3967
      %v5770 = vpop.f32.mrb[0].mxu0
      %v5771 = vadd.f32 %v5628, %v5770
      %v5772 = vpop.f32.mrb[0].mxu0
      %v5773 = vadd.f32 %v5630, %v5772
      %5774 = vmatprep.mubr.f32.mxu0 0.0
      %5775 = vmatmul.mubr.f32.gmra.mrb[0].mxu0 %v3972
      %v5776 = vpop.f32.mrb[0].mxu0
      %v5777 = vadd.f32 %v5634, %v5776
      %v5778 = vpop.f32.mrb[0].mxu0
      %v5779 = vadd.f32 %v5636, %v5778
      %5780 = vmatprep.mubr.f32.mxu0 0.0
      %5781 = vmatmul.mubr.f32.gmra.mrb[0].mxu0 %v3977
      %v5782 = vpop.f32.mrb[0].mxu0
      %v5783 = vadd.f32 %v5640, %v5782
      %v5784 = vpop.f32.mrb[0].mxu0
      %v5785 = vadd.f32 %v5642, %v5784
      %5786 = vmatprep.mubr.f32.mxu0 0.0
      %5787 = vmatmul.mubr.f32.gmra.mrb[0].mxu0 %v3982
      %v5788 = vpop.f32.mrb[0].mxu0
      %v5789 = vadd.f32 %v5646, %v5788
      %v5790 = vpop.f32.mrb[0].mxu0
      %v5791 = vadd.f32 %v5648, %v5790
      %5792 = vmatprep.mubr.f32.mxu0 0.0
      %5793 = vmatmul.mubr.f32.gmra.mrb[0].mxu0 %v3987
      %v5794 = vpop.f32.mrb[0].mxu0
      %v5795 = vadd.f32 %v5652, %v5794
      %v5796 = vpop.f32.mrb[0].mxu0
      %v5797 = vadd.f32 %v5654, %v5796
      %5798 = vmatprep.mubr.f32.mxu0 0.0
      %5799 = vmatmul.mubr.f32.gmra.mrb[0].mxu0 %v3992
      %v5800 = vpop.f32.mrb[0].mxu0
      %v5801 = vadd.f32 %v5658, %v5800
      %v5802 = vpop.f32.mrb[0].mxu0
      %v5803 = vadd.f32 %v5660, %v5802
      %5804 = vmatprep.mubr.f32.mxu0 0.0
      %5805 = vmatmul.mubr.f32.gmra.mrb[0].mxu0 %v3997
      %v5806 = vpop.f32.mrb[0].mxu0
      %v5807 = vadd.f32 %v5664, %v5806
      %v5808 = vpop.f32.mrb[0].mxu0
      %v5809 = vadd.f32 %v5666, %v5808
      %5810 = vmatprep.mubr.f32.mxu0 0.0
      %5811 = vmatmul.mubr.f32.gmra.mrb[0].mxu0 %v4002
      %v5812 = vpop.f32.mrb[0].mxu0
      %v5813 = vadd.f32 %v5670, %v5812
      %v5814 = vpop.f32.mrb[0].mxu0
      %v5815 = vadd.f32 %v5672, %v5814
      %5816 = vdwg.mxu0
      %5817 = vmatprep.subr.mxu0 0.0
      %5818 = vmatpush1.msra.mxu0 %v5389
      %5819 = vmatprep.subr.mxu0 0.0
      %5820 = vmatpush1.msra.mxu0 %v5392
      %5821 = vmatprep.subr.mxu0 0.0
      %5822 = vmatpush1.msra.mxu0 %v5395
      %5823 = vmatprep.subr.mxu0 0.0
      %5824 = vmatpush1.msra.mxu0 %v5398
      %5825 = vmatprep.subr.mxu0 0.0
      %5826 = vmatpush1.msra.mxu0 %v5401
      %5827 = vmatprep.subr.mxu0 0.0
      %5828 = vmatpush1.msra.mxu0 %v5404
      %5829 = vmatprep.subr.mxu0 0.0
      %5830 = vmatpush1.msra.mxu0 %v5407
      %5831 = vmatprep.subr.mxu0 0.0
      %5832 = vmatpush1.msra.mxu0 %v5410
      %5833 = vmatprep.subr.mxu0 0.0
      %5834 = vmatpush1.msra.mxu0 %v5413
      %5835 = vmatprep.subr.mxu0 0.0
      %5836 = vmatpush1.msra.mxu0 %v5416
      %5837 = vmatprep.subr.mxu0 0.0
      %5838 = vmatpush1.msra.mxu0 %v5419
      %5839 = vmatprep.subr.mxu0 0.0
      %5840 = vmatpush1.msra.mxu0 %v5422
      %5841 = vmatprep.subr.mxu0 0.0
      %5842 = vmatpush1.msra.mxu0 %v5425
      %5843 = vmatprep.subr.mxu0 0.0
      %5844 = vmatpush1.msra.mxu0 %v5428
      %5845 = vmatprep.subr.mxu0 0.0
      %5846 = vmatpush1.msra.mxu0 %v5431
      %5847 = vmatprep.subr.mxu0 0.0
      %5848 = vmatpush1.msra.mxu0 %v5434
      %5849 = vmatprep.subr.mxu0 0.0
      %5850 = vmatpush1.msra.mxu0 %v5437
      %5851 = vmatprep.subr.mxu0 0.0
      %5852 = vmatpush1.msra.mxu0 %v5440
      %5853 = vmatprep.subr.mxu0 0.0
      %5854 = vmatpush1.msra.mxu0 %v5443
      %5855 = vmatprep.subr.mxu0 0.0
      %5856 = vmatpush1.msra.mxu0 %v5446
      %5857 = vmatprep.subr.mxu0 0.0
      %5858 = vmatpush1.msra.mxu0 %v5449
      %5859 = vmatprep.subr.mxu0 0.0
      %5860 = vmatpush1.msra.mxu0 %v5452
      %5861 = vmatprep.subr.mxu0 0.0
      %5862 = vmatpush1.msra.mxu0 %v5455
      %5863 = vmatprep.subr.mxu0 0.0
      %5864 = vmatpush1.msra.mxu0 %v5458
      %5865 = vmatprep.subr.mxu0 0.0
      %5866 = vmatpush1.msra.mxu0 %v5461
      %5867 = vmatprep.subr.mxu0 0.0
      %5868 = vmatpush1.msra.mxu0 %v5464
      %5869 = vmatprep.subr.mxu0 0.0
      %5870 = vmatpush1.msra.mxu0 %v5467
      %5871 = vmatprep.subr.mxu0 0.0
      %5872 = vmatpush1.msra.mxu0 %v5470
      %5873 = vmatprep.subr.mxu0 0.0
      %5874 = vmatpush1.msra.mxu0 %v5473
      %5875 = vmatprep.subr.mxu0 0.0
      %5876 = vmatpush1.msra.mxu0 %v5476
      %5877 = vmatprep.subr.mxu0 0.0
      %5878 = vmatpush1.msra.mxu0 %v5479
      %5879 = vmatprep.subr.mxu0 0.0
      %5880 = vmatpush1.msra.mxu0 %v5482
      %5881 = vmatprep.mubr.f32.mxu0 %v3801
      %5882 = vmatmul.mubr.f32.gmra.mrb[0].mxu0 %v3799
      %v5883 = vpop.f32.mrb[0].mxu0
      %v5884 = vadd.f32 0.0, %v5883
      %v5885 = vpop.f32.mrb[0].mxu0
      %5886 = vmatprep.mubr.f32.mxu0 %v3807
      %5887 = vmatmul.mubr.f32.gmra.mrb[0].mxu0 %v3805
      %v5888 = vpop.f32.mrb[0].mxu0
      %v5889 = vadd.f32 0.0, %v5888
      %v5890 = vpop.f32.mrb[0].mxu0
      %5891 = vmatprep.mubr.f32.mxu0 %v3813
      %5892 = vmatmul.mubr.f32.gmra.mrb[0].mxu0 %v3811
      %v5893 = vpop.f32.mrb[0].mxu0
      %v5894 = vadd.f32 0.0, %v5893
      %v5895 = vpop.f32.mrb[0].mxu0
      %5896 = vmatprep.mubr.f32.mxu0 %v3819
      %5897 = vmatmul.mubr.f32.gmra.mrb[0].mxu0 %v3817
      %v5898 = vpop.f32.mrb[0].mxu0
      %v5899 = vadd.f32 0.0, %v5898
      %v5900 = vpop.f32.mrb[0].mxu0
      %5901 = vmatprep.mubr.f32.mxu0 %v3825
      %5902 = vmatmul.mubr.f32.gmra.mrb[0].mxu0 %v3823
      %v5903 = vpop.f32.mrb[0].mxu0
      %v5904 = vadd.f32 0.0, %v5903
      %v5905 = vpop.f32.mrb[0].mxu0
      %5906 = vmatprep.mubr.f32.mxu0 %v3831
      %5907 = vmatmul.mubr.f32.gmra.mrb[0].mxu0 %v3829
      %v5908 = vpop.f32.mrb[0].mxu0
      %v5909 = vadd.f32 0.0, %v5908
      %v5910 = vpop.f32.mrb[0].mxu0
      %5911 = vmatprep.mubr.f32.mxu0 %v3837
      %5912 = vmatmul.mubr.f32.gmra.mrb[0].mxu0 %v3835
      %v5913 = vpop.f32.mrb[0].mxu0
      %v5914 = vadd.f32 0.0, %v5913
      %v5915 = vpop.f32.mrb[0].mxu0
      %5916 = vmatprep.mubr.f32.mxu0 %v3843
      %5917 = vmatmul.mubr.f32.gmra.mrb[0].mxu0 %v3841
      %v5918 = vpop.f32.mrb[0].mxu0
      %v5919 = vadd.f32 0.0, %v5918
      %v5920 = vpop.f32.mrb[0].mxu0
      %5921 = vmatprep.mubr.f32.mxu0 %v3849
      %5922 = vmatmul.mubr.f32.gmra.mrb[0].mxu0 %v3847
      %v5923 = vpop.f32.mrb[0].mxu0
      %v5924 = vadd.f32 0.0, %v5923
      %v5925 = vpop.f32.mrb[0].mxu0
      %5926 = vmatprep.mubr.f32.mxu0 %v3855
      %5927 = vmatmul.mubr.f32.gmra.mrb[0].mxu0 %v3853
      %v5928 = vpop.f32.mrb[0].mxu0
      %v5929 = vadd.f32 0.0, %v5928
      %v5930 = vpop.f32.mrb[0].mxu0
      %5931 = vmatprep.mubr.f32.mxu0 %v3861
      %5932 = vmatmul.mubr.f32.gmra.mrb[0].mxu0 %v3859
      %v5933 = vpop.f32.mrb[0].mxu0
      %v5934 = vadd.f32 0.0, %v5933
      %v5935 = vpop.f32.mrb[0].mxu0
      %5936 = vmatprep.mubr.f32.mxu0 %v3867
      %5937 = vmatmul.mubr.f32.gmra.mrb[0].mxu0 %v3865
      %v5938 = vpop.f32.mrb[0].mxu0
      %v5939 = vadd.f32 0.0, %v5938
      %v5940 = vpop.f32.mrb[0].mxu0
      %5941 = vmatprep.mubr.f32.mxu0 %v3873
      %5942 = vmatmul.mubr.f32.gmra.mrb[0].mxu0 %v3871
      %v5943 = vpop.f32.mrb[0].mxu0
      %v5944 = vadd.f32 0.0, %v5943
      %v5945 = vpop.f32.mrb[0].mxu0
      %5946 = vdwg.mxu0
      %5947 = vmatprep.subr.mxu0 0.0
      %5948 = vmatpush1.msra.mxu0 %v5485
      %5949 = vmatprep.subr.mxu0 0.0
      %5950 = vmatpush1.msra.mxu0 %v5488
      %5951 = vmatprep.subr.mxu0 0.0
      %5952 = vmatpush1.msra.mxu0 %v5491
      %5953 = vmatprep.subr.mxu0 0.0
      %5954 = vmatpush1.msra.mxu0 %v5494
      %5955 = vmatprep.subr.mxu0 0.0
      %5956 = vmatpush1.msra.mxu0 %v5497
      %5957 = vmatprep.subr.mxu0 0.0
      %5958 = vmatpush1.msra.mxu0 %v5500
      %5959 = vmatprep.subr.mxu0 0.0
      %5960 = vmatpush1.msra.mxu0 %v5503
      %5961 = vmatprep.subr.mxu0 0.0
      %5962 = vmatpush1.msra.mxu0 %v5506
      %5963 = vmatprep.subr.mxu0 0.0
      %5964 = vmatpush1.msra.mxu0 %v5509
      %5965 = vmatprep.subr.mxu0 0.0
      %5966 = vmatpush1.msra.mxu0 %v5512
      %5967 = vmatprep.subr.mxu0 0.0
      %5968 = vmatpush1.msra.mxu0 %v5515
      %5969 = vmatprep.subr.mxu0 0.0
      %5970 = vmatpush1.msra.mxu0 %v5518
      %5971 = vmatprep.subr.mxu0 0.0
      %5972 = vmatpush1.msra.mxu0 %v5521
      %5973 = vmatprep.subr.mxu0 0.0
      %5974 = vmatpush1.msra.mxu0 %v5524
      %5975 = vmatprep.subr.mxu0 0.0
      %5976 = vmatpush1.msra.mxu0 %v5527
      %5977 = vmatprep.subr.mxu0 0.0
      %5978 = vmatpush1.msra.mxu0 %v5530
      %5979 = vmatprep.subr.mxu0 0.0
      %5980 = vmatpush1.msra.mxu0 0.0
      %5981 = vmatprep.subr.mxu0 0.0
      %5982 = vmatpush1.msra.mxu0 0.0
      %5983 = vmatprep.subr.mxu0 0.0
      %5984 = vmatpush1.msra.mxu0 0.0
      %5985 = vmatprep.subr.mxu0 0.0
      %5986 = vmatpush1.msra.mxu0 0.0
      %5987 = vmatprep.subr.mxu0 0.0
      %5988 = vmatpush1.msra.mxu0 0.0
      %5989 = vmatprep.subr.mxu0 0.0
      %5990 = vmatpush1.msra.mxu0 0.0
      %5991 = vmatprep.subr.mxu0 0.0
      %5992 = vmatpush1.msra.mxu0 0.0
      %5993 = vmatprep.subr.mxu0 0.0
      %5994 = vmatpush1.msra.mxu0 0.0
      %5995 = vmatprep.subr.mxu0 0.0
      %5996 = vmatpush1.msra.mxu0 0.0
      %5997 = vmatprep.subr.mxu0 0.0
      %5998 = vmatpush1.msra.mxu0 0.0
      %5999 = vmatprep.subr.mxu0 0.0
      %6000 = vmatpush1.msra.mxu0 0.0
      %6001 = vmatprep.subr.mxu0 0.0
      %6002 = vmatpush1.msra.mxu0 0.0
      %6003 = vmatprep.subr.mxu0 0.0
      %6004 = vmatpush1.msra.mxu0 0.0
      %6005 = vmatprep.subr.mxu0 0.0
      %6006 = vmatpush1.msra.mxu0 0.0
      %6007 = vmatprep.subr.mxu0 0.0
      %6008 = vmatpush1.msra.mxu0 0.0
      %6009 = vmatprep.subr.mxu0 0.0
      %6010 = vmatpush1.msra.mxu0 0.0
      %6011 = vmatprep.mubr.f32.mxu0 0.0
      %6012 = vmatmul.mubr.f32.gmra.mrb[0].mxu0 %v3942
      %v6013 = vpop.f32.mrb[0].mxu0
      %v6014 = vadd.f32 %v5884, %v6013
      %v6015 = vpop.f32.mrb[0].mxu0
      %6016 = vmatprep.mubr.f32.mxu0 0.0
      %6017 = vmatmul.mubr.f32.gmra.mrb[0].mxu0 %v3947
      %v6018 = vpop.f32.mrb[0].mxu0
      %v6019 = vadd.f32 %v5889, %v6018
      %v6020 = vpop.f32.mrb[0].mxu0
      %6021 = vmatprep.mubr.f32.mxu0 0.0
      %6022 = vmatmul.mubr.f32.gmra.mrb[0].mxu0 %v3952
      %v6023 = vpop.f32.mrb[0].mxu0
      %v6024 = vadd.f32 %v5894, %v6023
      %v6025 = vpop.f32.mrb[0].mxu0
      %6026 = vmatprep.mubr.f32.mxu0 0.0
      %6027 = vmatmul.mubr.f32.gmra.mrb[0].mxu0 %v3957
      %v6028 = vpop.f32.mrb[0].mxu0
      %v6029 = vadd.f32 %v5899, %v6028
      %v6030 = vpop.f32.mrb[0].mxu0
      %6031 = vmatprep.mubr.f32.mxu0 0.0
      %6032 = vmatmul.mubr.f32.gmra.mrb[0].mxu0 %v3962
      %v6033 = vpop.f32.mrb[0].mxu0
      %v6034 = vadd.f32 %v5904, %v6033
      %v6035 = vpop.f32.mrb[0].mxu0
      %6036 = vmatprep.mubr.f32.mxu0 0.0
      %6037 = vmatmul.mubr.f32.gmra.mrb[0].mxu0 %v3967
      %v6038 = vpop.f32.mrb[0].mxu0
      %v6039 = vadd.f32 %v5909, %v6038
      %v6040 = vpop.f32.mrb[0].mxu0
      %6041 = vmatprep.mubr.f32.mxu0 0.0
      %6042 = vmatmul.mubr.f32.gmra.mrb[0].mxu0 %v3972
      %v6043 = vpop.f32.mrb[0].mxu0
      %v6044 = vadd.f32 %v5914, %v6043
      %v6045 = vpop.f32.mrb[0].mxu0
      %6046 = vmatprep.mubr.f32.mxu0 0.0
      %6047 = vmatmul.mubr.f32.gmra.mrb[0].mxu0 %v3977
      %v6048 = vpop.f32.mrb[0].mxu0
      %v6049 = vadd.f32 %v5919, %v6048
      %v6050 = vpop.f32.mrb[0].mxu0
      %6051 = vmatprep.mubr.f32.mxu0 0.0
      %6052 = vmatmul.mubr.f32.gmra.mrb[0].mxu0 %v3982
      %v6053 = vpop.f32.mrb[0].mxu0
      %v6054 = vadd.f32 %v5924, %v6053
      %v6055 = vpop.f32.mrb[0].mxu0
      %6056 = vmatprep.mubr.f32.mxu0 0.0
      %6057 = vmatmul.mubr.f32.gmra.mrb[0].mxu0 %v3987
      %v6058 = vpop.f32.mrb[0].mxu0
      %v6059 = vadd.f32 %v5929, %v6058
      %v6060 = vpop.f32.mrb[0].mxu0
      %6061 = vmatprep.mubr.f32.mxu0 0.0
      %6062 = vmatmul.mubr.f32.gmra.mrb[0].mxu0 %v3992
      %v6063 = vpop.f32.mrb[0].mxu0
      %v6064 = vadd.f32 %v5934, %v6063
      %v6065 = vpop.f32.mrb[0].mxu0
      %6066 = vmatprep.mubr.f32.mxu0 0.0
      %6067 = vmatmul.mubr.f32.gmra.mrb[0].mxu0 %v3997
      %v6068 = vpop.f32.mrb[0].mxu0
      %v6069 = vadd.f32 %v5939, %v6068
      %v6070 = vpop.f32.mrb[0].mxu0
      %6071 = vmatprep.mubr.f32.mxu0 0.0
      %6072 = vmatmul.mubr.f32.gmra.mrb[0].mxu0 %v4002
      %v6073 = vpop.f32.mrb[0].mxu0
      %v6074 = vadd.f32 %v5944, %v6073
      %v6075 = vpop.f32.mrb[0].mxu0
      %6076 = vdwg.mxu0
      %v6077 = vadd.f32 %v5050, %v5741
      %v6078 = vadd.f32 %v5052, %v5743
      %v6079 = vadd.f32 %v5323, %v6014
      %v6080 = vadd.f32 %v5056, %v5747
      %v6081 = vadd.f32 %v5058, %v5749
      %v6082 = vadd.f32 %v5328, %v6019
      %v6083 = vadd.f32 %v5062, %v5753
      %v6084 = vadd.f32 %v5064, %v5755
      %v6085 = vadd.f32 %v5333, %v6024
      %v6086 = vadd.f32 %v5068, %v5759
      %v6087 = vadd.f32 %v5070, %v5761
      %v6088 = vadd.f32 %v5338, %v6029
      %v6089 = vadd.f32 %v5074, %v5765
      %v6090 = vadd.f32 %v5076, %v5767
      %v6091 = vadd.f32 %v5343, %v6034
      %v6092 = vadd.f32 %v5080, %v5771
      %v6093 = vadd.f32 %v5082, %v5773
      %v6094 = vadd.f32 %v5348, %v6039
      %v6095 = vadd.f32 %v5086, %v5777
      %v6096 = vadd.f32 %v5088, %v5779
      %v6097 = vadd.f32 %v5353, %v6044
      %v6098 = vadd.f32 %v5092, %v5783
      %v6099 = vadd.f32 %v5094, %v5785
      %v6100 = vadd.f32 %v5358, %v6049
      %v6101 = vadd.f32 %v5098, %v5789
      %v6102 = vadd.f32 %v5100, %v5791
      %v6103 = vadd.f32 %v5363, %v6054
      %v6104 = vadd.f32 %v5104, %v5795
      %v6105 = vadd.f32 %v5106, %v5797
      %v6106 = vadd.f32 %v5368, %v6059
      %v6107 = vadd.f32 %v5110, %v5801
      %v6108 = vadd.f32 %v5112, %v5803
      %v6109 = vadd.f32 %v5373, %v6064
      %v6110 = vadd.f32 %v5116, %v5807
      %v6111 = vadd.f32 %v5118, %v5809
      %v6112 = vadd.f32 %v5378, %v6069
      %v6113 = vadd.f32 %v5122, %v5813
      %v6114 = vadd.f32 %v5124, %v5815
      %v6115 = vadd.f32 %v5383, %v6074
      %v6116 = vld [vmem:[%s4] sm:$0x7]
      %v6118 = vlaneseq
      %v6119 = vshrl.u32 %v6118, 7
      %v6120 = vsub.s32 0, %v6119
      %v6121 = vrot.slane %v6116, %v6120
      %v6122 = vlaneseq
      %v6123 = vshrl.u32 %v6122, 7
      %v6124 = vsub.s32 1, %v6123
      %v6125 = vrot.slane %v6116, %v6124
      %v6126 = vlaneseq
      %v6127 = vshrl.u32 %v6126, 7
      %v6128 = vsub.s32 2, %v6127
      %v6129 = vrot.slane %v6116, %v6128
      %v6133 = vadd.f32 %v6077, %v6121
      %v6134 = vadd.f32 %v6078, %v6125
      %v6135 = vadd.f32 %v6079, %v6129
      %v6136 = vadd.f32 %v6080, %v6121
      %v6137 = vadd.f32 %v6081, %v6125
      %v6138 = vadd.f32 %v6082, %v6129
      %v6139 = vadd.f32 %v6083, %v6121
      %v6140 = vadd.f32 %v6084, %v6125
      %v6141 = vadd.f32 %v6085, %v6129
      %v6142 = vadd.f32 %v6086, %v6121
      %v6143 = vadd.f32 %v6087, %v6125
      %v6144 = vadd.f32 %v6088, %v6129
      %v6145 = vadd.f32 %v6089, %v6121
      %v6146 = vadd.f32 %v6090, %v6125
      %v6147 = vadd.f32 %v6091, %v6129
      %v6148 = vadd.f32 %v6092, %v6121
      %v6149 = vadd.f32 %v6093, %v6125
      %v6150 = vadd.f32 %v6094, %v6129
      %v6151 = vadd.f32 %v6095, %v6121
      %v6152 = vadd.f32 %v6096, %v6125
      %v6153 = vadd.f32 %v6097, %v6129
      %v6154 = vadd.f32 %v6098, %v6121
      %v6155 = vadd.f32 %v6099, %v6125
      %v6156 = vadd.f32 %v6100, %v6129
      %v6157 = vadd.f32 %v6101, %v6121
      %v6158 = vadd.f32 %v6102, %v6125
      %v6159 = vadd.f32 %v6103, %v6129
      %v6160 = vadd.f32 %v6104, %v6121
      %v6161 = vadd.f32 %v6105, %v6125
      %v6162 = vadd.f32 %v6106, %v6129
      %v6163 = vadd.f32 %v6107, %v6121
      %v6164 = vadd.f32 %v6108, %v6125
      %v6165 = vadd.f32 %v6109, %v6129
      %v6166 = vadd.f32 %v6110, %v6121
      %v6167 = vadd.f32 %v6111, %v6125
      %v6168 = vadd.f32 %v6112, %v6129
      %v6169 = vadd.f32 %v6113, %v6121
      %v6170 = vadd.f32 %v6114, %v6125
      %v6171 = vadd.f32 %v6115, %v6129
      %v6172 = vtanh.pop %v6133
      %v6173 = vtanh.pop %v6134
      %v6174 = vtanh.pop %v6135
      %v6175 = vtanh.pop %v6136
      %v6176 = vtanh.pop %v6137
      %v6177 = vtanh.pop %v6138
      %v6178 = vtanh.pop %v6139
      %v6179 = vtanh.pop %v6140
      %v6180 = vtanh.pop %v6141
      %v6181 = vtanh.pop %v6142
      %v6182 = vtanh.pop %v6143
      %v6183 = vtanh.pop %v6144
      %v6184 = vtanh.pop %v6145
      %v6185 = vtanh.pop %v6146
      %v6186 = vtanh.pop %v6147
      %v6187 = vtanh.pop %v6148
      %v6188 = vtanh.pop %v6149
      %v6189 = vtanh.pop %v6150
      %v6190 = vtanh.pop %v6151
      %v6191 = vtanh.pop %v6152
      %v6192 = vtanh.pop %v6153
      %v6193 = vtanh.pop %v6154
      %v6194 = vtanh.pop %v6155
      %v6195 = vtanh.pop %v6156
      %v6196 = vtanh.pop %v6157
      %v6197 = vtanh.pop %v6158
      %v6198 = vtanh.pop %v6159
      %v6199 = vtanh.pop %v6160
      %v6200 = vtanh.pop %v6161
      %v6201 = vtanh.pop %v6162
      %v6202 = vtanh.pop %v6163
      %v6203 = vtanh.pop %v6164
      %v6204 = vtanh.pop %v6165
      %v6205 = vtanh.pop %v6166
      %v6206 = vtanh.pop %v6167
      %v6207 = vtanh.pop %v6168
      %v6208 = vtanh.pop %v6169
      %v6209 = vtanh.pop %v6170
      %v6210 = vtanh.pop %v6171
      %6211 = vxpose.xlu0.b32.start [1/16] %v6172, 128
      %6212 = vxpose.xlu0.b32.cont [2/16] %v6175, 128
      %6213 = vxpose.xlu0.b32.cont [3/16] %v6178, 128
      %6214 = vxpose.xlu0.b32.cont [4/16] %v6181, 128
      %6215 = vxpose.xlu0.b32.cont [5/16] %v6184, 128
      %6216 = vxpose.xlu0.b32.cont [6/16] %v6187, 128
      %6217 = vxpose.xlu0.b32.cont [7/16] %v6190, 128
      %6218 = vxpose.xlu0.b32.cont [8/16] %v6193, 128
      %6219 = vxpose.xlu0.b32.cont [9/16] %v6196, 128
      %6220 = vxpose.xlu0.b32.cont [10/16] %v6199, 128
      %6221 = vxpose.xlu0.b32.cont [11/16] %v6202, 128
      %6222 = vxpose.xlu0.b32.cont [12/16] %v6205, 128
      %6223 = vxpose.xlu0.b32.cont [13/16] %v6208, 128
      %6224 = vxpose.xlu0.b32.cont [14/16] 0.0, 128
      %6225 = vxpose.xlu0.b32.cont [15/16] 0.0, 128
      %6226 = vxpose.xlu0.b32.end [16/16] 0.0, 128
      %v6227 = vpop.trf.xlu0
      %v6228 = vpop.trf.xlu0
      %v6229 = vpop.trf.xlu0
      %v6230 = vpop.trf.xlu0
      %v6231 = vpop.trf.xlu0
      %v6232 = vpop.trf.xlu0
      %v6233 = vpop.trf.xlu0
      %v6234 = vpop.trf.xlu0
      %v6235 = vpop.trf.xlu0
      %v6236 = vpop.trf.xlu0
      %v6237 = vpop.trf.xlu0
      %v6238 = vpop.trf.xlu0
      %v6239 = vpop.trf.xlu0
      %v6240 = vpop.trf.xlu0
      %v6241 = vpop.trf.xlu0
      %v6242 = vpop.trf.xlu0
      %6243 = vxpose.xlu0.b32.start [1/16] %v6173, 128
      %6244 = vxpose.xlu0.b32.cont [2/16] %v6176, 128
      %6245 = vxpose.xlu0.b32.cont [3/16] %v6179, 128
      %6246 = vxpose.xlu0.b32.cont [4/16] %v6182, 128
      %6247 = vxpose.xlu0.b32.cont [5/16] %v6185, 128
      %6248 = vxpose.xlu0.b32.cont [6/16] %v6188, 128
      %6249 = vxpose.xlu0.b32.cont [7/16] %v6191, 128
      %6250 = vxpose.xlu0.b32.cont [8/16] %v6194, 128
      %6251 = vxpose.xlu0.b32.cont [9/16] %v6197, 128
      %6252 = vxpose.xlu0.b32.cont [10/16] %v6200, 128
      %6253 = vxpose.xlu0.b32.cont [11/16] %v6203, 128
      %6254 = vxpose.xlu0.b32.cont [12/16] %v6206, 128
      %6255 = vxpose.xlu0.b32.cont [13/16] %v6209, 128
      %6256 = vxpose.xlu0.b32.cont [14/16] 0.0, 128
      %6257 = vxpose.xlu0.b32.cont [15/16] 0.0, 128
      %6258 = vxpose.xlu0.b32.end [16/16] 0.0, 128
      %v6259 = vpop.trf.xlu0
      %v6260 = vpop.trf.xlu0
      %v6261 = vpop.trf.xlu0
      %v6262 = vpop.trf.xlu0
      %v6263 = vpop.trf.xlu0
      %v6264 = vpop.trf.xlu0
      %v6265 = vpop.trf.xlu0
      %v6266 = vpop.trf.xlu0
      %v6267 = vpop.trf.xlu0
      %v6268 = vpop.trf.xlu0
      %v6269 = vpop.trf.xlu0
      %v6270 = vpop.trf.xlu0
      %v6271 = vpop.trf.xlu0
      %v6272 = vpop.trf.xlu0
      %v6273 = vpop.trf.xlu0
      %v6274 = vpop.trf.xlu0
      %6275 = vxpose.xlu0.b32.start [1/16] %v6174, 128
      %6276 = vxpose.xlu0.b32.cont [2/16] %v6177, 128
      %6277 = vxpose.xlu0.b32.cont [3/16] %v6180, 128
      %6278 = vxpose.xlu0.b32.cont [4/16] %v6183, 128
      %6279 = vxpose.xlu0.b32.cont [5/16] %v6186, 128
      %6280 = vxpose.xlu0.b32.cont [6/16] %v6189, 128
      %6281 = vxpose.xlu0.b32.cont [7/16] %v6192, 128
      %6282 = vxpose.xlu0.b32.cont [8/16] %v6195, 128
      %6283 = vxpose.xlu0.b32.cont [9/16] %v6198, 128
      %6284 = vxpose.xlu0.b32.cont [10/16] %v6201, 128
      %6285 = vxpose.xlu0.b32.cont [11/16] %v6204, 128
      %6286 = vxpose.xlu0.b32.cont [12/16] %v6207, 128
      %6287 = vxpose.xlu0.b32.cont [13/16] %v6210, 128
      %6288 = vxpose.xlu0.b32.cont [14/16] 0.0, 128
      %6289 = vxpose.xlu0.b32.cont [15/16] 0.0, 128
      %6290 = vxpose.xlu0.b32.end [16/16] 0.0, 128
      %v6291 = vpop.trf.xlu0
      %v6292 = vpop.trf.xlu0
      %v6293 = vpop.trf.xlu0
      %v6294 = vpop.trf.xlu0
      %v6295 = vpop.trf.xlu0
      %v6296 = vpop.trf.xlu0
      %v6297 = vpop.trf.xlu0
      %v6298 = vpop.trf.xlu0
      %v6299 = vpop.trf.xlu0
      %v6300 = vpop.trf.xlu0
      %v6301 = vpop.trf.xlu0
      %v6302 = vpop.trf.xlu0
      %v6303 = vpop.trf.xlu0
      %v6304 = vpop.trf.xlu0
      %v6305 = vpop.trf.xlu0
      %v6306 = vpop.trf.xlu0
      loop: start=0, step=1, limit=4
      $region53: #{model_forward.3} parent=51 // loop_pre_header
        _
      $region54: #{model_forward.3} parent=51 // loop_header
        %s6308 = sphi 0, %s6312
        %p6309 = scmp.ge.s32.totalorder %s6308, 4
        %v6313 = vphi 0.0, %v7950
        %v6314 = vphi 0.0, %v7951
        %v6315 = vphi 0.0, %v7952
        %v6316 = vphi 0.0, %v7953
        %v6317 = vphi 0.0, %v7954
        %v6318 = vphi 0.0, %v7955
        %v6319 = vphi 0.0, %v7956
        %v6320 = vphi 0.0, %v7957
        %v6321 = vphi 0.0, %v7958
        %v6322 = vphi 0.0, %v7959
        %v6323 = vphi 0.0, %v7960
        %v6324 = vphi 0.0, %v7961
        %v6325 = vphi 0.0, %v7962
        %v6326 = vphi 0.0, %v7963
        %v6327 = vphi 0.0, %v7964
        %v6328 = vphi 0.0, %v7965
        %v6329 = vphi 0.0, %v7966
        %v6330 = vphi 0.0, %v7967
        %v6331 = vphi 0.0, %v7968
        %v6332 = vphi 0.0, %v7969
        %v6333 = vphi 0.0, %v7970
        %v6334 = vphi 0.0, %v7971
        %v6335 = vphi 0.0, %v7972
        %v6336 = vphi 0.0, %v7973
        %v6337 = vphi 0.0, %v7974
        %v6338 = vphi 0.0, %v7975
        %v6339 = vphi 0.0, %v7976
        %v6340 = vphi 0.0, %v7977
        %v6341 = vphi 0.0, %v7978
        %v6342 = vphi 0.0, %v7979
        %v6343 = vphi 0.0, %v7980
        %v6344 = vphi 0.0, %v7981
        %v6345 = vphi 0.0, %v7982
        %v6346 = vphi 0.0, %v7983
        %v6347 = vphi 0.0, %v7984
        %v6348 = vphi 0.0, %v7985
        %v6349 = vphi 0.0, %v7986
        %v6350 = vphi 0.0, %v7987
        %v6351 = vphi 0.0, %v7988
        %v6352 = vphi 0.0, %v7989
        %v6353 = vphi 0.0, %v7990
        %v6354 = vphi 0.0, %v7991
        %v6355 = vphi 0.0, %v7992
        %v6356 = vphi 0.0, %v7993
        %v6357 = vphi 0.0, %v7994
        %v6358 = vphi 0.0, %v7995
        %v6359 = vphi 0.0, %v7996
        %v6360 = vphi 0.0, %v7997
      $region55: #{model_forward.3} parent=51 // loop_header_branch
        %6311 = sbr.rel (%p6309) target = $region59
      $region56: #{model_forward.3} parent=51 // loop_body
        %s6361 = smul.u32 %s6308, 512
        %s6362 = sshra.s32 %s6361, 7
        %s6363 = sand.u32 %s6361, 127
        %s6364 = smul.addr %s6362, 8
        %s6365 = scalar_lea.vmem %s5, %s6364
        %v6366 = vld [vmem:[%s6365] sm:$0xff]
        %v6367 = vld [vmem:[%s6365 + $0x8] sm:$0xff]
        %v6368 = vld [vmem:[%s6365 + $0x10] sm:$0xff]
        %v6369 = vld [vmem:[%s6365 + $0x18] sm:$0xff]
        %v6370 = vld [vmem:[%s6365 + $0x80] sm:$0xff]
        %v6371 = vld [vmem:[%s6365 + $0x88] sm:$0xff]
        %v6372 = vld [vmem:[%s6365 + $0x90] sm:$0xff]
        %v6373 = vld [vmem:[%s6365 + $0x98] sm:$0xff]
        %v6374 = vld [vmem:[%s6365 + $0x100] sm:$0xff]
        %v6375 = vld [vmem:[%s6365 + $0x108] sm:$0xff]
        %v6376 = vld [vmem:[%s6365 + $0x110] sm:$0xff]
        %v6377 = vld [vmem:[%s6365 + $0x118] sm:$0xff]
        %v6378 = vld [vmem:[%s6365 + $0x180] sm:$0xff]
        %v6379 = vld [vmem:[%s6365 + $0x188] sm:$0xff]
        %v6380 = vld [vmem:[%s6365 + $0x190] sm:$0xff]
        %v6381 = vld [vmem:[%s6365 + $0x198] sm:$0xff]
        %v6382 = vld [vmem:[%s6365 + $0x200] sm:$0xff]
        %v6383 = vld [vmem:[%s6365 + $0x208] sm:$0xff]
        %v6384 = vld [vmem:[%s6365 + $0x210] sm:$0xff]
        %v6385 = vld [vmem:[%s6365 + $0x218] sm:$0xff]
        %v6386 = vld [vmem:[%s6365 + $0x280] sm:$0xff]
        %v6387 = vld [vmem:[%s6365 + $0x288] sm:$0xff]
        %v6388 = vld [vmem:[%s6365 + $0x290] sm:$0xff]
        %v6389 = vld [vmem:[%s6365 + $0x298] sm:$0xff]
        %v6390 = vld [vmem:[%s6365 + $0x300] sm:$0xff]
        %v6391 = vld [vmem:[%s6365 + $0x308] sm:$0xff]
        %v6392 = vld [vmem:[%s6365 + $0x310] sm:$0xff]
        %v6393 = vld [vmem:[%s6365 + $0x318] sm:$0xff]
        %v6394 = vld [vmem:[%s6365 + $0x380] sm:$0xff]
        %v6395 = vld [vmem:[%s6365 + $0x388] sm:$0xff]
        %v6396 = vld [vmem:[%s6365 + $0x390] sm:$0xff]
        %v6397 = vld [vmem:[%s6365 + $0x398] sm:$0xff]
        %v6398 = vld [vmem:[%s6365 + $0x400] sm:$0xff]
        %v6399 = vld [vmem:[%s6365 + $0x408] sm:$0xff]
        %v6400 = vld [vmem:[%s6365 + $0x410] sm:$0xff]
        %v6401 = vld [vmem:[%s6365 + $0x418] sm:$0xff]
        %v6402 = vld [vmem:[%s6365 + $0x480] sm:$0xff]
        %v6403 = vld [vmem:[%s6365 + $0x488] sm:$0xff]
        %v6404 = vld [vmem:[%s6365 + $0x490] sm:$0xff]
        %v6405 = vld [vmem:[%s6365 + $0x498] sm:$0xff]
        %v6406 = vld [vmem:[%s6365 + $0x500] sm:$0xff]
        %v6407 = vld [vmem:[%s6365 + $0x508] sm:$0xff]
        %v6408 = vld [vmem:[%s6365 + $0x510] sm:$0xff]
        %v6409 = vld [vmem:[%s6365 + $0x518] sm:$0xff]
        %v6410 = vld [vmem:[%s6365 + $0x580] sm:$0xff]
        %v6411 = vld [vmem:[%s6365 + $0x588] sm:$0xff]
        %v6412 = vld [vmem:[%s6365 + $0x590] sm:$0xff]
        %v6413 = vld [vmem:[%s6365 + $0x598] sm:$0xff]
        %v6414 = vld [vmem:[%s6365 + $0x600] sm:$0xf]
        %v6415 = vld [vmem:[%s6365 + $0x608] sm:$0xf]
        %v6416 = vld [vmem:[%s6365 + $0x610] sm:$0xf]
        %v6417 = vld [vmem:[%s6365 + $0x618] sm:$0xf]
        %s6418 = scalar_lea.vmem %s6, %s6362
        %v6419 = vld [vmem:[%s6418] sm:$0xf]
        %v6421 = vlaneseq
        %v6422 = vshrl.u32 %v6421, 7
        %v6423 = vsub.s32 0, %v6422
        %v6424 = vrot.slane %v6419, %v6423
        %v6425 = vlaneseq
        %v6426 = vshrl.u32 %v6425, 7
        %v6427 = vsub.s32 1, %v6426
        %v6428 = vrot.slane %v6419, %v6427
        %v6429 = vlaneseq
        %v6430 = vshrl.u32 %v6429, 7
        %v6431 = vsub.s32 2, %v6430
        %v6432 = vrot.slane %v6419, %v6431
        %v6433 = vlaneseq
        %v6434 = vshrl.u32 %v6433, 7
        %v6435 = vsub.s32 3, %v6434
        %v6436 = vrot.slane %v6419, %v6435
        %v6442 = vsel %vm453, %v6227, 0
        %v6445 = vsel %vm453, %v6228, 0
        %v6448 = vsel %vm453, %v6229, 0
        %v6451 = vsel %vm453, %v6230, 0
        %v6454 = vsel %vm453, %v6231, 0
        %v6457 = vsel %vm453, %v6232, 0
        %v6460 = vsel %vm453, %v6233, 0
        %v6463 = vsel %vm453, %v6234, 0
        %v6466 = vsel %vm453, %v6235, 0
        %v6469 = vsel %vm453, %v6236, 0
        %v6472 = vsel %vm453, %v6237, 0
        %v6475 = vsel %vm453, %v6238, 0
        %v6478 = vsel %vm453, %v6239, 0
        %v6481 = vsel %vm453, %v6240, 0
        %v6484 = vsel %vm453, %v6241, 0
        %v6487 = vsel %vm453, %v6242, 0
        %v6490 = vsel %vm453, %v6259, 0
        %v6493 = vsel %vm453, %v6260, 0
        %v6496 = vsel %vm453, %v6261, 0
        %v6499 = vsel %vm453, %v6262, 0
        %v6502 = vsel %vm453, %v6263, 0
        %v6505 = vsel %vm453, %v6264, 0
        %v6508 = vsel %vm453, %v6265, 0
        %v6511 = vsel %vm453, %v6266, 0
        %v6514 = vsel %vm453, %v6267, 0
        %v6517 = vsel %vm453, %v6268, 0
        %v6520 = vsel %vm453, %v6269, 0
        %v6523 = vsel %vm453, %v6270, 0
        %v6526 = vsel %vm453, %v6271, 0
        %v6529 = vsel %vm453, %v6272, 0
        %v6532 = vsel %vm453, %v6273, 0
        %v6535 = vsel %vm453, %v6274, 0
        %v6538 = vsel %vm453, %v6291, 0
        %v6541 = vsel %vm453, %v6292, 0
        %v6544 = vsel %vm453, %v6293, 0
        %v6547 = vsel %vm453, %v6294, 0
        %v6550 = vsel %vm453, %v6295, 0
        %v6553 = vsel %vm453, %v6296, 0
        %v6556 = vsel %vm453, %v6297, 0
        %v6559 = vsel %vm453, %v6298, 0
        %v6562 = vsel %vm453, %v6299, 0
        %v6565 = vsel %vm453, %v6300, 0
        %v6568 = vsel %vm453, %v6301, 0
        %v6571 = vsel %vm453, %v6302, 0
        %v6574 = vsel %vm453, %v6303, 0
        %v6577 = vsel %vm453, %v6304, 0
        %v6580 = vsel %vm453, %v6305, 0
        %v6583 = vsel %vm453, %v6306, 0
        %v6586 = vsel %vm493, %v6414, 0
        %v6589 = vsel %vm493, %v6415, 0
        %v6592 = vsel %vm493, %v6416, 0
        %v6595 = vsel %vm493, %v6417, 0
        %6597 = vmatprep.subr.mxu0 %v6367
        %6598 = vmatpush1.msra.mxu0 %v6366
        %6599 = vmatprep.subr.mxu0 %v6371
        %6600 = vmatpush1.msra.mxu0 %v6370
        %6601 = vmatprep.subr.mxu0 %v6375
        %6602 = vmatpush1.msra.mxu0 %v6374
        %6603 = vmatprep.subr.mxu0 %v6379
        %6604 = vmatpush1.msra.mxu0 %v6378
        %6605 = vmatprep.subr.mxu0 %v6383
        %6606 = vmatpush1.msra.mxu0 %v6382
        %6607 = vmatprep.subr.mxu0 %v6387
        %6608 = vmatpush1.msra.mxu0 %v6386
        %6609 = vmatprep.subr.mxu0 %v6391
        %6610 = vmatpush1.msra.mxu0 %v6390
        %6611 = vmatprep.subr.mxu0 %v6395
        %6612 = vmatpush1.msra.mxu0 %v6394
        %6613 = vmatprep.subr.mxu0 %v6399
        %6614 = vmatpush1.msra.mxu0 %v6398
        %6615 = vmatprep.subr.mxu0 %v6403
        %6616 = vmatpush1.msra.mxu0 %v6402
        %6617 = vmatprep.subr.mxu0 %v6407
        %6618 = vmatpush1.msra.mxu0 %v6406
        %6619 = vmatprep.subr.mxu0 %v6411
        %6620 = vmatpush1.msra.mxu0 %v6410
        %6621 = vmatprep.subr.mxu0 %v6589
        %6622 = vmatpush1.msra.mxu0 %v6586
        %6623 = vmatprep.subr.mxu0 0.0
        %6624 = vmatpush1.msra.mxu0 0.0
        %6625 = vmatprep.subr.mxu0 0.0
        %6626 = vmatpush1.msra.mxu0 0.0
        %6627 = vmatprep.subr.mxu0 0.0
        %6628 = vmatpush1.msra.mxu0 0.0
        %6629 = vmatprep.subr.mxu0 0.0
        %6630 = vmatpush1.msra.mxu0 0.0
        %6631 = vmatprep.subr.mxu0 0.0
        %6632 = vmatpush1.msra.mxu0 0.0
        %6633 = vmatprep.subr.mxu0 0.0
        %6634 = vmatpush1.msra.mxu0 0.0
        %6635 = vmatprep.subr.mxu0 0.0
        %6636 = vmatpush1.msra.mxu0 0.0
        %6637 = vmatprep.subr.mxu0 0.0
        %6638 = vmatpush1.msra.mxu0 0.0
        %6639 = vmatprep.subr.mxu0 0.0
        %6640 = vmatpush1.msra.mxu0 0.0
        %6641 = vmatprep.subr.mxu0 0.0
        %6642 = vmatpush1.msra.mxu0 0.0
        %6643 = vmatprep.subr.mxu0 0.0
        %6644 = vmatpush1.msra.mxu0 0.0
        %6645 = vmatprep.subr.mxu0 0.0
        %6646 = vmatpush1.msra.mxu0 0.0
        %6647 = vmatprep.subr.mxu0 0.0
        %6648 = vmatpush1.msra.mxu0 0.0
        %6649 = vmatprep.subr.mxu0 0.0
        %6650 = vmatpush1.msra.mxu0 0.0
        %6651 = vmatprep.subr.mxu0 0.0
        %6652 = vmatpush1.msra.mxu0 0.0
        %6653 = vmatprep.subr.mxu0 0.0
        %6654 = vmatpush1.msra.mxu0 0.0
        %6655 = vmatprep.subr.mxu0 0.0
        %6656 = vmatpush1.msra.mxu0 0.0
        %6657 = vmatprep.subr.mxu0 0.0
        %6658 = vmatpush1.msra.mxu0 0.0
        %6659 = vmatprep.subr.mxu0 0.0
        %6660 = vmatpush1.msra.mxu0 0.0
        %6661 = vmatprep.mubr.f32.mxu0 0.0
        %6662 = vmatmul.mubr.f32.gmra.mrb[0].mxu0 %v6442
        %v6663 = vpop.f32.mrb[0].mxu0
        %v6664 = vadd.f32 %v6424, %v6663
        %v6665 = vpop.f32.mrb[0].mxu0
        %v6666 = vadd.f32 %v6428, %v6665
        %6667 = vmatprep.mubr.f32.mxu0 0.0
        %6668 = vmatmul.mubr.f32.gmra.mrb[0].mxu0 %v6445
        %v6669 = vpop.f32.mrb[0].mxu0
        %v6670 = vadd.f32 %v6424, %v6669
        %v6671 = vpop.f32.mrb[0].mxu0
        %v6672 = vadd.f32 %v6428, %v6671
        %6673 = vmatprep.mubr.f32.mxu0 0.0
        %6674 = vmatmul.mubr.f32.gmra.mrb[0].mxu0 %v6448
        %v6675 = vpop.f32.mrb[0].mxu0
        %v6676 = vadd.f32 %v6424, %v6675
        %v6677 = vpop.f32.mrb[0].mxu0
        %v6678 = vadd.f32 %v6428, %v6677
        %6679 = vmatprep.mubr.f32.mxu0 0.0
        %6680 = vmatmul.mubr.f32.gmra.mrb[0].mxu0 %v6451
        %v6681 = vpop.f32.mrb[0].mxu0
        %v6682 = vadd.f32 %v6424, %v6681
        %v6683 = vpop.f32.mrb[0].mxu0
        %v6684 = vadd.f32 %v6428, %v6683
        %6685 = vmatprep.mubr.f32.mxu0 0.0
        %6686 = vmatmul.mubr.f32.gmra.mrb[0].mxu0 %v6454
        %v6687 = vpop.f32.mrb[0].mxu0
        %v6688 = vadd.f32 %v6424, %v6687
        %v6689 = vpop.f32.mrb[0].mxu0
        %v6690 = vadd.f32 %v6428, %v6689
        %6691 = vmatprep.mubr.f32.mxu0 0.0
        %6692 = vmatmul.mubr.f32.gmra.mrb[0].mxu0 %v6457
        %v6693 = vpop.f32.mrb[0].mxu0
        %v6694 = vadd.f32 %v6424, %v6693
        %v6695 = vpop.f32.mrb[0].mxu0
        %v6696 = vadd.f32 %v6428, %v6695
        %6697 = vmatprep.mubr.f32.mxu0 0.0
        %6698 = vmatmul.mubr.f32.gmra.mrb[0].mxu0 %v6460
        %v6699 = vpop.f32.mrb[0].mxu0
        %v6700 = vadd.f32 %v6424, %v6699
        %v6701 = vpop.f32.mrb[0].mxu0
        %v6702 = vadd.f32 %v6428, %v6701
        %6703 = vmatprep.mubr.f32.mxu0 0.0
        %6704 = vmatmul.mubr.f32.gmra.mrb[0].mxu0 %v6463
        %v6705 = vpop.f32.mrb[0].mxu0
        %v6706 = vadd.f32 %v6424, %v6705
        %v6707 = vpop.f32.mrb[0].mxu0
        %v6708 = vadd.f32 %v6428, %v6707
        %6709 = vmatprep.mubr.f32.mxu0 0.0
        %6710 = vmatmul.mubr.f32.gmra.mrb[0].mxu0 %v6466
        %v6711 = vpop.f32.mrb[0].mxu0
        %v6712 = vadd.f32 %v6424, %v6711
        %v6713 = vpop.f32.mrb[0].mxu0
        %v6714 = vadd.f32 %v6428, %v6713
        %6715 = vmatprep.mubr.f32.mxu0 0.0
        %6716 = vmatmul.mubr.f32.gmra.mrb[0].mxu0 %v6469
        %v6717 = vpop.f32.mrb[0].mxu0
        %v6718 = vadd.f32 %v6424, %v6717
        %v6719 = vpop.f32.mrb[0].mxu0
        %v6720 = vadd.f32 %v6428, %v6719
        %6721 = vmatprep.mubr.f32.mxu0 0.0
        %6722 = vmatmul.mubr.f32.gmra.mrb[0].mxu0 %v6472
        %v6723 = vpop.f32.mrb[0].mxu0
        %v6724 = vadd.f32 %v6424, %v6723
        %v6725 = vpop.f32.mrb[0].mxu0
        %v6726 = vadd.f32 %v6428, %v6725
        %6727 = vmatprep.mubr.f32.mxu0 0.0
        %6728 = vmatmul.mubr.f32.gmra.mrb[0].mxu0 %v6475
        %v6729 = vpop.f32.mrb[0].mxu0
        %v6730 = vadd.f32 %v6424, %v6729
        %v6731 = vpop.f32.mrb[0].mxu0
        %v6732 = vadd.f32 %v6428, %v6731
        %6733 = vmatprep.mubr.f32.mxu0 0.0
        %6734 = vmatmul.mubr.f32.gmra.mrb[0].mxu0 %v6478
        %v6735 = vpop.f32.mrb[0].mxu0
        %v6736 = vadd.f32 %v6424, %v6735
        %v6737 = vpop.f32.mrb[0].mxu0
        %v6738 = vadd.f32 %v6428, %v6737
        %6739 = vmatprep.mubr.f32.mxu0 0.0
        %6740 = vmatmul.mubr.f32.gmra.mrb[0].mxu0 %v6481
        %v6741 = vpop.f32.mrb[0].mxu0
        %v6742 = vadd.f32 %v6424, %v6741
        %v6743 = vpop.f32.mrb[0].mxu0
        %v6744 = vadd.f32 %v6428, %v6743
        %6745 = vmatprep.mubr.f32.mxu0 0.0
        %6746 = vmatmul.mubr.f32.gmra.mrb[0].mxu0 %v6484
        %v6747 = vpop.f32.mrb[0].mxu0
        %v6748 = vadd.f32 %v6424, %v6747
        %v6749 = vpop.f32.mrb[0].mxu0
        %v6750 = vadd.f32 %v6428, %v6749
        %6751 = vmatprep.mubr.f32.mxu0 0.0
        %6752 = vmatmul.mubr.f32.gmra.mrb[0].mxu0 %v6487
        %v6753 = vpop.f32.mrb[0].mxu0
        %v6754 = vadd.f32 %v6424, %v6753
        %v6755 = vpop.f32.mrb[0].mxu0
        %v6756 = vadd.f32 %v6428, %v6755
        %6757 = vmatprep.mubr.f32.mxu0 0.0
        %6758 = vmatmul.mubr.f32.gmra.mrb[0].mxu0 %v6490
        %v6759 = vpop.f32.mrb[0].mxu0
        %v6760 = vadd.f32 %v6424, %v6759
        %v6761 = vpop.f32.mrb[0].mxu0
        %v6762 = vadd.f32 %v6428, %v6761
        %6763 = vmatprep.mubr.f32.mxu0 0.0
        %6764 = vmatmul.mubr.f32.gmra.mrb[0].mxu0 %v6493
        %v6765 = vpop.f32.mrb[0].mxu0
        %v6766 = vadd.f32 %v6424, %v6765
        %v6767 = vpop.f32.mrb[0].mxu0
        %v6768 = vadd.f32 %v6428, %v6767
        %6769 = vmatprep.mubr.f32.mxu0 0.0
        %6770 = vmatmul.mubr.f32.gmra.mrb[0].mxu0 %v6496
        %v6771 = vpop.f32.mrb[0].mxu0
        %v6772 = vadd.f32 %v6424, %v6771
        %v6773 = vpop.f32.mrb[0].mxu0
        %v6774 = vadd.f32 %v6428, %v6773
        %6775 = vmatprep.mubr.f32.mxu0 0.0
        %6776 = vmatmul.mubr.f32.gmra.mrb[0].mxu0 %v6499
        %v6777 = vpop.f32.mrb[0].mxu0
        %v6778 = vadd.f32 %v6424, %v6777
        %v6779 = vpop.f32.mrb[0].mxu0
        %v6780 = vadd.f32 %v6428, %v6779
        %6781 = vmatprep.mubr.f32.mxu0 0.0
        %6782 = vmatmul.mubr.f32.gmra.mrb[0].mxu0 %v6502
        %v6783 = vpop.f32.mrb[0].mxu0
        %v6784 = vadd.f32 %v6424, %v6783
        %v6785 = vpop.f32.mrb[0].mxu0
        %v6786 = vadd.f32 %v6428, %v6785
        %6787 = vmatprep.mubr.f32.mxu0 0.0
        %6788 = vmatmul.mubr.f32.gmra.mrb[0].mxu0 %v6505
        %v6789 = vpop.f32.mrb[0].mxu0
        %v6790 = vadd.f32 %v6424, %v6789
        %v6791 = vpop.f32.mrb[0].mxu0
        %v6792 = vadd.f32 %v6428, %v6791
        %6793 = vmatprep.mubr.f32.mxu0 0.0
        %6794 = vmatmul.mubr.f32.gmra.mrb[0].mxu0 %v6508
        %v6795 = vpop.f32.mrb[0].mxu0
        %v6796 = vadd.f32 %v6424, %v6795
        %v6797 = vpop.f32.mrb[0].mxu0
        %v6798 = vadd.f32 %v6428, %v6797
        %6799 = vmatprep.mubr.f32.mxu0 0.0
        %6800 = vmatmul.mubr.f32.gmra.mrb[0].mxu0 %v6511
        %v6801 = vpop.f32.mrb[0].mxu0
        %v6802 = vadd.f32 %v6424, %v6801
        %v6803 = vpop.f32.mrb[0].mxu0
        %v6804 = vadd.f32 %v6428, %v6803
        %6805 = vmatprep.mubr.f32.mxu0 0.0
        %6806 = vmatmul.mubr.f32.gmra.mrb[0].mxu0 %v6514
        %v6807 = vpop.f32.mrb[0].mxu0
        %v6808 = vadd.f32 %v6424, %v6807
        %v6809 = vpop.f32.mrb[0].mxu0
        %v6810 = vadd.f32 %v6428, %v6809
        %6811 = vmatprep.mubr.f32.mxu0 0.0
        %6812 = vmatmul.mubr.f32.gmra.mrb[0].mxu0 %v6517
        %v6813 = vpop.f32.mrb[0].mxu0
        %v6814 = vadd.f32 %v6424, %v6813
        %v6815 = vpop.f32.mrb[0].mxu0
        %v6816 = vadd.f32 %v6428, %v6815
        %6817 = vmatprep.mubr.f32.mxu0 0.0
        %6818 = vmatmul.mubr.f32.gmra.mrb[0].mxu0 %v6520
        %v6819 = vpop.f32.mrb[0].mxu0
        %v6820 = vadd.f32 %v6424, %v6819
        %v6821 = vpop.f32.mrb[0].mxu0
        %v6822 = vadd.f32 %v6428, %v6821
        %6823 = vmatprep.mubr.f32.mxu0 0.0
        %6824 = vmatmul.mubr.f32.gmra.mrb[0].mxu0 %v6523
        %v6825 = vpop.f32.mrb[0].mxu0
        %v6826 = vadd.f32 %v6424, %v6825
        %v6827 = vpop.f32.mrb[0].mxu0
        %v6828 = vadd.f32 %v6428, %v6827
        %6829 = vmatprep.mubr.f32.mxu0 0.0
        %6830 = vmatmul.mubr.f32.gmra.mrb[0].mxu0 %v6526
        %v6831 = vpop.f32.mrb[0].mxu0
        %v6832 = vadd.f32 %v6424, %v6831
        %v6833 = vpop.f32.mrb[0].mxu0
        %v6834 = vadd.f32 %v6428, %v6833
        %6835 = vmatprep.mubr.f32.mxu0 0.0
        %6836 = vmatmul.mubr.f32.gmra.mrb[0].mxu0 %v6529
        %v6837 = vpop.f32.mrb[0].mxu0
        %v6838 = vadd.f32 %v6424, %v6837
        %v6839 = vpop.f32.mrb[0].mxu0
        %v6840 = vadd.f32 %v6428, %v6839
        %6841 = vmatprep.mubr.f32.mxu0 0.0
        %6842 = vmatmul.mubr.f32.gmra.mrb[0].mxu0 %v6532
        %v6843 = vpop.f32.mrb[0].mxu0
        %v6844 = vadd.f32 %v6424, %v6843
        %v6845 = vpop.f32.mrb[0].mxu0
        %v6846 = vadd.f32 %v6428, %v6845
        %6847 = vmatprep.mubr.f32.mxu0 0.0
        %6848 = vmatmul.mubr.f32.gmra.mrb[0].mxu0 %v6535
        %v6849 = vpop.f32.mrb[0].mxu0
        %v6850 = vadd.f32 %v6424, %v6849
        %v6851 = vpop.f32.mrb[0].mxu0
        %v6852 = vadd.f32 %v6428, %v6851
        %6853 = vmatprep.mubr.f32.mxu0 0.0
        %6854 = vmatmul.mubr.f32.gmra.mrb[0].mxu0 %v6538
        %v6855 = vpop.f32.mrb[0].mxu0
        %v6856 = vadd.f32 %v6424, %v6855
        %v6857 = vpop.f32.mrb[0].mxu0
        %v6858 = vadd.f32 %v6428, %v6857
        %6859 = vmatprep.mubr.f32.mxu0 0.0
        %6860 = vmatmul.mubr.f32.gmra.mrb[0].mxu0 %v6541
        %v6861 = vpop.f32.mrb[0].mxu0
        %v6862 = vadd.f32 %v6424, %v6861
        %v6863 = vpop.f32.mrb[0].mxu0
        %v6864 = vadd.f32 %v6428, %v6863
        %6865 = vmatprep.mubr.f32.mxu0 0.0
        %6866 = vmatmul.mubr.f32.gmra.mrb[0].mxu0 %v6544
        %v6867 = vpop.f32.mrb[0].mxu0
        %v6868 = vadd.f32 %v6424, %v6867
        %v6869 = vpop.f32.mrb[0].mxu0
        %v6870 = vadd.f32 %v6428, %v6869
        %6871 = vmatprep.mubr.f32.mxu0 0.0
        %6872 = vmatmul.mubr.f32.gmra.mrb[0].mxu0 %v6547
        %v6873 = vpop.f32.mrb[0].mxu0
        %v6874 = vadd.f32 %v6424, %v6873
        %v6875 = vpop.f32.mrb[0].mxu0
        %v6876 = vadd.f32 %v6428, %v6875
        %6877 = vmatprep.mubr.f32.mxu0 0.0
        %6878 = vmatmul.mubr.f32.gmra.mrb[0].mxu0 %v6550
        %v6879 = vpop.f32.mrb[0].mxu0
        %v6880 = vadd.f32 %v6424, %v6879
        %v6881 = vpop.f32.mrb[0].mxu0
        %v6882 = vadd.f32 %v6428, %v6881
        %6883 = vmatprep.mubr.f32.mxu0 0.0
        %6884 = vmatmul.mubr.f32.gmra.mrb[0].mxu0 %v6553
        %v6885 = vpop.f32.mrb[0].mxu0
        %v6886 = vadd.f32 %v6424, %v6885
        %v6887 = vpop.f32.mrb[0].mxu0
        %v6888 = vadd.f32 %v6428, %v6887
        %6889 = vmatprep.mubr.f32.mxu0 0.0
        %6890 = vmatmul.mubr.f32.gmra.mrb[0].mxu0 %v6556
        %v6891 = vpop.f32.mrb[0].mxu0
        %v6892 = vadd.f32 %v6424, %v6891
        %v6893 = vpop.f32.mrb[0].mxu0
        %v6894 = vadd.f32 %v6428, %v6893
        %6895 = vmatprep.mubr.f32.mxu0 0.0
        %6896 = vmatmul.mubr.f32.gmra.mrb[0].mxu0 %v6559
        %v6897 = vpop.f32.mrb[0].mxu0
        %v6898 = vadd.f32 %v6424, %v6897
        %v6899 = vpop.f32.mrb[0].mxu0
        %v6900 = vadd.f32 %v6428, %v6899
        %6901 = vmatprep.mubr.f32.mxu0 0.0
        %6902 = vmatmul.mubr.f32.gmra.mrb[0].mxu0 %v6562
        %v6903 = vpop.f32.mrb[0].mxu0
        %v6904 = vadd.f32 %v6424, %v6903
        %v6905 = vpop.f32.mrb[0].mxu0
        %v6906 = vadd.f32 %v6428, %v6905
        %6907 = vmatprep.mubr.f32.mxu0 0.0
        %6908 = vmatmul.mubr.f32.gmra.mrb[0].mxu0 %v6565
        %v6909 = vpop.f32.mrb[0].mxu0
        %v6910 = vadd.f32 %v6424, %v6909
        %v6911 = vpop.f32.mrb[0].mxu0
        %v6912 = vadd.f32 %v6428, %v6911
        %6913 = vmatprep.mubr.f32.mxu0 0.0
        %6914 = vmatmul.mubr.f32.gmra.mrb[0].mxu0 %v6568
        %v6915 = vpop.f32.mrb[0].mxu0
        %v6916 = vadd.f32 %v6424, %v6915
        %v6917 = vpop.f32.mrb[0].mxu0
        %v6918 = vadd.f32 %v6428, %v6917
        %6919 = vmatprep.mubr.f32.mxu0 0.0
        %6920 = vmatmul.mubr.f32.gmra.mrb[0].mxu0 %v6571
        %v6921 = vpop.f32.mrb[0].mxu0
        %v6922 = vadd.f32 %v6424, %v6921
        %v6923 = vpop.f32.mrb[0].mxu0
        %v6924 = vadd.f32 %v6428, %v6923
        %6925 = vmatprep.mubr.f32.mxu0 0.0
        %6926 = vmatmul.mubr.f32.gmra.mrb[0].mxu0 %v6574
        %v6927 = vpop.f32.mrb[0].mxu0
        %v6928 = vadd.f32 %v6424, %v6927
        %v6929 = vpop.f32.mrb[0].mxu0
        %v6930 = vadd.f32 %v6428, %v6929
        %6931 = vmatprep.mubr.f32.mxu0 0.0
        %6932 = vmatmul.mubr.f32.gmra.mrb[0].mxu0 %v6577
        %v6933 = vpop.f32.mrb[0].mxu0
        %v6934 = vadd.f32 %v6424, %v6933
        %v6935 = vpop.f32.mrb[0].mxu0
        %v6936 = vadd.f32 %v6428, %v6935
        %6937 = vmatprep.mubr.f32.mxu0 0.0
        %6938 = vmatmul.mubr.f32.gmra.mrb[0].mxu0 %v6580
        %v6939 = vpop.f32.mrb[0].mxu0
        %v6940 = vadd.f32 %v6424, %v6939
        %v6941 = vpop.f32.mrb[0].mxu0
        %v6942 = vadd.f32 %v6428, %v6941
        %6943 = vmatprep.mubr.f32.mxu0 0.0
        %6944 = vmatmul.mubr.f32.gmra.mrb[0].mxu0 %v6583
        %v6945 = vpop.f32.mrb[0].mxu0
        %v6946 = vadd.f32 %v6424, %v6945
        %v6947 = vpop.f32.mrb[0].mxu0
        %v6948 = vadd.f32 %v6428, %v6947
        %6949 = vdwg.mxu0
        %6950 = vmatprep.subr.mxu0 %v6369
        %6951 = vmatpush1.msra.mxu0 %v6368
        %6952 = vmatprep.subr.mxu0 %v6373
        %6953 = vmatpush1.msra.mxu0 %v6372
        %6954 = vmatprep.subr.mxu0 %v6377
        %6955 = vmatpush1.msra.mxu0 %v6376
        %6956 = vmatprep.subr.mxu0 %v6381
        %6957 = vmatpush1.msra.mxu0 %v6380
        %6958 = vmatprep.subr.mxu0 %v6385
        %6959 = vmatpush1.msra.mxu0 %v6384
        %6960 = vmatprep.subr.mxu0 %v6389
        %6961 = vmatpush1.msra.mxu0 %v6388
        %6962 = vmatprep.subr.mxu0 %v6393
        %6963 = vmatpush1.msra.mxu0 %v6392
        %6964 = vmatprep.subr.mxu0 %v6397
        %6965 = vmatpush1.msra.mxu0 %v6396
        %6966 = vmatprep.subr.mxu0 %v6401
        %6967 = vmatpush1.msra.mxu0 %v6400
        %6968 = vmatprep.subr.mxu0 %v6405
        %6969 = vmatpush1.msra.mxu0 %v6404
        %6970 = vmatprep.subr.mxu0 %v6409
        %6971 = vmatpush1.msra.mxu0 %v6408
        %6972 = vmatprep.subr.mxu0 %v6413
        %6973 = vmatpush1.msra.mxu0 %v6412
        %6974 = vmatprep.subr.mxu0 %v6595
        %6975 = vmatpush1.msra.mxu0 %v6592
        %6976 = vmatprep.subr.mxu0 0.0
        %6977 = vmatpush1.msra.mxu0 0.0
        %6978 = vmatprep.subr.mxu0 0.0
        %6979 = vmatpush1.msra.mxu0 0.0
        %6980 = vmatprep.subr.mxu0 0.0
        %6981 = vmatpush1.msra.mxu0 0.0
        %6982 = vmatprep.subr.mxu0 0.0
        %6983 = vmatpush1.msra.mxu0 0.0
        %6984 = vmatprep.subr.mxu0 0.0
        %6985 = vmatpush1.msra.mxu0 0.0
        %6986 = vmatprep.subr.mxu0 0.0
        %6987 = vmatpush1.msra.mxu0 0.0
        %6988 = vmatprep.subr.mxu0 0.0
        %6989 = vmatpush1.msra.mxu0 0.0
        %6990 = vmatprep.subr.mxu0 0.0
        %6991 = vmatpush1.msra.mxu0 0.0
        %6992 = vmatprep.subr.mxu0 0.0
        %6993 = vmatpush1.msra.mxu0 0.0
        %6994 = vmatprep.subr.mxu0 0.0
        %6995 = vmatpush1.msra.mxu0 0.0
        %6996 = vmatprep.subr.mxu0 0.0
        %6997 = vmatpush1.msra.mxu0 0.0
        %6998 = vmatprep.subr.mxu0 0.0
        %6999 = vmatpush1.msra.mxu0 0.0
        %7000 = vmatprep.subr.mxu0 0.0
        %7001 = vmatpush1.msra.mxu0 0.0
        %7002 = vmatprep.subr.mxu0 0.0
        %7003 = vmatpush1.msra.mxu0 0.0
        %7004 = vmatprep.subr.mxu0 0.0
        %7005 = vmatpush1.msra.mxu0 0.0
        %7006 = vmatprep.subr.mxu0 0.0
        %7007 = vmatpush1.msra.mxu0 0.0
        %7008 = vmatprep.subr.mxu0 0.0
        %7009 = vmatpush1.msra.mxu0 0.0
        %7010 = vmatprep.subr.mxu0 0.0
        %7011 = vmatpush1.msra.mxu0 0.0
        %7012 = vmatprep.subr.mxu0 0.0
        %7013 = vmatpush1.msra.mxu0 0.0
        %7014 = vmatprep.mubr.f32.mxu0 0.0
        %7015 = vmatmul.mubr.f32.gmra.mrb[0].mxu0 %v6442
        %v7016 = vpop.f32.mrb[0].mxu0
        %v7017 = vadd.f32 %v6432, %v7016
        %v7018 = vpop.f32.mrb[0].mxu0
        %v7019 = vadd.f32 %v6436, %v7018
        %7020 = vmatprep.mubr.f32.mxu0 0.0
        %7021 = vmatmul.mubr.f32.gmra.mrb[0].mxu0 %v6445
        %v7022 = vpop.f32.mrb[0].mxu0
        %v7023 = vadd.f32 %v6432, %v7022
        %v7024 = vpop.f32.mrb[0].mxu0
        %v7025 = vadd.f32 %v6436, %v7024
        %7026 = vmatprep.mubr.f32.mxu0 0.0
        %7027 = vmatmul.mubr.f32.gmra.mrb[0].mxu0 %v6448
        %v7028 = vpop.f32.mrb[0].mxu0
        %v7029 = vadd.f32 %v6432, %v7028
        %v7030 = vpop.f32.mrb[0].mxu0
        %v7031 = vadd.f32 %v6436, %v7030
        %7032 = vmatprep.mubr.f32.mxu0 0.0
        %7033 = vmatmul.mubr.f32.gmra.mrb[0].mxu0 %v6451
        %v7034 = vpop.f32.mrb[0].mxu0
        %v7035 = vadd.f32 %v6432, %v7034
        %v7036 = vpop.f32.mrb[0].mxu0
        %v7037 = vadd.f32 %v6436, %v7036
        %7038 = vmatprep.mubr.f32.mxu0 0.0
        %7039 = vmatmul.mubr.f32.gmra.mrb[0].mxu0 %v6454
        %v7040 = vpop.f32.mrb[0].mxu0
        %v7041 = vadd.f32 %v6432, %v7040
        %v7042 = vpop.f32.mrb[0].mxu0
        %v7043 = vadd.f32 %v6436, %v7042
        %7044 = vmatprep.mubr.f32.mxu0 0.0
        %7045 = vmatmul.mubr.f32.gmra.mrb[0].mxu0 %v6457
        %v7046 = vpop.f32.mrb[0].mxu0
        %v7047 = vadd.f32 %v6432, %v7046
        %v7048 = vpop.f32.mrb[0].mxu0
        %v7049 = vadd.f32 %v6436, %v7048
        %7050 = vmatprep.mubr.f32.mxu0 0.0
        %7051 = vmatmul.mubr.f32.gmra.mrb[0].mxu0 %v6460
        %v7052 = vpop.f32.mrb[0].mxu0
        %v7053 = vadd.f32 %v6432, %v7052
        %v7054 = vpop.f32.mrb[0].mxu0
        %v7055 = vadd.f32 %v6436, %v7054
        %7056 = vmatprep.mubr.f32.mxu0 0.0
        %7057 = vmatmul.mubr.f32.gmra.mrb[0].mxu0 %v6463
        %v7058 = vpop.f32.mrb[0].mxu0
        %v7059 = vadd.f32 %v6432, %v7058
        %v7060 = vpop.f32.mrb[0].mxu0
        %v7061 = vadd.f32 %v6436, %v7060
        %7062 = vmatprep.mubr.f32.mxu0 0.0
        %7063 = vmatmul.mubr.f32.gmra.mrb[0].mxu0 %v6466
        %v7064 = vpop.f32.mrb[0].mxu0
        %v7065 = vadd.f32 %v6432, %v7064
        %v7066 = vpop.f32.mrb[0].mxu0
        %v7067 = vadd.f32 %v6436, %v7066
        %7068 = vmatprep.mubr.f32.mxu0 0.0
        %7069 = vmatmul.mubr.f32.gmra.mrb[0].mxu0 %v6469
        %v7070 = vpop.f32.mrb[0].mxu0
        %v7071 = vadd.f32 %v6432, %v7070
        %v7072 = vpop.f32.mrb[0].mxu0
        %v7073 = vadd.f32 %v6436, %v7072
        %7074 = vmatprep.mubr.f32.mxu0 0.0
        %7075 = vmatmul.mubr.f32.gmra.mrb[0].mxu0 %v6472
        %v7076 = vpop.f32.mrb[0].mxu0
        %v7077 = vadd.f32 %v6432, %v7076
        %v7078 = vpop.f32.mrb[0].mxu0
        %v7079 = vadd.f32 %v6436, %v7078
        %7080 = vmatprep.mubr.f32.mxu0 0.0
        %7081 = vmatmul.mubr.f32.gmra.mrb[0].mxu0 %v6475
        %v7082 = vpop.f32.mrb[0].mxu0
        %v7083 = vadd.f32 %v6432, %v7082
        %v7084 = vpop.f32.mrb[0].mxu0
        %v7085 = vadd.f32 %v6436, %v7084
        %7086 = vmatprep.mubr.f32.mxu0 0.0
        %7087 = vmatmul.mubr.f32.gmra.mrb[0].mxu0 %v6478
        %v7088 = vpop.f32.mrb[0].mxu0
        %v7089 = vadd.f32 %v6432, %v7088
        %v7090 = vpop.f32.mrb[0].mxu0
        %v7091 = vadd.f32 %v6436, %v7090
        %7092 = vmatprep.mubr.f32.mxu0 0.0
        %7093 = vmatmul.mubr.f32.gmra.mrb[0].mxu0 %v6481
        %v7094 = vpop.f32.mrb[0].mxu0
        %v7095 = vadd.f32 %v6432, %v7094
        %v7096 = vpop.f32.mrb[0].mxu0
        %v7097 = vadd.f32 %v6436, %v7096
        %7098 = vmatprep.mubr.f32.mxu0 0.0
        %7099 = vmatmul.mubr.f32.gmra.mrb[0].mxu0 %v6484
        %v7100 = vpop.f32.mrb[0].mxu0
        %v7101 = vadd.f32 %v6432, %v7100
        %v7102 = vpop.f32.mrb[0].mxu0
        %v7103 = vadd.f32 %v6436, %v7102
        %7104 = vmatprep.mubr.f32.mxu0 0.0
        %7105 = vmatmul.mubr.f32.gmra.mrb[0].mxu0 %v6487
        %v7106 = vpop.f32.mrb[0].mxu0
        %v7107 = vadd.f32 %v6432, %v7106
        %v7108 = vpop.f32.mrb[0].mxu0
        %v7109 = vadd.f32 %v6436, %v7108
        %7110 = vmatprep.mubr.f32.mxu0 0.0
        %7111 = vmatmul.mubr.f32.gmra.mrb[0].mxu0 %v6490
        %v7112 = vpop.f32.mrb[0].mxu0
        %v7113 = vadd.f32 %v6432, %v7112
        %v7114 = vpop.f32.mrb[0].mxu0
        %v7115 = vadd.f32 %v6436, %v7114
        %7116 = vmatprep.mubr.f32.mxu0 0.0
        %7117 = vmatmul.mubr.f32.gmra.mrb[0].mxu0 %v6493
        %v7118 = vpop.f32.mrb[0].mxu0
        %v7119 = vadd.f32 %v6432, %v7118
        %v7120 = vpop.f32.mrb[0].mxu0
        %v7121 = vadd.f32 %v6436, %v7120
        %7122 = vmatprep.mubr.f32.mxu0 0.0
        %7123 = vmatmul.mubr.f32.gmra.mrb[0].mxu0 %v6496
        %v7124 = vpop.f32.mrb[0].mxu0
        %v7125 = vadd.f32 %v6432, %v7124
        %v7126 = vpop.f32.mrb[0].mxu0
        %v7127 = vadd.f32 %v6436, %v7126
        %7128 = vmatprep.mubr.f32.mxu0 0.0
        %7129 = vmatmul.mubr.f32.gmra.mrb[0].mxu0 %v6499
        %v7130 = vpop.f32.mrb[0].mxu0
        %v7131 = vadd.f32 %v6432, %v7130
        %v7132 = vpop.f32.mrb[0].mxu0
        %v7133 = vadd.f32 %v6436, %v7132
        %7134 = vmatprep.mubr.f32.mxu0 0.0
        %7135 = vmatmul.mubr.f32.gmra.mrb[0].mxu0 %v6502
        %v7136 = vpop.f32.mrb[0].mxu0
        %v7137 = vadd.f32 %v6432, %v7136
        %v7138 = vpop.f32.mrb[0].mxu0
        %v7139 = vadd.f32 %v6436, %v7138
        %7140 = vmatprep.mubr.f32.mxu0 0.0
        %7141 = vmatmul.mubr.f32.gmra.mrb[0].mxu0 %v6505
        %v7142 = vpop.f32.mrb[0].mxu0
        %v7143 = vadd.f32 %v6432, %v7142
        %v7144 = vpop.f32.mrb[0].mxu0
        %v7145 = vadd.f32 %v6436, %v7144
        %7146 = vmatprep.mubr.f32.mxu0 0.0
        %7147 = vmatmul.mubr.f32.gmra.mrb[0].mxu0 %v6508
        %v7148 = vpop.f32.mrb[0].mxu0
        %v7149 = vadd.f32 %v6432, %v7148
        %v7150 = vpop.f32.mrb[0].mxu0
        %v7151 = vadd.f32 %v6436, %v7150
        %7152 = vmatprep.mubr.f32.mxu0 0.0
        %7153 = vmatmul.mubr.f32.gmra.mrb[0].mxu0 %v6511
        %v7154 = vpop.f32.mrb[0].mxu0
        %v7155 = vadd.f32 %v6432, %v7154
        %v7156 = vpop.f32.mrb[0].mxu0
        %v7157 = vadd.f32 %v6436, %v7156
        %7158 = vmatprep.mubr.f32.mxu0 0.0
        %7159 = vmatmul.mubr.f32.gmra.mrb[0].mxu0 %v6514
        %v7160 = vpop.f32.mrb[0].mxu0
        %v7161 = vadd.f32 %v6432, %v7160
        %v7162 = vpop.f32.mrb[0].mxu0
        %v7163 = vadd.f32 %v6436, %v7162
        %7164 = vmatprep.mubr.f32.mxu0 0.0
        %7165 = vmatmul.mubr.f32.gmra.mrb[0].mxu0 %v6517
        %v7166 = vpop.f32.mrb[0].mxu0
        %v7167 = vadd.f32 %v6432, %v7166
        %v7168 = vpop.f32.mrb[0].mxu0
        %v7169 = vadd.f32 %v6436, %v7168
        %7170 = vmatprep.mubr.f32.mxu0 0.0
        %7171 = vmatmul.mubr.f32.gmra.mrb[0].mxu0 %v6520
        %v7172 = vpop.f32.mrb[0].mxu0
        %v7173 = vadd.f32 %v6432, %v7172
        %v7174 = vpop.f32.mrb[0].mxu0
        %v7175 = vadd.f32 %v6436, %v7174
        %7176 = vmatprep.mubr.f32.mxu0 0.0
        %7177 = vmatmul.mubr.f32.gmra.mrb[0].mxu0 %v6523
        %v7178 = vpop.f32.mrb[0].mxu0
        %v7179 = vadd.f32 %v6432, %v7178
        %v7180 = vpop.f32.mrb[0].mxu0
        %v7181 = vadd.f32 %v6436, %v7180
        %7182 = vmatprep.mubr.f32.mxu0 0.0
        %7183 = vmatmul.mubr.f32.gmra.mrb[0].mxu0 %v6526
        %v7184 = vpop.f32.mrb[0].mxu0
        %v7185 = vadd.f32 %v6432, %v7184
        %v7186 = vpop.f32.mrb[0].mxu0
        %v7187 = vadd.f32 %v6436, %v7186
        %7188 = vmatprep.mubr.f32.mxu0 0.0
        %7189 = vmatmul.mubr.f32.gmra.mrb[0].mxu0 %v6529
        %v7190 = vpop.f32.mrb[0].mxu0
        %v7191 = vadd.f32 %v6432, %v7190
        %v7192 = vpop.f32.mrb[0].mxu0
        %v7193 = vadd.f32 %v6436, %v7192
        %7194 = vmatprep.mubr.f32.mxu0 0.0
        %7195 = vmatmul.mubr.f32.gmra.mrb[0].mxu0 %v6532
        %v7196 = vpop.f32.mrb[0].mxu0
        %v7197 = vadd.f32 %v6432, %v7196
        %v7198 = vpop.f32.mrb[0].mxu0
        %v7199 = vadd.f32 %v6436, %v7198
        %7200 = vmatprep.mubr.f32.mxu0 0.0
        %7201 = vmatmul.mubr.f32.gmra.mrb[0].mxu0 %v6535
        %v7202 = vpop.f32.mrb[0].mxu0
        %v7203 = vadd.f32 %v6432, %v7202
        %v7204 = vpop.f32.mrb[0].mxu0
        %v7205 = vadd.f32 %v6436, %v7204
        %7206 = vmatprep.mubr.f32.mxu0 0.0
        %7207 = vmatmul.mubr.f32.gmra.mrb[0].mxu0 %v6538
        %v7208 = vpop.f32.mrb[0].mxu0
        %v7209 = vadd.f32 %v6432, %v7208
        %v7210 = vpop.f32.mrb[0].mxu0
        %v7211 = vadd.f32 %v6436, %v7210
        %7212 = vmatprep.mubr.f32.mxu0 0.0
        %7213 = vmatmul.mubr.f32.gmra.mrb[0].mxu0 %v6541
        %v7214 = vpop.f32.mrb[0].mxu0
        %v7215 = vadd.f32 %v6432, %v7214
        %v7216 = vpop.f32.mrb[0].mxu0
        %v7217 = vadd.f32 %v6436, %v7216
        %7218 = vmatprep.mubr.f32.mxu0 0.0
        %7219 = vmatmul.mubr.f32.gmra.mrb[0].mxu0 %v6544
        %v7220 = vpop.f32.mrb[0].mxu0
        %v7221 = vadd.f32 %v6432, %v7220
        %v7222 = vpop.f32.mrb[0].mxu0
        %v7223 = vadd.f32 %v6436, %v7222
        %7224 = vmatprep.mubr.f32.mxu0 0.0
        %7225 = vmatmul.mubr.f32.gmra.mrb[0].mxu0 %v6547
        %v7226 = vpop.f32.mrb[0].mxu0
        %v7227 = vadd.f32 %v6432, %v7226
        %v7228 = vpop.f32.mrb[0].mxu0
        %v7229 = vadd.f32 %v6436, %v7228
        %7230 = vmatprep.mubr.f32.mxu0 0.0
        %7231 = vmatmul.mubr.f32.gmra.mrb[0].mxu0 %v6550
        %v7232 = vpop.f32.mrb[0].mxu0
        %v7233 = vadd.f32 %v6432, %v7232
        %v7234 = vpop.f32.mrb[0].mxu0
        %v7235 = vadd.f32 %v6436, %v7234
        %7236 = vmatprep.mubr.f32.mxu0 0.0
        %7237 = vmatmul.mubr.f32.gmra.mrb[0].mxu0 %v6553
        %v7238 = vpop.f32.mrb[0].mxu0
        %v7239 = vadd.f32 %v6432, %v7238
        %v7240 = vpop.f32.mrb[0].mxu0
        %v7241 = vadd.f32 %v6436, %v7240
        %7242 = vmatprep.mubr.f32.mxu0 0.0
        %7243 = vmatmul.mubr.f32.gmra.mrb[0].mxu0 %v6556
        %v7244 = vpop.f32.mrb[0].mxu0
        %v7245 = vadd.f32 %v6432, %v7244
        %v7246 = vpop.f32.mrb[0].mxu0
        %v7247 = vadd.f32 %v6436, %v7246
        %7248 = vmatprep.mubr.f32.mxu0 0.0
        %7249 = vmatmul.mubr.f32.gmra.mrb[0].mxu0 %v6559
        %v7250 = vpop.f32.mrb[0].mxu0
        %v7251 = vadd.f32 %v6432, %v7250
        %v7252 = vpop.f32.mrb[0].mxu0
        %v7253 = vadd.f32 %v6436, %v7252
        %7254 = vmatprep.mubr.f32.mxu0 0.0
        %7255 = vmatmul.mubr.f32.gmra.mrb[0].mxu0 %v6562
        %v7256 = vpop.f32.mrb[0].mxu0
        %v7257 = vadd.f32 %v6432, %v7256
        %v7258 = vpop.f32.mrb[0].mxu0
        %v7259 = vadd.f32 %v6436, %v7258
        %7260 = vmatprep.mubr.f32.mxu0 0.0
        %7261 = vmatmul.mubr.f32.gmra.mrb[0].mxu0 %v6565
        %v7262 = vpop.f32.mrb[0].mxu0
        %v7263 = vadd.f32 %v6432, %v7262
        %v7264 = vpop.f32.mrb[0].mxu0
        %v7265 = vadd.f32 %v6436, %v7264
        %7266 = vmatprep.mubr.f32.mxu0 0.0
        %7267 = vmatmul.mubr.f32.gmra.mrb[0].mxu0 %v6568
        %v7268 = vpop.f32.mrb[0].mxu0
        %v7269 = vadd.f32 %v6432, %v7268
        %v7270 = vpop.f32.mrb[0].mxu0
        %v7271 = vadd.f32 %v6436, %v7270
        %7272 = vmatprep.mubr.f32.mxu0 0.0
        %7273 = vmatmul.mubr.f32.gmra.mrb[0].mxu0 %v6571
        %v7274 = vpop.f32.mrb[0].mxu0
        %v7275 = vadd.f32 %v6432, %v7274
        %v7276 = vpop.f32.mrb[0].mxu0
        %v7277 = vadd.f32 %v6436, %v7276
        %7278 = vmatprep.mubr.f32.mxu0 0.0
        %7279 = vmatmul.mubr.f32.gmra.mrb[0].mxu0 %v6574
        %v7280 = vpop.f32.mrb[0].mxu0
        %v7281 = vadd.f32 %v6432, %v7280
        %v7282 = vpop.f32.mrb[0].mxu0
        %v7283 = vadd.f32 %v6436, %v7282
        %7284 = vmatprep.mubr.f32.mxu0 0.0
        %7285 = vmatmul.mubr.f32.gmra.mrb[0].mxu0 %v6577
        %v7286 = vpop.f32.mrb[0].mxu0
        %v7287 = vadd.f32 %v6432, %v7286
        %v7288 = vpop.f32.mrb[0].mxu0
        %v7289 = vadd.f32 %v6436, %v7288
        %7290 = vmatprep.mubr.f32.mxu0 0.0
        %7291 = vmatmul.mubr.f32.gmra.mrb[0].mxu0 %v6580
        %v7292 = vpop.f32.mrb[0].mxu0
        %v7293 = vadd.f32 %v6432, %v7292
        %v7294 = vpop.f32.mrb[0].mxu0
        %v7295 = vadd.f32 %v6436, %v7294
        %7296 = vmatprep.mubr.f32.mxu0 0.0
        %7297 = vmatmul.mubr.f32.gmra.mrb[0].mxu0 %v6583
        %v7298 = vpop.f32.mrb[0].mxu0
        %v7299 = vadd.f32 %v6432, %v7298
        %v7300 = vpop.f32.mrb[0].mxu0
        %v7301 = vadd.f32 %v6436, %v7300
        %7302 = vdwg.mxu0
        %v7303 = vmax.f32 %v6664, 0.0
        %v7304 = vmax.f32 %v6666, 0.0
        %v7305 = vmax.f32 %v7017, 0.0
        %v7306 = vmax.f32 %v7019, 0.0
        %v7307 = vmax.f32 %v6670, 0.0
        %v7308 = vmax.f32 %v6672, 0.0
        %v7309 = vmax.f32 %v7023, 0.0
        %v7310 = vmax.f32 %v7025, 0.0
        %v7311 = vmax.f32 %v6676, 0.0
        %v7312 = vmax.f32 %v6678, 0.0
        %v7313 = vmax.f32 %v7029, 0.0
        %v7314 = vmax.f32 %v7031, 0.0
        %v7315 = vmax.f32 %v6682, 0.0
        %v7316 = vmax.f32 %v6684, 0.0
        %v7317 = vmax.f32 %v7035, 0.0
        %v7318 = vmax.f32 %v7037, 0.0
        %v7319 = vmax.f32 %v6688, 0.0
        %v7320 = vmax.f32 %v6690, 0.0
        %v7321 = vmax.f32 %v7041, 0.0
        %v7322 = vmax.f32 %v7043, 0.0
        %v7323 = vmax.f32 %v6694, 0.0
        %v7324 = vmax.f32 %v6696, 0.0
        %v7325 = vmax.f32 %v7047, 0.0
        %v7326 = vmax.f32 %v7049, 0.0
        %v7327 = vmax.f32 %v6700, 0.0
        %v7328 = vmax.f32 %v6702, 0.0
        %v7329 = vmax.f32 %v7053, 0.0
        %v7330 = vmax.f32 %v7055, 0.0
        %v7331 = vmax.f32 %v6706, 0.0
        %v7332 = vmax.f32 %v6708, 0.0
        %v7333 = vmax.f32 %v7059, 0.0
        %v7334 = vmax.f32 %v7061, 0.0
        %v7335 = vmax.f32 %v6712, 0.0
        %v7336 = vmax.f32 %v6714, 0.0
        %v7337 = vmax.f32 %v7065, 0.0
        %v7338 = vmax.f32 %v7067, 0.0
        %v7339 = vmax.f32 %v6718, 0.0
        %v7340 = vmax.f32 %v6720, 0.0
        %v7341 = vmax.f32 %v7071, 0.0
        %v7342 = vmax.f32 %v7073, 0.0
        %v7343 = vmax.f32 %v6724, 0.0
        %v7344 = vmax.f32 %v6726, 0.0
        %v7345 = vmax.f32 %v7077, 0.0
        %v7346 = vmax.f32 %v7079, 0.0
        %v7347 = vmax.f32 %v6730, 0.0
        %v7348 = vmax.f32 %v6732, 0.0
        %v7349 = vmax.f32 %v7083, 0.0
        %v7350 = vmax.f32 %v7085, 0.0
        %v7351 = vmax.f32 %v6736, 0.0
        %v7352 = vmax.f32 %v6738, 0.0
        %v7353 = vmax.f32 %v7089, 0.0
        %v7354 = vmax.f32 %v7091, 0.0
        %v7355 = vmax.f32 %v6742, 0.0
        %v7356 = vmax.f32 %v6744, 0.0
        %v7357 = vmax.f32 %v7095, 0.0
        %v7358 = vmax.f32 %v7097, 0.0
        %v7359 = vmax.f32 %v6748, 0.0
        %v7360 = vmax.f32 %v6750, 0.0
        %v7361 = vmax.f32 %v7101, 0.0
        %v7362 = vmax.f32 %v7103, 0.0
        %v7363 = vmax.f32 %v6754, 0.0
        %v7364 = vmax.f32 %v6756, 0.0
        %v7365 = vmax.f32 %v7107, 0.0
        %v7366 = vmax.f32 %v7109, 0.0
        %v7367 = vmax.f32 %v6760, 0.0
        %v7368 = vmax.f32 %v6762, 0.0
        %v7369 = vmax.f32 %v7113, 0.0
        %v7370 = vmax.f32 %v7115, 0.0
        %v7371 = vmax.f32 %v6766, 0.0
        %v7372 = vmax.f32 %v6768, 0.0
        %v7373 = vmax.f32 %v7119, 0.0
        %v7374 = vmax.f32 %v7121, 0.0
        %v7375 = vmax.f32 %v6772, 0.0
        %v7376 = vmax.f32 %v6774, 0.0
        %v7377 = vmax.f32 %v7125, 0.0
        %v7378 = vmax.f32 %v7127, 0.0
        %v7379 = vmax.f32 %v6778, 0.0
        %v7380 = vmax.f32 %v6780, 0.0
        %v7381 = vmax.f32 %v7131, 0.0
        %v7382 = vmax.f32 %v7133, 0.0
        %v7383 = vmax.f32 %v6784, 0.0
        %v7384 = vmax.f32 %v6786, 0.0
        %v7385 = vmax.f32 %v7137, 0.0
        %v7386 = vmax.f32 %v7139, 0.0
        %v7387 = vmax.f32 %v6790, 0.0
        %v7388 = vmax.f32 %v6792, 0.0
        %v7389 = vmax.f32 %v7143, 0.0
        %v7390 = vmax.f32 %v7145, 0.0
        %v7391 = vmax.f32 %v6796, 0.0
        %v7392 = vmax.f32 %v6798, 0.0
        %v7393 = vmax.f32 %v7149, 0.0
        %v7394 = vmax.f32 %v7151, 0.0
        %v7395 = vmax.f32 %v6802, 0.0
        %v7396 = vmax.f32 %v6804, 0.0
        %v7397 = vmax.f32 %v7155, 0.0
        %v7398 = vmax.f32 %v7157, 0.0
        %v7399 = vmax.f32 %v6808, 0.0
        %v7400 = vmax.f32 %v6810, 0.0
        %v7401 = vmax.f32 %v7161, 0.0
        %v7402 = vmax.f32 %v7163, 0.0
        %v7403 = vmax.f32 %v6814, 0.0
        %v7404 = vmax.f32 %v6816, 0.0
        %v7405 = vmax.f32 %v7167, 0.0
        %v7406 = vmax.f32 %v7169, 0.0
        %v7407 = vmax.f32 %v6820, 0.0
        %v7408 = vmax.f32 %v6822, 0.0
        %v7409 = vmax.f32 %v7173, 0.0
        %v7410 = vmax.f32 %v7175, 0.0
        %v7411 = vmax.f32 %v6826, 0.0
        %v7412 = vmax.f32 %v6828, 0.0
        %v7413 = vmax.f32 %v7179, 0.0
        %v7414 = vmax.f32 %v7181, 0.0
        %v7415 = vmax.f32 %v6832, 0.0
        %v7416 = vmax.f32 %v6834, 0.0
        %v7417 = vmax.f32 %v7185, 0.0
        %v7418 = vmax.f32 %v7187, 0.0
        %v7419 = vmax.f32 %v6838, 0.0
        %v7420 = vmax.f32 %v6840, 0.0
        %v7421 = vmax.f32 %v7191, 0.0
        %v7422 = vmax.f32 %v7193, 0.0
        %v7423 = vmax.f32 %v6844, 0.0
        %v7424 = vmax.f32 %v6846, 0.0
        %v7425 = vmax.f32 %v7197, 0.0
        %v7426 = vmax.f32 %v7199, 0.0
        %v7427 = vmax.f32 %v6850, 0.0
        %v7428 = vmax.f32 %v6852, 0.0
        %v7429 = vmax.f32 %v7203, 0.0
        %v7430 = vmax.f32 %v7205, 0.0
        %v7431 = vmax.f32 %v6856, 0.0
        %v7432 = vmax.f32 %v6858, 0.0
        %v7433 = vmax.f32 %v7209, 0.0
        %v7434 = vmax.f32 %v7211, 0.0
        %v7435 = vmax.f32 %v6862, 0.0
        %v7436 = vmax.f32 %v6864, 0.0
        %v7437 = vmax.f32 %v7215, 0.0
        %v7438 = vmax.f32 %v7217, 0.0
        %v7439 = vmax.f32 %v6868, 0.0
        %v7440 = vmax.f32 %v6870, 0.0
        %v7441 = vmax.f32 %v7221, 0.0
        %v7442 = vmax.f32 %v7223, 0.0
        %v7443 = vmax.f32 %v6874, 0.0
        %v7444 = vmax.f32 %v6876, 0.0
        %v7445 = vmax.f32 %v7227, 0.0
        %v7446 = vmax.f32 %v7229, 0.0
        %v7447 = vmax.f32 %v6880, 0.0
        %v7448 = vmax.f32 %v6882, 0.0
        %v7449 = vmax.f32 %v7233, 0.0
        %v7450 = vmax.f32 %v7235, 0.0
        %v7451 = vmax.f32 %v6886, 0.0
        %v7452 = vmax.f32 %v6888, 0.0
        %v7453 = vmax.f32 %v7239, 0.0
        %v7454 = vmax.f32 %v7241, 0.0
        %v7455 = vmax.f32 %v6892, 0.0
        %v7456 = vmax.f32 %v6894, 0.0
        %v7457 = vmax.f32 %v7245, 0.0
        %v7458 = vmax.f32 %v7247, 0.0
        %v7459 = vmax.f32 %v6898, 0.0
        %v7460 = vmax.f32 %v6900, 0.0
        %v7461 = vmax.f32 %v7251, 0.0
        %v7462 = vmax.f32 %v7253, 0.0
        %v7463 = vmax.f32 %v6904, 0.0
        %v7464 = vmax.f32 %v6906, 0.0
        %v7465 = vmax.f32 %v7257, 0.0
        %v7466 = vmax.f32 %v7259, 0.0
        %v7467 = vmax.f32 %v6910, 0.0
        %v7468 = vmax.f32 %v6912, 0.0
        %v7469 = vmax.f32 %v7263, 0.0
        %v7470 = vmax.f32 %v7265, 0.0
        %v7471 = vmax.f32 %v6916, 0.0
        %v7472 = vmax.f32 %v6918, 0.0
        %v7473 = vmax.f32 %v7269, 0.0
        %v7474 = vmax.f32 %v7271, 0.0
        %v7475 = vmax.f32 %v6922, 0.0
        %v7476 = vmax.f32 %v6924, 0.0
        %v7477 = vmax.f32 %v7275, 0.0
        %v7478 = vmax.f32 %v7277, 0.0
        %v7479 = vmax.f32 %v6928, 0.0
        %v7480 = vmax.f32 %v6930, 0.0
        %v7481 = vmax.f32 %v7281, 0.0
        %v7482 = vmax.f32 %v7283, 0.0
        %v7483 = vmax.f32 %v6934, 0.0
        %v7484 = vmax.f32 %v6936, 0.0
        %v7485 = vmax.f32 %v7287, 0.0
        %v7486 = vmax.f32 %v7289, 0.0
        %v7487 = vmax.f32 %v6940, 0.0
        %v7488 = vmax.f32 %v6942, 0.0
        %v7489 = vmax.f32 %v7293, 0.0
        %v7490 = vmax.f32 %v7295, 0.0
        %v7491 = vmax.f32 %v6946, 0.0
        %v7492 = vmax.f32 %v6948, 0.0
        %v7493 = vmax.f32 %v7299, 0.0
        %v7494 = vmax.f32 %v7301, 0.0
        %s7495 = scalar_lea.vmem %s7, %s6362
        %v7496 = vld [vmem:[%s7495] sm:$0xf]
        %v7498 = vlaneseq
        %v7499 = vshrl.u32 %v7498, 7
        %v7500 = vsub.s32 0, %v7499
        %v7501 = vrot.slane %v7496, %v7500
        %v7502 = vlaneseq
        %v7503 = vshrl.u32 %v7502, 7
        %v7504 = vsub.s32 1, %v7503
        %v7505 = vrot.slane %v7496, %v7504
        %v7506 = vlaneseq
        %v7507 = vshrl.u32 %v7506, 7
        %v7508 = vsub.s32 2, %v7507
        %v7509 = vrot.slane %v7496, %v7508
        %v7510 = vlaneseq
        %v7511 = vshrl.u32 %v7510, 7
        %v7512 = vsub.s32 3, %v7511
        %v7513 = vrot.slane %v7496, %v7512
        %v7518 = vmul.f32 %v7303, %v7501
        %v7519 = vmul.f32 %v7304, %v7505
        %v7520 = vmul.f32 %v7305, %v7509
        %v7521 = vmul.f32 %v7306, %v7513
        %v7522 = vmul.f32 %v7307, %v7501
        %v7523 = vmul.f32 %v7308, %v7505
        %v7524 = vmul.f32 %v7309, %v7509
        %v7525 = vmul.f32 %v7310, %v7513
        %v7526 = vmul.f32 %v7311, %v7501
        %v7527 = vmul.f32 %v7312, %v7505
        %v7528 = vmul.f32 %v7313, %v7509
        %v7529 = vmul.f32 %v7314, %v7513
        %v7530 = vmul.f32 %v7315, %v7501
        %v7531 = vmul.f32 %v7316, %v7505
        %v7532 = vmul.f32 %v7317, %v7509
        %v7533 = vmul.f32 %v7318, %v7513
        %v7534 = vmul.f32 %v7319, %v7501
        %v7535 = vmul.f32 %v7320, %v7505
        %v7536 = vmul.f32 %v7321, %v7509
        %v7537 = vmul.f32 %v7322, %v7513
        %v7538 = vmul.f32 %v7323, %v7501
        %v7539 = vmul.f32 %v7324, %v7505
        %v7540 = vmul.f32 %v7325, %v7509
        %v7541 = vmul.f32 %v7326, %v7513
        %v7542 = vmul.f32 %v7327, %v7501
        %v7543 = vmul.f32 %v7328, %v7505
        %v7544 = vmul.f32 %v7329, %v7509
        %v7545 = vmul.f32 %v7330, %v7513
        %v7546 = vmul.f32 %v7331, %v7501
        %v7547 = vmul.f32 %v7332, %v7505
        %v7548 = vmul.f32 %v7333, %v7509
        %v7549 = vmul.f32 %v7334, %v7513
        %v7550 = vmul.f32 %v7335, %v7501
        %v7551 = vmul.f32 %v7336, %v7505
        %v7552 = vmul.f32 %v7337, %v7509
        %v7553 = vmul.f32 %v7338, %v7513
        %v7554 = vmul.f32 %v7339, %v7501
        %v7555 = vmul.f32 %v7340, %v7505
        %v7556 = vmul.f32 %v7341, %v7509
        %v7557 = vmul.f32 %v7342, %v7513
        %v7558 = vmul.f32 %v7343, %v7501
        %v7559 = vmul.f32 %v7344, %v7505
        %v7560 = vmul.f32 %v7345, %v7509
        %v7561 = vmul.f32 %v7346, %v7513
        %v7562 = vmul.f32 %v7347, %v7501
        %v7563 = vmul.f32 %v7348, %v7505
        %v7564 = vmul.f32 %v7349, %v7509
        %v7565 = vmul.f32 %v7350, %v7513
        %v7566 = vmul.f32 %v7351, %v7501
        %v7567 = vmul.f32 %v7352, %v7505
        %v7568 = vmul.f32 %v7353, %v7509
        %v7569 = vmul.f32 %v7354, %v7513
        %v7570 = vmul.f32 %v7355, %v7501
        %v7571 = vmul.f32 %v7356, %v7505
        %v7572 = vmul.f32 %v7357, %v7509
        %v7573 = vmul.f32 %v7358, %v7513
        %v7574 = vmul.f32 %v7359, %v7501
        %v7575 = vmul.f32 %v7360, %v7505
        %v7576 = vmul.f32 %v7361, %v7509
        %v7577 = vmul.f32 %v7362, %v7513
        %v7578 = vmul.f32 %v7363, %v7501
        %v7579 = vmul.f32 %v7364, %v7505
        %v7580 = vmul.f32 %v7365, %v7509
        %v7581 = vmul.f32 %v7366, %v7513
        %v7582 = vmul.f32 %v7367, %v7501
        %v7583 = vmul.f32 %v7368, %v7505
        %v7584 = vmul.f32 %v7369, %v7509
        %v7585 = vmul.f32 %v7370, %v7513
        %v7586 = vmul.f32 %v7371, %v7501
        %v7587 = vmul.f32 %v7372, %v7505
        %v7588 = vmul.f32 %v7373, %v7509
        %v7589 = vmul.f32 %v7374, %v7513
        %v7590 = vmul.f32 %v7375, %v7501
        %v7591 = vmul.f32 %v7376, %v7505
        %v7592 = vmul.f32 %v7377, %v7509
        %v7593 = vmul.f32 %v7378, %v7513
        %v7594 = vmul.f32 %v7379, %v7501
        %v7595 = vmul.f32 %v7380, %v7505
        %v7596 = vmul.f32 %v7381, %v7509
        %v7597 = vmul.f32 %v7382, %v7513
        %v7598 = vmul.f32 %v7383, %v7501
        %v7599 = vmul.f32 %v7384, %v7505
        %v7600 = vmul.f32 %v7385, %v7509
        %v7601 = vmul.f32 %v7386, %v7513
        %v7602 = vmul.f32 %v7387, %v7501
        %v7603 = vmul.f32 %v7388, %v7505
        %v7604 = vmul.f32 %v7389, %v7509
        %v7605 = vmul.f32 %v7390, %v7513
        %v7606 = vmul.f32 %v7391, %v7501
        %v7607 = vmul.f32 %v7392, %v7505
        %v7608 = vmul.f32 %v7393, %v7509
        %v7609 = vmul.f32 %v7394, %v7513
        %v7610 = vmul.f32 %v7395, %v7501
        %v7611 = vmul.f32 %v7396, %v7505
        %v7612 = vmul.f32 %v7397, %v7509
        %v7613 = vmul.f32 %v7398, %v7513
        %v7614 = vmul.f32 %v7399, %v7501
        %v7615 = vmul.f32 %v7400, %v7505
        %v7616 = vmul.f32 %v7401, %v7509
        %v7617 = vmul.f32 %v7402, %v7513
        %v7618 = vmul.f32 %v7403, %v7501
        %v7619 = vmul.f32 %v7404, %v7505
        %v7620 = vmul.f32 %v7405, %v7509
        %v7621 = vmul.f32 %v7406, %v7513
        %v7622 = vmul.f32 %v7407, %v7501
        %v7623 = vmul.f32 %v7408, %v7505
        %v7624 = vmul.f32 %v7409, %v7509
        %v7625 = vmul.f32 %v7410, %v7513
        %v7626 = vmul.f32 %v7411, %v7501
        %v7627 = vmul.f32 %v7412, %v7505
        %v7628 = vmul.f32 %v7413, %v7509
        %v7629 = vmul.f32 %v7414, %v7513
        %v7630 = vmul.f32 %v7415, %v7501
        %v7631 = vmul.f32 %v7416, %v7505
        %v7632 = vmul.f32 %v7417, %v7509
        %v7633 = vmul.f32 %v7418, %v7513
        %v7634 = vmul.f32 %v7419, %v7501
        %v7635 = vmul.f32 %v7420, %v7505
        %v7636 = vmul.f32 %v7421, %v7509
        %v7637 = vmul.f32 %v7422, %v7513
        %v7638 = vmul.f32 %v7423, %v7501
        %v7639 = vmul.f32 %v7424, %v7505
        %v7640 = vmul.f32 %v7425, %v7509
        %v7641 = vmul.f32 %v7426, %v7513
        %v7642 = vmul.f32 %v7427, %v7501
        %v7643 = vmul.f32 %v7428, %v7505
        %v7644 = vmul.f32 %v7429, %v7509
        %v7645 = vmul.f32 %v7430, %v7513
        %v7646 = vmul.f32 %v7431, %v7501
        %v7647 = vmul.f32 %v7432, %v7505
        %v7648 = vmul.f32 %v7433, %v7509
        %v7649 = vmul.f32 %v7434, %v7513
        %v7650 = vmul.f32 %v7435, %v7501
        %v7651 = vmul.f32 %v7436, %v7505
        %v7652 = vmul.f32 %v7437, %v7509
        %v7653 = vmul.f32 %v7438, %v7513
        %v7654 = vmul.f32 %v7439, %v7501
        %v7655 = vmul.f32 %v7440, %v7505
        %v7656 = vmul.f32 %v7441, %v7509
        %v7657 = vmul.f32 %v7442, %v7513
        %v7658 = vmul.f32 %v7443, %v7501
        %v7659 = vmul.f32 %v7444, %v7505
        %v7660 = vmul.f32 %v7445, %v7509
        %v7661 = vmul.f32 %v7446, %v7513
        %v7662 = vmul.f32 %v7447, %v7501
        %v7663 = vmul.f32 %v7448, %v7505
        %v7664 = vmul.f32 %v7449, %v7509
        %v7665 = vmul.f32 %v7450, %v7513
        %v7666 = vmul.f32 %v7451, %v7501
        %v7667 = vmul.f32 %v7452, %v7505
        %v7668 = vmul.f32 %v7453, %v7509
        %v7669 = vmul.f32 %v7454, %v7513
        %v7670 = vmul.f32 %v7455, %v7501
        %v7671 = vmul.f32 %v7456, %v7505
        %v7672 = vmul.f32 %v7457, %v7509
        %v7673 = vmul.f32 %v7458, %v7513
        %v7674 = vmul.f32 %v7459, %v7501
        %v7675 = vmul.f32 %v7460, %v7505
        %v7676 = vmul.f32 %v7461, %v7509
        %v7677 = vmul.f32 %v7462, %v7513
        %v7678 = vmul.f32 %v7463, %v7501
        %v7679 = vmul.f32 %v7464, %v7505
        %v7680 = vmul.f32 %v7465, %v7509
        %v7681 = vmul.f32 %v7466, %v7513
        %v7682 = vmul.f32 %v7467, %v7501
        %v7683 = vmul.f32 %v7468, %v7505
        %v7684 = vmul.f32 %v7469, %v7509
        %v7685 = vmul.f32 %v7470, %v7513
        %v7686 = vmul.f32 %v7471, %v7501
        %v7687 = vmul.f32 %v7472, %v7505
        %v7688 = vmul.f32 %v7473, %v7509
        %v7689 = vmul.f32 %v7474, %v7513
        %v7690 = vmul.f32 %v7475, %v7501
        %v7691 = vmul.f32 %v7476, %v7505
        %v7692 = vmul.f32 %v7477, %v7509
        %v7693 = vmul.f32 %v7478, %v7513
        %v7694 = vmul.f32 %v7479, %v7501
        %v7695 = vmul.f32 %v7480, %v7505
        %v7696 = vmul.f32 %v7481, %v7509
        %v7697 = vmul.f32 %v7482, %v7513
        %v7698 = vmul.f32 %v7483, %v7501
        %v7699 = vmul.f32 %v7484, %v7505
        %v7700 = vmul.f32 %v7485, %v7509
        %v7701 = vmul.f32 %v7486, %v7513
        %v7702 = vmul.f32 %v7487, %v7501
        %v7703 = vmul.f32 %v7488, %v7505
        %v7704 = vmul.f32 %v7489, %v7509
        %v7705 = vmul.f32 %v7490, %v7513
        %v7706 = vmul.f32 %v7491, %v7501
        %v7707 = vmul.f32 %v7492, %v7505
        %v7708 = vmul.f32 %v7493, %v7509
        %v7709 = vmul.f32 %v7494, %v7513
        %v7710 = vadd.f32 %v7518, %v7519
        %v7711 = vadd.f32 %v7710, %v7520
        %v7712 = vadd.f32 %v7711, %v7521
        %7713 = vadd.xlane.f32.xlu0 %v7712
        %v7714 = vpop.xlane.xlu0 %7713
        %v7715 = vadd.f32 %v7522, %v7523
        %v7716 = vadd.f32 %v7715, %v7524
        %v7717 = vadd.f32 %v7716, %v7525
        %7718 = vadd.xlane.f32.xlu0 %v7717
        %v7719 = vpop.xlane.xlu0 %7718
        %v7720 = vadd.f32 %v7526, %v7527
        %v7721 = vadd.f32 %v7720, %v7528
        %v7722 = vadd.f32 %v7721, %v7529
        %7723 = vadd.xlane.f32.xlu0 %v7722
        %v7724 = vpop.xlane.xlu0 %7723
        %v7725 = vadd.f32 %v7530, %v7531
        %v7726 = vadd.f32 %v7725, %v7532
        %v7727 = vadd.f32 %v7726, %v7533
        %7728 = vadd.xlane.f32.xlu0 %v7727
        %v7729 = vpop.xlane.xlu0 %7728
        %v7730 = vadd.f32 %v7534, %v7535
        %v7731 = vadd.f32 %v7730, %v7536
        %v7732 = vadd.f32 %v7731, %v7537
        %7733 = vadd.xlane.f32.xlu0 %v7732
        %v7734 = vpop.xlane.xlu0 %7733
        %v7735 = vadd.f32 %v7538, %v7539
        %v7736 = vadd.f32 %v7735, %v7540
        %v7737 = vadd.f32 %v7736, %v7541
        %7738 = vadd.xlane.f32.xlu0 %v7737
        %v7739 = vpop.xlane.xlu0 %7738
        %v7740 = vadd.f32 %v7542, %v7543
        %v7741 = vadd.f32 %v7740, %v7544
        %v7742 = vadd.f32 %v7741, %v7545
        %7743 = vadd.xlane.f32.xlu0 %v7742
        %v7744 = vpop.xlane.xlu0 %7743
        %v7745 = vadd.f32 %v7546, %v7547
        %v7746 = vadd.f32 %v7745, %v7548
        %v7747 = vadd.f32 %v7746, %v7549
        %7748 = vadd.xlane.f32.xlu0 %v7747
        %v7749 = vpop.xlane.xlu0 %7748
        %v7750 = vadd.f32 %v7550, %v7551
        %v7751 = vadd.f32 %v7750, %v7552
        %v7752 = vadd.f32 %v7751, %v7553
        %7753 = vadd.xlane.f32.xlu0 %v7752
        %v7754 = vpop.xlane.xlu0 %7753
        %v7755 = vadd.f32 %v7554, %v7555
        %v7756 = vadd.f32 %v7755, %v7556
        %v7757 = vadd.f32 %v7756, %v7557
        %7758 = vadd.xlane.f32.xlu0 %v7757
        %v7759 = vpop.xlane.xlu0 %7758
        %v7760 = vadd.f32 %v7558, %v7559
        %v7761 = vadd.f32 %v7760, %v7560
        %v7762 = vadd.f32 %v7761, %v7561
        %7763 = vadd.xlane.f32.xlu0 %v7762
        %v7764 = vpop.xlane.xlu0 %7763
        %v7765 = vadd.f32 %v7562, %v7563
        %v7766 = vadd.f32 %v7765, %v7564
        %v7767 = vadd.f32 %v7766, %v7565
        %7768 = vadd.xlane.f32.xlu0 %v7767
        %v7769 = vpop.xlane.xlu0 %7768
        %v7770 = vadd.f32 %v7566, %v7567
        %v7771 = vadd.f32 %v7770, %v7568
        %v7772 = vadd.f32 %v7771, %v7569
        %7773 = vadd.xlane.f32.xlu0 %v7772
        %v7774 = vpop.xlane.xlu0 %7773
        %v7775 = vadd.f32 %v7570, %v7571
        %v7776 = vadd.f32 %v7775, %v7572
        %v7777 = vadd.f32 %v7776, %v7573
        %7778 = vadd.xlane.f32.xlu0 %v7777
        %v7779 = vpop.xlane.xlu0 %7778
        %v7780 = vadd.f32 %v7574, %v7575
        %v7781 = vadd.f32 %v7780, %v7576
        %v7782 = vadd.f32 %v7781, %v7577
        %7783 = vadd.xlane.f32.xlu0 %v7782
        %v7784 = vpop.xlane.xlu0 %7783
        %v7785 = vadd.f32 %v7578, %v7579
        %v7786 = vadd.f32 %v7785, %v7580
        %v7787 = vadd.f32 %v7786, %v7581
        %7788 = vadd.xlane.f32.xlu0 %v7787
        %v7789 = vpop.xlane.xlu0 %7788
        %v7790 = vadd.f32 %v7582, %v7583
        %v7791 = vadd.f32 %v7790, %v7584
        %v7792 = vadd.f32 %v7791, %v7585
        %7793 = vadd.xlane.f32.xlu0 %v7792
        %v7794 = vpop.xlane.xlu0 %7793
        %v7795 = vadd.f32 %v7586, %v7587
        %v7796 = vadd.f32 %v7795, %v7588
        %v7797 = vadd.f32 %v7796, %v7589
        %7798 = vadd.xlane.f32.xlu0 %v7797
        %v7799 = vpop.xlane.xlu0 %7798
        %v7800 = vadd.f32 %v7590, %v7591
        %v7801 = vadd.f32 %v7800, %v7592
        %v7802 = vadd.f32 %v7801, %v7593
        %7803 = vadd.xlane.f32.xlu0 %v7802
        %v7804 = vpop.xlane.xlu0 %7803
        %v7805 = vadd.f32 %v7594, %v7595
        %v7806 = vadd.f32 %v7805, %v7596
        %v7807 = vadd.f32 %v7806, %v7597
        %7808 = vadd.xlane.f32.xlu0 %v7807
        %v7809 = vpop.xlane.xlu0 %7808
        %v7810 = vadd.f32 %v7598, %v7599
        %v7811 = vadd.f32 %v7810, %v7600
        %v7812 = vadd.f32 %v7811, %v7601
        %7813 = vadd.xlane.f32.xlu0 %v7812
        %v7814 = vpop.xlane.xlu0 %7813
        %v7815 = vadd.f32 %v7602, %v7603
        %v7816 = vadd.f32 %v7815, %v7604
        %v7817 = vadd.f32 %v7816, %v7605
        %7818 = vadd.xlane.f32.xlu0 %v7817
        %v7819 = vpop.xlane.xlu0 %7818
        %v7820 = vadd.f32 %v7606, %v7607
        %v7821 = vadd.f32 %v7820, %v7608
        %v7822 = vadd.f32 %v7821, %v7609
        %7823 = vadd.xlane.f32.xlu0 %v7822
        %v7824 = vpop.xlane.xlu0 %7823
        %v7825 = vadd.f32 %v7610, %v7611
        %v7826 = vadd.f32 %v7825, %v7612
        %v7827 = vadd.f32 %v7826, %v7613
        %7828 = vadd.xlane.f32.xlu0 %v7827
        %v7829 = vpop.xlane.xlu0 %7828
        %v7830 = vadd.f32 %v7614, %v7615
        %v7831 = vadd.f32 %v7830, %v7616
        %v7832 = vadd.f32 %v7831, %v7617
        %7833 = vadd.xlane.f32.xlu0 %v7832
        %v7834 = vpop.xlane.xlu0 %7833
        %v7835 = vadd.f32 %v7618, %v7619
        %v7836 = vadd.f32 %v7835, %v7620
        %v7837 = vadd.f32 %v7836, %v7621
        %7838 = vadd.xlane.f32.xlu0 %v7837
        %v7839 = vpop.xlane.xlu0 %7838
        %v7840 = vadd.f32 %v7622, %v7623
        %v7841 = vadd.f32 %v7840, %v7624
        %v7842 = vadd.f32 %v7841, %v7625
        %7843 = vadd.xlane.f32.xlu0 %v7842
        %v7844 = vpop.xlane.xlu0 %7843
        %v7845 = vadd.f32 %v7626, %v7627
        %v7846 = vadd.f32 %v7845, %v7628
        %v7847 = vadd.f32 %v7846, %v7629
        %7848 = vadd.xlane.f32.xlu0 %v7847
        %v7849 = vpop.xlane.xlu0 %7848
        %v7850 = vadd.f32 %v7630, %v7631
        %v7851 = vadd.f32 %v7850, %v7632
        %v7852 = vadd.f32 %v7851, %v7633
        %7853 = vadd.xlane.f32.xlu0 %v7852
        %v7854 = vpop.xlane.xlu0 %7853
        %v7855 = vadd.f32 %v7634, %v7635
        %v7856 = vadd.f32 %v7855, %v7636
        %v7857 = vadd.f32 %v7856, %v7637
        %7858 = vadd.xlane.f32.xlu0 %v7857
        %v7859 = vpop.xlane.xlu0 %7858
        %v7860 = vadd.f32 %v7638, %v7639
        %v7861 = vadd.f32 %v7860, %v7640
        %v7862 = vadd.f32 %v7861, %v7641
        %7863 = vadd.xlane.f32.xlu0 %v7862
        %v7864 = vpop.xlane.xlu0 %7863
        %v7865 = vadd.f32 %v7642, %v7643
        %v7866 = vadd.f32 %v7865, %v7644
        %v7867 = vadd.f32 %v7866, %v7645
        %7868 = vadd.xlane.f32.xlu0 %v7867
        %v7869 = vpop.xlane.xlu0 %7868
        %v7870 = vadd.f32 %v7646, %v7647
        %v7871 = vadd.f32 %v7870, %v7648
        %v7872 = vadd.f32 %v7871, %v7649
        %7873 = vadd.xlane.f32.xlu0 %v7872
        %v7874 = vpop.xlane.xlu0 %7873
        %v7875 = vadd.f32 %v7650, %v7651
        %v7876 = vadd.f32 %v7875, %v7652
        %v7877 = vadd.f32 %v7876, %v7653
        %7878 = vadd.xlane.f32.xlu0 %v7877
        %v7879 = vpop.xlane.xlu0 %7878
        %v7880 = vadd.f32 %v7654, %v7655
        %v7881 = vadd.f32 %v7880, %v7656
        %v7882 = vadd.f32 %v7881, %v7657
        %7883 = vadd.xlane.f32.xlu0 %v7882
        %v7884 = vpop.xlane.xlu0 %7883
        %v7885 = vadd.f32 %v7658, %v7659
        %v7886 = vadd.f32 %v7885, %v7660
        %v7887 = vadd.f32 %v7886, %v7661
        %7888 = vadd.xlane.f32.xlu0 %v7887
        %v7889 = vpop.xlane.xlu0 %7888
        %v7890 = vadd.f32 %v7662, %v7663
        %v7891 = vadd.f32 %v7890, %v7664
        %v7892 = vadd.f32 %v7891, %v7665
        %7893 = vadd.xlane.f32.xlu0 %v7892
        %v7894 = vpop.xlane.xlu0 %7893
        %v7895 = vadd.f32 %v7666, %v7667
        %v7896 = vadd.f32 %v7895, %v7668
        %v7897 = vadd.f32 %v7896, %v7669
        %7898 = vadd.xlane.f32.xlu0 %v7897
        %v7899 = vpop.xlane.xlu0 %7898
        %v7900 = vadd.f32 %v7670, %v7671
        %v7901 = vadd.f32 %v7900, %v7672
        %v7902 = vadd.f32 %v7901, %v7673
        %7903 = vadd.xlane.f32.xlu0 %v7902
        %v7904 = vpop.xlane.xlu0 %7903
        %v7905 = vadd.f32 %v7674, %v7675
        %v7906 = vadd.f32 %v7905, %v7676
        %v7907 = vadd.f32 %v7906, %v7677
        %7908 = vadd.xlane.f32.xlu0 %v7907
        %v7909 = vpop.xlane.xlu0 %7908
        %v7910 = vadd.f32 %v7678, %v7679
        %v7911 = vadd.f32 %v7910, %v7680
        %v7912 = vadd.f32 %v7911, %v7681
        %7913 = vadd.xlane.f32.xlu0 %v7912
        %v7914 = vpop.xlane.xlu0 %7913
        %v7915 = vadd.f32 %v7682, %v7683
        %v7916 = vadd.f32 %v7915, %v7684
        %v7917 = vadd.f32 %v7916, %v7685
        %7918 = vadd.xlane.f32.xlu0 %v7917
        %v7919 = vpop.xlane.xlu0 %7918
        %v7920 = vadd.f32 %v7686, %v7687
        %v7921 = vadd.f32 %v7920, %v7688
        %v7922 = vadd.f32 %v7921, %v7689
        %7923 = vadd.xlane.f32.xlu0 %v7922
        %v7924 = vpop.xlane.xlu0 %7923
        %v7925 = vadd.f32 %v7690, %v7691
        %v7926 = vadd.f32 %v7925, %v7692
        %v7927 = vadd.f32 %v7926, %v7693
        %7928 = vadd.xlane.f32.xlu0 %v7927
        %v7929 = vpop.xlane.xlu0 %7928
        %v7930 = vadd.f32 %v7694, %v7695
        %v7931 = vadd.f32 %v7930, %v7696
        %v7932 = vadd.f32 %v7931, %v7697
        %7933 = vadd.xlane.f32.xlu0 %v7932
        %v7934 = vpop.xlane.xlu0 %7933
        %v7935 = vadd.f32 %v7698, %v7699
        %v7936 = vadd.f32 %v7935, %v7700
        %v7937 = vadd.f32 %v7936, %v7701
        %7938 = vadd.xlane.f32.xlu0 %v7937
        %v7939 = vpop.xlane.xlu0 %7938
        %v7940 = vadd.f32 %v7702, %v7703
        %v7941 = vadd.f32 %v7940, %v7704
        %v7942 = vadd.f32 %v7941, %v7705
        %7943 = vadd.xlane.f32.xlu0 %v7942
        %v7944 = vpop.xlane.xlu0 %7943
        %v7945 = vadd.f32 %v7706, %v7707
        %v7946 = vadd.f32 %v7945, %v7708
        %v7947 = vadd.f32 %v7946, %v7709
        %7948 = vadd.xlane.f32.xlu0 %v7947
        %v7949 = vpop.xlane.xlu0 %7948
        %v7950 = vadd.f32 %v6313, %v7714
        %v7951 = vadd.f32 %v6314, %v7719
        %v7952 = vadd.f32 %v6315, %v7724
        %v7953 = vadd.f32 %v6316, %v7729
        %v7954 = vadd.f32 %v6317, %v7734
        %v7955 = vadd.f32 %v6318, %v7739
        %v7956 = vadd.f32 %v6319, %v7744
        %v7957 = vadd.f32 %v6320, %v7749
        %v7958 = vadd.f32 %v6321, %v7754
        %v7959 = vadd.f32 %v6322, %v7759
        %v7960 = vadd.f32 %v6323, %v7764
        %v7961 = vadd.f32 %v6324, %v7769
        %v7962 = vadd.f32 %v6325, %v7774
        %v7963 = vadd.f32 %v6326, %v7779
        %v7964 = vadd.f32 %v6327, %v7784
        %v7965 = vadd.f32 %v6328, %v7789
        %v7966 = vadd.f32 %v6329, %v7794
        %v7967 = vadd.f32 %v6330, %v7799
        %v7968 = vadd.f32 %v6331, %v7804
        %v7969 = vadd.f32 %v6332, %v7809
        %v7970 = vadd.f32 %v6333, %v7814
        %v7971 = vadd.f32 %v6334, %v7819
        %v7972 = vadd.f32 %v6335, %v7824
        %v7973 = vadd.f32 %v6336, %v7829
        %v7974 = vadd.f32 %v6337, %v7834
        %v7975 = vadd.f32 %v6338, %v7839
        %v7976 = vadd.f32 %v6339, %v7844
        %v7977 = vadd.f32 %v6340, %v7849
        %v7978 = vadd.f32 %v6341, %v7854
        %v7979 = vadd.f32 %v6342, %v7859
        %v7980 = vadd.f32 %v6343, %v7864
        %v7981 = vadd.f32 %v6344, %v7869
        %v7982 = vadd.f32 %v6345, %v7874
        %v7983 = vadd.f32 %v6346, %v7879
        %v7984 = vadd.f32 %v6347, %v7884
        %v7985 = vadd.f32 %v6348, %v7889
        %v7986 = vadd.f32 %v6349, %v7894
        %v7987 = vadd.f32 %v6350, %v7899
        %v7988 = vadd.f32 %v6351, %v7904
        %v7989 = vadd.f32 %v6352, %v7909
        %v7990 = vadd.f32 %v6353, %v7914
        %v7991 = vadd.f32 %v6354, %v7919
        %v7992 = vadd.f32 %v6355, %v7924
        %v7993 = vadd.f32 %v6356, %v7929
        %v7994 = vadd.f32 %v6357, %v7934
        %v7995 = vadd.f32 %v6358, %v7939
        %v7996 = vadd.f32 %v6359, %v7944
        %v7997 = vadd.f32 %v6360, %v7949
      $region57: #{model_forward.3} parent=51 // loop_footer
        %s6312 = sadd.s32 1, %s6308
      $region58: #{model_forward.3} parent=51 // loop_footer_branch
        %6307 = sbr.rel target = $region54
      $region59: #{model_forward.3} parent=51 // loop_exit
        _
      %vm7998 = vcmask 7168
      %7999 = vst.msk [vmem:[%s305] sm:$0xff] %vm7998, %v6313
      %8000 = vst.msk [vmem:[%s305 + $0x8] sm:$0xff] %vm7998, %v6314
      %8001 = vst.msk [vmem:[%s305 + $0x10] sm:$0xff] %vm7998, %v6315
      %8002 = vst.msk [vmem:[%s305 + $0x18] sm:$0xff] %vm7998, %v6316
      %8003 = vst.msk [vmem:[%s305 + $0x20] sm:$0xff] %vm7998, %v6317
      %8004 = vst.msk [vmem:[%s305 + $0x28] sm:$0xff] %vm7998, %v6318
      %8005 = vst.msk [vmem:[%s305 + $0x30] sm:$0xff] %vm7998, %v6319
      %8006 = vst.msk [vmem:[%s305 + $0x38] sm:$0xff] %vm7998, %v6320
      %8007 = vst.msk [vmem:[%s305 + $0x40] sm:$0xff] %vm7998, %v6321
      %8008 = vst.msk [vmem:[%s305 + $0x48] sm:$0xff] %vm7998, %v6322
      %8009 = vst.msk [vmem:[%s305 + $0x50] sm:$0xff] %vm7998, %v6323
      %8010 = vst.msk [vmem:[%s305 + $0x58] sm:$0xff] %vm7998, %v6324
      %8011 = vst.msk [vmem:[%s305 + $0x60] sm:$0xff] %vm7998, %v6325
      %8012 = vst.msk [vmem:[%s305 + $0x68] sm:$0xff] %vm7998, %v6326
      %8013 = vst.msk [vmem:[%s305 + $0x70] sm:$0xff] %vm7998, %v6327
      %8014 = vst.msk [vmem:[%s305 + $0x78] sm:$0xff] %vm7998, %v6328
      %8015 = vst.msk [vmem:[%s305 + $0x80] sm:$0xff] %vm7998, %v6329
      %8016 = vst.msk [vmem:[%s305 + $0x88] sm:$0xff] %vm7998, %v6330
      %8017 = vst.msk [vmem:[%s305 + $0x90] sm:$0xff] %vm7998, %v6331
      %8018 = vst.msk [vmem:[%s305 + $0x98] sm:$0xff] %vm7998, %v6332
      %8019 = vst.msk [vmem:[%s305 + $0xa0] sm:$0xff] %vm7998, %v6333
      %8020 = vst.msk [vmem:[%s305 + $0xa8] sm:$0xff] %vm7998, %v6334
      %8021 = vst.msk [vmem:[%s305 + $0xb0] sm:$0xff] %vm7998, %v6335
      %8022 = vst.msk [vmem:[%s305 + $0xb8] sm:$0xff] %vm7998, %v6336
      %8023 = vst.msk [vmem:[%s305 + $0xc0] sm:$0xff] %vm7998, %v6337
      %8024 = vst.msk [vmem:[%s305 + $0xc8] sm:$0xff] %vm7998, %v6338
      %8025 = vst.msk [vmem:[%s305 + $0xd0] sm:$0xff] %vm7998, %v6339
      %8026 = vst.msk [vmem:[%s305 + $0xd8] sm:$0xff] %vm7998, %v6340
      %8027 = vst.msk [vmem:[%s305 + $0xe0] sm:$0xff] %vm7998, %v6341
      %8028 = vst.msk [vmem:[%s305 + $0xe8] sm:$0xff] %vm7998, %v6342
      %8029 = vst.msk [vmem:[%s305 + $0xf0] sm:$0xff] %vm7998, %v6343
      %8030 = vst.msk [vmem:[%s305 + $0xf8] sm:$0xff] %vm7998, %v6344
      %8031 = vst.msk [vmem:[%s305 + $0x100] sm:$0xff] %vm7998, %v6345
      %8032 = vst.msk [vmem:[%s305 + $0x108] sm:$0xff] %vm7998, %v6346
      %8033 = vst.msk [vmem:[%s305 + $0x110] sm:$0xff] %vm7998, %v6347
      %8034 = vst.msk [vmem:[%s305 + $0x118] sm:$0xff] %vm7998, %v6348
      %8035 = vst.msk [vmem:[%s305 + $0x120] sm:$0xff] %vm7998, %v6349
      %8036 = vst.msk [vmem:[%s305 + $0x128] sm:$0xff] %vm7998, %v6350
      %8037 = vst.msk [vmem:[%s305 + $0x130] sm:$0xff] %vm7998, %v6351
      %8038 = vst.msk [vmem:[%s305 + $0x138] sm:$0xff] %vm7998, %v6352
      %8039 = vst.msk [vmem:[%s305 + $0x140] sm:$0xff] %vm7998, %v6353
      %8040 = vst.msk [vmem:[%s305 + $0x148] sm:$0xff] %vm7998, %v6354
      %8041 = vst.msk [vmem:[%s305 + $0x150] sm:$0xff] %vm7998, %v6355
      %8042 = vst.msk [vmem:[%s305 + $0x158] sm:$0xff] %vm7998, %v6356
      %8043 = vst.msk [vmem:[%s305 + $0x160] sm:$0xff] %vm7998, %v6357
      %8044 = vst.msk [vmem:[%s305 + $0x168] sm:$0xff] %vm7998, %v6358
      %8045 = vst.msk [vmem:[%s305 + $0x170] sm:$0xff] %vm7998, %v6359
      %8046 = vst.msk [vmem:[%s305 + $0x178] sm:$0xff] %vm7998, %v6360
      %p8047 = scmp.lt.s32.totalorder %s19, 3
      %s8048 = scalar_select %p8047, %s19, 3
      %s8049 = smul.addr %s8048, 48
      %s8050 = smul.addr %s8049, 8
      %s8051 = scalar_lea.vmem %s8, %s8050
      // Predicated region
      $region60: #{model_forward.3} parent=51 // pred_check
        %p8052 = pneg %p210
      $region61: #{model_forward.3} parent=51 // pred_check_branch
        %8054 = sbr.rel (%p8052) target = $region63
      $region62: #{model_forward.3} parent=51 // pred_region
        _
      $region63: #{model_forward.3} parent=51 // pred_fallthru
        _
    $region52: #{model_forward.3} parent=5 // pred_fallthru
      _
    %p8055 = scmp.le.s32.totalorder 2, %s14
    // Predicated region
    $region64: #{model_forward.3} parent=5 // pred_check
      %p8056 = pneg %p8055
    $region65: #{model_forward.3} parent=5 // pred_check_branch
      %8058 = sbr.rel (%p8056) target = $region67
    $region66: #{model_forward.3} parent=5 // pred_region
      %s8059 = ssub.s32 %s14, 2
      // Predicated region
      $region68: #{model_forward.3} parent=66 // pred_check
        %p8060 = pneg %p216
      $region69: #{model_forward.3} parent=66 // pred_check_branch
        %8062 = sbr.rel (%p8060) target = $region71
      $region70: #{model_forward.3} parent=66 // pred_region
        %p8063 = scmp.lt.s32.totalorder %s20, 3
        %s8064 = scalar_select %p8063, %s20, 3
        %s8065 = smul.addr %s8064, 48
        %s8066 = smul.addr %s8065, 8
        %s8067 = scalar_lea.vmem %s8, %s8066
      $region71: #{model_forward.3} parent=66 // pred_fallthru
        _
    $region67: #{model_forward.3} parent=5 // pred_fallthru
      _
  $region6: #{model_forward.3} parent=0 // loop_footer
    %s18 = sadd.s32 1, %s14
  $region7: #{model_forward.3} parent=0 // loop_footer_branch
    %13 = sbr.rel target = $region3
  $region8: #{model_forward.3} parent=0 // loop_exit
    _

</llo_original>
